<compile_context>
chip_gen: v7x
topology: tpu7x:2x2x1
jax: 0.10.0
libtpu: 0.0.40
codegen_flags: <defaults>
</compile_context>

<pallas_src>
import functools

import jax
import jax.numpy as jnp
from jax.experimental import pallas as pl
from jax.experimental.pallas import tpu as pltpu


_COMPUTE_DTYPE = jnp.bfloat16            # MXU dtype; accumulation stays f32
_VMEM_LIMIT_BYTES = 32 * 1024 * 1024     # scoped VMEM request; safe on v5e/v6e/v7x
_FUSE_VMEM_BUDGET = 20 * 1024 * 1024     # resident-weight budget for fused stages


def _pick_tile(dim, target, quantum):
    """Largest multiple of `quantum` that divides `dim` and is <= target.

    Falls back to the full dimension (always a legal BlockSpec block)."""
    t = (min(dim, target) // quantum) * quantum
    while t >= quantum:
        if dim % t == 0:
            return t
        t -= quantum
    return dim


# --------------------------- tiled matmul kernel ----------------------------
# Fallback path for stages whose weights do not fit resident in VMEM.

def _matmul_kernel(*refs, relu, has_skip):
    if has_skip:
        x_ref, s_ref, w_ref, b_ref, o_ref, acc_ref = refs
    else:
        x_ref, w_ref, b_ref, o_ref, acc_ref = refs
        s_ref = None

    @pl.when(pl.program_id(2) == 0)
    def _init():
        acc_ref[...] = jnp.zeros_like(acc_ref)

    x = x_ref[...]
    if s_ref is not None:
        # skip-add in f32 (v5e has no bf16 VPU), cast back for the MXU.
        x = (x.astype(jnp.float32) + s_ref[...].astype(jnp.float32)).astype(x_ref.dtype)
    acc_ref[...] += jnp.dot(x, w_ref[...], preferred_element_type=jnp.float32)

    @pl.when(pl.program_id(2) == pl.num_programs(2) - 1)
    def _epilogue():
        y = acc_ref[...] + b_ref[...].astype(jnp.float32)
        if relu:
            y = jnp.maximum(y, 0.0)
        o_ref[...] = y.astype(o_ref.dtype)


def linear_pallas(x, w, b, *, relu=False, skip=None,
                  tm_target=512, tn_target=512, tk_target=512):
    """y = (x [+ skip]) @ w + b [, ReLU] with a pipelined, tiled grid."""
    M, K = x.shape
    N = w.shape[1]
    tm = _pick_tile(M, tm_target, 8)
    tn = _pick_tile(N, tn_target, 128)
    tk = _pick_tile(K, tk_target, 128)
    grid = (M // tm, N // tn, K // tk)
    has_skip = skip is not None

    x_spec = pl.BlockSpec((tm, tk), lambda i, j, k: (i, k))
    w_spec = pl.BlockSpec((tk, tn), lambda i, j, k: (k, j))
    b_spec = pl.BlockSpec((1, tn), lambda i, j, k: (0, j))
    o_spec = pl.BlockSpec((tm, tn), lambda i, j, k: (i, j))

    in_specs = [x_spec] + ([x_spec] if has_skip else []) + [w_spec, b_spec]
    args = (x,) + ((skip,) if has_skip else ()) + (w, b)

    kernel = functools.partial(_matmul_kernel, relu=relu, has_skip=has_skip)
    return pl.pallas_call(
        kernel,
        out_shape=jax.ShapeDtypeStruct((M, N), x.dtype),
        grid_spec=pltpu.PrefetchScalarGridSpec(
            num_scalar_prefetch=0,
            grid=grid,
            in_specs=in_specs,
            out_specs=o_spec,
            scratch_shapes=[pltpu.VMEM((tm, tn), jnp.float32)]),
        compiler_params=pltpu.CompilerParams(
            dimension_semantics=("parallel", "parallel", "arbitrary"),
            vmem_limit_bytes=_VMEM_LIMIT_BYTES),
    )(*args)


# --------------------------- fused "chain" kernel ---------------------------
# One pallas_call per UNet stage: optional skip-add, then 1..3 Linear(+ReLU)
# layers back to back with all weights resident in VMEM.  Grid only over M
# tiles (marked "parallel" -> sharded across the 2 TensorCores on v7x).

def _chain_kernel(*refs, relus, has_skip):
    n_stages = len(relus)
    idx = 0
    x_ref = refs[idx]; idx += 1
    s_ref = None
    if has_skip:
        s_ref = refs[idx]; idx += 1
    wb = refs[idx: idx + 2 * n_stages]
    o_ref = refs[idx + 2 * n_stages]

    x = x_ref[...]
    if s_ref is not None:
        x = (x.astype(jnp.float32) + s_ref[...].astype(jnp.float32)).astype(x_ref.dtype)

    h = x
    for s in range(n_stages):
        w_ref, b_ref = wb[2 * s], wb[2 * s + 1]
        acc = jnp.dot(h, w_ref[...], preferred_element_type=jnp.float32)
        acc = acc + b_ref[...].astype(jnp.float32)
        if relus[s]:
            acc = jnp.maximum(acc, 0.0)
        if s < n_stages - 1:
            h = acc.astype(x_ref.dtype)        # bf16 for the next MXU matmul
        else:
            o_ref[...] = acc.astype(o_ref.dtype)


def chain_pallas(x, stages, *, skip=None, tm_target=512):
    """Fused multi-Linear stage on an (M, K) slab.

    `stages` is a list of (w, b, relu).  Falls back to per-stage tiled matmuls
    when the resident weights would not fit the VMEM budget."""
    M, K = x.shape
    itemsize = jnp.dtype(_COMPUTE_DTYPE).itemsize
    tm = _pick_tile(M, tm_target, 8)

    widths = [K] + [w.shape[1] for (w, _, _) in stages]
    w_bytes = sum(w.size * itemsize + b.size * 4 for (w, b, _) in stages)
    io_bytes = 2 * tm * (widths[0] * (2 if skip is not None else 1)
                         + widths[-1]) * itemsize          # double-buffered x/skip/out
    acc_bytes = 2 * tm * max(widths) * 4                   # f32 intermediates
    if w_bytes + io_bytes + acc_bytes > _FUSE_VMEM_BUDGET:
        # Large-channel fallback: tiled, double-buffered matmuls per stage.
        h = x
        for s, (w, b, relu) in enumerate(stages):
            h = linear_pallas(h, w, b, relu=relu, skip=skip if s == 0 else None)
        return h

    n_out = widths[-1]
    x_spec = pl.BlockSpec((tm, K), lambda i: (i, 0))
    in_specs = [x_spec]
    args = [x]
    if skip is not None:
        in_specs.append(x_spec)
        args.append(skip)
    for (w, b, _) in stages:
        in_specs.append(pl.BlockSpec(w.shape, lambda i: (0, 0)))   # resident weight
        in_specs.append(pl.BlockSpec(b.shape, lambda i: (0, 0)))   # resident bias
        args.extend([w, b])
    o_spec = pl.BlockSpec((tm, n_out), lambda i: (i, 0))

    kernel = functools.partial(
        _chain_kernel,
        relus=tuple(r for (_, _, r) in stages),
        has_skip=skip is not None)

    return pl.pallas_call(
        kernel,
        out_shape=jax.ShapeDtypeStruct((M, n_out), x.dtype),
        grid_spec=pltpu.PrefetchScalarGridSpec(
            num_scalar_prefetch=0,
            grid=(M // tm,),
            in_specs=in_specs,
            out_specs=o_spec),
        compiler_params=pltpu.CompilerParams(
            dimension_semantics=("parallel",),
            vmem_limit_bytes=_VMEM_LIMIT_BYTES),
    )(*args)


# ------------------------------ module pieces -------------------------------

def _fold_time(x3d, f):
    B, T, C = x3d.shape
    return x3d.reshape(B, T // f, f * C)


def _stage(p, relu):
    return (p["w"], p["b"], relu)


def _apply_chain_pallas(x3d, stages, skip3d=None, up_factor=1):
    B, T, C = x3d.shape
    x2 = x3d.reshape(B * T, C).astype(_COMPUTE_DTYPE)
    s2 = None if skip3d is None else skip3d.reshape(B * T, C).astype(_COMPUTE_DTYPE)
    y = chain_pallas(x2, stages, skip=s2)
    n = y.shape[-1]
    if up_factor > 1:
        return y.reshape(B, T * up_factor, n // up_factor)
    return y.reshape(B, T, n)


def _apply_chain_ref(x3d, stages, skip3d=None, up_factor=1):
    """Pure-JAX f32 reference of one fused stage (for correctness check)."""
    B, T, _ = x3d.shape
    h = x3d.astype(jnp.float32)
    if skip3d is not None:
        h = h + skip3d.astype(jnp.float32)
    for (w, b, relu) in stages:
        h = h @ w.astype(jnp.float32) + b
        if relu:
            h = jnp.maximum(h, 0.0)
    n = h.shape[-1]
    if up_factor > 1:
        return h.reshape(B, T * up_factor, n // up_factor)
    return h.reshape(B, T, n)


def _unet_core(x, params, f, times, apply_chain):
    B, T, _ = x.shape
    pad_len = (-T) % (f ** times)
    x = jnp.pad(x, ((0, 0), (0, pad_len), (0, 0)))      # pad T like F.pad

    h = [x]
    # encoders[0]: block(input_dims -> hidden)
    h.append(apply_chain(h[-1], [_stage(params["enc"][0]["block"], True)]))
    # encoders[1:]: down + block, fused
    for i in range(1, times):
        h.append(apply_chain(_fold_time(h[-1], f),
                             [_stage(params["enc"][i]["down"], False),
                              _stage(params["enc"][i]["block"], True)]))

    # bottleneck: down + block + up, fused
    y = apply_chain(_fold_time(h[-1], f),
                    [_stage(params["bn"]["down"], False),
                     _stage(params["bn"]["block"], True),
                     _stage(params["bn"]["up"], False)],
                    up_factor=f)
    h_ = [y]

    # decoders[:-1]: (skip add) + block + up, fused
    for i in range(times - 1):
        p = params["dec"][i]
        h_.append(apply_chain(h_[-1],
                              [_stage(p["block"], True), _stage(p["up"], False)],
                              skip3d=h[-1 - i], up_factor=f))

    # decoders[-1]: (skip add) + block
    h_.append(apply_chain(h_[-1],
                          [_stage(params["dec"][times - 1]["block"], True)],
                          skip3d=h[-1 - (times - 1)]))

    return h_[-1][:, :T, :]                              # crop padding


@functools.partial(jax.jit, static_argnames=("f", "times"))
def unet_forward(x, params, *, f=2, times=5):
    return _unet_core(x, params, f, times, _apply_chain_pallas).astype(jnp.float32)


@functools.partial(jax.jit, static_argnames=("f", "times"))
def unet_reference(x, params, *, f=2, times=5):
    return _unet_core(x, params, f, times, _apply_chain_ref)


def init_params(key, input_dims, output_dims, hidden_dims,
                f=2, times=5, scale=2):
    keys = iter(jax.random.split(key, 4 * times + 8))

    def lin(cin, cout):
        kw, kb = jax.random.split(next(keys))
        bound = 1.0 / float(cin) ** 0.5
        w = jax.random.uniform(kw, (cin, cout), jnp.float32, -bound, bound)
        b = jax.random.uniform(kb, (1, cout), jnp.float32, -bound, bound)
        # bf16 weights (MXU rate, half the HBM bytes); bias stays f32 and is
        # added to the f32 accumulator in the kernel epilogue.
        return {"w": w.astype(_COMPUTE_DTYPE), "b": b}

    params = {"enc": [{"block": lin(input_dims, hidden_dims)}]}
    for i in range(1, times):
        cin = int(scale ** (i - 1)) * hidden_dims
        cout = int(scale ** i) * hidden_dims
        params["enc"].append({"down": lin(f * cin, cout),
                              "block": lin(cout, cout)})
    c_pre = int(scale ** (times - 1)) * hidden_dims
    c_bn = int(scale ** times) * hidden_dims
    params["bn"] = {"down": lin(f * c_pre, c_bn),
                    "block": lin(c_bn, c_bn),
                    "up": lin(c_bn, f * c_pre)}
    params["dec"] = []
    for i in range(1, times):
        c = int(scale ** (times - i)) * hidden_dims
        c_next = int(scale ** (times - i - 1)) * hidden_dims
        params["dec"].append({"block": lin(c, c), "up": lin(c, f * c_next)})
    params["dec"].append({"block": lin(hidden_dims, output_dims)})
    return params


# ----------------------------------- main -----------------------------------

if __name__ == "__main__":
    INPUT_DIMS, OUTPUT_DIMS, HIDDEN_DIMS = 8, 8, 16
    F, TIMES, SCALE = 2, 5, 2
    B, T = 2, 40          # T=40 not a multiple of 2**5=32 -> exercises padding

    key = jax.random.PRNGKey(0)
    k_x, k_p = jax.random.split(key)
    x = jax.random.normal(k_x, (B, T, INPUT_DIMS), dtype=jnp.float32)
    params = init_params(k_p, INPUT_DIMS, OUTPUT_DIMS, HIDDEN_DIMS,
                         f=F, times=TIMES, scale=SCALE)

    out = unet_forward(x, params, f=F, times=TIMES)
    out = jax.block_until_ready(out)
    assert out.shape == (B, T, OUTPUT_DIMS), out.shape
    assert bool(jnp.all(jnp.isfinite(out)))

    # Pure-JAX f32 reference (same bf16-stored weights); loose tol covers the
    # bf16 activation rounding of the Pallas path.
    ref = jax.block_until_ready(unet_reference(x, params, f=F, times=TIMES))
    max_err = float(jnp.max(jnp.abs(out - ref)))
    assert max_err < 0.25, f"mismatch vs reference: max|err|={max_err}"

    print("KERNEL_OK")
</pallas_src>

<mosaic_0001>
module attributes {stable_mosaic.version = 11 : i64} {
  func.func @_chain_kernel(%arg0: i32, %arg1: memref<128x8xbf16, #tpu.memory_space<vmem>>, %arg2: memref<8x16xbf16, #tpu.memory_space<vmem>>, %arg3: memref<1x16xf32, #tpu.memory_space<vmem>>, %arg4: memref<128x16xbf16, #tpu.memory_space<vmem>>) attributes {dimension_semantics = [#tpu.dimension_semantics<parallel>], iteration_bounds = array<i64: 1>, scalar_prefetch = 0 : i64, scratch_operands = 0 : i64, tpu.core_type = #tpu.core_type<tc>, window_params = [{transform_indices = @transform_0, window_bounds = array<i64: 128, 8>}, {pipeline_mode = #tpu.pipeline_mode<synchronous>, transform_indices = @transform_1, window_bounds = array<i64: 8, 16>}, {pipeline_mode = #tpu.pipeline_mode<synchronous>, transform_indices = @transform_2, window_bounds = array<i64: 1, 16>}, {transform_indices = @transform_3, window_bounds = array<i64: 128, 16>}]} {
    %c0 = arith.constant 0 : index
    %c0_0 = arith.constant 0 : index
    %0 = vector.load %arg1[%c0, %c0_0] : memref<128x8xbf16, #tpu.memory_space<vmem>>, vector<128x8xbf16>
    %c0_1 = arith.constant 0 : index
    %c0_2 = arith.constant 0 : index
    %1 = vector.load %arg2[%c0_1, %c0_2] : memref<8x16xbf16, #tpu.memory_space<vmem>>, vector<8x16xbf16>
    %cst = arith.constant dense<0.000000e+00> : vector<128x16xf32>
    %2 = tpu.matmul %0, %1, %cst {dimension_numbers = #tpu.dot_dimension_numbers<[1], [0], [0], [1], [0, 0, 1, 1], [], []>} : vector<128x8xbf16>, vector<8x16xbf16>, vector<128x16xf32> -> vector<128x16xf32>
    %c0_3 = arith.constant 0 : index
    %c0_4 = arith.constant 0 : index
    %3 = vector.load %arg3[%c0_3, %c0_4] : memref<1x16xf32, #tpu.memory_space<vmem>>, vector<1x16xf32>
    %4 = vector.broadcast %3 : vector<1x16xf32> to vector<128x16xf32>
    %5 = arith.addf %2, %4 : vector<128x16xf32>
    %cst_5 = arith.constant 0.000000e+00 : f32
    %6 = vector.broadcast %cst_5 : f32 to vector<128x16xf32>
    %7 = arith.maximumf %5, %6 : vector<128x16xf32>
    %8 = arith.truncf %7 : vector<128x16xf32> to vector<128x16xbf16>
    %c0_6 = arith.constant 0 : index
    %c0_7 = arith.constant 0 : index
    %9 = vector.load %arg4[%c0_6, %c0_7] : memref<128x16xbf16, #tpu.memory_space<vmem>>, vector<128x16xbf16>
    tpu.vector_store %arg4[%c0_6, %c0_7], %8 {strides = array<i32>} : memref<128x16xbf16, #tpu.memory_space<vmem>>, vector<128x16xbf16>,
    return
  }
  func.func @transform_0(%arg0: i32) -> (i32, i32) {
    %c0_i32 = arith.constant 0 : i32
    %c0_i32_0 = arith.constant 0 : i32
    return %arg0, %c0_i32 : i32, i32
  }
  func.func @transform_1(%arg0: i32) -> (i32, i32) {
    %c0_i32 = arith.constant 0 : i32
    %c0_i32_0 = arith.constant 0 : i32
    %c0_i32_1 = arith.constant 0 : i32
    return %c0_i32, %c0_i32_0 : i32, i32
  }
  func.func @transform_2(%arg0: i32) -> (i32, i32) {
    %c0_i32 = arith.constant 0 : i32
    %c0_i32_0 = arith.constant 0 : i32
    %c0_i32_1 = arith.constant 0 : i32
    return %c0_i32, %c0_i32_0 : i32, i32
  }
  func.func @transform_3(%arg0: i32) -> (i32, i32) {
    %c0_i32 = arith.constant 0 : i32
    %c0_i32_0 = arith.constant 0 : i32
    return %arg0, %c0_i32 : i32, i32
  }
}

module attributes {stable_mosaic.version = 11 : i64} {
  func.func @_chain_kernel(%arg0: i32, %arg1: memref<64x32xbf16, #tpu.memory_space<vmem>>, %arg2: memref<32x32xbf16, #tpu.memory_space<vmem>>, %arg3: memref<1x32xf32, #tpu.memory_space<vmem>>, %arg4: memref<32x32xbf16, #tpu.memory_space<vmem>>, %arg5: memref<1x32xf32, #tpu.memory_space<vmem>>, %arg6: memref<64x32xbf16, #tpu.memory_space<vmem>>) attributes {dimension_semantics = [#tpu.dimension_semantics<parallel>], iteration_bounds = array<i64: 1>, scalar_prefetch = 0 : i64, scratch_operands = 0 : i64, tpu.core_type = #tpu.core_type<tc>, window_params = [{transform_indices = @transform_0, window_bounds = array<i64: 64, 32>}, {pipeline_mode = #tpu.pipeline_mode<synchronous>, transform_indices = @transform_1, window_bounds = array<i64: 32, 32>}, {pipeline_mode = #tpu.pipeline_mode<synchronous>, transform_indices = @transform_2, window_bounds = array<i64: 1, 32>}, {pipeline_mode = #tpu.pipeline_mode<synchronous>, transform_indices = @transform_3, window_bounds = array<i64: 32, 32>}, {pipeline_mode = #tpu.pipeline_mode<synchronous>, transform_indices = @transform_4, window_bounds = array<i64: 1, 32>}, {transform_indices = @transform_5, window_bounds = array<i64: 64, 32>}]} {
    %c0 = arith.constant 0 : index
    %c0_0 = arith.constant 0 : index
    %0 = vector.load %arg1[%c0, %c0_0] : memref<64x32xbf16, #tpu.memory_space<vmem>>, vector<64x32xbf16>
    %c0_1 = arith.constant 0 : index
    %c0_2 = arith.constant 0 : index
    %1 = vector.load %arg2[%c0_1, %c0_2] : memref<32x32xbf16, #tpu.memory_space<vmem>>, vector<32x32xbf16>
    %cst = arith.constant dense<0.000000e+00> : vector<64x32xf32>
    %2 = tpu.matmul %0, %1, %cst {dimension_numbers = #tpu.dot_dimension_numbers<[1], [0], [0], [1], [0, 0, 1, 1], [], []>} : vector<64x32xbf16>, vector<32x32xbf16>, vector<64x32xf32> -> vector<64x32xf32>
    %c0_3 = arith.constant 0 : index
    %c0_4 = arith.constant 0 : index
    %3 = vector.load %arg3[%c0_3, %c0_4] : memref<1x32xf32, #tpu.memory_space<vmem>>, vector<1x32xf32>
    %4 = vector.broadcast %3 : vector<1x32xf32> to vector<64x32xf32>
    %5 = arith.addf %2, %4 : vector<64x32xf32>
    %6 = arith.truncf %5 : vector<64x32xf32> to vector<64x32xbf16>
    %c0_5 = arith.constant 0 : index
    %c0_6 = arith.constant 0 : index
    %7 = vector.load %arg4[%c0_5, %c0_6] : memref<32x32xbf16, #tpu.memory_space<vmem>>, vector<32x32xbf16>
    %cst_7 = arith.constant dense<0.000000e+00> : vector<64x32xf32>
    %8 = tpu.matmul %6, %7, %cst_7 {dimension_numbers = #tpu.dot_dimension_numbers<[1], [0], [0], [1], [0, 0, 1, 1], [], []>} : vector<64x32xbf16>, vector<32x32xbf16>, vector<64x32xf32> -> vector<64x32xf32>
    %c0_8 = arith.constant 0 : index
    %c0_9 = arith.constant 0 : index
    %9 = vector.load %arg5[%c0_8, %c0_9] : memref<1x32xf32, #tpu.memory_space<vmem>>, vector<1x32xf32>
    %10 = vector.broadcast %9 : vector<1x32xf32> to vector<64x32xf32>
    %11 = arith.addf %8, %10 : vector<64x32xf32>
    %cst_10 = arith.constant 0.000000e+00 : f32
    %12 = vector.broadcast %cst_10 : f32 to vector<64x32xf32>
    %13 = arith.maximumf %11, %12 : vector<64x32xf32>
    %14 = arith.truncf %13 : vector<64x32xf32> to vector<64x32xbf16>
    %c0_11 = arith.constant 0 : index
    %c0_12 = arith.constant 0 : index
    %15 = vector.load %arg6[%c0_11, %c0_12] : memref<64x32xbf16, #tpu.memory_space<vmem>>, vector<64x32xbf16>
    tpu.vector_store %arg6[%c0_11, %c0_12], %14 {strides = array<i32>} : memref<64x32xbf16, #tpu.memory_space<vmem>>, vector<64x32xbf16>,
    return
  }
  func.func @transform_0(%arg0: i32) -> (i32, i32) {
    %c0_i32 = arith.constant 0 : i32
    %c0_i32_0 = arith.constant 0 : i32
    return %arg0, %c0_i32 : i32, i32
  }
  func.func @transform_1(%arg0: i32) -> (i32, i32) {
    %c0_i32 = arith.constant 0 : i32
    %c0_i32_0 = arith.constant 0 : i32
    %c0_i32_1 = arith.constant 0 : i32
    return %c0_i32, %c0_i32_0 : i32, i32
  }
  func.func @transform_2(%arg0: i32) -> (i32, i32) {
    %c0_i32 = arith.constant 0 : i32
    %c0_i32_0 = arith.constant 0 : i32
    %c0_i32_1 = arith.constant 0 : i32
    return %c0_i32, %c0_i32_0 : i32, i32
  }
  func.func @transform_3(%arg0: i32) -> (i32, i32) {
    %c0_i32 = arith.constant 0 : i32
    %c0_i32_0 = arith.constant 0 : i32
    %c0_i32_1 = arith.constant 0 : i32
    return %c0_i32, %c0_i32_0 : i32, i32
  }
  func.func @transform_4(%arg0: i32) -> (i32, i32) {
    %c0_i32 = arith.constant 0 : i32
    %c0_i32_0 = arith.constant 0 : i32
    %c0_i32_1 = arith.constant 0 : i32
    return %c0_i32, %c0_i32_0 : i32, i32
  }
  func.func @transform_5(%arg0: i32) -> (i32, i32) {
    %c0_i32 = arith.constant 0 : i32
    %c0_i32_0 = arith.constant 0 : i32
    return %arg0, %c0_i32 : i32, i32
  }
}

module attributes {stable_mosaic.version = 11 : i64} {
  func.func @_chain_kernel(%arg0: i32, %arg1: memref<32x64xbf16, #tpu.memory_space<vmem>>, %arg2: memref<64x64xbf16, #tpu.memory_space<vmem>>, %arg3: memref<1x64xf32, #tpu.memory_space<vmem>>, %arg4: memref<64x64xbf16, #tpu.memory_space<vmem>>, %arg5: memref<1x64xf32, #tpu.memory_space<vmem>>, %arg6: memref<32x64xbf16, #tpu.memory_space<vmem>>) attributes {dimension_semantics = [#tpu.dimension_semantics<parallel>], iteration_bounds = array<i64: 1>, scalar_prefetch = 0 : i64, scratch_operands = 0 : i64, tpu.core_type = #tpu.core_type<tc>, window_params = [{transform_indices = @transform_0, window_bounds = array<i64: 32, 64>}, {pipeline_mode = #tpu.pipeline_mode<synchronous>, transform_indices = @transform_1, window_bounds = array<i64: 64, 64>}, {pipeline_mode = #tpu.pipeline_mode<synchronous>, transform_indices = @transform_2, window_bounds = array<i64: 1, 64>}, {pipeline_mode = #tpu.pipeline_mode<synchronous>, transform_indices = @transform_3, window_bounds = array<i64: 64, 64>}, {pipeline_mode = #tpu.pipeline_mode<synchronous>, transform_indices = @transform_4, window_bounds = array<i64: 1, 64>}, {transform_indices = @transform_5, window_bounds = array<i64: 32, 64>}]} {
    %c0 = arith.constant 0 : index
    %c0_0 = arith.constant 0 : index
    %0 = vector.load %arg1[%c0, %c0_0] : memref<32x64xbf16, #tpu.memory_space<vmem>>, vector<32x64xbf16>
    %c0_1 = arith.constant 0 : index
    %c0_2 = arith.constant 0 : index
    %1 = vector.load %arg2[%c0_1, %c0_2] : memref<64x64xbf16, #tpu.memory_space<vmem>>, vector<64x64xbf16>
    %cst = arith.constant dense<0.000000e+00> : vector<32x64xf32>
    %2 = tpu.matmul %0, %1, %cst {dimension_numbers = #tpu.dot_dimension_numbers<[1], [0], [0], [1], [0, 0, 1, 1], [], []>} : vector<32x64xbf16>, vector<64x64xbf16>, vector<32x64xf32> -> vector<32x64xf32>
    %c0_3 = arith.constant 0 : index
    %c0_4 = arith.constant 0 : index
    %3 = vector.load %arg3[%c0_3, %c0_4] : memref<1x64xf32, #tpu.memory_space<vmem>>, vector<1x64xf32>
    %4 = vector.broadcast %3 : vector<1x64xf32> to vector<32x64xf32>
    %5 = arith.addf %2, %4 : vector<32x64xf32>
    %6 = arith.truncf %5 : vector<32x64xf32> to vector<32x64xbf16>
    %c0_5 = arith.constant 0 : index
    %c0_6 = arith.constant 0 : index
    %7 = vector.load %arg4[%c0_5, %c0_6] : memref<64x64xbf16, #tpu.memory_space<vmem>>, vector<64x64xbf16>
    %cst_7 = arith.constant dense<0.000000e+00> : vector<32x64xf32>
    %8 = tpu.matmul %6, %7, %cst_7 {dimension_numbers = #tpu.dot_dimension_numbers<[1], [0], [0], [1], [0, 0, 1, 1], [], []>} : vector<32x64xbf16>, vector<64x64xbf16>, vector<32x64xf32> -> vector<32x64xf32>
    %c0_8 = arith.constant 0 : index
    %c0_9 = arith.constant 0 : index
    %9 = vector.load %arg5[%c0_8, %c0_9] : memref<1x64xf32, #tpu.memory_space<vmem>>, vector<1x64xf32>
    %10 = vector.broadcast %9 : vector<1x64xf32> to vector<32x64xf32>
    %11 = arith.addf %8, %10 : vector<32x64xf32>
    %cst_10 = arith.constant 0.000000e+00 : f32
    %12 = vector.broadcast %cst_10 : f32 to vector<32x64xf32>
    %13 = arith.maximumf %11, %12 : vector<32x64xf32>
    %14 = arith.truncf %13 : vector<32x64xf32> to vector<32x64xbf16>
    %c0_11 = arith.constant 0 : index
    %c0_12 = arith.constant 0 : index
    %15 = vector.load %arg6[%c0_11, %c0_12] : memref<32x64xbf16, #tpu.memory_space<vmem>>, vector<32x64xbf16>
    tpu.vector_store %arg6[%c0_11, %c0_12], %14 {strides = array<i32>} : memref<32x64xbf16, #tpu.memory_space<vmem>>, vector<32x64xbf16>,
    return
  }
  func.func @transform_0(%arg0: i32) -> (i32, i32) {
    %c0_i32 = arith.constant 0 : i32
    %c0_i32_0 = arith.constant 0 : i32
    return %arg0, %c0_i32 : i32, i32
  }
  func.func @transform_1(%arg0: i32) -> (i32, i32) {
    %c0_i32 = arith.constant 0 : i32
    %c0_i32_0 = arith.constant 0 : i32
    %c0_i32_1 = arith.constant 0 : i32
    return %c0_i32, %c0_i32_0 : i32, i32
  }
  func.func @transform_2(%arg0: i32) -> (i32, i32) {
    %c0_i32 = arith.constant 0 : i32
    %c0_i32_0 = arith.constant 0 : i32
    %c0_i32_1 = arith.constant 0 : i32
    return %c0_i32, %c0_i32_0 : i32, i32
  }
  func.func @transform_3(%arg0: i32) -> (i32, i32) {
    %c0_i32 = arith.constant 0 : i32
    %c0_i32_0 = arith.constant 0 : i32
    %c0_i32_1 = arith.constant 0 : i32
    return %c0_i32, %c0_i32_0 : i32, i32
  }
  func.func @transform_4(%arg0: i32) -> (i32, i32) {
    %c0_i32 = arith.constant 0 : i32
    %c0_i32_0 = arith.constant 0 : i32
    %c0_i32_1 = arith.constant 0 : i32
    return %c0_i32, %c0_i32_0 : i32, i32
  }
  func.func @transform_5(%arg0: i32) -> (i32, i32) {
    %c0_i32 = arith.constant 0 : i32
    %c0_i32_0 = arith.constant 0 : i32
    return %arg0, %c0_i32 : i32, i32
  }
}

module attributes {stable_mosaic.version = 11 : i64} {
  func.func @_chain_kernel(%arg0: i32, %arg1: memref<16x128xbf16, #tpu.memory_space<vmem>>, %arg2: memref<128x128xbf16, #tpu.memory_space<vmem>>, %arg3: memref<1x128xf32, #tpu.memory_space<vmem>>, %arg4: memref<128x128xbf16, #tpu.memory_space<vmem>>, %arg5: memref<1x128xf32, #tpu.memory_space<vmem>>, %arg6: memref<16x128xbf16, #tpu.memory_space<vmem>>) attributes {dimension_semantics = [#tpu.dimension_semantics<parallel>], iteration_bounds = array<i64: 1>, scalar_prefetch = 0 : i64, scratch_operands = 0 : i64, tpu.core_type = #tpu.core_type<tc>, window_params = [{transform_indices = @transform_0, window_bounds = array<i64: 16, 128>}, {pipeline_mode = #tpu.pipeline_mode<synchronous>, transform_indices = @transform_1, window_bounds = array<i64: 128, 128>}, {pipeline_mode = #tpu.pipeline_mode<synchronous>, transform_indices = @transform_2, window_bounds = array<i64: 1, 128>}, {pipeline_mode = #tpu.pipeline_mode<synchronous>, transform_indices = @transform_3, window_bounds = array<i64: 128, 128>}, {pipeline_mode = #tpu.pipeline_mode<synchronous>, transform_indices = @transform_4, window_bounds = array<i64: 1, 128>}, {transform_indices = @transform_5, window_bounds = array<i64: 16, 128>}]} {
    %c0 = arith.constant 0 : index
    %c0_0 = arith.constant 0 : index
    %0 = vector.load %arg1[%c0, %c0_0] : memref<16x128xbf16, #tpu.memory_space<vmem>>, vector<16x128xbf16>
    %c0_1 = arith.constant 0 : index
    %c0_2 = arith.constant 0 : index
    %1 = vector.load %arg2[%c0_1, %c0_2] : memref<128x128xbf16, #tpu.memory_space<vmem>>, vector<128x128xbf16>
    %cst = arith.constant dense<0.000000e+00> : vector<16x128xf32>
    %2 = tpu.matmul %0, %1, %cst {dimension_numbers = #tpu.dot_dimension_numbers<[1], [0], [0], [1], [0, 0, 1, 1], [], []>} : vector<16x128xbf16>, vector<128x128xbf16>, vector<16x128xf32> -> vector<16x128xf32>
    %c0_3 = arith.constant 0 : index
    %c0_4 = arith.constant 0 : index
    %3 = vector.load %arg3[%c0_3, %c0_4] : memref<1x128xf32, #tpu.memory_space<vmem>>, vector<1x128xf32>
    %4 = vector.broadcast %3 : vector<1x128xf32> to vector<16x128xf32>
    %5 = arith.addf %2, %4 : vector<16x128xf32>
    %6 = arith.truncf %5 : vector<16x128xf32> to vector<16x128xbf16>
    %c0_5 = arith.constant 0 : index
    %c0_6 = arith.constant 0 : index
    %7 = vector.load %arg4[%c0_5, %c0_6] : memref<128x128xbf16, #tpu.memory_space<vmem>>, vector<128x128xbf16>
    %cst_7 = arith.constant dense<0.000000e+00> : vector<16x128xf32>
    %8 = tpu.matmul %6, %7, %cst_7 {dimension_numbers = #tpu.dot_dimension_numbers<[1], [0], [0], [1], [0, 0, 1, 1], [], []>} : vector<16x128xbf16>, vector<128x128xbf16>, vector<16x128xf32> -> vector<16x128xf32>
    %c0_8 = arith.constant 0 : index
    %c0_9 = arith.constant 0 : index
    %9 = vector.load %arg5[%c0_8, %c0_9] : memref<1x128xf32, #tpu.memory_space<vmem>>, vector<1x128xf32>
    %10 = vector.broadcast %9 : vector<1x128xf32> to vector<16x128xf32>
    %11 = arith.addf %8, %10 : vector<16x128xf32>
    %cst_10 = arith.constant 0.000000e+00 : f32
    %12 = vector.broadcast %cst_10 : f32 to vector<16x128xf32>
    %13 = arith.maximumf %11, %12 : vector<16x128xf32>
    %14 = arith.truncf %13 : vector<16x128xf32> to vector<16x128xbf16>
    %c0_11 = arith.constant 0 : index
    %c0_12 = arith.constant 0 : index
    %15 = vector.load %arg6[%c0_11, %c0_12] : memref<16x128xbf16, #tpu.memory_space<vmem>>, vector<16x128xbf16>
    tpu.vector_store %arg6[%c0_11, %c0_12], %14 {strides = array<i32>} : memref<16x128xbf16, #tpu.memory_space<vmem>>, vector<16x128xbf16>,
    return
  }
  func.func @transform_0(%arg0: i32) -> (i32, i32) {
    %c0_i32 = arith.constant 0 : i32
    %c0_i32_0 = arith.constant 0 : i32
    return %arg0, %c0_i32 : i32, i32
  }
  func.func @transform_1(%arg0: i32) -> (i32, i32) {
    %c0_i32 = arith.constant 0 : i32
    %c0_i32_0 = arith.constant 0 : i32
    %c0_i32_1 = arith.constant 0 : i32
    return %c0_i32, %c0_i32_0 : i32, i32
  }
  func.func @transform_2(%arg0: i32) -> (i32, i32) {
    %c0_i32 = arith.constant 0 : i32
    %c0_i32_0 = arith.constant 0 : i32
    %c0_i32_1 = arith.constant 0 : i32
    return %c0_i32, %c0_i32_0 : i32, i32
  }
  func.func @transform_3(%arg0: i32) -> (i32, i32) {
    %c0_i32 = arith.constant 0 : i32
    %c0_i32_0 = arith.constant 0 : i32
    %c0_i32_1 = arith.constant 0 : i32
    return %c0_i32, %c0_i32_0 : i32, i32
  }
  func.func @transform_4(%arg0: i32) -> (i32, i32) {
    %c0_i32 = arith.constant 0 : i32
    %c0_i32_0 = arith.constant 0 : i32
    %c0_i32_1 = arith.constant 0 : i32
    return %c0_i32, %c0_i32_0 : i32, i32
  }
  func.func @transform_5(%arg0: i32) -> (i32, i32) {
    %c0_i32 = arith.constant 0 : i32
    %c0_i32_0 = arith.constant 0 : i32
    return %arg0, %c0_i32 : i32, i32
  }
}

module attributes {stable_mosaic.version = 11 : i64} {
  func.func @_chain_kernel(%arg0: i32, %arg1: memref<8x256xbf16, #tpu.memory_space<vmem>>, %arg2: memref<256x256xbf16, #tpu.memory_space<vmem>>, %arg3: memref<1x256xf32, #tpu.memory_space<vmem>>, %arg4: memref<256x256xbf16, #tpu.memory_space<vmem>>, %arg5: memref<1x256xf32, #tpu.memory_space<vmem>>, %arg6: memref<8x256xbf16, #tpu.memory_space<vmem>>) attributes {dimension_semantics = [#tpu.dimension_semantics<parallel>], iteration_bounds = array<i64: 1>, scalar_prefetch = 0 : i64, scratch_operands = 0 : i64, tpu.core_type = #tpu.core_type<tc>, window_params = [{transform_indices = @transform_0, window_bounds = array<i64: 8, 256>}, {pipeline_mode = #tpu.pipeline_mode<synchronous>, transform_indices = @transform_1, window_bounds = array<i64: 256, 256>}, {pipeline_mode = #tpu.pipeline_mode<synchronous>, transform_indices = @transform_2, window_bounds = array<i64: 1, 256>}, {pipeline_mode = #tpu.pipeline_mode<synchronous>, transform_indices = @transform_3, window_bounds = array<i64: 256, 256>}, {pipeline_mode = #tpu.pipeline_mode<synchronous>, transform_indices = @transform_4, window_bounds = array<i64: 1, 256>}, {transform_indices = @transform_5, window_bounds = array<i64: 8, 256>}]} {
    %c0 = arith.constant 0 : index
    %c0_0 = arith.constant 0 : index
    %0 = vector.load %arg1[%c0, %c0_0] : memref<8x256xbf16, #tpu.memory_space<vmem>>, vector<8x256xbf16>
    %c0_1 = arith.constant 0 : index
    %c0_2 = arith.constant 0 : index
    %1 = vector.load %arg2[%c0_1, %c0_2] : memref<256x256xbf16, #tpu.memory_space<vmem>>, vector<256x256xbf16>
    %cst = arith.constant dense<0.000000e+00> : vector<8x256xf32>
    %2 = tpu.matmul %0, %1, %cst {dimension_numbers = #tpu.dot_dimension_numbers<[1], [0], [0], [1], [0, 0, 1, 1], [], []>} : vector<8x256xbf16>, vector<256x256xbf16>, vector<8x256xf32> -> vector<8x256xf32>
    %c0_3 = arith.constant 0 : index
    %c0_4 = arith.constant 0 : index
    %3 = vector.load %arg3[%c0_3, %c0_4] : memref<1x256xf32, #tpu.memory_space<vmem>>, vector<1x256xf32>
    %4 = vector.broadcast %3 : vector<1x256xf32> to vector<8x256xf32>
    %5 = arith.addf %2, %4 : vector<8x256xf32>
    %6 = arith.truncf %5 : vector<8x256xf32> to vector<8x256xbf16>
    %c0_5 = arith.constant 0 : index
    %c0_6 = arith.constant 0 : index
    %7 = vector.load %arg4[%c0_5, %c0_6] : memref<256x256xbf16, #tpu.memory_space<vmem>>, vector<256x256xbf16>
    %cst_7 = arith.constant dense<0.000000e+00> : vector<8x256xf32>
    %8 = tpu.matmul %6, %7, %cst_7 {dimension_numbers = #tpu.dot_dimension_numbers<[1], [0], [0], [1], [0, 0, 1, 1], [], []>} : vector<8x256xbf16>, vector<256x256xbf16>, vector<8x256xf32> -> vector<8x256xf32>
    %c0_8 = arith.constant 0 : index
    %c0_9 = arith.constant 0 : index
    %9 = vector.load %arg5[%c0_8, %c0_9] : memref<1x256xf32, #tpu.memory_space<vmem>>, vector<1x256xf32>
    %10 = vector.broadcast %9 : vector<1x256xf32> to vector<8x256xf32>
    %11 = arith.addf %8, %10 : vector<8x256xf32>
    %cst_10 = arith.constant 0.000000e+00 : f32
    %12 = vector.broadcast %cst_10 : f32 to vector<8x256xf32>
    %13 = arith.maximumf %11, %12 : vector<8x256xf32>
    %14 = arith.truncf %13 : vector<8x256xf32> to vector<8x256xbf16>
    %c0_11 = arith.constant 0 : index
    %c0_12 = arith.constant 0 : index
    %15 = vector.load %arg6[%c0_11, %c0_12] : memref<8x256xbf16, #tpu.memory_space<vmem>>, vector<8x256xbf16>
    tpu.vector_store %arg6[%c0_11, %c0_12], %14 {strides = array<i32>} : memref<8x256xbf16, #tpu.memory_space<vmem>>, vector<8x256xbf16>,
    return
  }
  func.func @transform_0(%arg0: i32) -> (i32, i32) {
    %c0_i32 = arith.constant 0 : i32
    %c0_i32_0 = arith.constant 0 : i32
    return %arg0, %c0_i32 : i32, i32
  }
  func.func @transform_1(%arg0: i32) -> (i32, i32) {
    %c0_i32 = arith.constant 0 : i32
    %c0_i32_0 = arith.constant 0 : i32
    %c0_i32_1 = arith.constant 0 : i32
    return %c0_i32, %c0_i32_0 : i32, i32
  }
  func.func @transform_2(%arg0: i32) -> (i32, i32) {
    %c0_i32 = arith.constant 0 : i32
    %c0_i32_0 = arith.constant 0 : i32
    %c0_i32_1 = arith.constant 0 : i32
    return %c0_i32, %c0_i32_0 : i32, i32
  }
  func.func @transform_3(%arg0: i32) -> (i32, i32) {
    %c0_i32 = arith.constant 0 : i32
    %c0_i32_0 = arith.constant 0 : i32
    %c0_i32_1 = arith.constant 0 : i32
    return %c0_i32, %c0_i32_0 : i32, i32
  }
  func.func @transform_4(%arg0: i32) -> (i32, i32) {
    %c0_i32 = arith.constant 0 : i32
    %c0_i32_0 = arith.constant 0 : i32
    %c0_i32_1 = arith.constant 0 : i32
    return %c0_i32, %c0_i32_0 : i32, i32
  }
  func.func @transform_5(%arg0: i32) -> (i32, i32) {
    %c0_i32 = arith.constant 0 : i32
    %c0_i32_0 = arith.constant 0 : i32
    return %arg0, %c0_i32 : i32, i32
  }
}

module attributes {stable_mosaic.version = 11 : i64} {
  func.func @_chain_kernel(%arg0: i32, %arg1: memref<4x512xbf16, #tpu.memory_space<vmem>>, %arg2: memref<512x512xbf16, #tpu.memory_space<vmem>>, %arg3: memref<1x512xf32, #tpu.memory_space<vmem>>, %arg4: memref<512x512xbf16, #tpu.memory_space<vmem>>, %arg5: memref<1x512xf32, #tpu.memory_space<vmem>>, %arg6: memref<512x512xbf16, #tpu.memory_space<vmem>>, %arg7: memref<1x512xf32, #tpu.memory_space<vmem>>, %arg8: memref<4x512xbf16, #tpu.memory_space<vmem>>) attributes {dimension_semantics = [#tpu.dimension_semantics<parallel>], iteration_bounds = array<i64: 1>, scalar_prefetch = 0 : i64, scratch_operands = 0 : i64, tpu.core_type = #tpu.core_type<tc>, window_params = [{transform_indices = @transform_0, window_bounds = array<i64: 4, 512>}, {pipeline_mode = #tpu.pipeline_mode<synchronous>, transform_indices = @transform_1, window_bounds = array<i64: 512, 512>}, {pipeline_mode = #tpu.pipeline_mode<synchronous>, transform_indices = @transform_2, window_bounds = array<i64: 1, 512>}, {pipeline_mode = #tpu.pipeline_mode<synchronous>, transform_indices = @transform_3, window_bounds = array<i64: 512, 512>}, {pipeline_mode = #tpu.pipeline_mode<synchronous>, transform_indices = @transform_4, window_bounds = array<i64: 1, 512>}, {pipeline_mode = #tpu.pipeline_mode<synchronous>, transform_indices = @transform_5, window_bounds = array<i64: 512, 512>}, {pipeline_mode = #tpu.pipeline_mode<synchronous>, transform_indices = @transform_6, window_bounds = array<i64: 1, 512>}, {transform_indices = @transform_7, window_bounds = array<i64: 4, 512>}]} {
    %c0 = arith.constant 0 : index
    %c0_0 = arith.constant 0 : index
    %0 = vector.load %arg1[%c0, %c0_0] : memref<4x512xbf16, #tpu.memory_space<vmem>>, vector<4x512xbf16>
    %c0_1 = arith.constant 0 : index
    %c0_2 = arith.constant 0 : index
    %1 = vector.load %arg2[%c0_1, %c0_2] : memref<512x512xbf16, #tpu.memory_space<vmem>>, vector<512x512xbf16>
    %cst = arith.constant dense<0.000000e+00> : vector<4x512xf32>
    %2 = tpu.matmul %0, %1, %cst {dimension_numbers = #tpu.dot_dimension_numbers<[1], [0], [0], [1], [0, 0, 1, 1], [], []>} : vector<4x512xbf16>, vector<512x512xbf16>, vector<4x512xf32> -> vector<4x512xf32>
    %c0_3 = arith.constant 0 : index
    %c0_4 = arith.constant 0 : index
    %3 = vector.load %arg3[%c0_3, %c0_4] : memref<1x512xf32, #tpu.memory_space<vmem>>, vector<1x512xf32>
    %4 = vector.broadcast %3 : vector<1x512xf32> to vector<4x512xf32>
    %5 = arith.addf %2, %4 : vector<4x512xf32>
    %6 = arith.truncf %5 : vector<4x512xf32> to vector<4x512xbf16>
    %c0_5 = arith.constant 0 : index
    %c0_6 = arith.constant 0 : index
    %7 = vector.load %arg4[%c0_5, %c0_6] : memref<512x512xbf16, #tpu.memory_space<vmem>>, vector<512x512xbf16>
    %cst_7 = arith.constant dense<0.000000e+00> : vector<4x512xf32>
    %8 = tpu.matmul %6, %7, %cst_7 {dimension_numbers = #tpu.dot_dimension_numbers<[1], [0], [0], [1], [0, 0, 1, 1], [], []>} : vector<4x512xbf16>, vector<512x512xbf16>, vector<4x512xf32> -> vector<4x512xf32>
    %c0_8 = arith.constant 0 : index
    %c0_9 = arith.constant 0 : index
    %9 = vector.load %arg5[%c0_8, %c0_9] : memref<1x512xf32, #tpu.memory_space<vmem>>, vector<1x512xf32>
    %10 = vector.broadcast %9 : vector<1x512xf32> to vector<4x512xf32>
    %11 = arith.addf %8, %10 : vector<4x512xf32>
    %cst_10 = arith.constant 0.000000e+00 : f32
    %12 = vector.broadcast %cst_10 : f32 to vector<4x512xf32>
    %13 = arith.maximumf %11, %12 : vector<4x512xf32>
    %14 = arith.truncf %13 : vector<4x512xf32> to vector<4x512xbf16>
    %c0_11 = arith.constant 0 : index
    %c0_12 = arith.constant 0 : index
    %15 = vector.load %arg6[%c0_11, %c0_12] : memref<512x512xbf16, #tpu.memory_space<vmem>>, vector<512x512xbf16>
    %cst_13 = arith.constant dense<0.000000e+00> : vector<4x512xf32>
    %16 = tpu.matmul %14, %15, %cst_13 {dimension_numbers = #tpu.dot_dimension_numbers<[1], [0], [0], [1], [0, 0, 1, 1], [], []>} : vector<4x512xbf16>, vector<512x512xbf16>, vector<4x512xf32> -> vector<4x512xf32>
    %c0_14 = arith.constant 0 : index
    %c0_15 = arith.constant 0 : index
    %17 = vector.load %arg7[%c0_14, %c0_15] : memref<1x512xf32, #tpu.memory_space<vmem>>, vector<1x512xf32>
    %18 = vector.broadcast %17 : vector<1x512xf32> to vector<4x512xf32>
    %19 = arith.addf %16, %18 : vector<4x512xf32>
    %20 = arith.truncf %19 : vector<4x512xf32> to vector<4x512xbf16>
    %c0_16 = arith.constant 0 : index
    %c0_17 = arith.constant 0 : index
    %21 = vector.load %arg8[%c0_16, %c0_17] : memref<4x512xbf16, #tpu.memory_space<vmem>>, vector<4x512xbf16>
    tpu.vector_store %arg8[%c0_16, %c0_17], %20 {strides = array<i32>} : memref<4x512xbf16, #tpu.memory_space<vmem>>, vector<4x512xbf16>,
    return
  }
  func.func @transform_0(%arg0: i32) -> (i32, i32) {
    %c0_i32 = arith.constant 0 : i32
    %c0_i32_0 = arith.constant 0 : i32
    return %arg0, %c0_i32 : i32, i32
  }
  func.func @transform_1(%arg0: i32) -> (i32, i32) {
    %c0_i32 = arith.constant 0 : i32
    %c0_i32_0 = arith.constant 0 : i32
    %c0_i32_1 = arith.constant 0 : i32
    return %c0_i32, %c0_i32_0 : i32, i32
  }
  func.func @transform_2(%arg0: i32) -> (i32, i32) {
    %c0_i32 = arith.constant 0 : i32
    %c0_i32_0 = arith.constant 0 : i32
    %c0_i32_1 = arith.constant 0 : i32
    return %c0_i32, %c0_i32_0 : i32, i32
  }
  func.func @transform_3(%arg0: i32) -> (i32, i32) {
    %c0_i32 = arith.constant 0 : i32
    %c0_i32_0 = arith.constant 0 : i32
    %c0_i32_1 = arith.constant 0 : i32
    return %c0_i32, %c0_i32_0 : i32, i32
  }
  func.func @transform_4(%arg0: i32) -> (i32, i32) {
    %c0_i32 = arith.constant 0 : i32
    %c0_i32_0 = arith.constant 0 : i32
    %c0_i32_1 = arith.constant 0 : i32
    return %c0_i32, %c0_i32_0 : i32, i32
  }
  func.func @transform_5(%arg0: i32) -> (i32, i32) {
    %c0_i32 = arith.constant 0 : i32
    %c0_i32_0 = arith.constant 0 : i32
    %c0_i32_1 = arith.constant 0 : i32
    return %c0_i32, %c0_i32_0 : i32, i32
  }
  func.func @transform_6(%arg0: i32) -> (i32, i32) {
    %c0_i32 = arith.constant 0 : i32
    %c0_i32_0 = arith.constant 0 : i32
    %c0_i32_1 = arith.constant 0 : i32
    return %c0_i32, %c0_i32_0 : i32, i32
  }
  func.func @transform_7(%arg0: i32) -> (i32, i32) {
    %c0_i32 = arith.constant 0 : i32
    %c0_i32_0 = arith.constant 0 : i32
    return %arg0, %c0_i32 : i32, i32
  }
}

module attributes {stable_mosaic.version = 11 : i64} {
  func.func @_chain_kernel(%arg0: i32, %arg1: memref<8x256xbf16, #tpu.memory_space<vmem>>, %arg2: memref<8x256xbf16, #tpu.memory_space<vmem>>, %arg3: memref<256x256xbf16, #tpu.memory_space<vmem>>, %arg4: memref<1x256xf32, #tpu.memory_space<vmem>>, %arg5: memref<256x256xbf16, #tpu.memory_space<vmem>>, %arg6: memref<1x256xf32, #tpu.memory_space<vmem>>, %arg7: memref<8x256xbf16, #tpu.memory_space<vmem>>) attributes {dimension_semantics = [#tpu.dimension_semantics<parallel>], iteration_bounds = array<i64: 1>, scalar_prefetch = 0 : i64, scratch_operands = 0 : i64, tpu.core_type = #tpu.core_type<tc>, window_params = [{transform_indices = @transform_0, window_bounds = array<i64: 8, 256>}, {transform_indices = @transform_1, window_bounds = array<i64: 8, 256>}, {pipeline_mode = #tpu.pipeline_mode<synchronous>, transform_indices = @transform_2, window_bounds = array<i64: 256, 256>}, {pipeline_mode = #tpu.pipeline_mode<synchronous>, transform_indices = @transform_3, window_bounds = array<i64: 1, 256>}, {pipeline_mode = #tpu.pipeline_mode<synchronous>, transform_indices = @transform_4, window_bounds = array<i64: 256, 256>}, {pipeline_mode = #tpu.pipeline_mode<synchronous>, transform_indices = @transform_5, window_bounds = array<i64: 1, 256>}, {transform_indices = @transform_6, window_bounds = array<i64: 8, 256>}]} {
    %c0 = arith.constant 0 : index
    %c0_0 = arith.constant 0 : index
    %0 = vector.load %arg1[%c0, %c0_0] : memref<8x256xbf16, #tpu.memory_space<vmem>>, vector<8x256xbf16>
    %1 = arith.extf %0 : vector<8x256xbf16> to vector<8x256xf32>
    %c0_1 = arith.constant 0 : index
    %c0_2 = arith.constant 0 : index
    %2 = vector.load %arg2[%c0_1, %c0_2] : memref<8x256xbf16, #tpu.memory_space<vmem>>, vector<8x256xbf16>
    %3 = arith.extf %2 : vector<8x256xbf16> to vector<8x256xf32>
    %4 = arith.addf %1, %3 : vector<8x256xf32>
    %5 = arith.truncf %4 : vector<8x256xf32> to vector<8x256xbf16>
    %c0_3 = arith.constant 0 : index
    %c0_4 = arith.constant 0 : index
    %6 = vector.load %arg3[%c0_3, %c0_4] : memref<256x256xbf16, #tpu.memory_space<vmem>>, vector<256x256xbf16>
    %cst = arith.constant dense<0.000000e+00> : vector<8x256xf32>
    %7 = tpu.matmul %5, %6, %cst {dimension_numbers = #tpu.dot_dimension_numbers<[1], [0], [0], [1], [0, 0, 1, 1], [], []>} : vector<8x256xbf16>, vector<256x256xbf16>, vector<8x256xf32> -> vector<8x256xf32>
    %c0_5 = arith.constant 0 : index
    %c0_6 = arith.constant 0 : index
    %8 = vector.load %arg4[%c0_5, %c0_6] : memref<1x256xf32, #tpu.memory_space<vmem>>, vector<1x256xf32>
    %9 = vector.broadcast %8 : vector<1x256xf32> to vector<8x256xf32>
    %10 = arith.addf %7, %9 : vector<8x256xf32>
    %cst_7 = arith.constant 0.000000e+00 : f32
    %11 = vector.broadcast %cst_7 : f32 to vector<8x256xf32>
    %12 = arith.maximumf %10, %11 : vector<8x256xf32>
    %13 = arith.truncf %12 : vector<8x256xf32> to vector<8x256xbf16>
    %c0_8 = arith.constant 0 : index
    %c0_9 = arith.constant 0 : index
    %14 = vector.load %arg5[%c0_8, %c0_9] : memref<256x256xbf16, #tpu.memory_space<vmem>>, vector<256x256xbf16>
    %cst_10 = arith.constant dense<0.000000e+00> : vector<8x256xf32>
    %15 = tpu.matmul %13, %14, %cst_10 {dimension_numbers = #tpu.dot_dimension_numbers<[1], [0], [0], [1], [0, 0, 1, 1], [], []>} : vector<8x256xbf16>, vector<256x256xbf16>, vector<8x256xf32> -> vector<8x256xf32>
    %c0_11 = arith.constant 0 : index
    %c0_12 = arith.constant 0 : index
    %16 = vector.load %arg6[%c0_11, %c0_12] : memref<1x256xf32, #tpu.memory_space<vmem>>, vector<1x256xf32>
    %17 = vector.broadcast %16 : vector<1x256xf32> to vector<8x256xf32>
    %18 = arith.addf %15, %17 : vector<8x256xf32>
    %19 = arith.truncf %18 : vector<8x256xf32> to vector<8x256xbf16>
    %c0_13 = arith.constant 0 : index
    %c0_14 = arith.constant 0 : index
    %20 = vector.load %arg7[%c0_13, %c0_14] : memref<8x256xbf16, #tpu.memory_space<vmem>>, vector<8x256xbf16>
    tpu.vector_store %arg7[%c0_13, %c0_14], %19 {strides = array<i32>} : memref<8x256xbf16, #tpu.memory_space<vmem>>, vector<8x256xbf16>,
    return
  }
  func.func @transform_0(%arg0: i32) -> (i32, i32) {
    %c0_i32 = arith.constant 0 : i32
    %c0_i32_0 = arith.constant 0 : i32
    return %arg0, %c0_i32 : i32, i32
  }
  func.func @transform_1(%arg0: i32) -> (i32, i32) {
    %c0_i32 = arith.constant 0 : i32
    %c0_i32_0 = arith.constant 0 : i32
    return %arg0, %c0_i32 : i32, i32
  }
  func.func @transform_2(%arg0: i32) -> (i32, i32) {
    %c0_i32 = arith.constant 0 : i32
    %c0_i32_0 = arith.constant 0 : i32
    %c0_i32_1 = arith.constant 0 : i32
    return %c0_i32, %c0_i32_0 : i32, i32
  }
  func.func @transform_3(%arg0: i32) -> (i32, i32) {
    %c0_i32 = arith.constant 0 : i32
    %c0_i32_0 = arith.constant 0 : i32
    %c0_i32_1 = arith.constant 0 : i32
    return %c0_i32, %c0_i32_0 : i32, i32
  }
  func.func @transform_4(%arg0: i32) -> (i32, i32) {
    %c0_i32 = arith.constant 0 : i32
    %c0_i32_0 = arith.constant 0 : i32
    %c0_i32_1 = arith.constant 0 : i32
    return %c0_i32, %c0_i32_0 : i32, i32
  }
  func.func @transform_5(%arg0: i32) -> (i32, i32) {
    %c0_i32 = arith.constant 0 : i32
    %c0_i32_0 = arith.constant 0 : i32
    %c0_i32_1 = arith.constant 0 : i32
    return %c0_i32, %c0_i32_0 : i32, i32
  }
  func.func @transform_6(%arg0: i32) -> (i32, i32) {
    %c0_i32 = arith.constant 0 : i32
    %c0_i32_0 = arith.constant 0 : i32
    return %arg0, %c0_i32 : i32, i32
  }
}

module attributes {stable_mosaic.version = 11 : i64} {
  func.func @_chain_kernel(%arg0: i32, %arg1: memref<16x128xbf16, #tpu.memory_space<vmem>>, %arg2: memref<16x128xbf16, #tpu.memory_space<vmem>>, %arg3: memref<128x128xbf16, #tpu.memory_space<vmem>>, %arg4: memref<1x128xf32, #tpu.memory_space<vmem>>, %arg5: memref<128x128xbf16, #tpu.memory_space<vmem>>, %arg6: memref<1x128xf32, #tpu.memory_space<vmem>>, %arg7: memref<16x128xbf16, #tpu.memory_space<vmem>>) attributes {dimension_semantics = [#tpu.dimension_semantics<parallel>], iteration_bounds = array<i64: 1>, scalar_prefetch = 0 : i64, scratch_operands = 0 : i64, tpu.core_type = #tpu.core_type<tc>, window_params = [{transform_indices = @transform_0, window_bounds = array<i64: 16, 128>}, {transform_indices = @transform_1, window_bounds = array<i64: 16, 128>}, {pipeline_mode = #tpu.pipeline_mode<synchronous>, transform_indices = @transform_2, window_bounds = array<i64: 128, 128>}, {pipeline_mode = #tpu.pipeline_mode<synchronous>, transform_indices = @transform_3, window_bounds = array<i64: 1, 128>}, {pipeline_mode = #tpu.pipeline_mode<synchronous>, transform_indices = @transform_4, window_bounds = array<i64: 128, 128>}, {pipeline_mode = #tpu.pipeline_mode<synchronous>, transform_indices = @transform_5, window_bounds = array<i64: 1, 128>}, {transform_indices = @transform_6, window_bounds = array<i64: 16, 128>}]} {
    %c0 = arith.constant 0 : index
    %c0_0 = arith.constant 0 : index
    %0 = vector.load %arg1[%c0, %c0_0] : memref<16x128xbf16, #tpu.memory_space<vmem>>, vector<16x128xbf16>
    %1 = arith.extf %0 : vector<16x128xbf16> to vector<16x128xf32>
    %c0_1 = arith.constant 0 : index
    %c0_2 = arith.constant 0 : index
    %2 = vector.load %arg2[%c0_1, %c0_2] : memref<16x128xbf16, #tpu.memory_space<vmem>>, vector<16x128xbf16>
    %3 = arith.extf %2 : vector<16x128xbf16> to vector<16x128xf32>
    %4 = arith.addf %1, %3 : vector<16x128xf32>
    %5 = arith.truncf %4 : vector<16x128xf32> to vector<16x128xbf16>
    %c0_3 = arith.constant 0 : index
    %c0_4 = arith.constant 0 : index
    %6 = vector.load %arg3[%c0_3, %c0_4] : memref<128x128xbf16, #tpu.memory_space<vmem>>, vector<128x128xbf16>
    %cst = arith.constant dense<0.000000e+00> : vector<16x128xf32>
    %7 = tpu.matmul %5, %6, %cst {dimension_numbers = #tpu.dot_dimension_numbers<[1], [0], [0], [1], [0, 0, 1, 1], [], []>} : vector<16x128xbf16>, vector<128x128xbf16>, vector<16x128xf32> -> vector<16x128xf32>
    %c0_5 = arith.constant 0 : index
    %c0_6 = arith.constant 0 : index
    %8 = vector.load %arg4[%c0_5, %c0_6] : memref<1x128xf32, #tpu.memory_space<vmem>>, vector<1x128xf32>
    %9 = vector.broadcast %8 : vector<1x128xf32> to vector<16x128xf32>
    %10 = arith.addf %7, %9 : vector<16x128xf32>
    %cst_7 = arith.constant 0.000000e+00 : f32
    %11 = vector.broadcast %cst_7 : f32 to vector<16x128xf32>
    %12 = arith.maximumf %10, %11 : vector<16x128xf32>
    %13 = arith.truncf %12 : vector<16x128xf32> to vector<16x128xbf16>
    %c0_8 = arith.constant 0 : index
    %c0_9 = arith.constant 0 : index
    %14 = vector.load %arg5[%c0_8, %c0_9] : memref<128x128xbf16, #tpu.memory_space<vmem>>, vector<128x128xbf16>
    %cst_10 = arith.constant dense<0.000000e+00> : vector<16x128xf32>
    %15 = tpu.matmul %13, %14, %cst_10 {dimension_numbers = #tpu.dot_dimension_numbers<[1], [0], [0], [1], [0, 0, 1, 1], [], []>} : vector<16x128xbf16>, vector<128x128xbf16>, vector<16x128xf32> -> vector<16x128xf32>
    %c0_11 = arith.constant 0 : index
    %c0_12 = arith.constant 0 : index
    %16 = vector.load %arg6[%c0_11, %c0_12] : memref<1x128xf32, #tpu.memory_space<vmem>>, vector<1x128xf32>
    %17 = vector.broadcast %16 : vector<1x128xf32> to vector<16x128xf32>
    %18 = arith.addf %15, %17 : vector<16x128xf32>
    %19 = arith.truncf %18 : vector<16x128xf32> to vector<16x128xbf16>
    %c0_13 = arith.constant 0 : index
    %c0_14 = arith.constant 0 : index
    %20 = vector.load %arg7[%c0_13, %c0_14] : memref<16x128xbf16, #tpu.memory_space<vmem>>, vector<16x128xbf16>
    tpu.vector_store %arg7[%c0_13, %c0_14], %19 {strides = array<i32>} : memref<16x128xbf16, #tpu.memory_space<vmem>>, vector<16x128xbf16>,
    return
  }
  func.func @transform_0(%arg0: i32) -> (i32, i32) {
    %c0_i32 = arith.constant 0 : i32
    %c0_i32_0 = arith.constant 0 : i32
    return %arg0, %c0_i32 : i32, i32
  }
  func.func @transform_1(%arg0: i32) -> (i32, i32) {
    %c0_i32 = arith.constant 0 : i32
    %c0_i32_0 = arith.constant 0 : i32
    return %arg0, %c0_i32 : i32, i32
  }
  func.func @transform_2(%arg0: i32) -> (i32, i32) {
    %c0_i32 = arith.constant 0 : i32
    %c0_i32_0 = arith.constant 0 : i32
    %c0_i32_1 = arith.constant 0 : i32
    return %c0_i32, %c0_i32_0 : i32, i32
  }
  func.func @transform_3(%arg0: i32) -> (i32, i32) {
    %c0_i32 = arith.constant 0 : i32
    %c0_i32_0 = arith.constant 0 : i32
    %c0_i32_1 = arith.constant 0 : i32
    return %c0_i32, %c0_i32_0 : i32, i32
  }
  func.func @transform_4(%arg0: i32) -> (i32, i32) {
    %c0_i32 = arith.constant 0 : i32
    %c0_i32_0 = arith.constant 0 : i32
    %c0_i32_1 = arith.constant 0 : i32
    return %c0_i32, %c0_i32_0 : i32, i32
  }
  func.func @transform_5(%arg0: i32) -> (i32, i32) {
    %c0_i32 = arith.constant 0 : i32
    %c0_i32_0 = arith.constant 0 : i32
    %c0_i32_1 = arith.constant 0 : i32
    return %c0_i32, %c0_i32_0 : i32, i32
  }
  func.func @transform_6(%arg0: i32) -> (i32, i32) {
    %c0_i32 = arith.constant 0 : i32
    %c0_i32_0 = arith.constant 0 : i32
    return %arg0, %c0_i32 : i32, i32
  }
}

module attributes {stable_mosaic.version = 11 : i64} {
  func.func @_chain_kernel(%arg0: i32, %arg1: memref<32x64xbf16, #tpu.memory_space<vmem>>, %arg2: memref<32x64xbf16, #tpu.memory_space<vmem>>, %arg3: memref<64x64xbf16, #tpu.memory_space<vmem>>, %arg4: memref<1x64xf32, #tpu.memory_space<vmem>>, %arg5: memref<64x64xbf16, #tpu.memory_space<vmem>>, %arg6: memref<1x64xf32, #tpu.memory_space<vmem>>, %arg7: memref<32x64xbf16, #tpu.memory_space<vmem>>) attributes {dimension_semantics = [#tpu.dimension_semantics<parallel>], iteration_bounds = array<i64: 1>, scalar_prefetch = 0 : i64, scratch_operands = 0 : i64, tpu.core_type = #tpu.core_type<tc>, window_params = [{transform_indices = @transform_0, window_bounds = array<i64: 32, 64>}, {transform_indices = @transform_1, window_bounds = array<i64: 32, 64>}, {pipeline_mode = #tpu.pipeline_mode<synchronous>, transform_indices = @transform_2, window_bounds = array<i64: 64, 64>}, {pipeline_mode = #tpu.pipeline_mode<synchronous>, transform_indices = @transform_3, window_bounds = array<i64: 1, 64>}, {pipeline_mode = #tpu.pipeline_mode<synchronous>, transform_indices = @transform_4, window_bounds = array<i64: 64, 64>}, {pipeline_mode = #tpu.pipeline_mode<synchronous>, transform_indices = @transform_5, window_bounds = array<i64: 1, 64>}, {transform_indices = @transform_6, window_bounds = array<i64: 32, 64>}]} {
    %c0 = arith.constant 0 : index
    %c0_0 = arith.constant 0 : index
    %0 = vector.load %arg1[%c0, %c0_0] : memref<32x64xbf16, #tpu.memory_space<vmem>>, vector<32x64xbf16>
    %1 = arith.extf %0 : vector<32x64xbf16> to vector<32x64xf32>
    %c0_1 = arith.constant 0 : index
    %c0_2 = arith.constant 0 : index
    %2 = vector.load %arg2[%c0_1, %c0_2] : memref<32x64xbf16, #tpu.memory_space<vmem>>, vector<32x64xbf16>
    %3 = arith.extf %2 : vector<32x64xbf16> to vector<32x64xf32>
    %4 = arith.addf %1, %3 : vector<32x64xf32>
    %5 = arith.truncf %4 : vector<32x64xf32> to vector<32x64xbf16>
    %c0_3 = arith.constant 0 : index
    %c0_4 = arith.constant 0 : index
    %6 = vector.load %arg3[%c0_3, %c0_4] : memref<64x64xbf16, #tpu.memory_space<vmem>>, vector<64x64xbf16>
    %cst = arith.constant dense<0.000000e+00> : vector<32x64xf32>
    %7 = tpu.matmul %5, %6, %cst {dimension_numbers = #tpu.dot_dimension_numbers<[1], [0], [0], [1], [0, 0, 1, 1], [], []>} : vector<32x64xbf16>, vector<64x64xbf16>, vector<32x64xf32> -> vector<32x64xf32>
    %c0_5 = arith.constant 0 : index
    %c0_6 = arith.constant 0 : index
    %8 = vector.load %arg4[%c0_5, %c0_6] : memref<1x64xf32, #tpu.memory_space<vmem>>, vector<1x64xf32>
    %9 = vector.broadcast %8 : vector<1x64xf32> to vector<32x64xf32>
    %10 = arith.addf %7, %9 : vector<32x64xf32>
    %cst_7 = arith.constant 0.000000e+00 : f32
    %11 = vector.broadcast %cst_7 : f32 to vector<32x64xf32>
    %12 = arith.maximumf %10, %11 : vector<32x64xf32>
    %13 = arith.truncf %12 : vector<32x64xf32> to vector<32x64xbf16>
    %c0_8 = arith.constant 0 : index
    %c0_9 = arith.constant 0 : index
    %14 = vector.load %arg5[%c0_8, %c0_9] : memref<64x64xbf16, #tpu.memory_space<vmem>>, vector<64x64xbf16>
    %cst_10 = arith.constant dense<0.000000e+00> : vector<32x64xf32>
    %15 = tpu.matmul %13, %14, %cst_10 {dimension_numbers = #tpu.dot_dimension_numbers<[1], [0], [0], [1], [0, 0, 1, 1], [], []>} : vector<32x64xbf16>, vector<64x64xbf16>, vector<32x64xf32> -> vector<32x64xf32>
    %c0_11 = arith.constant 0 : index
    %c0_12 = arith.constant 0 : index
    %16 = vector.load %arg6[%c0_11, %c0_12] : memref<1x64xf32, #tpu.memory_space<vmem>>, vector<1x64xf32>
    %17 = vector.broadcast %16 : vector<1x64xf32> to vector<32x64xf32>
    %18 = arith.addf %15, %17 : vector<32x64xf32>
    %19 = arith.truncf %18 : vector<32x64xf32> to vector<32x64xbf16>
    %c0_13 = arith.constant 0 : index
    %c0_14 = arith.constant 0 : index
    %20 = vector.load %arg7[%c0_13, %c0_14] : memref<32x64xbf16, #tpu.memory_space<vmem>>, vector<32x64xbf16>
    tpu.vector_store %arg7[%c0_13, %c0_14], %19 {strides = array<i32>} : memref<32x64xbf16, #tpu.memory_space<vmem>>, vector<32x64xbf16>,
    return
  }
  func.func @transform_0(%arg0: i32) -> (i32, i32) {
    %c0_i32 = arith.constant 0 : i32
    %c0_i32_0 = arith.constant 0 : i32
    return %arg0, %c0_i32 : i32, i32
  }
  func.func @transform_1(%arg0: i32) -> (i32, i32) {
    %c0_i32 = arith.constant 0 : i32
    %c0_i32_0 = arith.constant 0 : i32
    return %arg0, %c0_i32 : i32, i32
  }
  func.func @transform_2(%arg0: i32) -> (i32, i32) {
    %c0_i32 = arith.constant 0 : i32
    %c0_i32_0 = arith.constant 0 : i32
    %c0_i32_1 = arith.constant 0 : i32
    return %c0_i32, %c0_i32_0 : i32, i32
  }
  func.func @transform_3(%arg0: i32) -> (i32, i32) {
    %c0_i32 = arith.constant 0 : i32
    %c0_i32_0 = arith.constant 0 : i32
    %c0_i32_1 = arith.constant 0 : i32
    return %c0_i32, %c0_i32_0 : i32, i32
  }
  func.func @transform_4(%arg0: i32) -> (i32, i32) {
    %c0_i32 = arith.constant 0 : i32
    %c0_i32_0 = arith.constant 0 : i32
    %c0_i32_1 = arith.constant 0 : i32
    return %c0_i32, %c0_i32_0 : i32, i32
  }
  func.func @transform_5(%arg0: i32) -> (i32, i32) {
    %c0_i32 = arith.constant 0 : i32
    %c0_i32_0 = arith.constant 0 : i32
    %c0_i32_1 = arith.constant 0 : i32
    return %c0_i32, %c0_i32_0 : i32, i32
  }
  func.func @transform_6(%arg0: i32) -> (i32, i32) {
    %c0_i32 = arith.constant 0 : i32
    %c0_i32_0 = arith.constant 0 : i32
    return %arg0, %c0_i32 : i32, i32
  }
}

module attributes {stable_mosaic.version = 11 : i64} {
  func.func @_chain_kernel(%arg0: i32, %arg1: memref<64x32xbf16, #tpu.memory_space<vmem>>, %arg2: memref<64x32xbf16, #tpu.memory_space<vmem>>, %arg3: memref<32x32xbf16, #tpu.memory_space<vmem>>, %arg4: memref<1x32xf32, #tpu.memory_space<vmem>>, %arg5: memref<32x32xbf16, #tpu.memory_space<vmem>>, %arg6: memref<1x32xf32, #tpu.memory_space<vmem>>, %arg7: memref<64x32xbf16, #tpu.memory_space<vmem>>) attributes {dimension_semantics = [#tpu.dimension_semantics<parallel>], iteration_bounds = array<i64: 1>, scalar_prefetch = 0 : i64, scratch_operands = 0 : i64, tpu.core_type = #tpu.core_type<tc>, window_params = [{transform_indices = @transform_0, window_bounds = array<i64: 64, 32>}, {transform_indices = @transform_1, window_bounds = array<i64: 64, 32>}, {pipeline_mode = #tpu.pipeline_mode<synchronous>, transform_indices = @transform_2, window_bounds = array<i64: 32, 32>}, {pipeline_mode = #tpu.pipeline_mode<synchronous>, transform_indices = @transform_3, window_bounds = array<i64: 1, 32>}, {pipeline_mode = #tpu.pipeline_mode<synchronous>, transform_indices = @transform_4, window_bounds = array<i64: 32, 32>}, {pipeline_mode = #tpu.pipeline_mode<synchronous>, transform_indices = @transform_5, window_bounds = array<i64: 1, 32>}, {transform_indices = @transform_6, window_bounds = array<i64: 64, 32>}]} {
    %c0 = arith.constant 0 : index
    %c0_0 = arith.constant 0 : index
    %0 = vector.load %arg1[%c0, %c0_0] : memref<64x32xbf16, #tpu.memory_space<vmem>>, vector<64x32xbf16>
    %1 = arith.extf %0 : vector<64x32xbf16> to vector<64x32xf32>
    %c0_1 = arith.constant 0 : index
    %c0_2 = arith.constant 0 : index
    %2 = vector.load %arg2[%c0_1, %c0_2] : memref<64x32xbf16, #tpu.memory_space<vmem>>, vector<64x32xbf16>
    %3 = arith.extf %2 : vector<64x32xbf16> to vector<64x32xf32>
    %4 = arith.addf %1, %3 : vector<64x32xf32>
    %5 = arith.truncf %4 : vector<64x32xf32> to vector<64x32xbf16>
    %c0_3 = arith.constant 0 : index
    %c0_4 = arith.constant 0 : index
    %6 = vector.load %arg3[%c0_3, %c0_4] : memref<32x32xbf16, #tpu.memory_space<vmem>>, vector<32x32xbf16>
    %cst = arith.constant dense<0.000000e+00> : vector<64x32xf32>
    %7 = tpu.matmul %5, %6, %cst {dimension_numbers = #tpu.dot_dimension_numbers<[1], [0], [0], [1], [0, 0, 1, 1], [], []>} : vector<64x32xbf16>, vector<32x32xbf16>, vector<64x32xf32> -> vector<64x32xf32>
    %c0_5 = arith.constant 0 : index
    %c0_6 = arith.constant 0 : index
    %8 = vector.load %arg4[%c0_5, %c0_6] : memref<1x32xf32, #tpu.memory_space<vmem>>, vector<1x32xf32>
    %9 = vector.broadcast %8 : vector<1x32xf32> to vector<64x32xf32>
    %10 = arith.addf %7, %9 : vector<64x32xf32>
    %cst_7 = arith.constant 0.000000e+00 : f32
    %11 = vector.broadcast %cst_7 : f32 to vector<64x32xf32>
    %12 = arith.maximumf %10, %11 : vector<64x32xf32>
    %13 = arith.truncf %12 : vector<64x32xf32> to vector<64x32xbf16>
    %c0_8 = arith.constant 0 : index
    %c0_9 = arith.constant 0 : index
    %14 = vector.load %arg5[%c0_8, %c0_9] : memref<32x32xbf16, #tpu.memory_space<vmem>>, vector<32x32xbf16>
    %cst_10 = arith.constant dense<0.000000e+00> : vector<64x32xf32>
    %15 = tpu.matmul %13, %14, %cst_10 {dimension_numbers = #tpu.dot_dimension_numbers<[1], [0], [0], [1], [0, 0, 1, 1], [], []>} : vector<64x32xbf16>, vector<32x32xbf16>, vector<64x32xf32> -> vector<64x32xf32>
    %c0_11 = arith.constant 0 : index
    %c0_12 = arith.constant 0 : index
    %16 = vector.load %arg6[%c0_11, %c0_12] : memref<1x32xf32, #tpu.memory_space<vmem>>, vector<1x32xf32>
    %17 = vector.broadcast %16 : vector<1x32xf32> to vector<64x32xf32>
    %18 = arith.addf %15, %17 : vector<64x32xf32>
    %19 = arith.truncf %18 : vector<64x32xf32> to vector<64x32xbf16>
    %c0_13 = arith.constant 0 : index
    %c0_14 = arith.constant 0 : index
    %20 = vector.load %arg7[%c0_13, %c0_14] : memref<64x32xbf16, #tpu.memory_space<vmem>>, vector<64x32xbf16>
    tpu.vector_store %arg7[%c0_13, %c0_14], %19 {strides = array<i32>} : memref<64x32xbf16, #tpu.memory_space<vmem>>, vector<64x32xbf16>,
    return
  }
  func.func @transform_0(%arg0: i32) -> (i32, i32) {
    %c0_i32 = arith.constant 0 : i32
    %c0_i32_0 = arith.constant 0 : i32
    return %arg0, %c0_i32 : i32, i32
  }
  func.func @transform_1(%arg0: i32) -> (i32, i32) {
    %c0_i32 = arith.constant 0 : i32
    %c0_i32_0 = arith.constant 0 : i32
    return %arg0, %c0_i32 : i32, i32
  }
  func.func @transform_2(%arg0: i32) -> (i32, i32) {
    %c0_i32 = arith.constant 0 : i32
    %c0_i32_0 = arith.constant 0 : i32
    %c0_i32_1 = arith.constant 0 : i32
    return %c0_i32, %c0_i32_0 : i32, i32
  }
  func.func @transform_3(%arg0: i32) -> (i32, i32) {
    %c0_i32 = arith.constant 0 : i32
    %c0_i32_0 = arith.constant 0 : i32
    %c0_i32_1 = arith.constant 0 : i32
    return %c0_i32, %c0_i32_0 : i32, i32
  }
  func.func @transform_4(%arg0: i32) -> (i32, i32) {
    %c0_i32 = arith.constant 0 : i32
    %c0_i32_0 = arith.constant 0 : i32
    %c0_i32_1 = arith.constant 0 : i32
    return %c0_i32, %c0_i32_0 : i32, i32
  }
  func.func @transform_5(%arg0: i32) -> (i32, i32) {
    %c0_i32 = arith.constant 0 : i32
    %c0_i32_0 = arith.constant 0 : i32
    %c0_i32_1 = arith.constant 0 : i32
    return %c0_i32, %c0_i32_0 : i32, i32
  }
  func.func @transform_6(%arg0: i32) -> (i32, i32) {
    %c0_i32 = arith.constant 0 : i32
    %c0_i32_0 = arith.constant 0 : i32
    return %arg0, %c0_i32 : i32, i32
  }
}

module attributes {stable_mosaic.version = 11 : i64} {
  func.func @_chain_kernel(%arg0: i32, %arg1: memref<128x16xbf16, #tpu.memory_space<vmem>>, %arg2: memref<128x16xbf16, #tpu.memory_space<vmem>>, %arg3: memref<16x8xbf16, #tpu.memory_space<vmem>>, %arg4: memref<1x8xf32, #tpu.memory_space<vmem>>, %arg5: memref<128x8xbf16, #tpu.memory_space<vmem>>) attributes {dimension_semantics = [#tpu.dimension_semantics<parallel>], iteration_bounds = array<i64: 1>, scalar_prefetch = 0 : i64, scratch_operands = 0 : i64, tpu.core_type = #tpu.core_type<tc>, window_params = [{transform_indices = @transform_0, window_bounds = array<i64: 128, 16>}, {transform_indices = @transform_1, window_bounds = array<i64: 128, 16>}, {pipeline_mode = #tpu.pipeline_mode<synchronous>, transform_indices = @transform_2, window_bounds = array<i64: 16, 8>}, {pipeline_mode = #tpu.pipeline_mode<synchronous>, transform_indices = @transform_3, window_bounds = array<i64: 1, 8>}, {transform_indices = @transform_4, window_bounds = array<i64: 128, 8>}]} {
    %c0 = arith.constant 0 : index
    %c0_0 = arith.constant 0 : index
    %0 = vector.load %arg1[%c0, %c0_0] : memref<128x16xbf16, #tpu.memory_space<vmem>>, vector<128x16xbf16>
    %1 = arith.extf %0 : vector<128x16xbf16> to vector<128x16xf32>
    %c0_1 = arith.constant 0 : index
    %c0_2 = arith.constant 0 : index
    %2 = vector.load %arg2[%c0_1, %c0_2] : memref<128x16xbf16, #tpu.memory_space<vmem>>, vector<128x16xbf16>
    %3 = arith.extf %2 : vector<128x16xbf16> to vector<128x16xf32>
    %4 = arith.addf %1, %3 : vector<128x16xf32>
    %5 = arith.truncf %4 : vector<128x16xf32> to vector<128x16xbf16>
    %c0_3 = arith.constant 0 : index
    %c0_4 = arith.constant 0 : index
    %6 = vector.load %arg3[%c0_3, %c0_4] : memref<16x8xbf16, #tpu.memory_space<vmem>>, vector<16x8xbf16>
    %cst = arith.constant dense<0.000000e+00> : vector<128x8xf32>
    %7 = tpu.matmul %5, %6, %cst {dimension_numbers = #tpu.dot_dimension_numbers<[1], [0], [0], [1], [0, 0, 1, 1], [], []>} : vector<128x16xbf16>, vector<16x8xbf16>, vector<128x8xf32> -> vector<128x8xf32>
    %c0_5 = arith.constant 0 : index
    %c0_6 = arith.constant 0 : index
    %8 = vector.load %arg4[%c0_5, %c0_6] : memref<1x8xf32, #tpu.memory_space<vmem>>, vector<1x8xf32>
    %9 = vector.broadcast %8 : vector<1x8xf32> to vector<128x8xf32>
    %10 = arith.addf %7, %9 : vector<128x8xf32>
    %cst_7 = arith.constant 0.000000e+00 : f32
    %11 = vector.broadcast %cst_7 : f32 to vector<128x8xf32>
    %12 = arith.maximumf %10, %11 : vector<128x8xf32>
    %13 = arith.truncf %12 : vector<128x8xf32> to vector<128x8xbf16>
    %c0_8 = arith.constant 0 : index
    %c0_9 = arith.constant 0 : index
    %14 = vector.load %arg5[%c0_8, %c0_9] : memref<128x8xbf16, #tpu.memory_space<vmem>>, vector<128x8xbf16>
    tpu.vector_store %arg5[%c0_8, %c0_9], %13 {strides = array<i32>} : memref<128x8xbf16, #tpu.memory_space<vmem>>, vector<128x8xbf16>,
    return
  }
  func.func @transform_0(%arg0: i32) -> (i32, i32) {
    %c0_i32 = arith.constant 0 : i32
    %c0_i32_0 = arith.constant 0 : i32
    return %arg0, %c0_i32 : i32, i32
  }
  func.func @transform_1(%arg0: i32) -> (i32, i32) {
    %c0_i32 = arith.constant 0 : i32
    %c0_i32_0 = arith.constant 0 : i32
    return %arg0, %c0_i32 : i32, i32
  }
  func.func @transform_2(%arg0: i32) -> (i32, i32) {
    %c0_i32 = arith.constant 0 : i32
    %c0_i32_0 = arith.constant 0 : i32
    %c0_i32_1 = arith.constant 0 : i32
    return %c0_i32, %c0_i32_0 : i32, i32
  }
  func.func @transform_3(%arg0: i32) -> (i32, i32) {
    %c0_i32 = arith.constant 0 : i32
    %c0_i32_0 = arith.constant 0 : i32
    %c0_i32_1 = arith.constant 0 : i32
    return %c0_i32, %c0_i32_0 : i32, i32
  }
  func.func @transform_4(%arg0: i32) -> (i32, i32) {
    %c0_i32 = arith.constant 0 : i32
    %c0_i32_0 = arith.constant 0 : i32
    return %arg0, %c0_i32 : i32, i32
  }
}

</mosaic_0001>

<llo_original>
// kernel: unet_forward.11
$region0: #{unet_forward.11}
  #allocation0 [shape = 'u32[]', space=smem, size = 0x4, offset = 0x4, fixed_abs, tag = 'smem constant byte address 0x4 - core index']
  #allocation1 [shape = 'u32[144,128]{1,0:T(1,128)}', space=vmem, size = 0x12000, scoped, tag = 'internal scratch']
  %s0 = inlined_call_operand.vmem [shape: bf16[128,8], index: 0, kind: input, shape index: {}]
  %s1 = inlined_call_operand.hbm [shape: bf16[8,16], index: 1, kind: input, shape index: {}]
  %s2 = inlined_call_operand.hbm [shape: f32[1,16], index: 2, kind: input, shape index: {}]
  %s3 = inlined_call_operand.vmem [shape: bf16[128,16], index: 3, kind: output, shape index: {}]
  %s4 = sld [smem:[#allocation0]]
  $region30: #{unet_forward.11} parent=0
    _
  %s6 = ssub.s32 1, %s4
  %s7 = scalar_select 0, %s6, %s4
  $region1: #{unet_forward.11} parent=0
    #allocation2 [shape = 'u8[2048]{0}', space=vmem, size = 0x800, scoped, tag = 'input window, operand 1, single buffered']
    #allocation3 [shape = 's32[1]{0}', space=sflag, size = 0x4, scoped, tag = 'scoped memory for unet_forward.11']
    #allocation4 [shape = 'u8[512]{0}', space=vmem, size = 0x400, scoped, tag = 'input window, operand 2, single buffered']
    #allocation5 [shape = 's32[1]{0}', space=sflag, size = 0x4, scoped, tag = 'scoped memory for unet_forward.11']
    %8 = vsyncpa [#allocation3], 0
    %9 = vsyncpa [#allocation5], 0
    // Predicated region
    $region2: #{unet_forward.11} parent=1 // pred_check
      _
    $region3: #{unet_forward.11} parent=1 // pred_check_branch
      %11 = sbr.rel (0) target = $region5
    $region4: #{unet_forward.11} parent=1 // pred_region
      _
    $region5: #{unet_forward.11} parent=1 // pred_fallthru
      _
    // Predicated region
    $region6: #{unet_forward.11} parent=1 // pred_check
      _
    $region7: #{unet_forward.11} parent=1 // pred_check_branch
      %13 = sbr.rel (0) target = $region9
    $region8: #{unet_forward.11} parent=1 // pred_region
      %s15 = ssub.s32 64, 64
      %16 = vsyncadd [#allocation3], %s15
      %s18 = sshll.u32 [#allocation2], 4
      %s19 = int_to_ptr.vmem [resolvable:$true] %s18
      %21 = dma.hbm_to_vmem [thread:$0]  %s1, 64, %s19, [#allocation3]
    $region9: #{unet_forward.11} parent=1 // pred_fallthru
      _
    // Predicated region
    $region10: #{unet_forward.11} parent=1 // pred_check
      _
    $region11: #{unet_forward.11} parent=1 // pred_check_branch
      %23 = sbr.rel (0) target = $region13
    $region12: #{unet_forward.11} parent=1 // pred_region
      %s25 = ssub.s32 16, 16
      %26 = vsyncadd [#allocation5], %s25
      %s28 = sshll.u32 [#allocation4], 4
      %s29 = int_to_ptr.vmem [resolvable:$true] %s28
      %31 = dma.hbm_to_vmem [thread:$0]  %s2, 16, %s29, [#allocation5]
    $region13: #{unet_forward.11} parent=1 // pred_fallthru
      _
    // Predicated region
    $region14: #{unet_forward.11} parent=1 // pred_check
      _
    $region15: #{unet_forward.11} parent=1 // pred_check_branch
      %33 = sbr.rel (0) target = $region17
    $region16: #{unet_forward.11} parent=1 // pred_region
      %34 = dma.done [#allocation3], 64
    $region17: #{unet_forward.11} parent=1 // pred_fallthru
      _
    // Predicated region
    $region18: #{unet_forward.11} parent=1 // pred_check
      _
    $region19: #{unet_forward.11} parent=1 // pred_check_branch
      %36 = sbr.rel (0) target = $region21
    $region20: #{unet_forward.11} parent=1 // pred_region
      %37 = dma.done [#allocation5], 16
    $region21: #{unet_forward.11} parent=1 // pred_fallthru
      _
    %v39 = vld [vmem:[%s0] sm:$0xf]
    %v40 = vld [vmem:[%s0 + $0x4] sm:$0xf]
    %v41 = vld [vmem:[%s0 + $0x8] sm:$0xf]
    %v42 = vld [vmem:[%s0 + $0xc] sm:$0xf]
    %v43 = vld [vmem:[%s0 + $0x10] sm:$0xf]
    %v44 = vld [vmem:[%s0 + $0x14] sm:$0xf]
    %v45 = vld [vmem:[%s0 + $0x18] sm:$0xf]
    %v46 = vld [vmem:[%s0 + $0x1c] sm:$0xf]
    %v47 = vld [vmem:[%s0 + $0x20] sm:$0xf]
    %v48 = vld [vmem:[%s0 + $0x24] sm:$0xf]
    %v49 = vld [vmem:[%s0 + $0x28] sm:$0xf]
    %v50 = vld [vmem:[%s0 + $0x2c] sm:$0xf]
    %v51 = vld [vmem:[%s0 + $0x30] sm:$0xf]
    %v52 = vld [vmem:[%s0 + $0x34] sm:$0xf]
    %v53 = vld [vmem:[%s0 + $0x38] sm:$0xf]
    %v54 = vld [vmem:[%s0 + $0x3c] sm:$0xf]
    %v55 = vld [vmem:[#allocation2] sm:$0xf]
    %v56 = vld [vmem:[#allocation4] sm:$0x1]
    %v58 = vlaneseq
    %v59 = vshrl.u32 %v58, 7
    %v60 = vsub.s32 0, %v59
    %v61 = vrot.slane %v56, %v60
    %v79 = vunpack.c.l.b16 %v39
    %v80 = vunpack.c.l.b16 %v40
    %v81 = vunpack.c.l.b16 %v41
    %v82 = vunpack.c.l.b16 %v42
    %v83 = vunpack.c.l.b16 %v43
    %v84 = vunpack.c.l.b16 %v44
    %v85 = vunpack.c.l.b16 %v45
    %v86 = vunpack.c.l.b16 %v46
    %v87 = vunpack.c.l.b16 %v47
    %v88 = vunpack.c.l.b16 %v48
    %v89 = vunpack.c.l.b16 %v49
    %v90 = vunpack.c.l.b16 %v50
    %v91 = vunpack.c.l.b16 %v51
    %v92 = vunpack.c.l.b16 %v52
    %v93 = vunpack.c.l.b16 %v53
    %v94 = vunpack.c.l.b16 %v54
    %v95 = vpack.c.b16 %v80, %v79
    %v96 = vpack.c.b16 %v82, %v81
    %v97 = vpack.c.b16 %v84, %v83
    %v98 = vpack.c.b16 %v86, %v85
    %v99 = vpack.c.b16 %v88, %v87
    %v100 = vpack.c.b16 %v90, %v89
    %v101 = vpack.c.b16 %v92, %v91
    %v102 = vpack.c.b16 %v94, %v93
    %vm103 = vcmask 64512
    %v105 = vsel %vm103, %v95, 0
    %v108 = vsel %vm103, %v96, 0
    %v111 = vsel %vm103, %v97, 0
    %v114 = vsel %vm103, %v98, 0
    %v117 = vsel %vm103, %v99, 0
    %v120 = vsel %vm103, %v100, 0
    %v123 = vsel %vm103, %v101, 0
    %v126 = vsel %vm103, %v102, 0
    %vm128 = vcmask 1043456
    %v130 = vsel %vm128, %v55, 0
    %132 = vmatprep.subr.bf16.mxu0 0
    %133 = vmatpush1.bf16.msra.mxu0 %v130
    %134 = vmatprep.subr.bf16.mxu0 0
    %135 = vmatpush1.bf16.msra.mxu0 0
    %136 = vmatprep.subr.bf16.mxu0 0
    %137 = vmatpush1.bf16.msra.mxu0 0
    %138 = vmatprep.subr.bf16.mxu0 0
    %139 = vmatpush1.bf16.msra.mxu0 0
    %140 = vmatprep.subr.bf16.mxu0 0
    %141 = vmatpush1.bf16.msra.mxu0 0
    %142 = vmatprep.subr.bf16.mxu0 0
    %143 = vmatpush1.bf16.msra.mxu0 0
    %144 = vmatprep.subr.bf16.mxu0 0
    %145 = vmatpush1.bf16.msra.mxu0 0
    %146 = vmatprep.subr.bf16.mxu0 0
    %147 = vmatpush1.bf16.msra.mxu0 0
    %148 = vmatprep.subr.bf16.mxu0 0
    %149 = vmatpush1.bf16.msra.mxu0 0
    %150 = vmatprep.subr.bf16.mxu0 0
    %151 = vmatpush1.bf16.msra.mxu0 0
    %152 = vmatprep.subr.bf16.mxu0 0
    %153 = vmatpush1.bf16.msra.mxu0 0
    %154 = vmatprep.subr.bf16.mxu0 0
    %155 = vmatpush1.bf16.msra.mxu0 0
    %156 = vmatprep.subr.bf16.mxu0 0
    %157 = vmatpush1.bf16.msra.mxu0 0
    %158 = vmatprep.subr.bf16.mxu0 0
    %159 = vmatpush1.bf16.msra.mxu0 0
    %160 = vmatprep.subr.bf16.mxu0 0
    %161 = vmatpush1.bf16.msra.mxu0 0
    %162 = vmatprep.subr.bf16.mxu0 0
    %163 = vmatpush1.bf16.msra.mxu0 0
    %164 = vmatprep.mubr.bf16.mxu0 0
    %165 = vmatmul.mubr.bf16.gmra.mrb[0].mxu0 %v105
    %v166 = vpop.f32.mrb[0].mxu0
    %v167 = vadd.f32 %v61, %v166
    %v168 = vpop.f32.mrb[0].mxu0
    %v169 = vpop.f32.mrb[0].mxu0
    %v170 = vadd.f32 %v61, %v169
    %v171 = vpop.f32.mrb[0].mxu0
    %172 = vmatprep.mubr.bf16.mxu0 0
    %173 = vmatmul.mubr.bf16.gmra.mrb[0].mxu0 %v108
    %v174 = vpop.f32.mrb[0].mxu0
    %v175 = vadd.f32 %v61, %v174
    %v176 = vpop.f32.mrb[0].mxu0
    %v177 = vpop.f32.mrb[0].mxu0
    %v178 = vadd.f32 %v61, %v177
    %v179 = vpop.f32.mrb[0].mxu0
    %180 = vmatprep.mubr.bf16.mxu0 0
    %181 = vmatmul.mubr.bf16.gmra.mrb[0].mxu0 %v111
    %v182 = vpop.f32.mrb[0].mxu0
    %v183 = vadd.f32 %v61, %v182
    %v184 = vpop.f32.mrb[0].mxu0
    %v185 = vpop.f32.mrb[0].mxu0
    %v186 = vadd.f32 %v61, %v185
    %v187 = vpop.f32.mrb[0].mxu0
    %188 = vmatprep.mubr.bf16.mxu0 0
    %189 = vmatmul.mubr.bf16.gmra.mrb[0].mxu0 %v114
    %v190 = vpop.f32.mrb[0].mxu0
    %v191 = vadd.f32 %v61, %v190
    %v192 = vpop.f32.mrb[0].mxu0
    %v193 = vpop.f32.mrb[0].mxu0
    %v194 = vadd.f32 %v61, %v193
    %v195 = vpop.f32.mrb[0].mxu0
    %196 = vmatprep.mubr.bf16.mxu0 0
    %197 = vmatmul.mubr.bf16.gmra.mrb[0].mxu0 %v117
    %v198 = vpop.f32.mrb[0].mxu0
    %v199 = vadd.f32 %v61, %v198
    %v200 = vpop.f32.mrb[0].mxu0
    %v201 = vpop.f32.mrb[0].mxu0
    %v202 = vadd.f32 %v61, %v201
    %v203 = vpop.f32.mrb[0].mxu0
    %204 = vmatprep.mubr.bf16.mxu0 0
    %205 = vmatmul.mubr.bf16.gmra.mrb[0].mxu0 %v120
    %v206 = vpop.f32.mrb[0].mxu0
    %v207 = vadd.f32 %v61, %v206
    %v208 = vpop.f32.mrb[0].mxu0
    %v209 = vpop.f32.mrb[0].mxu0
    %v210 = vadd.f32 %v61, %v209
    %v211 = vpop.f32.mrb[0].mxu0
    %212 = vmatprep.mubr.bf16.mxu0 0
    %213 = vmatmul.mubr.bf16.gmra.mrb[0].mxu0 %v123
    %v214 = vpop.f32.mrb[0].mxu0
    %v215 = vadd.f32 %v61, %v214
    %v216 = vpop.f32.mrb[0].mxu0
    %v217 = vpop.f32.mrb[0].mxu0
    %v218 = vadd.f32 %v61, %v217
    %v219 = vpop.f32.mrb[0].mxu0
    %220 = vmatprep.mubr.bf16.mxu0 0
    %221 = vmatmul.mubr.bf16.gmra.mrb[0].mxu0 %v126
    %v222 = vpop.f32.mrb[0].mxu0
    %v223 = vadd.f32 %v61, %v222
    %v224 = vpop.f32.mrb[0].mxu0
    %v225 = vpop.f32.mrb[0].mxu0
    %v226 = vadd.f32 %v61, %v225
    %v227 = vpop.f32.mrb[0].mxu0
    %228 = vdwg.mxu0
    %v229 = vmax.f32 %v167, 0.0
    %v230 = vmax.f32 %v170, 0.0
    %v231 = vmax.f32 %v175, 0.0
    %v232 = vmax.f32 %v178, 0.0
    %v233 = vmax.f32 %v183, 0.0
    %v234 = vmax.f32 %v186, 0.0
    %v235 = vmax.f32 %v191, 0.0
    %v236 = vmax.f32 %v194, 0.0
    %v237 = vmax.f32 %v199, 0.0
    %v238 = vmax.f32 %v202, 0.0
    %v239 = vmax.f32 %v207, 0.0
    %v240 = vmax.f32 %v210, 0.0
    %v241 = vmax.f32 %v215, 0.0
    %v242 = vmax.f32 %v218, 0.0
    %v243 = vmax.f32 %v223, 0.0
    %v244 = vmax.f32 %v226, 0.0
    %v245 = vpack.c.bf16 %v230, %v229
    %v246 = vpack.c.bf16 %v232, %v231
    %v247 = vpack.c.bf16 %v234, %v233
    %v248 = vpack.c.bf16 %v236, %v235
    %v249 = vpack.c.bf16 %v238, %v237
    %v250 = vpack.c.bf16 %v240, %v239
    %v251 = vpack.c.bf16 %v242, %v241
    %v252 = vpack.c.bf16 %v244, %v243
    %v261 = vunpack.c.l.b16 %v245
    %v262 = vunpack.c.h.b16 %v245
    %v263 = vunpack.c.l.b16 %v246
    %v264 = vunpack.c.h.b16 %v246
    %v265 = vunpack.c.l.b16 %v247
    %v266 = vunpack.c.h.b16 %v247
    %v267 = vunpack.c.l.b16 %v248
    %v268 = vunpack.c.h.b16 %v248
    %v269 = vunpack.c.l.b16 %v249
    %v270 = vunpack.c.h.b16 %v249
    %v271 = vunpack.c.l.b16 %v250
    %v272 = vunpack.c.h.b16 %v250
    %v273 = vunpack.c.l.b16 %v251
    %v274 = vunpack.c.h.b16 %v251
    %v275 = vunpack.c.l.b16 %v252
    %v276 = vunpack.c.h.b16 %v252
    %v277 = vpack.c.b16 %v261, %v261
    %v278 = vpack.c.b16 %v262, %v262
    %v279 = vpack.c.b16 %v263, %v263
    %v280 = vpack.c.b16 %v264, %v264
    %v281 = vpack.c.b16 %v265, %v265
    %v282 = vpack.c.b16 %v266, %v266
    %v283 = vpack.c.b16 %v267, %v267
    %v284 = vpack.c.b16 %v268, %v268
    %v285 = vpack.c.b16 %v269, %v269
    %v286 = vpack.c.b16 %v270, %v270
    %v287 = vpack.c.b16 %v271, %v271
    %v288 = vpack.c.b16 %v272, %v272
    %v289 = vpack.c.b16 %v273, %v273
    %v290 = vpack.c.b16 %v274, %v274
    %v291 = vpack.c.b16 %v275, %v275
    %v292 = vpack.c.b16 %v276, %v276
    %vm309 = vcmask 125952
    %310 = vst.msk [vmem:[%s3] sm:$0xf] %vm309, %v277
    %311 = vst.msk [vmem:[%s3 + $0x4] sm:$0xf] %vm309, %v278
    %312 = vst.msk [vmem:[%s3 + $0x8] sm:$0xf] %vm309, %v279
    %313 = vst.msk [vmem:[%s3 + $0xc] sm:$0xf] %vm309, %v280
    %314 = vst.msk [vmem:[%s3 + $0x10] sm:$0xf] %vm309, %v281
    %315 = vst.msk [vmem:[%s3 + $0x14] sm:$0xf] %vm309, %v282
    %316 = vst.msk [vmem:[%s3 + $0x18] sm:$0xf] %vm309, %v283
    %317 = vst.msk [vmem:[%s3 + $0x1c] sm:$0xf] %vm309, %v284
    %318 = vst.msk [vmem:[%s3 + $0x20] sm:$0xf] %vm309, %v285
    %319 = vst.msk [vmem:[%s3 + $0x24] sm:$0xf] %vm309, %v286
    %320 = vst.msk [vmem:[%s3 + $0x28] sm:$0xf] %vm309, %v287
    %321 = vst.msk [vmem:[%s3 + $0x2c] sm:$0xf] %vm309, %v288
    %322 = vst.msk [vmem:[%s3 + $0x30] sm:$0xf] %vm309, %v289
    %323 = vst.msk [vmem:[%s3 + $0x34] sm:$0xf] %vm309, %v290
    %324 = vst.msk [vmem:[%s3 + $0x38] sm:$0xf] %vm309, %v291
    %325 = vst.msk [vmem:[%s3 + $0x3c] sm:$0xf] %vm309, %v292
    // Predicated region
    $region22: #{unet_forward.11} parent=1 // pred_check
      _
    $region23: #{unet_forward.11} parent=1 // pred_check_branch
      %327 = sbr.rel (0) target = $region25
    $region24: #{unet_forward.11} parent=1 // pred_region
      _
    $region25: #{unet_forward.11} parent=1 // pred_fallthru
      _
    // Predicated region
    $region26: #{unet_forward.11} parent=1 // pred_check
      _
    $region27: #{unet_forward.11} parent=1 // pred_check_branch
      %329 = sbr.rel (0) target = $region29
    $region28: #{unet_forward.11} parent=1 // pred_region
      _
    $region29: #{unet_forward.11} parent=1 // pred_fallthru
      _
    %330 = vsyncpa [#allocation3], 1
    %331 = vsyncpa [#allocation5], 1

// kernel: unet_forward.12
$region0: #{unet_forward.12}
  #allocation0 [shape = 'u32[]', space=smem, size = 0x4, offset = 0x4, fixed_abs, tag = 'smem constant byte address 0x4 - core index']
  #allocation1 [shape = 'u32[144,128]{1,0:T(1,128)}', space=vmem, size = 0x12000, scoped, tag = 'internal scratch']
  %s0 = inlined_call_operand.vmem [shape: bf16[64,32], index: 0, kind: input, shape index: {}]
  %s1 = inlined_call_operand.hbm [shape: bf16[32,32], index: 1, kind: input, shape index: {}]
  %s2 = inlined_call_operand.hbm [shape: f32[1,32], index: 2, kind: input, shape index: {}]
  %s3 = inlined_call_operand.hbm [shape: bf16[32,32], index: 3, kind: input, shape index: {}]
  %s4 = inlined_call_operand.hbm [shape: f32[1,32], index: 4, kind: input, shape index: {}]
  %s5 = inlined_call_operand.vmem [shape: bf16[64,32], index: 5, kind: output, shape index: {}]
  %s6 = sld [smem:[#allocation0]]
  $region46: #{unet_forward.12} parent=0
    _
  %s8 = ssub.s32 1, %s6
  %s9 = scalar_select 0, %s8, %s6
  $region1: #{unet_forward.12} parent=0
    #allocation2 [shape = 'u8[8192]{0}', space=vmem, size = 0x2000, scoped, tag = 'input window, operand 1, single buffered']
    #allocation3 [shape = 's32[1]{0}', space=sflag, size = 0x4, scoped, tag = 'scoped memory for unet_forward.12']
    #allocation4 [shape = 'u8[512]{0}', space=vmem, size = 0x400, scoped, tag = 'input window, operand 2, single buffered']
    #allocation5 [shape = 's32[1]{0}', space=sflag, size = 0x4, scoped, tag = 'scoped memory for unet_forward.12']
    #allocation6 [shape = 'u8[8192]{0}', space=vmem, size = 0x2000, scoped, tag = 'input window, operand 3, single buffered']
    #allocation7 [shape = 'u8[512]{0}', space=vmem, size = 0x400, scoped, tag = 'input window, operand 4, single buffered']
    #allocation8 [shape = 's32[1]{0}', space=sflag, size = 0x4, scoped, tag = 'scoped memory for unet_forward.12']
    %10 = vsyncpa [#allocation3], 0
    %11 = vsyncpa [#allocation5], 0
    %12 = vsyncpa [#allocation8], 0
    // Predicated region
    $region2: #{unet_forward.12} parent=1 // pred_check
      _
    $region3: #{unet_forward.12} parent=1 // pred_check_branch
      %14 = sbr.rel (0) target = $region5
    $region4: #{unet_forward.12} parent=1 // pred_region
      _
    $region5: #{unet_forward.12} parent=1 // pred_fallthru
      _
    // Predicated region
    $region6: #{unet_forward.12} parent=1 // pred_check
      _
    $region7: #{unet_forward.12} parent=1 // pred_check_branch
      %16 = sbr.rel (0) target = $region9
    $region8: #{unet_forward.12} parent=1 // pred_region
      %s18 = ssub.s32 256, 256
      %19 = vsyncadd [#allocation3], %s18
      %s20 = sshll.u32 [#allocation2], 4
      %s21 = int_to_ptr.vmem [resolvable:$true] %s20
      %26 = dma.hbm_to_vmem [thread:$0]  %s1, 256, %s21, [#allocation3], 64, 64, 4
    $region9: #{unet_forward.12} parent=1 // pred_fallthru
      _
    // Predicated region
    $region10: #{unet_forward.12} parent=1 // pred_check
      _
    $region11: #{unet_forward.12} parent=1 // pred_check_branch
      %28 = sbr.rel (0) target = $region13
    $region12: #{unet_forward.12} parent=1 // pred_region
      %s30 = ssub.s32 16, 16
      %31 = vsyncadd [#allocation5], %s30
      %s33 = sshll.u32 [#allocation4], 4
      %s34 = int_to_ptr.vmem [resolvable:$true] %s33
      %36 = dma.hbm_to_vmem [thread:$0]  %s2, 16, %s34, [#allocation5]
    $region13: #{unet_forward.12} parent=1 // pred_fallthru
      _
    // Predicated region
    $region14: #{unet_forward.12} parent=1 // pred_check
      _
    $region15: #{unet_forward.12} parent=1 // pred_check_branch
      %38 = sbr.rel (0) target = $region17
    $region16: #{unet_forward.12} parent=1 // pred_region
      %s40 = ssub.s32 256, 256
      %41 = vsyncadd [#allocation5], %s40
      %s42 = sshll.u32 [#allocation6], 4
      %s43 = int_to_ptr.vmem [resolvable:$true] %s42
      %48 = dma.hbm_to_vmem [thread:$0]  %s3, 256, %s43, [#allocation5], 64, 64, 4
    $region17: #{unet_forward.12} parent=1 // pred_fallthru
      _
    // Predicated region
    $region18: #{unet_forward.12} parent=1 // pred_check
      _
    $region19: #{unet_forward.12} parent=1 // pred_check_branch
      %50 = sbr.rel (0) target = $region21
    $region20: #{unet_forward.12} parent=1 // pred_region
      %s52 = ssub.s32 16, 16
      %53 = vsyncadd [#allocation8], %s52
      %s55 = sshll.u32 [#allocation7], 4
      %s56 = int_to_ptr.vmem [resolvable:$true] %s55
      %58 = dma.hbm_to_vmem [thread:$0]  %s4, 16, %s56, [#allocation8]
    $region21: #{unet_forward.12} parent=1 // pred_fallthru
      _
    // Predicated region
    $region22: #{unet_forward.12} parent=1 // pred_check
      _
    $region23: #{unet_forward.12} parent=1 // pred_check_branch
      %60 = sbr.rel (0) target = $region25
    $region24: #{unet_forward.12} parent=1 // pred_region
      %61 = dma.done [#allocation3], 256
    $region25: #{unet_forward.12} parent=1 // pred_fallthru
      _
    // Predicated region
    $region26: #{unet_forward.12} parent=1 // pred_check
      _
    $region27: #{unet_forward.12} parent=1 // pred_check_branch
      %63 = sbr.rel (0) target = $region29
    $region28: #{unet_forward.12} parent=1 // pred_region
      %64 = dma.done [#allocation5], 16
    $region29: #{unet_forward.12} parent=1 // pred_fallthru
      _
    // Predicated region
    $region30: #{unet_forward.12} parent=1 // pred_check
      _
    $region31: #{unet_forward.12} parent=1 // pred_check_branch
      %66 = sbr.rel (0) target = $region33
    $region32: #{unet_forward.12} parent=1 // pred_region
      %67 = dma.done [#allocation5], 256
    $region33: #{unet_forward.12} parent=1 // pred_fallthru
      _
    // Predicated region
    $region34: #{unet_forward.12} parent=1 // pred_check
      _
    $region35: #{unet_forward.12} parent=1 // pred_check_branch
      %69 = sbr.rel (0) target = $region37
    $region36: #{unet_forward.12} parent=1 // pred_region
      %70 = dma.done [#allocation8], 16
    $region37: #{unet_forward.12} parent=1 // pred_fallthru
      _
    %v72 = vld [vmem:[%s0] sm:$0xf]
    %v73 = vld [vmem:[%s0 + $0x4] sm:$0xf]
    %v74 = vld [vmem:[%s0 + $0x8] sm:$0xf]
    %v75 = vld [vmem:[%s0 + $0xc] sm:$0xf]
    %v76 = vld [vmem:[%s0 + $0x10] sm:$0xf]
    %v77 = vld [vmem:[%s0 + $0x14] sm:$0xf]
    %v78 = vld [vmem:[%s0 + $0x18] sm:$0xf]
    %v79 = vld [vmem:[%s0 + $0x1c] sm:$0xf]
    %v80 = vld [vmem:[#allocation2] sm:$0xf]
    %v81 = vld [vmem:[#allocation2 + $0x4] sm:$0xf]
    %v82 = vld [vmem:[#allocation2 + $0x8] sm:$0xf]
    %v83 = vld [vmem:[#allocation2 + $0xc] sm:$0xf]
    %v84 = vld [vmem:[#allocation4] sm:$0x1]
    %v86 = vlaneseq
    %v87 = vshrl.u32 %v86, 7
    %v88 = vsub.s32 0, %v87
    %v89 = vrot.slane %v84, %v88
    %v99 = vunpack.c.l.b16 %v72
    %v100 = vunpack.c.l.b16 %v73
    %v101 = vunpack.c.l.b16 %v74
    %v102 = vunpack.c.l.b16 %v75
    %v103 = vunpack.c.l.b16 %v76
    %v104 = vunpack.c.l.b16 %v77
    %v105 = vunpack.c.l.b16 %v78
    %v106 = vunpack.c.l.b16 %v79
    %v107 = vpack.c.b16 %v100, %v99
    %v108 = vpack.c.b16 %v102, %v101
    %v109 = vpack.c.b16 %v104, %v103
    %v110 = vpack.c.b16 %v106, %v105
    %v115 = vunpack.c.l.b16 %v80
    %v116 = vunpack.c.l.b16 %v81
    %v117 = vunpack.c.l.b16 %v82
    %v118 = vunpack.c.l.b16 %v83
    %v119 = vpack.c.b16 %v116, %v115
    %v120 = vpack.c.b16 %v118, %v117
    %vm123 = vcmask 261120
    %v125 = vsel %vm123, %v107, 0
    %v128 = vsel %vm123, %v108, 0
    %v131 = vsel %vm123, %v109, 0
    %v134 = vsel %vm123, %v110, 0
    %136 = vmatprep.subr.bf16.mxu0 0
    %137 = vmatpush1.bf16.msra.mxu0 %v119
    %138 = vmatprep.subr.bf16.mxu0 0
    %139 = vmatpush1.bf16.msra.mxu0 %v120
    %140 = vmatprep.subr.bf16.mxu0 0
    %141 = vmatpush1.bf16.msra.mxu0 0
    %142 = vmatprep.subr.bf16.mxu0 0
    %143 = vmatpush1.bf16.msra.mxu0 0
    %144 = vmatprep.subr.bf16.mxu0 0
    %145 = vmatpush1.bf16.msra.mxu0 0
    %146 = vmatprep.subr.bf16.mxu0 0
    %147 = vmatpush1.bf16.msra.mxu0 0
    %148 = vmatprep.subr.bf16.mxu0 0
    %149 = vmatpush1.bf16.msra.mxu0 0
    %150 = vmatprep.subr.bf16.mxu0 0
    %151 = vmatpush1.bf16.msra.mxu0 0
    %152 = vmatprep.subr.bf16.mxu0 0
    %153 = vmatpush1.bf16.msra.mxu0 0
    %154 = vmatprep.subr.bf16.mxu0 0
    %155 = vmatpush1.bf16.msra.mxu0 0
    %156 = vmatprep.subr.bf16.mxu0 0
    %157 = vmatpush1.bf16.msra.mxu0 0
    %158 = vmatprep.subr.bf16.mxu0 0
    %159 = vmatpush1.bf16.msra.mxu0 0
    %160 = vmatprep.subr.bf16.mxu0 0
    %161 = vmatpush1.bf16.msra.mxu0 0
    %162 = vmatprep.subr.bf16.mxu0 0
    %163 = vmatpush1.bf16.msra.mxu0 0
    %164 = vmatprep.subr.bf16.mxu0 0
    %165 = vmatpush1.bf16.msra.mxu0 0
    %166 = vmatprep.subr.bf16.mxu0 0
    %167 = vmatpush1.bf16.msra.mxu0 0
    %168 = vmatprep.mubr.bf16.mxu0 0
    %169 = vmatmul.mubr.bf16.gmra.mrb[0].mxu0 %v125
    %v170 = vpop.f32.mrb[0].mxu0
    %v171 = vadd.f32 %v89, %v170
    %v172 = vpop.f32.mrb[0].mxu0
    %v173 = vpop.f32.mrb[0].mxu0
    %v174 = vadd.f32 %v89, %v173
    %v175 = vpop.f32.mrb[0].mxu0
    %176 = vmatprep.mubr.bf16.mxu0 0
    %177 = vmatmul.mubr.bf16.gmra.mrb[0].mxu0 %v128
    %v178 = vpop.f32.mrb[0].mxu0
    %v179 = vadd.f32 %v89, %v178
    %v180 = vpop.f32.mrb[0].mxu0
    %v181 = vpop.f32.mrb[0].mxu0
    %v182 = vadd.f32 %v89, %v181
    %v183 = vpop.f32.mrb[0].mxu0
    %184 = vmatprep.mubr.bf16.mxu0 0
    %185 = vmatmul.mubr.bf16.gmra.mrb[0].mxu0 %v131
    %v186 = vpop.f32.mrb[0].mxu0
    %v187 = vadd.f32 %v89, %v186
    %v188 = vpop.f32.mrb[0].mxu0
    %v189 = vpop.f32.mrb[0].mxu0
    %v190 = vadd.f32 %v89, %v189
    %v191 = vpop.f32.mrb[0].mxu0
    %192 = vmatprep.mubr.bf16.mxu0 0
    %193 = vmatmul.mubr.bf16.gmra.mrb[0].mxu0 %v134
    %v194 = vpop.f32.mrb[0].mxu0
    %v195 = vadd.f32 %v89, %v194
    %v196 = vpop.f32.mrb[0].mxu0
    %v197 = vpop.f32.mrb[0].mxu0
    %v198 = vadd.f32 %v89, %v197
    %v199 = vpop.f32.mrb[0].mxu0
    %200 = vdwg.mxu0
    %v201 = vpack.c.bf16 %v174, %v171
    %v202 = vpack.c.bf16 %v182, %v179
    %v203 = vpack.c.bf16 %v190, %v187
    %v204 = vpack.c.bf16 %v198, %v195
    %v205 = vld [vmem:[#allocation6] sm:$0xf]
    %v206 = vld [vmem:[#allocation6 + $0x4] sm:$0xf]
    %v207 = vld [vmem:[#allocation6 + $0x8] sm:$0xf]
    %v208 = vld [vmem:[#allocation6 + $0xc] sm:$0xf]
    %v209 = vld [vmem:[#allocation7] sm:$0x1]
    %v211 = vlaneseq
    %v212 = vshrl.u32 %v211, 7
    %v213 = vsub.s32 0, %v212
    %v214 = vrot.slane %v209, %v213
    %v220 = vunpack.c.l.b16 %v205
    %v221 = vunpack.c.l.b16 %v206
    %v222 = vunpack.c.l.b16 %v207
    %v223 = vunpack.c.l.b16 %v208
    %v224 = vpack.c.b16 %v221, %v220
    %v225 = vpack.c.b16 %v223, %v222
    %v229 = vsel %vm123, %v201, 0
    %v232 = vsel %vm123, %v202, 0
    %v235 = vsel %vm123, %v203, 0
    %v238 = vsel %vm123, %v204, 0
    %240 = vmatprep.subr.bf16.mxu0 0
    %241 = vmatpush1.bf16.msra.mxu0 %v224
    %242 = vmatprep.subr.bf16.mxu0 0
    %243 = vmatpush1.bf16.msra.mxu0 %v225
    %244 = vmatprep.subr.bf16.mxu0 0
    %245 = vmatpush1.bf16.msra.mxu0 0
    %246 = vmatprep.subr.bf16.mxu0 0
    %247 = vmatpush1.bf16.msra.mxu0 0
    %248 = vmatprep.subr.bf16.mxu0 0
    %249 = vmatpush1.bf16.msra.mxu0 0
    %250 = vmatprep.subr.bf16.mxu0 0
    %251 = vmatpush1.bf16.msra.mxu0 0
    %252 = vmatprep.subr.bf16.mxu0 0
    %253 = vmatpush1.bf16.msra.mxu0 0
    %254 = vmatprep.subr.bf16.mxu0 0
    %255 = vmatpush1.bf16.msra.mxu0 0
    %256 = vmatprep.subr.bf16.mxu0 0
    %257 = vmatpush1.bf16.msra.mxu0 0
    %258 = vmatprep.subr.bf16.mxu0 0
    %259 = vmatpush1.bf16.msra.mxu0 0
    %260 = vmatprep.subr.bf16.mxu0 0
    %261 = vmatpush1.bf16.msra.mxu0 0
    %262 = vmatprep.subr.bf16.mxu0 0
    %263 = vmatpush1.bf16.msra.mxu0 0
    %264 = vmatprep.subr.bf16.mxu0 0
    %265 = vmatpush1.bf16.msra.mxu0 0
    %266 = vmatprep.subr.bf16.mxu0 0
    %267 = vmatpush1.bf16.msra.mxu0 0
    %268 = vmatprep.subr.bf16.mxu0 0
    %269 = vmatpush1.bf16.msra.mxu0 0
    %270 = vmatprep.subr.bf16.mxu0 0
    %271 = vmatpush1.bf16.msra.mxu0 0
    %272 = vmatprep.mubr.bf16.mxu0 0
    %273 = vmatmul.mubr.bf16.gmra.mrb[0].mxu0 %v229
    %v274 = vpop.f32.mrb[0].mxu0
    %v275 = vadd.f32 %v214, %v274
    %v276 = vpop.f32.mrb[0].mxu0
    %v277 = vpop.f32.mrb[0].mxu0
    %v278 = vadd.f32 %v214, %v277
    %v279 = vpop.f32.mrb[0].mxu0
    %280 = vmatprep.mubr.bf16.mxu0 0
    %281 = vmatmul.mubr.bf16.gmra.mrb[0].mxu0 %v232
    %v282 = vpop.f32.mrb[0].mxu0
    %v283 = vadd.f32 %v214, %v282
    %v284 = vpop.f32.mrb[0].mxu0
    %v285 = vpop.f32.mrb[0].mxu0
    %v286 = vadd.f32 %v214, %v285
    %v287 = vpop.f32.mrb[0].mxu0
    %288 = vmatprep.mubr.bf16.mxu0 0
    %289 = vmatmul.mubr.bf16.gmra.mrb[0].mxu0 %v235
    %v290 = vpop.f32.mrb[0].mxu0
    %v291 = vadd.f32 %v214, %v290
    %v292 = vpop.f32.mrb[0].mxu0
    %v293 = vpop.f32.mrb[0].mxu0
    %v294 = vadd.f32 %v214, %v293
    %v295 = vpop.f32.mrb[0].mxu0
    %296 = vmatprep.mubr.bf16.mxu0 0
    %297 = vmatmul.mubr.bf16.gmra.mrb[0].mxu0 %v238
    %v298 = vpop.f32.mrb[0].mxu0
    %v299 = vadd.f32 %v214, %v298
    %v300 = vpop.f32.mrb[0].mxu0
    %v301 = vpop.f32.mrb[0].mxu0
    %v302 = vadd.f32 %v214, %v301
    %v303 = vpop.f32.mrb[0].mxu0
    %304 = vdwg.mxu0
    %v305 = vmax.f32 %v275, 0.0
    %v306 = vmax.f32 %v278, 0.0
    %v307 = vmax.f32 %v283, 0.0
    %v308 = vmax.f32 %v286, 0.0
    %v309 = vmax.f32 %v291, 0.0
    %v310 = vmax.f32 %v294, 0.0
    %v311 = vmax.f32 %v299, 0.0
    %v312 = vmax.f32 %v302, 0.0
    %v313 = vpack.c.bf16 %v306, %v305
    %v314 = vpack.c.bf16 %v308, %v307
    %v315 = vpack.c.bf16 %v310, %v309
    %v316 = vpack.c.bf16 %v312, %v311
    %v321 = vunpack.c.l.b16 %v313
    %v322 = vunpack.c.h.b16 %v313
    %v323 = vunpack.c.l.b16 %v314
    %v324 = vunpack.c.h.b16 %v314
    %v325 = vunpack.c.l.b16 %v315
    %v326 = vunpack.c.h.b16 %v315
    %v327 = vunpack.c.l.b16 %v316
    %v328 = vunpack.c.h.b16 %v316
    %v329 = vpack.c.b16 %v321, %v321
    %v330 = vpack.c.b16 %v322, %v322
    %v331 = vpack.c.b16 %v323, %v323
    %v332 = vpack.c.b16 %v324, %v324
    %v333 = vpack.c.b16 %v325, %v325
    %v334 = vpack.c.b16 %v326, %v326
    %v335 = vpack.c.b16 %v327, %v327
    %v336 = vpack.c.b16 %v328, %v328
    %vm345 = vcmask 257024
    %346 = vst.msk [vmem:[%s5] sm:$0xf] %vm345, %v329
    %347 = vst.msk [vmem:[%s5 + $0x4] sm:$0xf] %vm345, %v330
    %348 = vst.msk [vmem:[%s5 + $0x8] sm:$0xf] %vm345, %v331
    %349 = vst.msk [vmem:[%s5 + $0xc] sm:$0xf] %vm345, %v332
    %350 = vst.msk [vmem:[%s5 + $0x10] sm:$0xf] %vm345, %v333
    %351 = vst.msk [vmem:[%s5 + $0x14] sm:$0xf] %vm345, %v334
    %352 = vst.msk [vmem:[%s5 + $0x18] sm:$0xf] %vm345, %v335
    %353 = vst.msk [vmem:[%s5 + $0x1c] sm:$0xf] %vm345, %v336
    // Predicated region
    $region38: #{unet_forward.12} parent=1 // pred_check
      _
    $region39: #{unet_forward.12} parent=1 // pred_check_branch
      %355 = sbr.rel (0) target = $region41
    $region40: #{unet_forward.12} parent=1 // pred_region
      _
    $region41: #{unet_forward.12} parent=1 // pred_fallthru
      _
    // Predicated region
    $region42: #{unet_forward.12} parent=1 // pred_check
      _
    $region43: #{unet_forward.12} parent=1 // pred_check_branch
      %357 = sbr.rel (0) target = $region45
    $region44: #{unet_forward.12} parent=1 // pred_region
      _
    $region45: #{unet_forward.12} parent=1 // pred_fallthru
      _
    %358 = vsyncpa [#allocation3], 1
    %359 = vsyncpa [#allocation5], 1
    %360 = vsyncpa [#allocation8], 1

// kernel: unet_forward.13
$region0: #{unet_forward.13}
  #allocation0 [shape = 'u32[]', space=smem, size = 0x4, offset = 0x4, fixed_abs, tag = 'smem constant byte address 0x4 - core index']
  #allocation1 [shape = 'u32[144,128]{1,0:T(1,128)}', space=vmem, size = 0x12000, scoped, tag = 'internal scratch']
  %s0 = inlined_call_operand.vmem [shape: bf16[32,64], index: 0, kind: input, shape index: {}]
  %s1 = inlined_call_operand.hbm [shape: bf16[64,64], index: 1, kind: input, shape index: {}]
  %s2 = inlined_call_operand.hbm [shape: f32[1,64], index: 2, kind: input, shape index: {}]
  %s3 = inlined_call_operand.hbm [shape: bf16[64,64], index: 3, kind: input, shape index: {}]
  %s4 = inlined_call_operand.hbm [shape: f32[1,64], index: 4, kind: input, shape index: {}]
  %s5 = inlined_call_operand.vmem [shape: bf16[32,64], index: 5, kind: output, shape index: {}]
  %s6 = sld [smem:[#allocation0]]
  $region46: #{unet_forward.13} parent=0
    _
  %s8 = ssub.s32 1, %s6
  %s9 = scalar_select 0, %s8, %s6
  $region1: #{unet_forward.13} parent=0
    #allocation2 [shape = 'u8[16384]{0}', space=vmem, size = 0x4000, scoped, tag = 'input window, operand 1, single buffered']
    #allocation3 [shape = 's32[1]{0}', space=sflag, size = 0x4, scoped, tag = 'scoped memory for unet_forward.13']
    #allocation4 [shape = 'u8[512]{0}', space=vmem, size = 0x400, scoped, tag = 'input window, operand 2, single buffered']
    #allocation5 [shape = 's32[1]{0}', space=sflag, size = 0x4, scoped, tag = 'scoped memory for unet_forward.13']
    #allocation6 [shape = 'u8[16384]{0}', space=vmem, size = 0x4000, scoped, tag = 'input window, operand 3, single buffered']
    #allocation7 [shape = 'u8[512]{0}', space=vmem, size = 0x400, scoped, tag = 'input window, operand 4, single buffered']
    #allocation8 [shape = 's32[1]{0}', space=sflag, size = 0x4, scoped, tag = 'scoped memory for unet_forward.13']
    %10 = vsyncpa [#allocation3], 0
    %11 = vsyncpa [#allocation5], 0
    %12 = vsyncpa [#allocation8], 0
    // Predicated region
    $region2: #{unet_forward.13} parent=1 // pred_check
      _
    $region3: #{unet_forward.13} parent=1 // pred_check_branch
      %14 = sbr.rel (0) target = $region5
    $region4: #{unet_forward.13} parent=1 // pred_region
      _
    $region5: #{unet_forward.13} parent=1 // pred_fallthru
      _
    // Predicated region
    $region6: #{unet_forward.13} parent=1 // pred_check
      _
    $region7: #{unet_forward.13} parent=1 // pred_check_branch
      %16 = sbr.rel (0) target = $region9
    $region8: #{unet_forward.13} parent=1 // pred_region
      %s18 = ssub.s32 512, 512
      %19 = vsyncadd [#allocation3], %s18
      %s20 = sshll.u32 [#allocation2], 4
      %s21 = int_to_ptr.vmem [resolvable:$true] %s20
      %26 = dma.hbm_to_vmem [thread:$0]  %s1, 512, %s21, [#allocation3], 64, 64, 4
    $region9: #{unet_forward.13} parent=1 // pred_fallthru
      _
    // Predicated region
    $region10: #{unet_forward.13} parent=1 // pred_check
      _
    $region11: #{unet_forward.13} parent=1 // pred_check_branch
      %28 = sbr.rel (0) target = $region13
    $region12: #{unet_forward.13} parent=1 // pred_region
      %s30 = ssub.s32 16, 16
      %31 = vsyncadd [#allocation5], %s30
      %s33 = sshll.u32 [#allocation4], 4
      %s34 = int_to_ptr.vmem [resolvable:$true] %s33
      %36 = dma.hbm_to_vmem [thread:$0]  %s2, 16, %s34, [#allocation5]
    $region13: #{unet_forward.13} parent=1 // pred_fallthru
      _
    // Predicated region
    $region14: #{unet_forward.13} parent=1 // pred_check
      _
    $region15: #{unet_forward.13} parent=1 // pred_check_branch
      %38 = sbr.rel (0) target = $region17
    $region16: #{unet_forward.13} parent=1 // pred_region
      %s40 = ssub.s32 512, 512
      %41 = vsyncadd [#allocation5], %s40
      %s42 = sshll.u32 [#allocation6], 4
      %s43 = int_to_ptr.vmem [resolvable:$true] %s42
      %48 = dma.hbm_to_vmem [thread:$0]  %s3, 512, %s43, [#allocation5], 64, 64, 4
    $region17: #{unet_forward.13} parent=1 // pred_fallthru
      _
    // Predicated region
    $region18: #{unet_forward.13} parent=1 // pred_check
      _
    $region19: #{unet_forward.13} parent=1 // pred_check_branch
      %50 = sbr.rel (0) target = $region21
    $region20: #{unet_forward.13} parent=1 // pred_region
      %s52 = ssub.s32 16, 16
      %53 = vsyncadd [#allocation8], %s52
      %s55 = sshll.u32 [#allocation7], 4
      %s56 = int_to_ptr.vmem [resolvable:$true] %s55
      %58 = dma.hbm_to_vmem [thread:$0]  %s4, 16, %s56, [#allocation8]
    $region21: #{unet_forward.13} parent=1 // pred_fallthru
      _
    // Predicated region
    $region22: #{unet_forward.13} parent=1 // pred_check
      _
    $region23: #{unet_forward.13} parent=1 // pred_check_branch
      %60 = sbr.rel (0) target = $region25
    $region24: #{unet_forward.13} parent=1 // pred_region
      %61 = dma.done [#allocation3], 512
    $region25: #{unet_forward.13} parent=1 // pred_fallthru
      _
    // Predicated region
    $region26: #{unet_forward.13} parent=1 // pred_check
      _
    $region27: #{unet_forward.13} parent=1 // pred_check_branch
      %63 = sbr.rel (0) target = $region29
    $region28: #{unet_forward.13} parent=1 // pred_region
      %64 = dma.done [#allocation5], 16
    $region29: #{unet_forward.13} parent=1 // pred_fallthru
      _
    // Predicated region
    $region30: #{unet_forward.13} parent=1 // pred_check
      _
    $region31: #{unet_forward.13} parent=1 // pred_check_branch
      %66 = sbr.rel (0) target = $region33
    $region32: #{unet_forward.13} parent=1 // pred_region
      %67 = dma.done [#allocation5], 512
    $region33: #{unet_forward.13} parent=1 // pred_fallthru
      _
    // Predicated region
    $region34: #{unet_forward.13} parent=1 // pred_check
      _
    $region35: #{unet_forward.13} parent=1 // pred_check_branch
      %69 = sbr.rel (0) target = $region37
    $region36: #{unet_forward.13} parent=1 // pred_region
      %70 = dma.done [#allocation8], 16
    $region37: #{unet_forward.13} parent=1 // pred_fallthru
      _
    %v72 = vld [vmem:[%s0] sm:$0xf]
    %v73 = vld [vmem:[%s0 + $0x4] sm:$0xf]
    %v74 = vld [vmem:[%s0 + $0x8] sm:$0xf]
    %v75 = vld [vmem:[%s0 + $0xc] sm:$0xf]
    %v76 = vld [vmem:[#allocation2] sm:$0xf]
    %v77 = vld [vmem:[#allocation2 + $0x4] sm:$0xf]
    %v78 = vld [vmem:[#allocation2 + $0x8] sm:$0xf]
    %v79 = vld [vmem:[#allocation2 + $0xc] sm:$0xf]
    %v80 = vld [vmem:[#allocation2 + $0x10] sm:$0xf]
    %v81 = vld [vmem:[#allocation2 + $0x14] sm:$0xf]
    %v82 = vld [vmem:[#allocation2 + $0x18] sm:$0xf]
    %v83 = vld [vmem:[#allocation2 + $0x1c] sm:$0xf]
    %v84 = vld [vmem:[#allocation4] sm:$0x1]
    %v86 = vlaneseq
    %v87 = vshrl.u32 %v86, 7
    %v88 = vsub.s32 0, %v87
    %v89 = vrot.slane %v84, %v88
    %v95 = vunpack.c.l.b16 %v72
    %v96 = vunpack.c.l.b16 %v73
    %v97 = vunpack.c.l.b16 %v74
    %v98 = vunpack.c.l.b16 %v75
    %v99 = vpack.c.b16 %v96, %v95
    %v100 = vpack.c.b16 %v98, %v97
    %v109 = vunpack.c.l.b16 %v76
    %v110 = vunpack.c.l.b16 %v77
    %v111 = vunpack.c.l.b16 %v78
    %v112 = vunpack.c.l.b16 %v79
    %v113 = vunpack.c.l.b16 %v80
    %v114 = vunpack.c.l.b16 %v81
    %v115 = vunpack.c.l.b16 %v82
    %v116 = vunpack.c.l.b16 %v83
    %v117 = vpack.c.b16 %v110, %v109
    %v118 = vpack.c.b16 %v112, %v111
    %v119 = vpack.c.b16 %v114, %v113
    %v120 = vpack.c.b16 %v116, %v115
    %vm125 = vcmask 523264
    %v127 = vsel %vm125, %v99, 0
    %v130 = vsel %vm125, %v100, 0
    %132 = vmatprep.subr.bf16.mxu0 0
    %133 = vmatpush1.bf16.msra.mxu0 %v117
    %134 = vmatprep.subr.bf16.mxu0 0
    %135 = vmatpush1.bf16.msra.mxu0 %v118
    %136 = vmatprep.subr.bf16.mxu0 0
    %137 = vmatpush1.bf16.msra.mxu0 %v119
    %138 = vmatprep.subr.bf16.mxu0 0
    %139 = vmatpush1.bf16.msra.mxu0 %v120
    %140 = vmatprep.subr.bf16.mxu0 0
    %141 = vmatpush1.bf16.msra.mxu0 0
    %142 = vmatprep.subr.bf16.mxu0 0
    %143 = vmatpush1.bf16.msra.mxu0 0
    %144 = vmatprep.subr.bf16.mxu0 0
    %145 = vmatpush1.bf16.msra.mxu0 0
    %146 = vmatprep.subr.bf16.mxu0 0
    %147 = vmatpush1.bf16.msra.mxu0 0
    %148 = vmatprep.subr.bf16.mxu0 0
    %149 = vmatpush1.bf16.msra.mxu0 0
    %150 = vmatprep.subr.bf16.mxu0 0
    %151 = vmatpush1.bf16.msra.mxu0 0
    %152 = vmatprep.subr.bf16.mxu0 0
    %153 = vmatpush1.bf16.msra.mxu0 0
    %154 = vmatprep.subr.bf16.mxu0 0
    %155 = vmatpush1.bf16.msra.mxu0 0
    %156 = vmatprep.subr.bf16.mxu0 0
    %157 = vmatpush1.bf16.msra.mxu0 0
    %158 = vmatprep.subr.bf16.mxu0 0
    %159 = vmatpush1.bf16.msra.mxu0 0
    %160 = vmatprep.subr.bf16.mxu0 0
    %161 = vmatpush1.bf16.msra.mxu0 0
    %162 = vmatprep.subr.bf16.mxu0 0
    %163 = vmatpush1.bf16.msra.mxu0 0
    %164 = vmatprep.mubr.bf16.mxu0 0
    %165 = vmatmul.mubr.bf16.gmra.mrb[0].mxu0 %v127
    %v166 = vpop.f32.mrb[0].mxu0
    %v167 = vadd.f32 %v89, %v166
    %v168 = vpop.f32.mrb[0].mxu0
    %v169 = vpop.f32.mrb[0].mxu0
    %v170 = vadd.f32 %v89, %v169
    %v171 = vpop.f32.mrb[0].mxu0
    %172 = vmatprep.mubr.bf16.mxu0 0
    %173 = vmatmul.mubr.bf16.gmra.mrb[0].mxu0 %v130
    %v174 = vpop.f32.mrb[0].mxu0
    %v175 = vadd.f32 %v89, %v174
    %v176 = vpop.f32.mrb[0].mxu0
    %v177 = vpop.f32.mrb[0].mxu0
    %v178 = vadd.f32 %v89, %v177
    %v179 = vpop.f32.mrb[0].mxu0
    %180 = vdwg.mxu0
    %v181 = vpack.c.bf16 %v170, %v167
    %v182 = vpack.c.bf16 %v178, %v175
    %v183 = vld [vmem:[#allocation6] sm:$0xf]
    %v184 = vld [vmem:[#allocation6 + $0x4] sm:$0xf]
    %v185 = vld [vmem:[#allocation6 + $0x8] sm:$0xf]
    %v186 = vld [vmem:[#allocation6 + $0xc] sm:$0xf]
    %v187 = vld [vmem:[#allocation6 + $0x10] sm:$0xf]
    %v188 = vld [vmem:[#allocation6 + $0x14] sm:$0xf]
    %v189 = vld [vmem:[#allocation6 + $0x18] sm:$0xf]
    %v190 = vld [vmem:[#allocation6 + $0x1c] sm:$0xf]
    %v191 = vld [vmem:[#allocation7] sm:$0x1]
    %v193 = vlaneseq
    %v194 = vshrl.u32 %v193, 7
    %v195 = vsub.s32 0, %v194
    %v196 = vrot.slane %v191, %v195
    %v206 = vunpack.c.l.b16 %v183
    %v207 = vunpack.c.l.b16 %v184
    %v208 = vunpack.c.l.b16 %v185
    %v209 = vunpack.c.l.b16 %v186
    %v210 = vunpack.c.l.b16 %v187
    %v211 = vunpack.c.l.b16 %v188
    %v212 = vunpack.c.l.b16 %v189
    %v213 = vunpack.c.l.b16 %v190
    %v214 = vpack.c.b16 %v207, %v206
    %v215 = vpack.c.b16 %v209, %v208
    %v216 = vpack.c.b16 %v211, %v210
    %v217 = vpack.c.b16 %v213, %v212
    %v223 = vsel %vm125, %v181, 0
    %v226 = vsel %vm125, %v182, 0
    %228 = vmatprep.subr.bf16.mxu0 0
    %229 = vmatpush1.bf16.msra.mxu0 %v214
    %230 = vmatprep.subr.bf16.mxu0 0
    %231 = vmatpush1.bf16.msra.mxu0 %v215
    %232 = vmatprep.subr.bf16.mxu0 0
    %233 = vmatpush1.bf16.msra.mxu0 %v216
    %234 = vmatprep.subr.bf16.mxu0 0
    %235 = vmatpush1.bf16.msra.mxu0 %v217
    %236 = vmatprep.subr.bf16.mxu0 0
    %237 = vmatpush1.bf16.msra.mxu0 0
    %238 = vmatprep.subr.bf16.mxu0 0
    %239 = vmatpush1.bf16.msra.mxu0 0
    %240 = vmatprep.subr.bf16.mxu0 0
    %241 = vmatpush1.bf16.msra.mxu0 0
    %242 = vmatprep.subr.bf16.mxu0 0
    %243 = vmatpush1.bf16.msra.mxu0 0
    %244 = vmatprep.subr.bf16.mxu0 0
    %245 = vmatpush1.bf16.msra.mxu0 0
    %246 = vmatprep.subr.bf16.mxu0 0
    %247 = vmatpush1.bf16.msra.mxu0 0
    %248 = vmatprep.subr.bf16.mxu0 0
    %249 = vmatpush1.bf16.msra.mxu0 0
    %250 = vmatprep.subr.bf16.mxu0 0
    %251 = vmatpush1.bf16.msra.mxu0 0
    %252 = vmatprep.subr.bf16.mxu0 0
    %253 = vmatpush1.bf16.msra.mxu0 0
    %254 = vmatprep.subr.bf16.mxu0 0
    %255 = vmatpush1.bf16.msra.mxu0 0
    %256 = vmatprep.subr.bf16.mxu0 0
    %257 = vmatpush1.bf16.msra.mxu0 0
    %258 = vmatprep.subr.bf16.mxu0 0
    %259 = vmatpush1.bf16.msra.mxu0 0
    %260 = vmatprep.mubr.bf16.mxu0 0
    %261 = vmatmul.mubr.bf16.gmra.mrb[0].mxu0 %v223
    %v262 = vpop.f32.mrb[0].mxu0
    %v263 = vadd.f32 %v196, %v262
    %v264 = vpop.f32.mrb[0].mxu0
    %v265 = vpop.f32.mrb[0].mxu0
    %v266 = vadd.f32 %v196, %v265
    %v267 = vpop.f32.mrb[0].mxu0
    %268 = vmatprep.mubr.bf16.mxu0 0
    %269 = vmatmul.mubr.bf16.gmra.mrb[0].mxu0 %v226
    %v270 = vpop.f32.mrb[0].mxu0
    %v271 = vadd.f32 %v196, %v270
    %v272 = vpop.f32.mrb[0].mxu0
    %v273 = vpop.f32.mrb[0].mxu0
    %v274 = vadd.f32 %v196, %v273
    %v275 = vpop.f32.mrb[0].mxu0
    %276 = vdwg.mxu0
    %v277 = vmax.f32 %v263, 0.0
    %v278 = vmax.f32 %v266, 0.0
    %v279 = vmax.f32 %v271, 0.0
    %v280 = vmax.f32 %v274, 0.0
    %v281 = vpack.c.bf16 %v278, %v277
    %v282 = vpack.c.bf16 %v280, %v279
    %v285 = vunpack.c.l.b16 %v281
    %v286 = vunpack.c.h.b16 %v281
    %v287 = vunpack.c.l.b16 %v282
    %v288 = vunpack.c.h.b16 %v282
    %v289 = vpack.c.b16 %v285, %v285
    %v290 = vpack.c.b16 %v286, %v286
    %v291 = vpack.c.b16 %v287, %v287
    %v292 = vpack.c.b16 %v288, %v288
    %vm297 = vcmask 519168
    %298 = vst.msk [vmem:[%s5] sm:$0xf] %vm297, %v289
    %299 = vst.msk [vmem:[%s5 + $0x4] sm:$0xf] %vm297, %v290
    %300 = vst.msk [vmem:[%s5 + $0x8] sm:$0xf] %vm297, %v291
    %301 = vst.msk [vmem:[%s5 + $0xc] sm:$0xf] %vm297, %v292
    // Predicated region
    $region38: #{unet_forward.13} parent=1 // pred_check
      _
    $region39: #{unet_forward.13} parent=1 // pred_check_branch
      %303 = sbr.rel (0) target = $region41
    $region40: #{unet_forward.13} parent=1 // pred_region
      _
    $region41: #{unet_forward.13} parent=1 // pred_fallthru
      _
    // Predicated region
    $region42: #{unet_forward.13} parent=1 // pred_check
      _
    $region43: #{unet_forward.13} parent=1 // pred_check_branch
      %305 = sbr.rel (0) target = $region45
    $region44: #{unet_forward.13} parent=1 // pred_region
      _
    $region45: #{unet_forward.13} parent=1 // pred_fallthru
      _
    %306 = vsyncpa [#allocation3], 1
    %307 = vsyncpa [#allocation5], 1
    %308 = vsyncpa [#allocation8], 1

// kernel: unet_forward.14
$region0: #{unet_forward.14}
  #allocation0 [shape = 'u32[]', space=smem, size = 0x4, offset = 0x4, fixed_abs, tag = 'smem constant byte address 0x4 - core index']
  #allocation1 [shape = 'u32[144,128]{1,0:T(1,128)}', space=vmem, size = 0x12000, scoped, tag = 'internal scratch']
  %s0 = inlined_call_operand.vmem [shape: bf16[16,128], index: 0, kind: input, shape index: {}]
  %s1 = inlined_call_operand.hbm [shape: bf16[128,128], index: 1, kind: input, shape index: {}]
  %s2 = inlined_call_operand.hbm [shape: f32[1,128], index: 2, kind: input, shape index: {}]
  %s3 = inlined_call_operand.hbm [shape: bf16[128,128], index: 3, kind: input, shape index: {}]
  %s4 = inlined_call_operand.hbm [shape: f32[1,128], index: 4, kind: input, shape index: {}]
  %s5 = inlined_call_operand.vmem [shape: bf16[16,128], index: 5, kind: output, shape index: {}]
  %s6 = sld [smem:[#allocation0]]
  $region46: #{unet_forward.14} parent=0
    _
  %s8 = ssub.s32 1, %s6
  %s9 = scalar_select 0, %s8, %s6
  $region1: #{unet_forward.14} parent=0
    #allocation2 [shape = 'u8[32768]{0}', space=vmem, size = 0x8000, scoped, tag = 'input window, operand 1, single buffered']
    #allocation3 [shape = 's32[1]{0}', space=sflag, size = 0x4, scoped, tag = 'scoped memory for unet_forward.14']
    #allocation4 [shape = 'u8[512]{0}', space=vmem, size = 0x400, scoped, tag = 'input window, operand 2, single buffered']
    #allocation5 [shape = 's32[1]{0}', space=sflag, size = 0x4, scoped, tag = 'scoped memory for unet_forward.14']
    #allocation6 [shape = 'u8[32768]{0}', space=vmem, size = 0x8000, scoped, tag = 'input window, operand 3, single buffered']
    #allocation7 [shape = 'u8[512]{0}', space=vmem, size = 0x400, scoped, tag = 'input window, operand 4, single buffered']
    #allocation8 [shape = 's32[1]{0}', space=sflag, size = 0x4, scoped, tag = 'scoped memory for unet_forward.14']
    %10 = vsyncpa [#allocation3], 0
    %11 = vsyncpa [#allocation5], 0
    %12 = vsyncpa [#allocation8], 0
    // Predicated region
    $region2: #{unet_forward.14} parent=1 // pred_check
      _
    $region3: #{unet_forward.14} parent=1 // pred_check_branch
      %14 = sbr.rel (0) target = $region5
    $region4: #{unet_forward.14} parent=1 // pred_region
      _
    $region5: #{unet_forward.14} parent=1 // pred_fallthru
      _
    // Predicated region
    $region6: #{unet_forward.14} parent=1 // pred_check
      _
    $region7: #{unet_forward.14} parent=1 // pred_check_branch
      %16 = sbr.rel (0) target = $region9
    $region8: #{unet_forward.14} parent=1 // pred_region
      %s18 = ssub.s32 1024, 1024
      %19 = vsyncadd [#allocation3], %s18
      %s20 = sshll.u32 [#allocation2], 4
      %s21 = int_to_ptr.vmem [resolvable:$true] %s20
      %26 = dma.hbm_to_vmem [thread:$0]  %s1, 1024, %s21, [#allocation3], 64, 64, 4
    $region9: #{unet_forward.14} parent=1 // pred_fallthru
      _
    // Predicated region
    $region10: #{unet_forward.14} parent=1 // pred_check
      _
    $region11: #{unet_forward.14} parent=1 // pred_check_branch
      %28 = sbr.rel (0) target = $region13
    $region12: #{unet_forward.14} parent=1 // pred_region
      %s30 = ssub.s32 16, 16
      %31 = vsyncadd [#allocation5], %s30
      %s33 = sshll.u32 [#allocation4], 4
      %s34 = int_to_ptr.vmem [resolvable:$true] %s33
      %36 = dma.hbm_to_vmem [thread:$0]  %s2, 16, %s34, [#allocation5]
    $region13: #{unet_forward.14} parent=1 // pred_fallthru
      _
    // Predicated region
    $region14: #{unet_forward.14} parent=1 // pred_check
      _
    $region15: #{unet_forward.14} parent=1 // pred_check_branch
      %38 = sbr.rel (0) target = $region17
    $region16: #{unet_forward.14} parent=1 // pred_region
      %s40 = ssub.s32 1024, 1024
      %41 = vsyncadd [#allocation5], %s40
      %s42 = sshll.u32 [#allocation6], 4
      %s43 = int_to_ptr.vmem [resolvable:$true] %s42
      %48 = dma.hbm_to_vmem [thread:$0]  %s3, 1024, %s43, [#allocation5], 64, 64, 4
    $region17: #{unet_forward.14} parent=1 // pred_fallthru
      _
    // Predicated region
    $region18: #{unet_forward.14} parent=1 // pred_check
      _
    $region19: #{unet_forward.14} parent=1 // pred_check_branch
      %50 = sbr.rel (0) target = $region21
    $region20: #{unet_forward.14} parent=1 // pred_region
      %s52 = ssub.s32 16, 16
      %53 = vsyncadd [#allocation8], %s52
      %s55 = sshll.u32 [#allocation7], 4
      %s56 = int_to_ptr.vmem [resolvable:$true] %s55
      %58 = dma.hbm_to_vmem [thread:$0]  %s4, 16, %s56, [#allocation8]
    $region21: #{unet_forward.14} parent=1 // pred_fallthru
      _
    // Predicated region
    $region22: #{unet_forward.14} parent=1 // pred_check
      _
    $region23: #{unet_forward.14} parent=1 // pred_check_branch
      %60 = sbr.rel (0) target = $region25
    $region24: #{unet_forward.14} parent=1 // pred_region
      %61 = dma.done [#allocation3], 1024
    $region25: #{unet_forward.14} parent=1 // pred_fallthru
      _
    // Predicated region
    $region26: #{unet_forward.14} parent=1 // pred_check
      _
    $region27: #{unet_forward.14} parent=1 // pred_check_branch
      %63 = sbr.rel (0) target = $region29
    $region28: #{unet_forward.14} parent=1 // pred_region
      %64 = dma.done [#allocation5], 16
    $region29: #{unet_forward.14} parent=1 // pred_fallthru
      _
    // Predicated region
    $region30: #{unet_forward.14} parent=1 // pred_check
      _
    $region31: #{unet_forward.14} parent=1 // pred_check_branch
      %66 = sbr.rel (0) target = $region33
    $region32: #{unet_forward.14} parent=1 // pred_region
      %67 = dma.done [#allocation5], 1024
    $region33: #{unet_forward.14} parent=1 // pred_fallthru
      _
    // Predicated region
    $region34: #{unet_forward.14} parent=1 // pred_check
      _
    $region35: #{unet_forward.14} parent=1 // pred_check_branch
      %69 = sbr.rel (0) target = $region37
    $region36: #{unet_forward.14} parent=1 // pred_region
      %70 = dma.done [#allocation8], 16
    $region37: #{unet_forward.14} parent=1 // pred_fallthru
      _
    %v72 = vld [vmem:[%s0] sm:$0xf]
    %v73 = vld [vmem:[%s0 + $0x4] sm:$0xf]
    %v74 = vld [vmem:[#allocation2] sm:$0xf]
    %v75 = vld [vmem:[#allocation2 + $0x4] sm:$0xf]
    %v76 = vld [vmem:[#allocation2 + $0x8] sm:$0xf]
    %v77 = vld [vmem:[#allocation2 + $0xc] sm:$0xf]
    %v78 = vld [vmem:[#allocation2 + $0x10] sm:$0xf]
    %v79 = vld [vmem:[#allocation2 + $0x14] sm:$0xf]
    %v80 = vld [vmem:[#allocation2 + $0x18] sm:$0xf]
    %v81 = vld [vmem:[#allocation2 + $0x1c] sm:$0xf]
    %v82 = vld [vmem:[#allocation2 + $0x20] sm:$0xf]
    %v83 = vld [vmem:[#allocation2 + $0x24] sm:$0xf]
    %v84 = vld [vmem:[#allocation2 + $0x28] sm:$0xf]
    %v85 = vld [vmem:[#allocation2 + $0x2c] sm:$0xf]
    %v86 = vld [vmem:[#allocation2 + $0x30] sm:$0xf]
    %v87 = vld [vmem:[#allocation2 + $0x34] sm:$0xf]
    %v88 = vld [vmem:[#allocation2 + $0x38] sm:$0xf]
    %v89 = vld [vmem:[#allocation2 + $0x3c] sm:$0xf]
    %v90 = vld [vmem:[#allocation4] sm:$0x1]
    %v92 = vlaneseq
    %v93 = vshrl.u32 %v92, 7
    %v94 = vsub.s32 0, %v93
    %v95 = vrot.slane %v90, %v94
    %v99 = vunpack.c.l.b16 %v72
    %v100 = vunpack.c.l.b16 %v73
    %v101 = vpack.c.b16 %v100, %v99
    %v119 = vunpack.c.l.b16 %v74
    %v120 = vunpack.c.l.b16 %v75
    %v121 = vunpack.c.l.b16 %v76
    %v122 = vunpack.c.l.b16 %v77
    %v123 = vunpack.c.l.b16 %v78
    %v124 = vunpack.c.l.b16 %v79
    %v125 = vunpack.c.l.b16 %v80
    %v126 = vunpack.c.l.b16 %v81
    %v127 = vunpack.c.l.b16 %v82
    %v128 = vunpack.c.l.b16 %v83
    %v129 = vunpack.c.l.b16 %v84
    %v130 = vunpack.c.l.b16 %v85
    %v131 = vunpack.c.l.b16 %v86
    %v132 = vunpack.c.l.b16 %v87
    %v133 = vunpack.c.l.b16 %v88
    %v134 = vunpack.c.l.b16 %v89
    %v135 = vpack.c.b16 %v120, %v119
    %v136 = vpack.c.b16 %v122, %v121
    %v137 = vpack.c.b16 %v124, %v123
    %v138 = vpack.c.b16 %v126, %v125
    %v139 = vpack.c.b16 %v128, %v127
    %v140 = vpack.c.b16 %v130, %v129
    %v141 = vpack.c.b16 %v132, %v131
    %v142 = vpack.c.b16 %v134, %v133
    %151 = vmatprep.subr.bf16.mxu0 0
    %152 = vmatpush1.bf16.msra.mxu0 %v135
    %153 = vmatprep.subr.bf16.mxu0 0
    %154 = vmatpush1.bf16.msra.mxu0 %v136
    %155 = vmatprep.subr.bf16.mxu0 0
    %156 = vmatpush1.bf16.msra.mxu0 %v137
    %157 = vmatprep.subr.bf16.mxu0 0
    %158 = vmatpush1.bf16.msra.mxu0 %v138
    %159 = vmatprep.subr.bf16.mxu0 0
    %160 = vmatpush1.bf16.msra.mxu0 %v139
    %161 = vmatprep.subr.bf16.mxu0 0
    %162 = vmatpush1.bf16.msra.mxu0 %v140
    %163 = vmatprep.subr.bf16.mxu0 0
    %164 = vmatpush1.bf16.msra.mxu0 %v141
    %165 = vmatprep.subr.bf16.mxu0 0
    %166 = vmatpush1.bf16.msra.mxu0 %v142
    %167 = vmatprep.subr.bf16.mxu0 0
    %168 = vmatpush1.bf16.msra.mxu0 0
    %169 = vmatprep.subr.bf16.mxu0 0
    %170 = vmatpush1.bf16.msra.mxu0 0
    %171 = vmatprep.subr.bf16.mxu0 0
    %172 = vmatpush1.bf16.msra.mxu0 0
    %173 = vmatprep.subr.bf16.mxu0 0
    %174 = vmatpush1.bf16.msra.mxu0 0
    %175 = vmatprep.subr.bf16.mxu0 0
    %176 = vmatpush1.bf16.msra.mxu0 0
    %177 = vmatprep.subr.bf16.mxu0 0
    %178 = vmatpush1.bf16.msra.mxu0 0
    %179 = vmatprep.subr.bf16.mxu0 0
    %180 = vmatpush1.bf16.msra.mxu0 0
    %181 = vmatprep.subr.bf16.mxu0 0
    %182 = vmatpush1.bf16.msra.mxu0 0
    %183 = vmatprep.mubr.bf16.mxu0 0
    %184 = vmatmul.mubr.bf16.gmra.mrb[0].mxu0 %v101
    %v185 = vpop.f32.mrb[0].mxu0
    %v186 = vadd.f32 %v95, %v185
    %v187 = vpop.f32.mrb[0].mxu0
    %v188 = vpop.f32.mrb[0].mxu0
    %v189 = vadd.f32 %v95, %v188
    %v190 = vpop.f32.mrb[0].mxu0
    %191 = vdwg.mxu0
    %v192 = vpack.c.bf16 %v189, %v186
    %v193 = vld [vmem:[#allocation6] sm:$0xf]
    %v194 = vld [vmem:[#allocation6 + $0x4] sm:$0xf]
    %v195 = vld [vmem:[#allocation6 + $0x8] sm:$0xf]
    %v196 = vld [vmem:[#allocation6 + $0xc] sm:$0xf]
    %v197 = vld [vmem:[#allocation6 + $0x10] sm:$0xf]
    %v198 = vld [vmem:[#allocation6 + $0x14] sm:$0xf]
    %v199 = vld [vmem:[#allocation6 + $0x18] sm:$0xf]
    %v200 = vld [vmem:[#allocation6 + $0x1c] sm:$0xf]
    %v201 = vld [vmem:[#allocation6 + $0x20] sm:$0xf]
    %v202 = vld [vmem:[#allocation6 + $0x24] sm:$0xf]
    %v203 = vld [vmem:[#allocation6 + $0x28] sm:$0xf]
    %v204 = vld [vmem:[#allocation6 + $0x2c] sm:$0xf]
    %v205 = vld [vmem:[#allocation6 + $0x30] sm:$0xf]
    %v206 = vld [vmem:[#allocation6 + $0x34] sm:$0xf]
    %v207 = vld [vmem:[#allocation6 + $0x38] sm:$0xf]
    %v208 = vld [vmem:[#allocation6 + $0x3c] sm:$0xf]
    %v209 = vld [vmem:[#allocation7] sm:$0x1]
    %v211 = vlaneseq
    %v212 = vshrl.u32 %v211, 7
    %v213 = vsub.s32 0, %v212
    %v214 = vrot.slane %v209, %v213
    %v232 = vunpack.c.l.b16 %v193
    %v233 = vunpack.c.l.b16 %v194
    %v234 = vunpack.c.l.b16 %v195
    %v235 = vunpack.c.l.b16 %v196
    %v236 = vunpack.c.l.b16 %v197
    %v237 = vunpack.c.l.b16 %v198
    %v238 = vunpack.c.l.b16 %v199
    %v239 = vunpack.c.l.b16 %v200
    %v240 = vunpack.c.l.b16 %v201
    %v241 = vunpack.c.l.b16 %v202
    %v242 = vunpack.c.l.b16 %v203
    %v243 = vunpack.c.l.b16 %v204
    %v244 = vunpack.c.l.b16 %v205
    %v245 = vunpack.c.l.b16 %v206
    %v246 = vunpack.c.l.b16 %v207
    %v247 = vunpack.c.l.b16 %v208
    %v248 = vpack.c.b16 %v233, %v232
    %v249 = vpack.c.b16 %v235, %v234
    %v250 = vpack.c.b16 %v237, %v236
    %v251 = vpack.c.b16 %v239, %v238
    %v252 = vpack.c.b16 %v241, %v240
    %v253 = vpack.c.b16 %v243, %v242
    %v254 = vpack.c.b16 %v245, %v244
    %v255 = vpack.c.b16 %v247, %v246
    %264 = vmatprep.subr.bf16.mxu0 0
    %265 = vmatpush1.bf16.msra.mxu0 %v248
    %266 = vmatprep.subr.bf16.mxu0 0
    %267 = vmatpush1.bf16.msra.mxu0 %v249
    %268 = vmatprep.subr.bf16.mxu0 0
    %269 = vmatpush1.bf16.msra.mxu0 %v250
    %270 = vmatprep.subr.bf16.mxu0 0
    %271 = vmatpush1.bf16.msra.mxu0 %v251
    %272 = vmatprep.subr.bf16.mxu0 0
    %273 = vmatpush1.bf16.msra.mxu0 %v252
    %274 = vmatprep.subr.bf16.mxu0 0
    %275 = vmatpush1.bf16.msra.mxu0 %v253
    %276 = vmatprep.subr.bf16.mxu0 0
    %277 = vmatpush1.bf16.msra.mxu0 %v254
    %278 = vmatprep.subr.bf16.mxu0 0
    %279 = vmatpush1.bf16.msra.mxu0 %v255
    %280 = vmatprep.subr.bf16.mxu0 0
    %281 = vmatpush1.bf16.msra.mxu0 0
    %282 = vmatprep.subr.bf16.mxu0 0
    %283 = vmatpush1.bf16.msra.mxu0 0
    %284 = vmatprep.subr.bf16.mxu0 0
    %285 = vmatpush1.bf16.msra.mxu0 0
    %286 = vmatprep.subr.bf16.mxu0 0
    %287 = vmatpush1.bf16.msra.mxu0 0
    %288 = vmatprep.subr.bf16.mxu0 0
    %289 = vmatpush1.bf16.msra.mxu0 0
    %290 = vmatprep.subr.bf16.mxu0 0
    %291 = vmatpush1.bf16.msra.mxu0 0
    %292 = vmatprep.subr.bf16.mxu0 0
    %293 = vmatpush1.bf16.msra.mxu0 0
    %294 = vmatprep.subr.bf16.mxu0 0
    %295 = vmatpush1.bf16.msra.mxu0 0
    %296 = vmatprep.mubr.bf16.mxu0 0
    %297 = vmatmul.mubr.bf16.gmra.mrb[0].mxu0 %v192
    %v298 = vpop.f32.mrb[0].mxu0
    %v299 = vadd.f32 %v214, %v298
    %v300 = vpop.f32.mrb[0].mxu0
    %v301 = vpop.f32.mrb[0].mxu0
    %v302 = vadd.f32 %v214, %v301
    %v303 = vpop.f32.mrb[0].mxu0
    %304 = vdwg.mxu0
    %v305 = vmax.f32 %v299, 0.0
    %v306 = vmax.f32 %v302, 0.0
    %v307 = vpack.c.bf16 %v306, %v305
    %v309 = vunpack.c.l.b16 %v307
    %v310 = vunpack.c.h.b16 %v307
    %v311 = vpack.c.b16 %v309, %v309
    %v312 = vpack.c.b16 %v310, %v310
    %315 = vst [vmem:[%s5] sm:$0xf] %v311
    %316 = vst [vmem:[%s5 + $0x4] sm:$0xf] %v312
    // Predicated region
    $region38: #{unet_forward.14} parent=1 // pred_check
      _
    $region39: #{unet_forward.14} parent=1 // pred_check_branch
      %318 = sbr.rel (0) target = $region41
    $region40: #{unet_forward.14} parent=1 // pred_region
      _
    $region41: #{unet_forward.14} parent=1 // pred_fallthru
      _
    // Predicated region
    $region42: #{unet_forward.14} parent=1 // pred_check
      _
    $region43: #{unet_forward.14} parent=1 // pred_check_branch
      %320 = sbr.rel (0) target = $region45
    $region44: #{unet_forward.14} parent=1 // pred_region
      _
    $region45: #{unet_forward.14} parent=1 // pred_fallthru
      _
    %321 = vsyncpa [#allocation3], 1
    %322 = vsyncpa [#allocation5], 1
    %323 = vsyncpa [#allocation8], 1

// kernel: unet_forward.15
$region0: #{unet_forward.15}
  #allocation0 [shape = 'u32[]', space=smem, size = 0x4, offset = 0x4, fixed_abs, tag = 'smem constant byte address 0x4 - core index']
  #allocation1 [shape = 'u32[144,128]{1,0:T(1,128)}', space=vmem, size = 0x12000, scoped, tag = 'internal scratch']
  %s0 = inlined_call_operand.vmem [shape: bf16[8,256], index: 0, kind: input, shape index: {}]
  %s1 = inlined_call_operand.vmem [shape: bf16[256,256], index: 1, kind: input, shape index: {}]
  %s2 = inlined_call_operand.vmem [shape: f32[1,256], index: 2, kind: input, shape index: {}]
  %s3 = inlined_call_operand.vmem [shape: bf16[256,256], index: 3, kind: input, shape index: {}]
  %s4 = inlined_call_operand.vmem [shape: f32[1,256], index: 4, kind: input, shape index: {}]
  %s5 = inlined_call_operand.vmem [shape: bf16[8,256], index: 5, kind: output, shape index: {}]
  %s6 = sld [smem:[#allocation0]]
  $region30: #{unet_forward.15} parent=0
    _
  %s8 = ssub.s32 1, %s6
  %s9 = scalar_select 0, %s8, %s6
  // Predicated region
  $region2: #{unet_forward.15} parent=0 // pred_check
    _
  $region3: #{unet_forward.15} parent=0 // pred_check_branch
    %11 = sbr.rel (0) target = $region5
  $region4: #{unet_forward.15} parent=0 // pred_region
    _
  $region5: #{unet_forward.15} parent=0 // pred_fallthru
    _
  // Predicated region
  $region6: #{unet_forward.15} parent=0 // pred_check
    _
  $region7: #{unet_forward.15} parent=0 // pred_check_branch
    %13 = sbr.rel (0) target = $region9
  $region8: #{unet_forward.15} parent=0 // pred_region
    _
  $region9: #{unet_forward.15} parent=0 // pred_fallthru
    _
  // Predicated region
  $region10: #{unet_forward.15} parent=0 // pred_check
    _
  $region11: #{unet_forward.15} parent=0 // pred_check_branch
    %15 = sbr.rel (0) target = $region13
  $region12: #{unet_forward.15} parent=0 // pred_region
    _
  $region13: #{unet_forward.15} parent=0 // pred_fallthru
    _
  // Predicated region
  $region14: #{unet_forward.15} parent=0 // pred_check
    _
  $region15: #{unet_forward.15} parent=0 // pred_check_branch
    %17 = sbr.rel (0) target = $region17
  $region16: #{unet_forward.15} parent=0 // pred_region
    _
  $region17: #{unet_forward.15} parent=0 // pred_fallthru
    _
  // Predicated region
  $region18: #{unet_forward.15} parent=0 // pred_check
    _
  $region19: #{unet_forward.15} parent=0 // pred_check_branch
    %19 = sbr.rel (0) target = $region21
  $region20: #{unet_forward.15} parent=0 // pred_region
    _
  $region21: #{unet_forward.15} parent=0 // pred_fallthru
    _
  %v20 = vld [vmem:[%s0] sm:$0xff]
  %v21 = vld [vmem:[%s1] sm:$0xff]
  %v22 = vld [vmem:[%s1 + $0x8] sm:$0xff]
  %v23 = vld [vmem:[%s1 + $0x10] sm:$0xff]
  %v24 = vld [vmem:[%s1 + $0x18] sm:$0xff]
  %v25 = vld [vmem:[%s1 + $0x20] sm:$0xff]
  %v26 = vld [vmem:[%s1 + $0x28] sm:$0xff]
  %v27 = vld [vmem:[%s1 + $0x30] sm:$0xff]
  %v28 = vld [vmem:[%s1 + $0x38] sm:$0xff]
  %v29 = vld [vmem:[%s1 + $0x40] sm:$0xff]
  %v30 = vld [vmem:[%s1 + $0x48] sm:$0xff]
  %v31 = vld [vmem:[%s1 + $0x50] sm:$0xff]
  %v32 = vld [vmem:[%s1 + $0x58] sm:$0xff]
  %v33 = vld [vmem:[%s1 + $0x60] sm:$0xff]
  %v34 = vld [vmem:[%s1 + $0x68] sm:$0xff]
  %v35 = vld [vmem:[%s1 + $0x70] sm:$0xff]
  %v36 = vld [vmem:[%s1 + $0x78] sm:$0xff]
  %v37 = vld [vmem:[%s1 + $0x80] sm:$0xff]
  %v38 = vld [vmem:[%s1 + $0x88] sm:$0xff]
  %v39 = vld [vmem:[%s1 + $0x90] sm:$0xff]
  %v40 = vld [vmem:[%s1 + $0x98] sm:$0xff]
  %v41 = vld [vmem:[%s1 + $0xa0] sm:$0xff]
  %v42 = vld [vmem:[%s1 + $0xa8] sm:$0xff]
  %v43 = vld [vmem:[%s1 + $0xb0] sm:$0xff]
  %v44 = vld [vmem:[%s1 + $0xb8] sm:$0xff]
  %v45 = vld [vmem:[%s1 + $0xc0] sm:$0xff]
  %v46 = vld [vmem:[%s1 + $0xc8] sm:$0xff]
  %v47 = vld [vmem:[%s1 + $0xd0] sm:$0xff]
  %v48 = vld [vmem:[%s1 + $0xd8] sm:$0xff]
  %v49 = vld [vmem:[%s1 + $0xe0] sm:$0xff]
  %v50 = vld [vmem:[%s1 + $0xe8] sm:$0xff]
  %v51 = vld [vmem:[%s1 + $0xf0] sm:$0xff]
  %v52 = vld [vmem:[%s1 + $0xf8] sm:$0xff]
  %v53 = vld [vmem:[%s2] sm:$0x3]
  %v55 = vlaneseq
  %v56 = vshrl.u32 %v55, 7
  %v57 = vsub.s32 0, %v56
  %v58 = vrot.slane %v53, %v57
  %v59 = vlaneseq
  %v60 = vshrl.u32 %v59, 7
  %v61 = vsub.s32 1, %v60
  %v62 = vrot.slane %v53, %v61
  %v66 = vunpack.c.l.b16 %v20
  %v67 = vunpack.c.h.b16 %v20
  %v68 = vpack.c.b16 %v66, %v66
  %v69 = vpack.c.b16 %v67, %v67
  %v104 = vunpack.c.l.b16 %v21
  %v105 = vunpack.c.h.b16 %v21
  %v106 = vunpack.c.l.b16 %v22
  %v107 = vunpack.c.h.b16 %v22
  %v108 = vunpack.c.l.b16 %v23
  %v109 = vunpack.c.h.b16 %v23
  %v110 = vunpack.c.l.b16 %v24
  %v111 = vunpack.c.h.b16 %v24
  %v112 = vunpack.c.l.b16 %v25
  %v113 = vunpack.c.h.b16 %v25
  %v114 = vunpack.c.l.b16 %v26
  %v115 = vunpack.c.h.b16 %v26
  %v116 = vunpack.c.l.b16 %v27
  %v117 = vunpack.c.h.b16 %v27
  %v118 = vunpack.c.l.b16 %v28
  %v119 = vunpack.c.h.b16 %v28
  %v120 = vunpack.c.l.b16 %v29
  %v121 = vunpack.c.h.b16 %v29
  %v122 = vunpack.c.l.b16 %v30
  %v123 = vunpack.c.h.b16 %v30
  %v124 = vunpack.c.l.b16 %v31
  %v125 = vunpack.c.h.b16 %v31
  %v126 = vunpack.c.l.b16 %v32
  %v127 = vunpack.c.h.b16 %v32
  %v128 = vunpack.c.l.b16 %v33
  %v129 = vunpack.c.h.b16 %v33
  %v130 = vunpack.c.l.b16 %v34
  %v131 = vunpack.c.h.b16 %v34
  %v132 = vunpack.c.l.b16 %v35
  %v133 = vunpack.c.h.b16 %v35
  %v134 = vunpack.c.l.b16 %v36
  %v135 = vunpack.c.h.b16 %v36
  %v136 = vunpack.c.l.b16 %v37
  %v137 = vunpack.c.h.b16 %v37
  %v138 = vunpack.c.l.b16 %v38
  %v139 = vunpack.c.h.b16 %v38
  %v140 = vunpack.c.l.b16 %v39
  %v141 = vunpack.c.h.b16 %v39
  %v142 = vunpack.c.l.b16 %v40
  %v143 = vunpack.c.h.b16 %v40
  %v144 = vunpack.c.l.b16 %v41
  %v145 = vunpack.c.h.b16 %v41
  %v146 = vunpack.c.l.b16 %v42
  %v147 = vunpack.c.h.b16 %v42
  %v148 = vunpack.c.l.b16 %v43
  %v149 = vunpack.c.h.b16 %v43
  %v150 = vunpack.c.l.b16 %v44
  %v151 = vunpack.c.h.b16 %v44
  %v152 = vunpack.c.l.b16 %v45
  %v153 = vunpack.c.h.b16 %v45
  %v154 = vunpack.c.l.b16 %v46
  %v155 = vunpack.c.h.b16 %v46
  %v156 = vunpack.c.l.b16 %v47
  %v157 = vunpack.c.h.b16 %v47
  %v158 = vunpack.c.l.b16 %v48
  %v159 = vunpack.c.h.b16 %v48
  %v160 = vunpack.c.l.b16 %v49
  %v161 = vunpack.c.h.b16 %v49
  %v162 = vunpack.c.l.b16 %v50
  %v163 = vunpack.c.h.b16 %v50
  %v164 = vunpack.c.l.b16 %v51
  %v165 = vunpack.c.h.b16 %v51
  %v166 = vunpack.c.l.b16 %v52
  %v167 = vunpack.c.h.b16 %v52
  %v168 = vpack.c.b16 %v106, %v104
  %v169 = vpack.c.b16 %v107, %v105
  %v170 = vpack.c.b16 %v110, %v108
  %v171 = vpack.c.b16 %v111, %v109
  %v172 = vpack.c.b16 %v114, %v112
  %v173 = vpack.c.b16 %v115, %v113
  %v174 = vpack.c.b16 %v118, %v116
  %v175 = vpack.c.b16 %v119, %v117
  %v176 = vpack.c.b16 %v122, %v120
  %v177 = vpack.c.b16 %v123, %v121
  %v178 = vpack.c.b16 %v126, %v124
  %v179 = vpack.c.b16 %v127, %v125
  %v180 = vpack.c.b16 %v130, %v128
  %v181 = vpack.c.b16 %v131, %v129
  %v182 = vpack.c.b16 %v134, %v132
  %v183 = vpack.c.b16 %v135, %v133
  %v184 = vpack.c.b16 %v138, %v136
  %v185 = vpack.c.b16 %v139, %v137
  %v186 = vpack.c.b16 %v142, %v140
  %v187 = vpack.c.b16 %v143, %v141
  %v188 = vpack.c.b16 %v146, %v144
  %v189 = vpack.c.b16 %v147, %v145
  %v190 = vpack.c.b16 %v150, %v148
  %v191 = vpack.c.b16 %v151, %v149
  %v192 = vpack.c.b16 %v154, %v152
  %v193 = vpack.c.b16 %v155, %v153
  %v194 = vpack.c.b16 %v158, %v156
  %v195 = vpack.c.b16 %v159, %v157
  %v196 = vpack.c.b16 %v162, %v160
  %v197 = vpack.c.b16 %v163, %v161
  %v198 = vpack.c.b16 %v166, %v164
  %v199 = vpack.c.b16 %v167, %v165
  %232 = vmatprep.subr.bf16.mxu0 %v169
  %233 = vmatpush1.bf16.msra.mxu0 %v168
  %234 = vmatprep.subr.bf16.mxu0 %v171
  %235 = vmatpush1.bf16.msra.mxu0 %v170
  %236 = vmatprep.subr.bf16.mxu0 %v173
  %237 = vmatpush1.bf16.msra.mxu0 %v172
  %238 = vmatprep.subr.bf16.mxu0 %v175
  %239 = vmatpush1.bf16.msra.mxu0 %v174
  %240 = vmatprep.subr.bf16.mxu0 %v177
  %241 = vmatpush1.bf16.msra.mxu0 %v176
  %242 = vmatprep.subr.bf16.mxu0 %v179
  %243 = vmatpush1.bf16.msra.mxu0 %v178
  %244 = vmatprep.subr.bf16.mxu0 %v181
  %245 = vmatpush1.bf16.msra.mxu0 %v180
  %246 = vmatprep.subr.bf16.mxu0 %v183
  %247 = vmatpush1.bf16.msra.mxu0 %v182
  %248 = vmatprep.subr.bf16.mxu0 %v185
  %249 = vmatpush1.bf16.msra.mxu0 %v184
  %250 = vmatprep.subr.bf16.mxu0 %v187
  %251 = vmatpush1.bf16.msra.mxu0 %v186
  %252 = vmatprep.subr.bf16.mxu0 %v189
  %253 = vmatpush1.bf16.msra.mxu0 %v188
  %254 = vmatprep.subr.bf16.mxu0 %v191
  %255 = vmatpush1.bf16.msra.mxu0 %v190
  %256 = vmatprep.subr.bf16.mxu0 %v193
  %257 = vmatpush1.bf16.msra.mxu0 %v192
  %258 = vmatprep.subr.bf16.mxu0 %v195
  %259 = vmatpush1.bf16.msra.mxu0 %v194
  %260 = vmatprep.subr.bf16.mxu0 %v197
  %261 = vmatpush1.bf16.msra.mxu0 %v196
  %262 = vmatprep.subr.bf16.mxu0 %v199
  %263 = vmatpush1.bf16.msra.mxu0 %v198
  %264 = vmatprep.mubr.bf16.mxu0 %v69
  %265 = vmatmul.mubr.bf16.gmra.mrb[0].mxu0 %v68
  %v266 = vpop.f32.mrb[0].mxu0
  %v267 = vadd.f32 %v58, %v266
  %v268 = vpop.f32.mrb[0].mxu0
  %v269 = vadd.f32 %v62, %v268
  %v270 = vpop.f32.mrb[0].mxu0
  %v271 = vpop.f32.mrb[0].mxu0
  %272 = vdwg.mxu0
  %v273 = vpack.c.bf16 %v267, %v267
  %v274 = vpack.c.bf16 %v269, %v269
  %v275 = vld [vmem:[%s3] sm:$0xff]
  %v276 = vld [vmem:[%s3 + $0x8] sm:$0xff]
  %v277 = vld [vmem:[%s3 + $0x10] sm:$0xff]
  %v278 = vld [vmem:[%s3 + $0x18] sm:$0xff]
  %v279 = vld [vmem:[%s3 + $0x20] sm:$0xff]
  %v280 = vld [vmem:[%s3 + $0x28] sm:$0xff]
  %v281 = vld [vmem:[%s3 + $0x30] sm:$0xff]
  %v282 = vld [vmem:[%s3 + $0x38] sm:$0xff]
  %v283 = vld [vmem:[%s3 + $0x40] sm:$0xff]
  %v284 = vld [vmem:[%s3 + $0x48] sm:$0xff]
  %v285 = vld [vmem:[%s3 + $0x50] sm:$0xff]
  %v286 = vld [vmem:[%s3 + $0x58] sm:$0xff]
  %v287 = vld [vmem:[%s3 + $0x60] sm:$0xff]
  %v288 = vld [vmem:[%s3 + $0x68] sm:$0xff]
  %v289 = vld [vmem:[%s3 + $0x70] sm:$0xff]
  %v290 = vld [vmem:[%s3 + $0x78] sm:$0xff]
  %v291 = vld [vmem:[%s3 + $0x80] sm:$0xff]
  %v292 = vld [vmem:[%s3 + $0x88] sm:$0xff]
  %v293 = vld [vmem:[%s3 + $0x90] sm:$0xff]
  %v294 = vld [vmem:[%s3 + $0x98] sm:$0xff]
  %v295 = vld [vmem:[%s3 + $0xa0] sm:$0xff]
  %v296 = vld [vmem:[%s3 + $0xa8] sm:$0xff]
  %v297 = vld [vmem:[%s3 + $0xb0] sm:$0xff]
  %v298 = vld [vmem:[%s3 + $0xb8] sm:$0xff]
  %v299 = vld [vmem:[%s3 + $0xc0] sm:$0xff]
  %v300 = vld [vmem:[%s3 + $0xc8] sm:$0xff]
  %v301 = vld [vmem:[%s3 + $0xd0] sm:$0xff]
  %v302 = vld [vmem:[%s3 + $0xd8] sm:$0xff]
  %v303 = vld [vmem:[%s3 + $0xe0] sm:$0xff]
  %v304 = vld [vmem:[%s3 + $0xe8] sm:$0xff]
  %v305 = vld [vmem:[%s3 + $0xf0] sm:$0xff]
  %v306 = vld [vmem:[%s3 + $0xf8] sm:$0xff]
  %v307 = vld [vmem:[%s4] sm:$0x3]
  %v309 = vlaneseq
  %v310 = vshrl.u32 %v309, 7
  %v311 = vsub.s32 0, %v310
  %v312 = vrot.slane %v307, %v311
  %v313 = vlaneseq
  %v314 = vshrl.u32 %v313, 7
  %v315 = vsub.s32 1, %v314
  %v316 = vrot.slane %v307, %v315
  %v351 = vunpack.c.l.b16 %v275
  %v352 = vunpack.c.h.b16 %v275
  %v353 = vunpack.c.l.b16 %v276
  %v354 = vunpack.c.h.b16 %v276
  %v355 = vunpack.c.l.b16 %v277
  %v356 = vunpack.c.h.b16 %v277
  %v357 = vunpack.c.l.b16 %v278
  %v358 = vunpack.c.h.b16 %v278
  %v359 = vunpack.c.l.b16 %v279
  %v360 = vunpack.c.h.b16 %v279
  %v361 = vunpack.c.l.b16 %v280
  %v362 = vunpack.c.h.b16 %v280
  %v363 = vunpack.c.l.b16 %v281
  %v364 = vunpack.c.h.b16 %v281
  %v365 = vunpack.c.l.b16 %v282
  %v366 = vunpack.c.h.b16 %v282
  %v367 = vunpack.c.l.b16 %v283
  %v368 = vunpack.c.h.b16 %v283
  %v369 = vunpack.c.l.b16 %v284
  %v370 = vunpack.c.h.b16 %v284
  %v371 = vunpack.c.l.b16 %v285
  %v372 = vunpack.c.h.b16 %v285
  %v373 = vunpack.c.l.b16 %v286
  %v374 = vunpack.c.h.b16 %v286
  %v375 = vunpack.c.l.b16 %v287
  %v376 = vunpack.c.h.b16 %v287
  %v377 = vunpack.c.l.b16 %v288
  %v378 = vunpack.c.h.b16 %v288
  %v379 = vunpack.c.l.b16 %v289
  %v380 = vunpack.c.h.b16 %v289
  %v381 = vunpack.c.l.b16 %v290
  %v382 = vunpack.c.h.b16 %v290
  %v383 = vunpack.c.l.b16 %v291
  %v384 = vunpack.c.h.b16 %v291
  %v385 = vunpack.c.l.b16 %v292
  %v386 = vunpack.c.h.b16 %v292
  %v387 = vunpack.c.l.b16 %v293
  %v388 = vunpack.c.h.b16 %v293
  %v389 = vunpack.c.l.b16 %v294
  %v390 = vunpack.c.h.b16 %v294
  %v391 = vunpack.c.l.b16 %v295
  %v392 = vunpack.c.h.b16 %v295
  %v393 = vunpack.c.l.b16 %v296
  %v394 = vunpack.c.h.b16 %v296
  %v395 = vunpack.c.l.b16 %v297
  %v396 = vunpack.c.h.b16 %v297
  %v397 = vunpack.c.l.b16 %v298
  %v398 = vunpack.c.h.b16 %v298
  %v399 = vunpack.c.l.b16 %v299
  %v400 = vunpack.c.h.b16 %v299
  %v401 = vunpack.c.l.b16 %v300
  %v402 = vunpack.c.h.b16 %v300
  %v403 = vunpack.c.l.b16 %v301
  %v404 = vunpack.c.h.b16 %v301
  %v405 = vunpack.c.l.b16 %v302
  %v406 = vunpack.c.h.b16 %v302
  %v407 = vunpack.c.l.b16 %v303
  %v408 = vunpack.c.h.b16 %v303
  %v409 = vunpack.c.l.b16 %v304
  %v410 = vunpack.c.h.b16 %v304
  %v411 = vunpack.c.l.b16 %v305
  %v412 = vunpack.c.h.b16 %v305
  %v413 = vunpack.c.l.b16 %v306
  %v414 = vunpack.c.h.b16 %v306
  %v415 = vpack.c.b16 %v353, %v351
  %v416 = vpack.c.b16 %v354, %v352
  %v417 = vpack.c.b16 %v357, %v355
  %v418 = vpack.c.b16 %v358, %v356
  %v419 = vpack.c.b16 %v361, %v359
  %v420 = vpack.c.b16 %v362, %v360
  %v421 = vpack.c.b16 %v365, %v363
  %v422 = vpack.c.b16 %v366, %v364
  %v423 = vpack.c.b16 %v369, %v367
  %v424 = vpack.c.b16 %v370, %v368
  %v425 = vpack.c.b16 %v373, %v371
  %v426 = vpack.c.b16 %v374, %v372
  %v427 = vpack.c.b16 %v377, %v375
  %v428 = vpack.c.b16 %v378, %v376
  %v429 = vpack.c.b16 %v381, %v379
  %v430 = vpack.c.b16 %v382, %v380
  %v431 = vpack.c.b16 %v385, %v383
  %v432 = vpack.c.b16 %v386, %v384
  %v433 = vpack.c.b16 %v389, %v387
  %v434 = vpack.c.b16 %v390, %v388
  %v435 = vpack.c.b16 %v393, %v391
  %v436 = vpack.c.b16 %v394, %v392
  %v437 = vpack.c.b16 %v397, %v395
  %v438 = vpack.c.b16 %v398, %v396
  %v439 = vpack.c.b16 %v401, %v399
  %v440 = vpack.c.b16 %v402, %v400
  %v441 = vpack.c.b16 %v405, %v403
  %v442 = vpack.c.b16 %v406, %v404
  %v443 = vpack.c.b16 %v409, %v407
  %v444 = vpack.c.b16 %v410, %v408
  %v445 = vpack.c.b16 %v413, %v411
  %v446 = vpack.c.b16 %v414, %v412
  %479 = vmatprep.subr.bf16.mxu0 %v416
  %480 = vmatpush1.bf16.msra.mxu0 %v415
  %481 = vmatprep.subr.bf16.mxu0 %v418
  %482 = vmatpush1.bf16.msra.mxu0 %v417
  %483 = vmatprep.subr.bf16.mxu0 %v420
  %484 = vmatpush1.bf16.msra.mxu0 %v419
  %485 = vmatprep.subr.bf16.mxu0 %v422
  %486 = vmatpush1.bf16.msra.mxu0 %v421
  %487 = vmatprep.subr.bf16.mxu0 %v424
  %488 = vmatpush1.bf16.msra.mxu0 %v423
  %489 = vmatprep.subr.bf16.mxu0 %v426
  %490 = vmatpush1.bf16.msra.mxu0 %v425
  %491 = vmatprep.subr.bf16.mxu0 %v428
  %492 = vmatpush1.bf16.msra.mxu0 %v427
  %493 = vmatprep.subr.bf16.mxu0 %v430
  %494 = vmatpush1.bf16.msra.mxu0 %v429
  %495 = vmatprep.subr.bf16.mxu0 %v432
  %496 = vmatpush1.bf16.msra.mxu0 %v431
  %497 = vmatprep.subr.bf16.mxu0 %v434
  %498 = vmatpush1.bf16.msra.mxu0 %v433
  %499 = vmatprep.subr.bf16.mxu0 %v436
  %500 = vmatpush1.bf16.msra.mxu0 %v435
  %501 = vmatprep.subr.bf16.mxu0 %v438
  %502 = vmatpush1.bf16.msra.mxu0 %v437
  %503 = vmatprep.subr.bf16.mxu0 %v440
  %504 = vmatpush1.bf16.msra.mxu0 %v439
  %505 = vmatprep.subr.bf16.mxu0 %v442
  %506 = vmatpush1.bf16.msra.mxu0 %v441
  %507 = vmatprep.subr.bf16.mxu0 %v444
  %508 = vmatpush1.bf16.msra.mxu0 %v443
  %509 = vmatprep.subr.bf16.mxu0 %v446
  %510 = vmatpush1.bf16.msra.mxu0 %v445
  %511 = vmatprep.mubr.bf16.mxu0 %v274
  %512 = vmatmul.mubr.bf16.gmra.mrb[0].mxu0 %v273
  %v513 = vpop.f32.mrb[0].mxu0
  %v514 = vadd.f32 %v312, %v513
  %v515 = vpop.f32.mrb[0].mxu0
  %v516 = vadd.f32 %v316, %v515
  %v517 = vpop.f32.mrb[0].mxu0
  %v518 = vpop.f32.mrb[0].mxu0
  %519 = vdwg.mxu0
  %v520 = vmax.f32 %v514, 0.0
  %v521 = vmax.f32 %v516, 0.0
  %v522 = vpack.c.bf16 %v520, %v520
  %v523 = vpack.c.bf16 %v521, %v521
  %v526 = vunpack.c.l.b16 %v522
  %v527 = vunpack.c.l.b16 %v523
  %v528 = vpack.c.b16 %v527, %v526
  %530 = vst [vmem:[%s5] sm:$0xff] %v528
  // Predicated region
  $region22: #{unet_forward.15} parent=0 // pred_check
    _
  $region23: #{unet_forward.15} parent=0 // pred_check_branch
    %532 = sbr.rel (0) target = $region25
  $region24: #{unet_forward.15} parent=0 // pred_region
    _
  $region25: #{unet_forward.15} parent=0 // pred_fallthru
    _
  // Predicated region
  $region26: #{unet_forward.15} parent=0 // pred_check
    _
  $region27: #{unet_forward.15} parent=0 // pred_check_branch
    %534 = sbr.rel (0) target = $region29
  $region28: #{unet_forward.15} parent=0 // pred_region
    _
  $region29: #{unet_forward.15} parent=0 // pred_fallthru
    _

// kernel: unet_forward.17
$region0: #{unet_forward.17}
  #allocation0 [shape = 'u32[]', space=smem, size = 0x4, offset = 0x4, fixed_abs, tag = 'smem constant byte address 0x4 - core index']
  #allocation1 [shape = 'u32[144,128]{1,0:T(1,128)}', space=vmem, size = 0x12000, scoped, tag = 'internal scratch']
  %s0 = inlined_call_operand.vmem [shape: bf16[8,256], index: 0, kind: input, shape index: {}]
  %s1 = inlined_call_operand.vmem [shape: bf16[8,256], index: 1, kind: input, shape index: {}]
  %s2 = inlined_call_operand.vmem [shape: bf16[256,256], index: 2, kind: input, shape index: {}]
  %s3 = inlined_call_operand.vmem [shape: f32[1,256], index: 3, kind: input, shape index: {}]
  %s4 = inlined_call_operand.vmem [shape: bf16[256,256], index: 4, kind: input, shape index: {}]
  %s5 = inlined_call_operand.vmem [shape: f32[1,256], index: 5, kind: input, shape index: {}]
  %s6 = inlined_call_operand.vmem [shape: bf16[8,256], index: 6, kind: output, shape index: {}]
  %s7 = sld [smem:[#allocation0]]
  $region34: #{unet_forward.17} parent=0
    _
  %s9 = ssub.s32 1, %s7
  %s10 = scalar_select 0, %s9, %s7
  // Predicated region
  $region2: #{unet_forward.17} parent=0 // pred_check
    _
  $region3: #{unet_forward.17} parent=0 // pred_check_branch
    %12 = sbr.rel (0) target = $region5
  $region4: #{unet_forward.17} parent=0 // pred_region
    _
  $region5: #{unet_forward.17} parent=0 // pred_fallthru
    _
  // Predicated region
  $region6: #{unet_forward.17} parent=0 // pred_check
    _
  $region7: #{unet_forward.17} parent=0 // pred_check_branch
    %14 = sbr.rel (0) target = $region9
  $region8: #{unet_forward.17} parent=0 // pred_region
    _
  $region9: #{unet_forward.17} parent=0 // pred_fallthru
    _
  // Predicated region
  $region10: #{unet_forward.17} parent=0 // pred_check
    _
  $region11: #{unet_forward.17} parent=0 // pred_check_branch
    %16 = sbr.rel (0) target = $region13
  $region12: #{unet_forward.17} parent=0 // pred_region
    _
  $region13: #{unet_forward.17} parent=0 // pred_fallthru
    _
  // Predicated region
  $region14: #{unet_forward.17} parent=0 // pred_check
    _
  $region15: #{unet_forward.17} parent=0 // pred_check_branch
    %18 = sbr.rel (0) target = $region17
  $region16: #{unet_forward.17} parent=0 // pred_region
    _
  $region17: #{unet_forward.17} parent=0 // pred_fallthru
    _
  // Predicated region
  $region18: #{unet_forward.17} parent=0 // pred_check
    _
  $region19: #{unet_forward.17} parent=0 // pred_check_branch
    %20 = sbr.rel (0) target = $region21
  $region20: #{unet_forward.17} parent=0 // pred_region
    _
  $region21: #{unet_forward.17} parent=0 // pred_fallthru
    _
  // Predicated region
  $region22: #{unet_forward.17} parent=0 // pred_check
    _
  $region23: #{unet_forward.17} parent=0 // pred_check_branch
    %22 = sbr.rel (0) target = $region25
  $region24: #{unet_forward.17} parent=0 // pred_region
    _
  $region25: #{unet_forward.17} parent=0 // pred_fallthru
    _
  %v23 = vld [vmem:[%s0] sm:$0xff]
  %v24 = vunpack.c.l.bf16 %v23
  %v25 = vunpack.c.h.bf16 %v23
  %v26 = vld [vmem:[%s1] sm:$0xff]
  %v27 = vunpack.c.l.bf16 %v26
  %v28 = vunpack.c.h.bf16 %v26
  %v29 = vadd.f32 %v24, %v27
  %v30 = vadd.f32 %v25, %v28
  %v31 = vpack.c.bf16 %v29, %v29
  %v32 = vpack.c.bf16 %v30, %v30
  %v33 = vld [vmem:[%s2] sm:$0xff]
  %v34 = vld [vmem:[%s2 + $0x8] sm:$0xff]
  %v35 = vld [vmem:[%s2 + $0x10] sm:$0xff]
  %v36 = vld [vmem:[%s2 + $0x18] sm:$0xff]
  %v37 = vld [vmem:[%s2 + $0x20] sm:$0xff]
  %v38 = vld [vmem:[%s2 + $0x28] sm:$0xff]
  %v39 = vld [vmem:[%s2 + $0x30] sm:$0xff]
  %v40 = vld [vmem:[%s2 + $0x38] sm:$0xff]
  %v41 = vld [vmem:[%s2 + $0x40] sm:$0xff]
  %v42 = vld [vmem:[%s2 + $0x48] sm:$0xff]
  %v43 = vld [vmem:[%s2 + $0x50] sm:$0xff]
  %v44 = vld [vmem:[%s2 + $0x58] sm:$0xff]
  %v45 = vld [vmem:[%s2 + $0x60] sm:$0xff]
  %v46 = vld [vmem:[%s2 + $0x68] sm:$0xff]
  %v47 = vld [vmem:[%s2 + $0x70] sm:$0xff]
  %v48 = vld [vmem:[%s2 + $0x78] sm:$0xff]
  %v49 = vld [vmem:[%s2 + $0x80] sm:$0xff]
  %v50 = vld [vmem:[%s2 + $0x88] sm:$0xff]
  %v51 = vld [vmem:[%s2 + $0x90] sm:$0xff]
  %v52 = vld [vmem:[%s2 + $0x98] sm:$0xff]
  %v53 = vld [vmem:[%s2 + $0xa0] sm:$0xff]
  %v54 = vld [vmem:[%s2 + $0xa8] sm:$0xff]
  %v55 = vld [vmem:[%s2 + $0xb0] sm:$0xff]
  %v56 = vld [vmem:[%s2 + $0xb8] sm:$0xff]
  %v57 = vld [vmem:[%s2 + $0xc0] sm:$0xff]
  %v58 = vld [vmem:[%s2 + $0xc8] sm:$0xff]
  %v59 = vld [vmem:[%s2 + $0xd0] sm:$0xff]
  %v60 = vld [vmem:[%s2 + $0xd8] sm:$0xff]
  %v61 = vld [vmem:[%s2 + $0xe0] sm:$0xff]
  %v62 = vld [vmem:[%s2 + $0xe8] sm:$0xff]
  %v63 = vld [vmem:[%s2 + $0xf0] sm:$0xff]
  %v64 = vld [vmem:[%s2 + $0xf8] sm:$0xff]
  %v65 = vld [vmem:[%s3] sm:$0x3]
  %v67 = vlaneseq
  %v68 = vshrl.u32 %v67, 7
  %v69 = vsub.s32 0, %v68
  %v70 = vrot.slane %v65, %v69
  %v71 = vlaneseq
  %v72 = vshrl.u32 %v71, 7
  %v73 = vsub.s32 1, %v72
  %v74 = vrot.slane %v65, %v73
  %v109 = vunpack.c.l.b16 %v33
  %v110 = vunpack.c.h.b16 %v33
  %v111 = vunpack.c.l.b16 %v34
  %v112 = vunpack.c.h.b16 %v34
  %v113 = vunpack.c.l.b16 %v35
  %v114 = vunpack.c.h.b16 %v35
  %v115 = vunpack.c.l.b16 %v36
  %v116 = vunpack.c.h.b16 %v36
  %v117 = vunpack.c.l.b16 %v37
  %v118 = vunpack.c.h.b16 %v37
  %v119 = vunpack.c.l.b16 %v38
  %v120 = vunpack.c.h.b16 %v38
  %v121 = vunpack.c.l.b16 %v39
  %v122 = vunpack.c.h.b16 %v39
  %v123 = vunpack.c.l.b16 %v40
  %v124 = vunpack.c.h.b16 %v40
  %v125 = vunpack.c.l.b16 %v41
  %v126 = vunpack.c.h.b16 %v41
  %v127 = vunpack.c.l.b16 %v42
  %v128 = vunpack.c.h.b16 %v42
  %v129 = vunpack.c.l.b16 %v43
  %v130 = vunpack.c.h.b16 %v43
  %v131 = vunpack.c.l.b16 %v44
  %v132 = vunpack.c.h.b16 %v44
  %v133 = vunpack.c.l.b16 %v45
  %v134 = vunpack.c.h.b16 %v45
  %v135 = vunpack.c.l.b16 %v46
  %v136 = vunpack.c.h.b16 %v46
  %v137 = vunpack.c.l.b16 %v47
  %v138 = vunpack.c.h.b16 %v47
  %v139 = vunpack.c.l.b16 %v48
  %v140 = vunpack.c.h.b16 %v48
  %v141 = vunpack.c.l.b16 %v49
  %v142 = vunpack.c.h.b16 %v49
  %v143 = vunpack.c.l.b16 %v50
  %v144 = vunpack.c.h.b16 %v50
  %v145 = vunpack.c.l.b16 %v51
  %v146 = vunpack.c.h.b16 %v51
  %v147 = vunpack.c.l.b16 %v52
  %v148 = vunpack.c.h.b16 %v52
  %v149 = vunpack.c.l.b16 %v53
  %v150 = vunpack.c.h.b16 %v53
  %v151 = vunpack.c.l.b16 %v54
  %v152 = vunpack.c.h.b16 %v54
  %v153 = vunpack.c.l.b16 %v55
  %v154 = vunpack.c.h.b16 %v55
  %v155 = vunpack.c.l.b16 %v56
  %v156 = vunpack.c.h.b16 %v56
  %v157 = vunpack.c.l.b16 %v57
  %v158 = vunpack.c.h.b16 %v57
  %v159 = vunpack.c.l.b16 %v58
  %v160 = vunpack.c.h.b16 %v58
  %v161 = vunpack.c.l.b16 %v59
  %v162 = vunpack.c.h.b16 %v59
  %v163 = vunpack.c.l.b16 %v60
  %v164 = vunpack.c.h.b16 %v60
  %v165 = vunpack.c.l.b16 %v61
  %v166 = vunpack.c.h.b16 %v61
  %v167 = vunpack.c.l.b16 %v62
  %v168 = vunpack.c.h.b16 %v62
  %v169 = vunpack.c.l.b16 %v63
  %v170 = vunpack.c.h.b16 %v63
  %v171 = vunpack.c.l.b16 %v64
  %v172 = vunpack.c.h.b16 %v64
  %v173 = vpack.c.b16 %v111, %v109
  %v174 = vpack.c.b16 %v112, %v110
  %v175 = vpack.c.b16 %v115, %v113
  %v176 = vpack.c.b16 %v116, %v114
  %v177 = vpack.c.b16 %v119, %v117
  %v178 = vpack.c.b16 %v120, %v118
  %v179 = vpack.c.b16 %v123, %v121
  %v180 = vpack.c.b16 %v124, %v122
  %v181 = vpack.c.b16 %v127, %v125
  %v182 = vpack.c.b16 %v128, %v126
  %v183 = vpack.c.b16 %v131, %v129
  %v184 = vpack.c.b16 %v132, %v130
  %v185 = vpack.c.b16 %v135, %v133
  %v186 = vpack.c.b16 %v136, %v134
  %v187 = vpack.c.b16 %v139, %v137
  %v188 = vpack.c.b16 %v140, %v138
  %v189 = vpack.c.b16 %v143, %v141
  %v190 = vpack.c.b16 %v144, %v142
  %v191 = vpack.c.b16 %v147, %v145
  %v192 = vpack.c.b16 %v148, %v146
  %v193 = vpack.c.b16 %v151, %v149
  %v194 = vpack.c.b16 %v152, %v150
  %v195 = vpack.c.b16 %v155, %v153
  %v196 = vpack.c.b16 %v156, %v154
  %v197 = vpack.c.b16 %v159, %v157
  %v198 = vpack.c.b16 %v160, %v158
  %v199 = vpack.c.b16 %v163, %v161
  %v200 = vpack.c.b16 %v164, %v162
  %v201 = vpack.c.b16 %v167, %v165
  %v202 = vpack.c.b16 %v168, %v166
  %v203 = vpack.c.b16 %v171, %v169
  %v204 = vpack.c.b16 %v172, %v170
  %237 = vmatprep.subr.bf16.mxu0 %v174
  %238 = vmatpush1.bf16.msra.mxu0 %v173
  %239 = vmatprep.subr.bf16.mxu0 %v176
  %240 = vmatpush1.bf16.msra.mxu0 %v175
  %241 = vmatprep.subr.bf16.mxu0 %v178
  %242 = vmatpush1.bf16.msra.mxu0 %v177
  %243 = vmatprep.subr.bf16.mxu0 %v180
  %244 = vmatpush1.bf16.msra.mxu0 %v179
  %245 = vmatprep.subr.bf16.mxu0 %v182
  %246 = vmatpush1.bf16.msra.mxu0 %v181
  %247 = vmatprep.subr.bf16.mxu0 %v184
  %248 = vmatpush1.bf16.msra.mxu0 %v183
  %249 = vmatprep.subr.bf16.mxu0 %v186
  %250 = vmatpush1.bf16.msra.mxu0 %v185
  %251 = vmatprep.subr.bf16.mxu0 %v188
  %252 = vmatpush1.bf16.msra.mxu0 %v187
  %253 = vmatprep.subr.bf16.mxu0 %v190
  %254 = vmatpush1.bf16.msra.mxu0 %v189
  %255 = vmatprep.subr.bf16.mxu0 %v192
  %256 = vmatpush1.bf16.msra.mxu0 %v191
  %257 = vmatprep.subr.bf16.mxu0 %v194
  %258 = vmatpush1.bf16.msra.mxu0 %v193
  %259 = vmatprep.subr.bf16.mxu0 %v196
  %260 = vmatpush1.bf16.msra.mxu0 %v195
  %261 = vmatprep.subr.bf16.mxu0 %v198
  %262 = vmatpush1.bf16.msra.mxu0 %v197
  %263 = vmatprep.subr.bf16.mxu0 %v200
  %264 = vmatpush1.bf16.msra.mxu0 %v199
  %265 = vmatprep.subr.bf16.mxu0 %v202
  %266 = vmatpush1.bf16.msra.mxu0 %v201
  %267 = vmatprep.subr.bf16.mxu0 %v204
  %268 = vmatpush1.bf16.msra.mxu0 %v203
  %269 = vmatprep.mubr.bf16.mxu0 %v32
  %270 = vmatmul.mubr.bf16.gmra.mrb[0].mxu0 %v31
  %v271 = vpop.f32.mrb[0].mxu0
  %v272 = vadd.f32 %v70, %v271
  %v273 = vpop.f32.mrb[0].mxu0
  %v274 = vadd.f32 %v74, %v273
  %v275 = vpop.f32.mrb[0].mxu0
  %v276 = vpop.f32.mrb[0].mxu0
  %277 = vdwg.mxu0
  %v278 = vmax.f32 %v272, 0.0
  %v279 = vmax.f32 %v274, 0.0
  %v280 = vpack.c.bf16 %v278, %v278
  %v281 = vpack.c.bf16 %v279, %v279
  %v282 = vld [vmem:[%s4] sm:$0xff]
  %v283 = vld [vmem:[%s4 + $0x8] sm:$0xff]
  %v284 = vld [vmem:[%s4 + $0x10] sm:$0xff]
  %v285 = vld [vmem:[%s4 + $0x18] sm:$0xff]
  %v286 = vld [vmem:[%s4 + $0x20] sm:$0xff]
  %v287 = vld [vmem:[%s4 + $0x28] sm:$0xff]
  %v288 = vld [vmem:[%s4 + $0x30] sm:$0xff]
  %v289 = vld [vmem:[%s4 + $0x38] sm:$0xff]
  %v290 = vld [vmem:[%s4 + $0x40] sm:$0xff]
  %v291 = vld [vmem:[%s4 + $0x48] sm:$0xff]
  %v292 = vld [vmem:[%s4 + $0x50] sm:$0xff]
  %v293 = vld [vmem:[%s4 + $0x58] sm:$0xff]
  %v294 = vld [vmem:[%s4 + $0x60] sm:$0xff]
  %v295 = vld [vmem:[%s4 + $0x68] sm:$0xff]
  %v296 = vld [vmem:[%s4 + $0x70] sm:$0xff]
  %v297 = vld [vmem:[%s4 + $0x78] sm:$0xff]
  %v298 = vld [vmem:[%s4 + $0x80] sm:$0xff]
  %v299 = vld [vmem:[%s4 + $0x88] sm:$0xff]
  %v300 = vld [vmem:[%s4 + $0x90] sm:$0xff]
  %v301 = vld [vmem:[%s4 + $0x98] sm:$0xff]
  %v302 = vld [vmem:[%s4 + $0xa0] sm:$0xff]
  %v303 = vld [vmem:[%s4 + $0xa8] sm:$0xff]
  %v304 = vld [vmem:[%s4 + $0xb0] sm:$0xff]
  %v305 = vld [vmem:[%s4 + $0xb8] sm:$0xff]
  %v306 = vld [vmem:[%s4 + $0xc0] sm:$0xff]
  %v307 = vld [vmem:[%s4 + $0xc8] sm:$0xff]
  %v308 = vld [vmem:[%s4 + $0xd0] sm:$0xff]
  %v309 = vld [vmem:[%s4 + $0xd8] sm:$0xff]
  %v310 = vld [vmem:[%s4 + $0xe0] sm:$0xff]
  %v311 = vld [vmem:[%s4 + $0xe8] sm:$0xff]
  %v312 = vld [vmem:[%s4 + $0xf0] sm:$0xff]
  %v313 = vld [vmem:[%s4 + $0xf8] sm:$0xff]
  %v314 = vld [vmem:[%s5] sm:$0x3]
  %v316 = vlaneseq
  %v317 = vshrl.u32 %v316, 7
  %v318 = vsub.s32 0, %v317
  %v319 = vrot.slane %v314, %v318
  %v320 = vlaneseq
  %v321 = vshrl.u32 %v320, 7
  %v322 = vsub.s32 1, %v321
  %v323 = vrot.slane %v314, %v322
  %v358 = vunpack.c.l.b16 %v282
  %v359 = vunpack.c.h.b16 %v282
  %v360 = vunpack.c.l.b16 %v283
  %v361 = vunpack.c.h.b16 %v283
  %v362 = vunpack.c.l.b16 %v284
  %v363 = vunpack.c.h.b16 %v284
  %v364 = vunpack.c.l.b16 %v285
  %v365 = vunpack.c.h.b16 %v285
  %v366 = vunpack.c.l.b16 %v286
  %v367 = vunpack.c.h.b16 %v286
  %v368 = vunpack.c.l.b16 %v287
  %v369 = vunpack.c.h.b16 %v287
  %v370 = vunpack.c.l.b16 %v288
  %v371 = vunpack.c.h.b16 %v288
  %v372 = vunpack.c.l.b16 %v289
  %v373 = vunpack.c.h.b16 %v289
  %v374 = vunpack.c.l.b16 %v290
  %v375 = vunpack.c.h.b16 %v290
  %v376 = vunpack.c.l.b16 %v291
  %v377 = vunpack.c.h.b16 %v291
  %v378 = vunpack.c.l.b16 %v292
  %v379 = vunpack.c.h.b16 %v292
  %v380 = vunpack.c.l.b16 %v293
  %v381 = vunpack.c.h.b16 %v293
  %v382 = vunpack.c.l.b16 %v294
  %v383 = vunpack.c.h.b16 %v294
  %v384 = vunpack.c.l.b16 %v295
  %v385 = vunpack.c.h.b16 %v295
  %v386 = vunpack.c.l.b16 %v296
  %v387 = vunpack.c.h.b16 %v296
  %v388 = vunpack.c.l.b16 %v297
  %v389 = vunpack.c.h.b16 %v297
  %v390 = vunpack.c.l.b16 %v298
  %v391 = vunpack.c.h.b16 %v298
  %v392 = vunpack.c.l.b16 %v299
  %v393 = vunpack.c.h.b16 %v299
  %v394 = vunpack.c.l.b16 %v300
  %v395 = vunpack.c.h.b16 %v300
  %v396 = vunpack.c.l.b16 %v301
  %v397 = vunpack.c.h.b16 %v301
  %v398 = vunpack.c.l.b16 %v302
  %v399 = vunpack.c.h.b16 %v302
  %v400 = vunpack.c.l.b16 %v303
  %v401 = vunpack.c.h.b16 %v303
  %v402 = vunpack.c.l.b16 %v304
  %v403 = vunpack.c.h.b16 %v304
  %v404 = vunpack.c.l.b16 %v305
  %v405 = vunpack.c.h.b16 %v305
  %v406 = vunpack.c.l.b16 %v306
  %v407 = vunpack.c.h.b16 %v306
  %v408 = vunpack.c.l.b16 %v307
  %v409 = vunpack.c.h.b16 %v307
  %v410 = vunpack.c.l.b16 %v308
  %v411 = vunpack.c.h.b16 %v308
  %v412 = vunpack.c.l.b16 %v309
  %v413 = vunpack.c.h.b16 %v309
  %v414 = vunpack.c.l.b16 %v310
  %v415 = vunpack.c.h.b16 %v310
  %v416 = vunpack.c.l.b16 %v311
  %v417 = vunpack.c.h.b16 %v311
  %v418 = vunpack.c.l.b16 %v312
  %v419 = vunpack.c.h.b16 %v312
  %v420 = vunpack.c.l.b16 %v313
  %v421 = vunpack.c.h.b16 %v313
  %v422 = vpack.c.b16 %v360, %v358
  %v423 = vpack.c.b16 %v361, %v359
  %v424 = vpack.c.b16 %v364, %v362
  %v425 = vpack.c.b16 %v365, %v363
  %v426 = vpack.c.b16 %v368, %v366
  %v427 = vpack.c.b16 %v369, %v367
  %v428 = vpack.c.b16 %v372, %v370
  %v429 = vpack.c.b16 %v373, %v371
  %v430 = vpack.c.b16 %v376, %v374
  %v431 = vpack.c.b16 %v377, %v375
  %v432 = vpack.c.b16 %v380, %v378
  %v433 = vpack.c.b16 %v381, %v379
  %v434 = vpack.c.b16 %v384, %v382
  %v435 = vpack.c.b16 %v385, %v383
  %v436 = vpack.c.b16 %v388, %v386
  %v437 = vpack.c.b16 %v389, %v387
  %v438 = vpack.c.b16 %v392, %v390
  %v439 = vpack.c.b16 %v393, %v391
  %v440 = vpack.c.b16 %v396, %v394
  %v441 = vpack.c.b16 %v397, %v395
  %v442 = vpack.c.b16 %v400, %v398
  %v443 = vpack.c.b16 %v401, %v399
  %v444 = vpack.c.b16 %v404, %v402
  %v445 = vpack.c.b16 %v405, %v403
  %v446 = vpack.c.b16 %v408, %v406
  %v447 = vpack.c.b16 %v409, %v407
  %v448 = vpack.c.b16 %v412, %v410
  %v449 = vpack.c.b16 %v413, %v411
  %v450 = vpack.c.b16 %v416, %v414
  %v451 = vpack.c.b16 %v417, %v415
  %v452 = vpack.c.b16 %v420, %v418
  %v453 = vpack.c.b16 %v421, %v419
  %486 = vmatprep.subr.bf16.mxu0 %v423
  %487 = vmatpush1.bf16.msra.mxu0 %v422
  %488 = vmatprep.subr.bf16.mxu0 %v425
  %489 = vmatpush1.bf16.msra.mxu0 %v424
  %490 = vmatprep.subr.bf16.mxu0 %v427
  %491 = vmatpush1.bf16.msra.mxu0 %v426
  %492 = vmatprep.subr.bf16.mxu0 %v429
  %493 = vmatpush1.bf16.msra.mxu0 %v428
  %494 = vmatprep.subr.bf16.mxu0 %v431
  %495 = vmatpush1.bf16.msra.mxu0 %v430
  %496 = vmatprep.subr.bf16.mxu0 %v433
  %497 = vmatpush1.bf16.msra.mxu0 %v432
  %498 = vmatprep.subr.bf16.mxu0 %v435
  %499 = vmatpush1.bf16.msra.mxu0 %v434
  %500 = vmatprep.subr.bf16.mxu0 %v437
  %501 = vmatpush1.bf16.msra.mxu0 %v436
  %502 = vmatprep.subr.bf16.mxu0 %v439
  %503 = vmatpush1.bf16.msra.mxu0 %v438
  %504 = vmatprep.subr.bf16.mxu0 %v441
  %505 = vmatpush1.bf16.msra.mxu0 %v440
  %506 = vmatprep.subr.bf16.mxu0 %v443
  %507 = vmatpush1.bf16.msra.mxu0 %v442
  %508 = vmatprep.subr.bf16.mxu0 %v445
  %509 = vmatpush1.bf16.msra.mxu0 %v444
  %510 = vmatprep.subr.bf16.mxu0 %v447
  %511 = vmatpush1.bf16.msra.mxu0 %v446
  %512 = vmatprep.subr.bf16.mxu0 %v449
  %513 = vmatpush1.bf16.msra.mxu0 %v448
  %514 = vmatprep.subr.bf16.mxu0 %v451
  %515 = vmatpush1.bf16.msra.mxu0 %v450
  %516 = vmatprep.subr.bf16.mxu0 %v453
  %517 = vmatpush1.bf16.msra.mxu0 %v452
  %518 = vmatprep.mubr.bf16.mxu0 %v281
  %519 = vmatmul.mubr.bf16.gmra.mrb[0].mxu0 %v280
  %v520 = vpop.f32.mrb[0].mxu0
  %v521 = vadd.f32 %v319, %v520
  %v522 = vpop.f32.mrb[0].mxu0
  %v523 = vadd.f32 %v323, %v522
  %v524 = vpop.f32.mrb[0].mxu0
  %v525 = vpop.f32.mrb[0].mxu0
  %526 = vdwg.mxu0
  %v527 = vpack.c.bf16 %v521, %v521
  %v528 = vpack.c.bf16 %v523, %v523
  %v531 = vunpack.c.l.b16 %v527
  %v532 = vunpack.c.l.b16 %v528
  %v533 = vpack.c.b16 %v532, %v531
  %535 = vst [vmem:[%s6] sm:$0xff] %v533
  // Predicated region
  $region26: #{unet_forward.17} parent=0 // pred_check
    _
  $region27: #{unet_forward.17} parent=0 // pred_check_branch
    %537 = sbr.rel (0) target = $region29
  $region28: #{unet_forward.17} parent=0 // pred_region
    _
  $region29: #{unet_forward.17} parent=0 // pred_fallthru
    _
  // Predicated region
  $region30: #{unet_forward.17} parent=0 // pred_check
    _
  $region31: #{unet_forward.17} parent=0 // pred_check_branch
    %539 = sbr.rel (0) target = $region33
  $region32: #{unet_forward.17} parent=0 // pred_region
    _
  $region33: #{unet_forward.17} parent=0 // pred_fallthru
    _

// kernel: unet_forward.18
$region0: #{unet_forward.18}
  #allocation0 [shape = 'u32[]', space=smem, size = 0x4, offset = 0x4, fixed_abs, tag = 'smem constant byte address 0x4 - core index']
  #allocation1 [shape = 'u32[144,128]{1,0:T(1,128)}', space=vmem, size = 0x12000, scoped, tag = 'internal scratch']
  %s0 = inlined_call_operand.vmem [shape: bf16[16,128], index: 0, kind: input, shape index: {}]
  %s1 = inlined_call_operand.vmem [shape: bf16[16,128], index: 1, kind: input, shape index: {}]
  %s2 = inlined_call_operand.vmem [shape: bf16[128,128], index: 2, kind: input, shape index: {}]
  %s3 = inlined_call_operand.vmem [shape: f32[1,128], index: 3, kind: input, shape index: {}]
  %s4 = inlined_call_operand.vmem [shape: bf16[128,128], index: 4, kind: input, shape index: {}]
  %s5 = inlined_call_operand.vmem [shape: f32[1,128], index: 5, kind: input, shape index: {}]
  %s6 = inlined_call_operand.vmem [shape: bf16[16,128], index: 6, kind: output, shape index: {}]
  %s7 = sld [smem:[#allocation0]]
  $region34: #{unet_forward.18} parent=0
    _
  %s9 = ssub.s32 1, %s7
  %s10 = scalar_select 0, %s9, %s7
  // Predicated region
  $region2: #{unet_forward.18} parent=0 // pred_check
    _
  $region3: #{unet_forward.18} parent=0 // pred_check_branch
    %12 = sbr.rel (0) target = $region5
  $region4: #{unet_forward.18} parent=0 // pred_region
    _
  $region5: #{unet_forward.18} parent=0 // pred_fallthru
    _
  // Predicated region
  $region6: #{unet_forward.18} parent=0 // pred_check
    _
  $region7: #{unet_forward.18} parent=0 // pred_check_branch
    %14 = sbr.rel (0) target = $region9
  $region8: #{unet_forward.18} parent=0 // pred_region
    _
  $region9: #{unet_forward.18} parent=0 // pred_fallthru
    _
  // Predicated region
  $region10: #{unet_forward.18} parent=0 // pred_check
    _
  $region11: #{unet_forward.18} parent=0 // pred_check_branch
    %16 = sbr.rel (0) target = $region13
  $region12: #{unet_forward.18} parent=0 // pred_region
    _
  $region13: #{unet_forward.18} parent=0 // pred_fallthru
    _
  // Predicated region
  $region14: #{unet_forward.18} parent=0 // pred_check
    _
  $region15: #{unet_forward.18} parent=0 // pred_check_branch
    %18 = sbr.rel (0) target = $region17
  $region16: #{unet_forward.18} parent=0 // pred_region
    _
  $region17: #{unet_forward.18} parent=0 // pred_fallthru
    _
  // Predicated region
  $region18: #{unet_forward.18} parent=0 // pred_check
    _
  $region19: #{unet_forward.18} parent=0 // pred_check_branch
    %20 = sbr.rel (0) target = $region21
  $region20: #{unet_forward.18} parent=0 // pred_region
    _
  $region21: #{unet_forward.18} parent=0 // pred_fallthru
    _
  // Predicated region
  $region22: #{unet_forward.18} parent=0 // pred_check
    _
  $region23: #{unet_forward.18} parent=0 // pred_check_branch
    %22 = sbr.rel (0) target = $region25
  $region24: #{unet_forward.18} parent=0 // pred_region
    _
  $region25: #{unet_forward.18} parent=0 // pred_fallthru
    _
  %v24 = vld [vmem:[%s0] sm:$0xf]
  %v25 = vld [vmem:[%s0 + $0x4] sm:$0xf]
  %v26 = vunpack.c.l.bf16 %v24
  %v27 = vunpack.c.l.bf16 %v25
  %v28 = vld [vmem:[%s1] sm:$0xf]
  %v29 = vld [vmem:[%s1 + $0x4] sm:$0xf]
  %v30 = vunpack.c.l.bf16 %v28
  %v31 = vunpack.c.l.bf16 %v29
  %v32 = vadd.f32 %v26, %v30
  %v33 = vadd.f32 %v27, %v31
  %v34 = vpack.c.bf16 %v33, %v32
  %v35 = vld [vmem:[%s2] sm:$0xf]
  %v36 = vld [vmem:[%s2 + $0x4] sm:$0xf]
  %v37 = vld [vmem:[%s2 + $0x8] sm:$0xf]
  %v38 = vld [vmem:[%s2 + $0xc] sm:$0xf]
  %v39 = vld [vmem:[%s2 + $0x10] sm:$0xf]
  %v40 = vld [vmem:[%s2 + $0x14] sm:$0xf]
  %v41 = vld [vmem:[%s2 + $0x18] sm:$0xf]
  %v42 = vld [vmem:[%s2 + $0x1c] sm:$0xf]
  %v43 = vld [vmem:[%s2 + $0x20] sm:$0xf]
  %v44 = vld [vmem:[%s2 + $0x24] sm:$0xf]
  %v45 = vld [vmem:[%s2 + $0x28] sm:$0xf]
  %v46 = vld [vmem:[%s2 + $0x2c] sm:$0xf]
  %v47 = vld [vmem:[%s2 + $0x30] sm:$0xf]
  %v48 = vld [vmem:[%s2 + $0x34] sm:$0xf]
  %v49 = vld [vmem:[%s2 + $0x38] sm:$0xf]
  %v50 = vld [vmem:[%s2 + $0x3c] sm:$0xf]
  %v51 = vld [vmem:[%s3] sm:$0x1]
  %v53 = vlaneseq
  %v54 = vshrl.u32 %v53, 7
  %v55 = vsub.s32 0, %v54
  %v56 = vrot.slane %v51, %v55
  %v74 = vunpack.c.l.b16 %v35
  %v75 = vunpack.c.l.b16 %v36
  %v76 = vunpack.c.l.b16 %v37
  %v77 = vunpack.c.l.b16 %v38
  %v78 = vunpack.c.l.b16 %v39
  %v79 = vunpack.c.l.b16 %v40
  %v80 = vunpack.c.l.b16 %v41
  %v81 = vunpack.c.l.b16 %v42
  %v82 = vunpack.c.l.b16 %v43
  %v83 = vunpack.c.l.b16 %v44
  %v84 = vunpack.c.l.b16 %v45
  %v85 = vunpack.c.l.b16 %v46
  %v86 = vunpack.c.l.b16 %v47
  %v87 = vunpack.c.l.b16 %v48
  %v88 = vunpack.c.l.b16 %v49
  %v89 = vunpack.c.l.b16 %v50
  %v90 = vpack.c.b16 %v75, %v74
  %v91 = vpack.c.b16 %v77, %v76
  %v92 = vpack.c.b16 %v79, %v78
  %v93 = vpack.c.b16 %v81, %v80
  %v94 = vpack.c.b16 %v83, %v82
  %v95 = vpack.c.b16 %v85, %v84
  %v96 = vpack.c.b16 %v87, %v86
  %v97 = vpack.c.b16 %v89, %v88
  %106 = vmatprep.subr.bf16.mxu0 0
  %107 = vmatpush1.bf16.msra.mxu0 %v90
  %108 = vmatprep.subr.bf16.mxu0 0
  %109 = vmatpush1.bf16.msra.mxu0 %v91
  %110 = vmatprep.subr.bf16.mxu0 0
  %111 = vmatpush1.bf16.msra.mxu0 %v92
  %112 = vmatprep.subr.bf16.mxu0 0
  %113 = vmatpush1.bf16.msra.mxu0 %v93
  %114 = vmatprep.subr.bf16.mxu0 0
  %115 = vmatpush1.bf16.msra.mxu0 %v94
  %116 = vmatprep.subr.bf16.mxu0 0
  %117 = vmatpush1.bf16.msra.mxu0 %v95
  %118 = vmatprep.subr.bf16.mxu0 0
  %119 = vmatpush1.bf16.msra.mxu0 %v96
  %120 = vmatprep.subr.bf16.mxu0 0
  %121 = vmatpush1.bf16.msra.mxu0 %v97
  %122 = vmatprep.subr.bf16.mxu0 0
  %123 = vmatpush1.bf16.msra.mxu0 0
  %124 = vmatprep.subr.bf16.mxu0 0
  %125 = vmatpush1.bf16.msra.mxu0 0
  %126 = vmatprep.subr.bf16.mxu0 0
  %127 = vmatpush1.bf16.msra.mxu0 0
  %128 = vmatprep.subr.bf16.mxu0 0
  %129 = vmatpush1.bf16.msra.mxu0 0
  %130 = vmatprep.subr.bf16.mxu0 0
  %131 = vmatpush1.bf16.msra.mxu0 0
  %132 = vmatprep.subr.bf16.mxu0 0
  %133 = vmatpush1.bf16.msra.mxu0 0
  %134 = vmatprep.subr.bf16.mxu0 0
  %135 = vmatpush1.bf16.msra.mxu0 0
  %136 = vmatprep.subr.bf16.mxu0 0
  %137 = vmatpush1.bf16.msra.mxu0 0
  %138 = vmatprep.mubr.bf16.mxu0 0
  %139 = vmatmul.mubr.bf16.gmra.mrb[0].mxu0 %v34
  %v140 = vpop.f32.mrb[0].mxu0
  %v141 = vadd.f32 %v56, %v140
  %v142 = vpop.f32.mrb[0].mxu0
  %v143 = vpop.f32.mrb[0].mxu0
  %v144 = vadd.f32 %v56, %v143
  %v145 = vpop.f32.mrb[0].mxu0
  %146 = vdwg.mxu0
  %v147 = vmax.f32 %v141, 0.0
  %v148 = vmax.f32 %v144, 0.0
  %v149 = vpack.c.bf16 %v148, %v147
  %v150 = vld [vmem:[%s4] sm:$0xf]
  %v151 = vld [vmem:[%s4 + $0x4] sm:$0xf]
  %v152 = vld [vmem:[%s4 + $0x8] sm:$0xf]
  %v153 = vld [vmem:[%s4 + $0xc] sm:$0xf]
  %v154 = vld [vmem:[%s4 + $0x10] sm:$0xf]
  %v155 = vld [vmem:[%s4 + $0x14] sm:$0xf]
  %v156 = vld [vmem:[%s4 + $0x18] sm:$0xf]
  %v157 = vld [vmem:[%s4 + $0x1c] sm:$0xf]
  %v158 = vld [vmem:[%s4 + $0x20] sm:$0xf]
  %v159 = vld [vmem:[%s4 + $0x24] sm:$0xf]
  %v160 = vld [vmem:[%s4 + $0x28] sm:$0xf]
  %v161 = vld [vmem:[%s4 + $0x2c] sm:$0xf]
  %v162 = vld [vmem:[%s4 + $0x30] sm:$0xf]
  %v163 = vld [vmem:[%s4 + $0x34] sm:$0xf]
  %v164 = vld [vmem:[%s4 + $0x38] sm:$0xf]
  %v165 = vld [vmem:[%s4 + $0x3c] sm:$0xf]
  %v166 = vld [vmem:[%s5] sm:$0x1]
  %v168 = vlaneseq
  %v169 = vshrl.u32 %v168, 7
  %v170 = vsub.s32 0, %v169
  %v171 = vrot.slane %v166, %v170
  %v189 = vunpack.c.l.b16 %v150
  %v190 = vunpack.c.l.b16 %v151
  %v191 = vunpack.c.l.b16 %v152
  %v192 = vunpack.c.l.b16 %v153
  %v193 = vunpack.c.l.b16 %v154
  %v194 = vunpack.c.l.b16 %v155
  %v195 = vunpack.c.l.b16 %v156
  %v196 = vunpack.c.l.b16 %v157
  %v197 = vunpack.c.l.b16 %v158
  %v198 = vunpack.c.l.b16 %v159
  %v199 = vunpack.c.l.b16 %v160
  %v200 = vunpack.c.l.b16 %v161
  %v201 = vunpack.c.l.b16 %v162
  %v202 = vunpack.c.l.b16 %v163
  %v203 = vunpack.c.l.b16 %v164
  %v204 = vunpack.c.l.b16 %v165
  %v205 = vpack.c.b16 %v190, %v189
  %v206 = vpack.c.b16 %v192, %v191
  %v207 = vpack.c.b16 %v194, %v193
  %v208 = vpack.c.b16 %v196, %v195
  %v209 = vpack.c.b16 %v198, %v197
  %v210 = vpack.c.b16 %v200, %v199
  %v211 = vpack.c.b16 %v202, %v201
  %v212 = vpack.c.b16 %v204, %v203
  %221 = vmatprep.subr.bf16.mxu0 0
  %222 = vmatpush1.bf16.msra.mxu0 %v205
  %223 = vmatprep.subr.bf16.mxu0 0
  %224 = vmatpush1.bf16.msra.mxu0 %v206
  %225 = vmatprep.subr.bf16.mxu0 0
  %226 = vmatpush1.bf16.msra.mxu0 %v207
  %227 = vmatprep.subr.bf16.mxu0 0
  %228 = vmatpush1.bf16.msra.mxu0 %v208
  %229 = vmatprep.subr.bf16.mxu0 0
  %230 = vmatpush1.bf16.msra.mxu0 %v209
  %231 = vmatprep.subr.bf16.mxu0 0
  %232 = vmatpush1.bf16.msra.mxu0 %v210
  %233 = vmatprep.subr.bf16.mxu0 0
  %234 = vmatpush1.bf16.msra.mxu0 %v211
  %235 = vmatprep.subr.bf16.mxu0 0
  %236 = vmatpush1.bf16.msra.mxu0 %v212
  %237 = vmatprep.subr.bf16.mxu0 0
  %238 = vmatpush1.bf16.msra.mxu0 0
  %239 = vmatprep.subr.bf16.mxu0 0
  %240 = vmatpush1.bf16.msra.mxu0 0
  %241 = vmatprep.subr.bf16.mxu0 0
  %242 = vmatpush1.bf16.msra.mxu0 0
  %243 = vmatprep.subr.bf16.mxu0 0
  %244 = vmatpush1.bf16.msra.mxu0 0
  %245 = vmatprep.subr.bf16.mxu0 0
  %246 = vmatpush1.bf16.msra.mxu0 0
  %247 = vmatprep.subr.bf16.mxu0 0
  %248 = vmatpush1.bf16.msra.mxu0 0
  %249 = vmatprep.subr.bf16.mxu0 0
  %250 = vmatpush1.bf16.msra.mxu0 0
  %251 = vmatprep.subr.bf16.mxu0 0
  %252 = vmatpush1.bf16.msra.mxu0 0
  %253 = vmatprep.mubr.bf16.mxu0 0
  %254 = vmatmul.mubr.bf16.gmra.mrb[0].mxu0 %v149
  %v255 = vpop.f32.mrb[0].mxu0
  %v256 = vadd.f32 %v171, %v255
  %v257 = vpop.f32.mrb[0].mxu0
  %v258 = vpop.f32.mrb[0].mxu0
  %v259 = vadd.f32 %v171, %v258
  %v260 = vpop.f32.mrb[0].mxu0
  %261 = vdwg.mxu0
  %v262 = vpack.c.bf16 %v259, %v256
  %v264 = vunpack.c.l.b16 %v262
  %v265 = vunpack.c.h.b16 %v262
  %v266 = vpack.c.b16 %v264, %v264
  %v267 = vpack.c.b16 %v265, %v265
  %270 = vst [vmem:[%s6] sm:$0xf] %v266
  %271 = vst [vmem:[%s6 + $0x4] sm:$0xf] %v267
  // Predicated region
  $region26: #{unet_forward.18} parent=0 // pred_check
    _
  $region27: #{unet_forward.18} parent=0 // pred_check_branch
    %273 = sbr.rel (0) target = $region29
  $region28: #{unet_forward.18} parent=0 // pred_region
    _
  $region29: #{unet_forward.18} parent=0 // pred_fallthru
    _
  // Predicated region
  $region30: #{unet_forward.18} parent=0 // pred_check
    _
  $region31: #{unet_forward.18} parent=0 // pred_check_branch
    %275 = sbr.rel (0) target = $region33
  $region32: #{unet_forward.18} parent=0 // pred_region
    _
  $region33: #{unet_forward.18} parent=0 // pred_fallthru
    _

// kernel: unet_forward.19
$region0: #{unet_forward.19}
  #allocation0 [shape = 'u32[]', space=smem, size = 0x4, offset = 0x4, fixed_abs, tag = 'smem constant byte address 0x4 - core index']
  #allocation1 [shape = 'u32[144,128]{1,0:T(1,128)}', space=vmem, size = 0x12000, scoped, tag = 'internal scratch']
  %s0 = inlined_call_operand.vmem [shape: bf16[32,64], index: 0, kind: input, shape index: {}]
  %s1 = inlined_call_operand.vmem [shape: bf16[32,64], index: 1, kind: input, shape index: {}]
  %s2 = inlined_call_operand.vmem [shape: bf16[64,64], index: 2, kind: input, shape index: {}]
  %s3 = inlined_call_operand.vmem [shape: f32[1,64], index: 3, kind: input, shape index: {}]
  %s4 = inlined_call_operand.vmem [shape: bf16[64,64], index: 4, kind: input, shape index: {}]
  %s5 = inlined_call_operand.vmem [shape: f32[1,64], index: 5, kind: input, shape index: {}]
  %s6 = inlined_call_operand.vmem [shape: bf16[32,64], index: 6, kind: output, shape index: {}]
  %s7 = sld [smem:[#allocation0]]
  $region34: #{unet_forward.19} parent=0
    _
  %s9 = ssub.s32 1, %s7
  %s10 = scalar_select 0, %s9, %s7
  // Predicated region
  $region2: #{unet_forward.19} parent=0 // pred_check
    _
  $region3: #{unet_forward.19} parent=0 // pred_check_branch
    %12 = sbr.rel (0) target = $region5
  $region4: #{unet_forward.19} parent=0 // pred_region
    _
  $region5: #{unet_forward.19} parent=0 // pred_fallthru
    _
  // Predicated region
  $region6: #{unet_forward.19} parent=0 // pred_check
    _
  $region7: #{unet_forward.19} parent=0 // pred_check_branch
    %14 = sbr.rel (0) target = $region9
  $region8: #{unet_forward.19} parent=0 // pred_region
    _
  $region9: #{unet_forward.19} parent=0 // pred_fallthru
    _
  // Predicated region
  $region10: #{unet_forward.19} parent=0 // pred_check
    _
  $region11: #{unet_forward.19} parent=0 // pred_check_branch
    %16 = sbr.rel (0) target = $region13
  $region12: #{unet_forward.19} parent=0 // pred_region
    _
  $region13: #{unet_forward.19} parent=0 // pred_fallthru
    _
  // Predicated region
  $region14: #{unet_forward.19} parent=0 // pred_check
    _
  $region15: #{unet_forward.19} parent=0 // pred_check_branch
    %18 = sbr.rel (0) target = $region17
  $region16: #{unet_forward.19} parent=0 // pred_region
    _
  $region17: #{unet_forward.19} parent=0 // pred_fallthru
    _
  // Predicated region
  $region18: #{unet_forward.19} parent=0 // pred_check
    _
  $region19: #{unet_forward.19} parent=0 // pred_check_branch
    %20 = sbr.rel (0) target = $region21
  $region20: #{unet_forward.19} parent=0 // pred_region
    _
  $region21: #{unet_forward.19} parent=0 // pred_fallthru
    _
  // Predicated region
  $region22: #{unet_forward.19} parent=0 // pred_check
    _
  $region23: #{unet_forward.19} parent=0 // pred_check_branch
    %22 = sbr.rel (0) target = $region25
  $region24: #{unet_forward.19} parent=0 // pred_region
    _
  $region25: #{unet_forward.19} parent=0 // pred_fallthru
    _
  %v24 = vld [vmem:[%s0] sm:$0xf]
  %v25 = vld [vmem:[%s0 + $0x4] sm:$0xf]
  %v26 = vld [vmem:[%s0 + $0x8] sm:$0xf]
  %v27 = vld [vmem:[%s0 + $0xc] sm:$0xf]
  %v28 = vunpack.c.l.bf16 %v24
  %v29 = vunpack.c.l.bf16 %v25
  %v30 = vunpack.c.l.bf16 %v26
  %v31 = vunpack.c.l.bf16 %v27
  %v32 = vld [vmem:[%s1] sm:$0xf]
  %v33 = vld [vmem:[%s1 + $0x4] sm:$0xf]
  %v34 = vld [vmem:[%s1 + $0x8] sm:$0xf]
  %v35 = vld [vmem:[%s1 + $0xc] sm:$0xf]
  %v36 = vunpack.c.l.bf16 %v32
  %v37 = vunpack.c.l.bf16 %v33
  %v38 = vunpack.c.l.bf16 %v34
  %v39 = vunpack.c.l.bf16 %v35
  %v40 = vadd.f32 %v28, %v36
  %v41 = vadd.f32 %v29, %v37
  %v42 = vadd.f32 %v30, %v38
  %v43 = vadd.f32 %v31, %v39
  %v44 = vpack.c.bf16 %v41, %v40
  %v45 = vpack.c.bf16 %v43, %v42
  %v46 = vld [vmem:[%s2] sm:$0xf]
  %v47 = vld [vmem:[%s2 + $0x4] sm:$0xf]
  %v48 = vld [vmem:[%s2 + $0x8] sm:$0xf]
  %v49 = vld [vmem:[%s2 + $0xc] sm:$0xf]
  %v50 = vld [vmem:[%s2 + $0x10] sm:$0xf]
  %v51 = vld [vmem:[%s2 + $0x14] sm:$0xf]
  %v52 = vld [vmem:[%s2 + $0x18] sm:$0xf]
  %v53 = vld [vmem:[%s2 + $0x1c] sm:$0xf]
  %v54 = vld [vmem:[%s3] sm:$0x1]
  %v56 = vlaneseq
  %v57 = vshrl.u32 %v56, 7
  %v58 = vsub.s32 0, %v57
  %v59 = vrot.slane %v54, %v58
  %v69 = vunpack.c.l.b16 %v46
  %v70 = vunpack.c.l.b16 %v47
  %v71 = vunpack.c.l.b16 %v48
  %v72 = vunpack.c.l.b16 %v49
  %v73 = vunpack.c.l.b16 %v50
  %v74 = vunpack.c.l.b16 %v51
  %v75 = vunpack.c.l.b16 %v52
  %v76 = vunpack.c.l.b16 %v53
  %v77 = vpack.c.b16 %v70, %v69
  %v78 = vpack.c.b16 %v72, %v71
  %v79 = vpack.c.b16 %v74, %v73
  %v80 = vpack.c.b16 %v76, %v75
  %vm85 = vcmask 523264
  %v87 = vsel %vm85, %v44, 0
  %v90 = vsel %vm85, %v45, 0
  %92 = vmatprep.subr.bf16.mxu0 0
  %93 = vmatpush1.bf16.msra.mxu0 %v77
  %94 = vmatprep.subr.bf16.mxu0 0
  %95 = vmatpush1.bf16.msra.mxu0 %v78
  %96 = vmatprep.subr.bf16.mxu0 0
  %97 = vmatpush1.bf16.msra.mxu0 %v79
  %98 = vmatprep.subr.bf16.mxu0 0
  %99 = vmatpush1.bf16.msra.mxu0 %v80
  %100 = vmatprep.subr.bf16.mxu0 0
  %101 = vmatpush1.bf16.msra.mxu0 0
  %102 = vmatprep.subr.bf16.mxu0 0
  %103 = vmatpush1.bf16.msra.mxu0 0
  %104 = vmatprep.subr.bf16.mxu0 0
  %105 = vmatpush1.bf16.msra.mxu0 0
  %106 = vmatprep.subr.bf16.mxu0 0
  %107 = vmatpush1.bf16.msra.mxu0 0
  %108 = vmatprep.subr.bf16.mxu0 0
  %109 = vmatpush1.bf16.msra.mxu0 0
  %110 = vmatprep.subr.bf16.mxu0 0
  %111 = vmatpush1.bf16.msra.mxu0 0
  %112 = vmatprep.subr.bf16.mxu0 0
  %113 = vmatpush1.bf16.msra.mxu0 0
  %114 = vmatprep.subr.bf16.mxu0 0
  %115 = vmatpush1.bf16.msra.mxu0 0
  %116 = vmatprep.subr.bf16.mxu0 0
  %117 = vmatpush1.bf16.msra.mxu0 0
  %118 = vmatprep.subr.bf16.mxu0 0
  %119 = vmatpush1.bf16.msra.mxu0 0
  %120 = vmatprep.subr.bf16.mxu0 0
  %121 = vmatpush1.bf16.msra.mxu0 0
  %122 = vmatprep.subr.bf16.mxu0 0
  %123 = vmatpush1.bf16.msra.mxu0 0
  %124 = vmatprep.mubr.bf16.mxu0 0
  %125 = vmatmul.mubr.bf16.gmra.mrb[0].mxu0 %v87
  %v126 = vpop.f32.mrb[0].mxu0
  %v127 = vadd.f32 %v59, %v126
  %v128 = vpop.f32.mrb[0].mxu0
  %v129 = vpop.f32.mrb[0].mxu0
  %v130 = vadd.f32 %v59, %v129
  %v131 = vpop.f32.mrb[0].mxu0
  %132 = vmatprep.mubr.bf16.mxu0 0
  %133 = vmatmul.mubr.bf16.gmra.mrb[0].mxu0 %v90
  %v134 = vpop.f32.mrb[0].mxu0
  %v135 = vadd.f32 %v59, %v134
  %v136 = vpop.f32.mrb[0].mxu0
  %v137 = vpop.f32.mrb[0].mxu0
  %v138 = vadd.f32 %v59, %v137
  %v139 = vpop.f32.mrb[0].mxu0
  %140 = vdwg.mxu0
  %v141 = vmax.f32 %v127, 0.0
  %v142 = vmax.f32 %v130, 0.0
  %v143 = vmax.f32 %v135, 0.0
  %v144 = vmax.f32 %v138, 0.0
  %v145 = vpack.c.bf16 %v142, %v141
  %v146 = vpack.c.bf16 %v144, %v143
  %v147 = vld [vmem:[%s4] sm:$0xf]
  %v148 = vld [vmem:[%s4 + $0x4] sm:$0xf]
  %v149 = vld [vmem:[%s4 + $0x8] sm:$0xf]
  %v150 = vld [vmem:[%s4 + $0xc] sm:$0xf]
  %v151 = vld [vmem:[%s4 + $0x10] sm:$0xf]
  %v152 = vld [vmem:[%s4 + $0x14] sm:$0xf]
  %v153 = vld [vmem:[%s4 + $0x18] sm:$0xf]
  %v154 = vld [vmem:[%s4 + $0x1c] sm:$0xf]
  %v155 = vld [vmem:[%s5] sm:$0x1]
  %v157 = vlaneseq
  %v158 = vshrl.u32 %v157, 7
  %v159 = vsub.s32 0, %v158
  %v160 = vrot.slane %v155, %v159
  %v170 = vunpack.c.l.b16 %v147
  %v171 = vunpack.c.l.b16 %v148
  %v172 = vunpack.c.l.b16 %v149
  %v173 = vunpack.c.l.b16 %v150
  %v174 = vunpack.c.l.b16 %v151
  %v175 = vunpack.c.l.b16 %v152
  %v176 = vunpack.c.l.b16 %v153
  %v177 = vunpack.c.l.b16 %v154
  %v178 = vpack.c.b16 %v171, %v170
  %v179 = vpack.c.b16 %v173, %v172
  %v180 = vpack.c.b16 %v175, %v174
  %v181 = vpack.c.b16 %v177, %v176
  %v187 = vsel %vm85, %v145, 0
  %v190 = vsel %vm85, %v146, 0
  %192 = vmatprep.subr.bf16.mxu0 0
  %193 = vmatpush1.bf16.msra.mxu0 %v178
  %194 = vmatprep.subr.bf16.mxu0 0
  %195 = vmatpush1.bf16.msra.mxu0 %v179
  %196 = vmatprep.subr.bf16.mxu0 0
  %197 = vmatpush1.bf16.msra.mxu0 %v180
  %198 = vmatprep.subr.bf16.mxu0 0
  %199 = vmatpush1.bf16.msra.mxu0 %v181
  %200 = vmatprep.subr.bf16.mxu0 0
  %201 = vmatpush1.bf16.msra.mxu0 0
  %202 = vmatprep.subr.bf16.mxu0 0
  %203 = vmatpush1.bf16.msra.mxu0 0
  %204 = vmatprep.subr.bf16.mxu0 0
  %205 = vmatpush1.bf16.msra.mxu0 0
  %206 = vmatprep.subr.bf16.mxu0 0
  %207 = vmatpush1.bf16.msra.mxu0 0
  %208 = vmatprep.subr.bf16.mxu0 0
  %209 = vmatpush1.bf16.msra.mxu0 0
  %210 = vmatprep.subr.bf16.mxu0 0
  %211 = vmatpush1.bf16.msra.mxu0 0
  %212 = vmatprep.subr.bf16.mxu0 0
  %213 = vmatpush1.bf16.msra.mxu0 0
  %214 = vmatprep.subr.bf16.mxu0 0
  %215 = vmatpush1.bf16.msra.mxu0 0
  %216 = vmatprep.subr.bf16.mxu0 0
  %217 = vmatpush1.bf16.msra.mxu0 0
  %218 = vmatprep.subr.bf16.mxu0 0
  %219 = vmatpush1.bf16.msra.mxu0 0
  %220 = vmatprep.subr.bf16.mxu0 0
  %221 = vmatpush1.bf16.msra.mxu0 0
  %222 = vmatprep.subr.bf16.mxu0 0
  %223 = vmatpush1.bf16.msra.mxu0 0
  %224 = vmatprep.mubr.bf16.mxu0 0
  %225 = vmatmul.mubr.bf16.gmra.mrb[0].mxu0 %v187
  %v226 = vpop.f32.mrb[0].mxu0
  %v227 = vadd.f32 %v160, %v226
  %v228 = vpop.f32.mrb[0].mxu0
  %v229 = vpop.f32.mrb[0].mxu0
  %v230 = vadd.f32 %v160, %v229
  %v231 = vpop.f32.mrb[0].mxu0
  %232 = vmatprep.mubr.bf16.mxu0 0
  %233 = vmatmul.mubr.bf16.gmra.mrb[0].mxu0 %v190
  %v234 = vpop.f32.mrb[0].mxu0
  %v235 = vadd.f32 %v160, %v234
  %v236 = vpop.f32.mrb[0].mxu0
  %v237 = vpop.f32.mrb[0].mxu0
  %v238 = vadd.f32 %v160, %v237
  %v239 = vpop.f32.mrb[0].mxu0
  %240 = vdwg.mxu0
  %v241 = vpack.c.bf16 %v230, %v227
  %v242 = vpack.c.bf16 %v238, %v235
  %v245 = vunpack.c.l.b16 %v241
  %v246 = vunpack.c.h.b16 %v241
  %v247 = vunpack.c.l.b16 %v242
  %v248 = vunpack.c.h.b16 %v242
  %v249 = vpack.c.b16 %v245, %v245
  %v250 = vpack.c.b16 %v246, %v246
  %v251 = vpack.c.b16 %v247, %v247
  %v252 = vpack.c.b16 %v248, %v248
  %vm257 = vcmask 519168
  %258 = vst.msk [vmem:[%s6] sm:$0xf] %vm257, %v249
  %259 = vst.msk [vmem:[%s6 + $0x4] sm:$0xf] %vm257, %v250
  %260 = vst.msk [vmem:[%s6 + $0x8] sm:$0xf] %vm257, %v251
  %261 = vst.msk [vmem:[%s6 + $0xc] sm:$0xf] %vm257, %v252
  // Predicated region
  $region26: #{unet_forward.19} parent=0 // pred_check
    _
  $region27: #{unet_forward.19} parent=0 // pred_check_branch
    %263 = sbr.rel (0) target = $region29
  $region28: #{unet_forward.19} parent=0 // pred_region
    _
  $region29: #{unet_forward.19} parent=0 // pred_fallthru
    _
  // Predicated region
  $region30: #{unet_forward.19} parent=0 // pred_check
    _
  $region31: #{unet_forward.19} parent=0 // pred_check_branch
    %265 = sbr.rel (0) target = $region33
  $region32: #{unet_forward.19} parent=0 // pred_region
    _
  $region33: #{unet_forward.19} parent=0 // pred_fallthru
    _

// kernel: unet_forward.20
$region0: #{unet_forward.20}
  #allocation0 [shape = 'u32[]', space=smem, size = 0x4, offset = 0x4, fixed_abs, tag = 'smem constant byte address 0x4 - core index']
  #allocation1 [shape = 'u32[144,128]{1,0:T(1,128)}', space=vmem, size = 0x12000, scoped, tag = 'internal scratch']
  %s0 = inlined_call_operand.vmem [shape: bf16[64,32], index: 0, kind: input, shape index: {}]
  %s1 = inlined_call_operand.vmem [shape: bf16[64,32], index: 1, kind: input, shape index: {}]
  %s2 = inlined_call_operand.vmem [shape: bf16[32,32], index: 2, kind: input, shape index: {}]
  %s3 = inlined_call_operand.vmem [shape: f32[1,32], index: 3, kind: input, shape index: {}]
  %s4 = inlined_call_operand.vmem [shape: bf16[32,32], index: 4, kind: input, shape index: {}]
  %s5 = inlined_call_operand.vmem [shape: f32[1,32], index: 5, kind: input, shape index: {}]
  %s6 = inlined_call_operand.vmem [shape: bf16[64,32], index: 6, kind: output, shape index: {}]
  %s7 = sld [smem:[#allocation0]]
  $region34: #{unet_forward.20} parent=0
    _
  %s9 = ssub.s32 1, %s7
  %s10 = scalar_select 0, %s9, %s7
  // Predicated region
  $region2: #{unet_forward.20} parent=0 // pred_check
    _
  $region3: #{unet_forward.20} parent=0 // pred_check_branch
    %12 = sbr.rel (0) target = $region5
  $region4: #{unet_forward.20} parent=0 // pred_region
    _
  $region5: #{unet_forward.20} parent=0 // pred_fallthru
    _
  // Predicated region
  $region6: #{unet_forward.20} parent=0 // pred_check
    _
  $region7: #{unet_forward.20} parent=0 // pred_check_branch
    %14 = sbr.rel (0) target = $region9
  $region8: #{unet_forward.20} parent=0 // pred_region
    _
  $region9: #{unet_forward.20} parent=0 // pred_fallthru
    _
  // Predicated region
  $region10: #{unet_forward.20} parent=0 // pred_check
    _
  $region11: #{unet_forward.20} parent=0 // pred_check_branch
    %16 = sbr.rel (0) target = $region13
  $region12: #{unet_forward.20} parent=0 // pred_region
    _
  $region13: #{unet_forward.20} parent=0 // pred_fallthru
    _
  // Predicated region
  $region14: #{unet_forward.20} parent=0 // pred_check
    _
  $region15: #{unet_forward.20} parent=0 // pred_check_branch
    %18 = sbr.rel (0) target = $region17
  $region16: #{unet_forward.20} parent=0 // pred_region
    _
  $region17: #{unet_forward.20} parent=0 // pred_fallthru
    _
  // Predicated region
  $region18: #{unet_forward.20} parent=0 // pred_check
    _
  $region19: #{unet_forward.20} parent=0 // pred_check_branch
    %20 = sbr.rel (0) target = $region21
  $region20: #{unet_forward.20} parent=0 // pred_region
    _
  $region21: #{unet_forward.20} parent=0 // pred_fallthru
    _
  // Predicated region
  $region22: #{unet_forward.20} parent=0 // pred_check
    _
  $region23: #{unet_forward.20} parent=0 // pred_check_branch
    %22 = sbr.rel (0) target = $region25
  $region24: #{unet_forward.20} parent=0 // pred_region
    _
  $region25: #{unet_forward.20} parent=0 // pred_fallthru
    _
  %v24 = vld [vmem:[%s0] sm:$0xf]
  %v25 = vld [vmem:[%s0 + $0x4] sm:$0xf]
  %v26 = vld [vmem:[%s0 + $0x8] sm:$0xf]
  %v27 = vld [vmem:[%s0 + $0xc] sm:$0xf]
  %v28 = vld [vmem:[%s0 + $0x10] sm:$0xf]
  %v29 = vld [vmem:[%s0 + $0x14] sm:$0xf]
  %v30 = vld [vmem:[%s0 + $0x18] sm:$0xf]
  %v31 = vld [vmem:[%s0 + $0x1c] sm:$0xf]
  %v32 = vunpack.c.l.bf16 %v24
  %v33 = vunpack.c.l.bf16 %v25
  %v34 = vunpack.c.l.bf16 %v26
  %v35 = vunpack.c.l.bf16 %v27
  %v36 = vunpack.c.l.bf16 %v28
  %v37 = vunpack.c.l.bf16 %v29
  %v38 = vunpack.c.l.bf16 %v30
  %v39 = vunpack.c.l.bf16 %v31
  %v40 = vld [vmem:[%s1] sm:$0xf]
  %v41 = vld [vmem:[%s1 + $0x4] sm:$0xf]
  %v42 = vld [vmem:[%s1 + $0x8] sm:$0xf]
  %v43 = vld [vmem:[%s1 + $0xc] sm:$0xf]
  %v44 = vld [vmem:[%s1 + $0x10] sm:$0xf]
  %v45 = vld [vmem:[%s1 + $0x14] sm:$0xf]
  %v46 = vld [vmem:[%s1 + $0x18] sm:$0xf]
  %v47 = vld [vmem:[%s1 + $0x1c] sm:$0xf]
  %v48 = vunpack.c.l.bf16 %v40
  %v49 = vunpack.c.l.bf16 %v41
  %v50 = vunpack.c.l.bf16 %v42
  %v51 = vunpack.c.l.bf16 %v43
  %v52 = vunpack.c.l.bf16 %v44
  %v53 = vunpack.c.l.bf16 %v45
  %v54 = vunpack.c.l.bf16 %v46
  %v55 = vunpack.c.l.bf16 %v47
  %v56 = vadd.f32 %v32, %v48
  %v57 = vadd.f32 %v33, %v49
  %v58 = vadd.f32 %v34, %v50
  %v59 = vadd.f32 %v35, %v51
  %v60 = vadd.f32 %v36, %v52
  %v61 = vadd.f32 %v37, %v53
  %v62 = vadd.f32 %v38, %v54
  %v63 = vadd.f32 %v39, %v55
  %v64 = vpack.c.bf16 %v57, %v56
  %v65 = vpack.c.bf16 %v59, %v58
  %v66 = vpack.c.bf16 %v61, %v60
  %v67 = vpack.c.bf16 %v63, %v62
  %v68 = vld [vmem:[%s2] sm:$0xf]
  %v69 = vld [vmem:[%s2 + $0x4] sm:$0xf]
  %v70 = vld [vmem:[%s2 + $0x8] sm:$0xf]
  %v71 = vld [vmem:[%s2 + $0xc] sm:$0xf]
  %v72 = vld [vmem:[%s3] sm:$0x1]
  %v74 = vlaneseq
  %v75 = vshrl.u32 %v74, 7
  %v76 = vsub.s32 0, %v75
  %v77 = vrot.slane %v72, %v76
  %v83 = vunpack.c.l.b16 %v68
  %v84 = vunpack.c.l.b16 %v69
  %v85 = vunpack.c.l.b16 %v70
  %v86 = vunpack.c.l.b16 %v71
  %v87 = vpack.c.b16 %v84, %v83
  %v88 = vpack.c.b16 %v86, %v85
  %vm91 = vcmask 261120
  %v93 = vsel %vm91, %v64, 0
  %v96 = vsel %vm91, %v65, 0
  %v99 = vsel %vm91, %v66, 0
  %v102 = vsel %vm91, %v67, 0
  %104 = vmatprep.subr.bf16.mxu0 0
  %105 = vmatpush1.bf16.msra.mxu0 %v87
  %106 = vmatprep.subr.bf16.mxu0 0
  %107 = vmatpush1.bf16.msra.mxu0 %v88
  %108 = vmatprep.subr.bf16.mxu0 0
  %109 = vmatpush1.bf16.msra.mxu0 0
  %110 = vmatprep.subr.bf16.mxu0 0
  %111 = vmatpush1.bf16.msra.mxu0 0
  %112 = vmatprep.subr.bf16.mxu0 0
  %113 = vmatpush1.bf16.msra.mxu0 0
  %114 = vmatprep.subr.bf16.mxu0 0
  %115 = vmatpush1.bf16.msra.mxu0 0
  %116 = vmatprep.subr.bf16.mxu0 0
  %117 = vmatpush1.bf16.msra.mxu0 0
  %118 = vmatprep.subr.bf16.mxu0 0
  %119 = vmatpush1.bf16.msra.mxu0 0
  %120 = vmatprep.subr.bf16.mxu0 0
  %121 = vmatpush1.bf16.msra.mxu0 0
  %122 = vmatprep.subr.bf16.mxu0 0
  %123 = vmatpush1.bf16.msra.mxu0 0
  %124 = vmatprep.subr.bf16.mxu0 0
  %125 = vmatpush1.bf16.msra.mxu0 0
  %126 = vmatprep.subr.bf16.mxu0 0
  %127 = vmatpush1.bf16.msra.mxu0 0
  %128 = vmatprep.subr.bf16.mxu0 0
  %129 = vmatpush1.bf16.msra.mxu0 0
  %130 = vmatprep.subr.bf16.mxu0 0
  %131 = vmatpush1.bf16.msra.mxu0 0
  %132 = vmatprep.subr.bf16.mxu0 0
  %133 = vmatpush1.bf16.msra.mxu0 0
  %134 = vmatprep.subr.bf16.mxu0 0
  %135 = vmatpush1.bf16.msra.mxu0 0
  %136 = vmatprep.mubr.bf16.mxu0 0
  %137 = vmatmul.mubr.bf16.gmra.mrb[0].mxu0 %v93
  %v138 = vpop.f32.mrb[0].mxu0
  %v139 = vadd.f32 %v77, %v138
  %v140 = vpop.f32.mrb[0].mxu0
  %v141 = vpop.f32.mrb[0].mxu0
  %v142 = vadd.f32 %v77, %v141
  %v143 = vpop.f32.mrb[0].mxu0
  %144 = vmatprep.mubr.bf16.mxu0 0
  %145 = vmatmul.mubr.bf16.gmra.mrb[0].mxu0 %v96
  %v146 = vpop.f32.mrb[0].mxu0
  %v147 = vadd.f32 %v77, %v146
  %v148 = vpop.f32.mrb[0].mxu0
  %v149 = vpop.f32.mrb[0].mxu0
  %v150 = vadd.f32 %v77, %v149
  %v151 = vpop.f32.mrb[0].mxu0
  %152 = vmatprep.mubr.bf16.mxu0 0
  %153 = vmatmul.mubr.bf16.gmra.mrb[0].mxu0 %v99
  %v154 = vpop.f32.mrb[0].mxu0
  %v155 = vadd.f32 %v77, %v154
  %v156 = vpop.f32.mrb[0].mxu0
  %v157 = vpop.f32.mrb[0].mxu0
  %v158 = vadd.f32 %v77, %v157
  %v159 = vpop.f32.mrb[0].mxu0
  %160 = vmatprep.mubr.bf16.mxu0 0
  %161 = vmatmul.mubr.bf16.gmra.mrb[0].mxu0 %v102
  %v162 = vpop.f32.mrb[0].mxu0
  %v163 = vadd.f32 %v77, %v162
  %v164 = vpop.f32.mrb[0].mxu0
  %v165 = vpop.f32.mrb[0].mxu0
  %v166 = vadd.f32 %v77, %v165
  %v167 = vpop.f32.mrb[0].mxu0
  %168 = vdwg.mxu0
  %v169 = vmax.f32 %v139, 0.0
  %v170 = vmax.f32 %v142, 0.0
  %v171 = vmax.f32 %v147, 0.0
  %v172 = vmax.f32 %v150, 0.0
  %v173 = vmax.f32 %v155, 0.0
  %v174 = vmax.f32 %v158, 0.0
  %v175 = vmax.f32 %v163, 0.0
  %v176 = vmax.f32 %v166, 0.0
  %v177 = vpack.c.bf16 %v170, %v169
  %v178 = vpack.c.bf16 %v172, %v171
  %v179 = vpack.c.bf16 %v174, %v173
  %v180 = vpack.c.bf16 %v176, %v175
  %v181 = vld [vmem:[%s4] sm:$0xf]
  %v182 = vld [vmem:[%s4 + $0x4] sm:$0xf]
  %v183 = vld [vmem:[%s4 + $0x8] sm:$0xf]
  %v184 = vld [vmem:[%s4 + $0xc] sm:$0xf]
  %v185 = vld [vmem:[%s5] sm:$0x1]
  %v187 = vlaneseq
  %v188 = vshrl.u32 %v187, 7
  %v189 = vsub.s32 0, %v188
  %v190 = vrot.slane %v185, %v189
  %v196 = vunpack.c.l.b16 %v181
  %v197 = vunpack.c.l.b16 %v182
  %v198 = vunpack.c.l.b16 %v183
  %v199 = vunpack.c.l.b16 %v184
  %v200 = vpack.c.b16 %v197, %v196
  %v201 = vpack.c.b16 %v199, %v198
  %v205 = vsel %vm91, %v177, 0
  %v208 = vsel %vm91, %v178, 0
  %v211 = vsel %vm91, %v179, 0
  %v214 = vsel %vm91, %v180, 0
  %216 = vmatprep.subr.bf16.mxu0 0
  %217 = vmatpush1.bf16.msra.mxu0 %v200
  %218 = vmatprep.subr.bf16.mxu0 0
  %219 = vmatpush1.bf16.msra.mxu0 %v201
  %220 = vmatprep.subr.bf16.mxu0 0
  %221 = vmatpush1.bf16.msra.mxu0 0
  %222 = vmatprep.subr.bf16.mxu0 0
  %223 = vmatpush1.bf16.msra.mxu0 0
  %224 = vmatprep.subr.bf16.mxu0 0
  %225 = vmatpush1.bf16.msra.mxu0 0
  %226 = vmatprep.subr.bf16.mxu0 0
  %227 = vmatpush1.bf16.msra.mxu0 0
  %228 = vmatprep.subr.bf16.mxu0 0
  %229 = vmatpush1.bf16.msra.mxu0 0
  %230 = vmatprep.subr.bf16.mxu0 0
  %231 = vmatpush1.bf16.msra.mxu0 0
  %232 = vmatprep.subr.bf16.mxu0 0
  %233 = vmatpush1.bf16.msra.mxu0 0
  %234 = vmatprep.subr.bf16.mxu0 0
  %235 = vmatpush1.bf16.msra.mxu0 0
  %236 = vmatprep.subr.bf16.mxu0 0
  %237 = vmatpush1.bf16.msra.mxu0 0
  %238 = vmatprep.subr.bf16.mxu0 0
  %239 = vmatpush1.bf16.msra.mxu0 0
  %240 = vmatprep.subr.bf16.mxu0 0
  %241 = vmatpush1.bf16.msra.mxu0 0
  %242 = vmatprep.subr.bf16.mxu0 0
  %243 = vmatpush1.bf16.msra.mxu0 0
  %244 = vmatprep.subr.bf16.mxu0 0
  %245 = vmatpush1.bf16.msra.mxu0 0
  %246 = vmatprep.subr.bf16.mxu0 0
  %247 = vmatpush1.bf16.msra.mxu0 0
  %248 = vmatprep.mubr.bf16.mxu0 0
  %249 = vmatmul.mubr.bf16.gmra.mrb[0].mxu0 %v205
  %v250 = vpop.f32.mrb[0].mxu0
  %v251 = vadd.f32 %v190, %v250
  %v252 = vpop.f32.mrb[0].mxu0
  %v253 = vpop.f32.mrb[0].mxu0
  %v254 = vadd.f32 %v190, %v253
  %v255 = vpop.f32.mrb[0].mxu0
  %256 = vmatprep.mubr.bf16.mxu0 0
  %257 = vmatmul.mubr.bf16.gmra.mrb[0].mxu0 %v208
  %v258 = vpop.f32.mrb[0].mxu0
  %v259 = vadd.f32 %v190, %v258
  %v260 = vpop.f32.mrb[0].mxu0
  %v261 = vpop.f32.mrb[0].mxu0
  %v262 = vadd.f32 %v190, %v261
  %v263 = vpop.f32.mrb[0].mxu0
  %264 = vmatprep.mubr.bf16.mxu0 0
  %265 = vmatmul.mubr.bf16.gmra.mrb[0].mxu0 %v211
  %v266 = vpop.f32.mrb[0].mxu0
  %v267 = vadd.f32 %v190, %v266
  %v268 = vpop.f32.mrb[0].mxu0
  %v269 = vpop.f32.mrb[0].mxu0
  %v270 = vadd.f32 %v190, %v269
  %v271 = vpop.f32.mrb[0].mxu0
  %272 = vmatprep.mubr.bf16.mxu0 0
  %273 = vmatmul.mubr.bf16.gmra.mrb[0].mxu0 %v214
  %v274 = vpop.f32.mrb[0].mxu0
  %v275 = vadd.f32 %v190, %v274
  %v276 = vpop.f32.mrb[0].mxu0
  %v277 = vpop.f32.mrb[0].mxu0
  %v278 = vadd.f32 %v190, %v277
  %v279 = vpop.f32.mrb[0].mxu0
  %280 = vdwg.mxu0
  %v281 = vpack.c.bf16 %v254, %v251
  %v282 = vpack.c.bf16 %v262, %v259
  %v283 = vpack.c.bf16 %v270, %v267
  %v284 = vpack.c.bf16 %v278, %v275
  %v289 = vunpack.c.l.b16 %v281
  %v290 = vunpack.c.h.b16 %v281
  %v291 = vunpack.c.l.b16 %v282
  %v292 = vunpack.c.h.b16 %v282
  %v293 = vunpack.c.l.b16 %v283
  %v294 = vunpack.c.h.b16 %v283
  %v295 = vunpack.c.l.b16 %v284
  %v296 = vunpack.c.h.b16 %v284
  %v297 = vpack.c.b16 %v289, %v289
  %v298 = vpack.c.b16 %v290, %v290
  %v299 = vpack.c.b16 %v291, %v291
  %v300 = vpack.c.b16 %v292, %v292
  %v301 = vpack.c.b16 %v293, %v293
  %v302 = vpack.c.b16 %v294, %v294
  %v303 = vpack.c.b16 %v295, %v295
  %v304 = vpack.c.b16 %v296, %v296
  %vm313 = vcmask 257024
  %314 = vst.msk [vmem:[%s6] sm:$0xf] %vm313, %v297
  %315 = vst.msk [vmem:[%s6 + $0x4] sm:$0xf] %vm313, %v298
  %316 = vst.msk [vmem:[%s6 + $0x8] sm:$0xf] %vm313, %v299
  %317 = vst.msk [vmem:[%s6 + $0xc] sm:$0xf] %vm313, %v300
  %318 = vst.msk [vmem:[%s6 + $0x10] sm:$0xf] %vm313, %v301
  %319 = vst.msk [vmem:[%s6 + $0x14] sm:$0xf] %vm313, %v302
  %320 = vst.msk [vmem:[%s6 + $0x18] sm:$0xf] %vm313, %v303
  %321 = vst.msk [vmem:[%s6 + $0x1c] sm:$0xf] %vm313, %v304
  // Predicated region
  $region26: #{unet_forward.20} parent=0 // pred_check
    _
  $region27: #{unet_forward.20} parent=0 // pred_check_branch
    %323 = sbr.rel (0) target = $region29
  $region28: #{unet_forward.20} parent=0 // pred_region
    _
  $region29: #{unet_forward.20} parent=0 // pred_fallthru
    _
  // Predicated region
  $region30: #{unet_forward.20} parent=0 // pred_check
    _
  $region31: #{unet_forward.20} parent=0 // pred_check_branch
    %325 = sbr.rel (0) target = $region33
  $region32: #{unet_forward.20} parent=0 // pred_region
    _
  $region33: #{unet_forward.20} parent=0 // pred_fallthru
    _

// kernel: unet_forward.21
$region0: #{unet_forward.21}
  #allocation0 [shape = 'u32[]', space=smem, size = 0x4, offset = 0x4, fixed_abs, tag = 'smem constant byte address 0x4 - core index']
  #allocation1 [shape = 'u32[144,128]{1,0:T(1,128)}', space=vmem, size = 0x12000, scoped, tag = 'internal scratch']
  %s0 = inlined_call_operand.vmem [shape: bf16[128,16], index: 0, kind: input, shape index: {}]
  %s1 = inlined_call_operand.vmem [shape: bf16[128,16], index: 1, kind: input, shape index: {}]
  %s2 = inlined_call_operand.vmem [shape: bf16[16,8], index: 2, kind: input, shape index: {}]
  %s3 = inlined_call_operand.vmem [shape: f32[1,8], index: 3, kind: input, shape index: {}]
  %s4 = inlined_call_operand.vmem [shape: bf16[128,8], index: 4, kind: output, shape index: {}]
  %s5 = sld [smem:[#allocation0]]
  $region26: #{unet_forward.21} parent=0
    _
  %s7 = ssub.s32 1, %s5
  %s8 = scalar_select 0, %s7, %s5
  // Predicated region
  $region2: #{unet_forward.21} parent=0 // pred_check
    _
  $region3: #{unet_forward.21} parent=0 // pred_check_branch
    %10 = sbr.rel (0) target = $region5
  $region4: #{unet_forward.21} parent=0 // pred_region
    _
  $region5: #{unet_forward.21} parent=0 // pred_fallthru
    _
  // Predicated region
  $region6: #{unet_forward.21} parent=0 // pred_check
    _
  $region7: #{unet_forward.21} parent=0 // pred_check_branch
    %12 = sbr.rel (0) target = $region9
  $region8: #{unet_forward.21} parent=0 // pred_region
    _
  $region9: #{unet_forward.21} parent=0 // pred_fallthru
    _
  // Predicated region
  $region10: #{unet_forward.21} parent=0 // pred_check
    _
  $region11: #{unet_forward.21} parent=0 // pred_check_branch
    %14 = sbr.rel (0) target = $region13
  $region12: #{unet_forward.21} parent=0 // pred_region
    _
  $region13: #{unet_forward.21} parent=0 // pred_fallthru
    _
  // Predicated region
  $region14: #{unet_forward.21} parent=0 // pred_check
    _
  $region15: #{unet_forward.21} parent=0 // pred_check_branch
    %16 = sbr.rel (0) target = $region17
  $region16: #{unet_forward.21} parent=0 // pred_region
    _
  $region17: #{unet_forward.21} parent=0 // pred_fallthru
    _
  %v18 = vld [vmem:[%s0] sm:$0xf]
  %v19 = vld [vmem:[%s0 + $0x4] sm:$0xf]
  %v20 = vld [vmem:[%s0 + $0x8] sm:$0xf]
  %v21 = vld [vmem:[%s0 + $0xc] sm:$0xf]
  %v22 = vld [vmem:[%s0 + $0x10] sm:$0xf]
  %v23 = vld [vmem:[%s0 + $0x14] sm:$0xf]
  %v24 = vld [vmem:[%s0 + $0x18] sm:$0xf]
  %v25 = vld [vmem:[%s0 + $0x1c] sm:$0xf]
  %v26 = vld [vmem:[%s0 + $0x20] sm:$0xf]
  %v27 = vld [vmem:[%s0 + $0x24] sm:$0xf]
  %v28 = vld [vmem:[%s0 + $0x28] sm:$0xf]
  %v29 = vld [vmem:[%s0 + $0x2c] sm:$0xf]
  %v30 = vld [vmem:[%s0 + $0x30] sm:$0xf]
  %v31 = vld [vmem:[%s0 + $0x34] sm:$0xf]
  %v32 = vld [vmem:[%s0 + $0x38] sm:$0xf]
  %v33 = vld [vmem:[%s0 + $0x3c] sm:$0xf]
  %v34 = vunpack.c.l.bf16 %v18
  %v35 = vunpack.c.l.bf16 %v19
  %v36 = vunpack.c.l.bf16 %v20
  %v37 = vunpack.c.l.bf16 %v21
  %v38 = vunpack.c.l.bf16 %v22
  %v39 = vunpack.c.l.bf16 %v23
  %v40 = vunpack.c.l.bf16 %v24
  %v41 = vunpack.c.l.bf16 %v25
  %v42 = vunpack.c.l.bf16 %v26
  %v43 = vunpack.c.l.bf16 %v27
  %v44 = vunpack.c.l.bf16 %v28
  %v45 = vunpack.c.l.bf16 %v29
  %v46 = vunpack.c.l.bf16 %v30
  %v47 = vunpack.c.l.bf16 %v31
  %v48 = vunpack.c.l.bf16 %v32
  %v49 = vunpack.c.l.bf16 %v33
  %v50 = vld [vmem:[%s1] sm:$0xf]
  %v51 = vld [vmem:[%s1 + $0x4] sm:$0xf]
  %v52 = vld [vmem:[%s1 + $0x8] sm:$0xf]
  %v53 = vld [vmem:[%s1 + $0xc] sm:$0xf]
  %v54 = vld [vmem:[%s1 + $0x10] sm:$0xf]
  %v55 = vld [vmem:[%s1 + $0x14] sm:$0xf]
  %v56 = vld [vmem:[%s1 + $0x18] sm:$0xf]
  %v57 = vld [vmem:[%s1 + $0x1c] sm:$0xf]
  %v58 = vld [vmem:[%s1 + $0x20] sm:$0xf]
  %v59 = vld [vmem:[%s1 + $0x24] sm:$0xf]
  %v60 = vld [vmem:[%s1 + $0x28] sm:$0xf]
  %v61 = vld [vmem:[%s1 + $0x2c] sm:$0xf]
  %v62 = vld [vmem:[%s1 + $0x30] sm:$0xf]
  %v63 = vld [vmem:[%s1 + $0x34] sm:$0xf]
  %v64 = vld [vmem:[%s1 + $0x38] sm:$0xf]
  %v65 = vld [vmem:[%s1 + $0x3c] sm:$0xf]
  %v66 = vunpack.c.l.bf16 %v50
  %v67 = vunpack.c.l.bf16 %v51
  %v68 = vunpack.c.l.bf16 %v52
  %v69 = vunpack.c.l.bf16 %v53
  %v70 = vunpack.c.l.bf16 %v54
  %v71 = vunpack.c.l.bf16 %v55
  %v72 = vunpack.c.l.bf16 %v56
  %v73 = vunpack.c.l.bf16 %v57
  %v74 = vunpack.c.l.bf16 %v58
  %v75 = vunpack.c.l.bf16 %v59
  %v76 = vunpack.c.l.bf16 %v60
  %v77 = vunpack.c.l.bf16 %v61
  %v78 = vunpack.c.l.bf16 %v62
  %v79 = vunpack.c.l.bf16 %v63
  %v80 = vunpack.c.l.bf16 %v64
  %v81 = vunpack.c.l.bf16 %v65
  %v82 = vadd.f32 %v34, %v66
  %v83 = vadd.f32 %v35, %v67
  %v84 = vadd.f32 %v36, %v68
  %v85 = vadd.f32 %v37, %v69
  %v86 = vadd.f32 %v38, %v70
  %v87 = vadd.f32 %v39, %v71
  %v88 = vadd.f32 %v40, %v72
  %v89 = vadd.f32 %v41, %v73
  %v90 = vadd.f32 %v42, %v74
  %v91 = vadd.f32 %v43, %v75
  %v92 = vadd.f32 %v44, %v76
  %v93 = vadd.f32 %v45, %v77
  %v94 = vadd.f32 %v46, %v78
  %v95 = vadd.f32 %v47, %v79
  %v96 = vadd.f32 %v48, %v80
  %v97 = vadd.f32 %v49, %v81
  %v98 = vpack.c.bf16 %v83, %v82
  %v99 = vpack.c.bf16 %v85, %v84
  %v100 = vpack.c.bf16 %v87, %v86
  %v101 = vpack.c.bf16 %v89, %v88
  %v102 = vpack.c.bf16 %v91, %v90
  %v103 = vpack.c.bf16 %v93, %v92
  %v104 = vpack.c.bf16 %v95, %v94
  %v105 = vpack.c.bf16 %v97, %v96
  %v106 = vld [vmem:[%s2] sm:$0xf]
  %v107 = vld [vmem:[%s2 + $0x4] sm:$0xf]
  %v108 = vld [vmem:[%s3] sm:$0x1]
  %v110 = vlaneseq
  %v111 = vshrl.u32 %v110, 7
  %v112 = vsub.s32 0, %v111
  %v113 = vrot.slane %v108, %v112
  %v117 = vunpack.c.l.b16 %v106
  %v118 = vunpack.c.l.b16 %v107
  %v119 = vpack.c.b16 %v118, %v117
  %vm121 = vcmask 130048
  %v123 = vsel %vm121, %v98, 0
  %v126 = vsel %vm121, %v99, 0
  %v129 = vsel %vm121, %v100, 0
  %v132 = vsel %vm121, %v101, 0
  %v135 = vsel %vm121, %v102, 0
  %v138 = vsel %vm121, %v103, 0
  %v141 = vsel %vm121, %v104, 0
  %v144 = vsel %vm121, %v105, 0
  %146 = vmatprep.subr.bf16.mxu0 0
  %147 = vmatpush1.bf16.msra.mxu0 %v119
  %148 = vmatprep.subr.bf16.mxu0 0
  %149 = vmatpush1.bf16.msra.mxu0 0
  %150 = vmatprep.subr.bf16.mxu0 0
  %151 = vmatpush1.bf16.msra.mxu0 0
  %152 = vmatprep.subr.bf16.mxu0 0
  %153 = vmatpush1.bf16.msra.mxu0 0
  %154 = vmatprep.subr.bf16.mxu0 0
  %155 = vmatpush1.bf16.msra.mxu0 0
  %156 = vmatprep.subr.bf16.mxu0 0
  %157 = vmatpush1.bf16.msra.mxu0 0
  %158 = vmatprep.subr.bf16.mxu0 0
  %159 = vmatpush1.bf16.msra.mxu0 0
  %160 = vmatprep.subr.bf16.mxu0 0
  %161 = vmatpush1.bf16.msra.mxu0 0
  %162 = vmatprep.subr.bf16.mxu0 0
  %163 = vmatpush1.bf16.msra.mxu0 0
  %164 = vmatprep.subr.bf16.mxu0 0
  %165 = vmatpush1.bf16.msra.mxu0 0
  %166 = vmatprep.subr.bf16.mxu0 0
  %167 = vmatpush1.bf16.msra.mxu0 0
  %168 = vmatprep.subr.bf16.mxu0 0
  %169 = vmatpush1.bf16.msra.mxu0 0
  %170 = vmatprep.subr.bf16.mxu0 0
  %171 = vmatpush1.bf16.msra.mxu0 0
  %172 = vmatprep.subr.bf16.mxu0 0
  %173 = vmatpush1.bf16.msra.mxu0 0
  %174 = vmatprep.subr.bf16.mxu0 0
  %175 = vmatpush1.bf16.msra.mxu0 0
  %176 = vmatprep.subr.bf16.mxu0 0
  %177 = vmatpush1.bf16.msra.mxu0 0
  %178 = vmatprep.mubr.bf16.mxu0 0
  %179 = vmatmul.mubr.bf16.gmra.mrb[0].mxu0 %v123
  %v180 = vpop.f32.mrb[0].mxu0
  %v181 = vadd.f32 %v113, %v180
  %v182 = vpop.f32.mrb[0].mxu0
  %v183 = vpop.f32.mrb[0].mxu0
  %v184 = vadd.f32 %v113, %v183
  %v185 = vpop.f32.mrb[0].mxu0
  %186 = vmatprep.mubr.bf16.mxu0 0
  %187 = vmatmul.mubr.bf16.gmra.mrb[0].mxu0 %v126
  %v188 = vpop.f32.mrb[0].mxu0
  %v189 = vadd.f32 %v113, %v188
  %v190 = vpop.f32.mrb[0].mxu0
  %v191 = vpop.f32.mrb[0].mxu0
  %v192 = vadd.f32 %v113, %v191
  %v193 = vpop.f32.mrb[0].mxu0
  %194 = vmatprep.mubr.bf16.mxu0 0
  %195 = vmatmul.mubr.bf16.gmra.mrb[0].mxu0 %v129
  %v196 = vpop.f32.mrb[0].mxu0
  %v197 = vadd.f32 %v113, %v196
  %v198 = vpop.f32.mrb[0].mxu0
  %v199 = vpop.f32.mrb[0].mxu0
  %v200 = vadd.f32 %v113, %v199
  %v201 = vpop.f32.mrb[0].mxu0
  %202 = vmatprep.mubr.bf16.mxu0 0
  %203 = vmatmul.mubr.bf16.gmra.mrb[0].mxu0 %v132
  %v204 = vpop.f32.mrb[0].mxu0
  %v205 = vadd.f32 %v113, %v204
  %v206 = vpop.f32.mrb[0].mxu0
  %v207 = vpop.f32.mrb[0].mxu0
  %v208 = vadd.f32 %v113, %v207
  %v209 = vpop.f32.mrb[0].mxu0
  %210 = vmatprep.mubr.bf16.mxu0 0
  %211 = vmatmul.mubr.bf16.gmra.mrb[0].mxu0 %v135
  %v212 = vpop.f32.mrb[0].mxu0
  %v213 = vadd.f32 %v113, %v212
  %v214 = vpop.f32.mrb[0].mxu0
  %v215 = vpop.f32.mrb[0].mxu0
  %v216 = vadd.f32 %v113, %v215
  %v217 = vpop.f32.mrb[0].mxu0
  %218 = vmatprep.mubr.bf16.mxu0 0
  %219 = vmatmul.mubr.bf16.gmra.mrb[0].mxu0 %v138
  %v220 = vpop.f32.mrb[0].mxu0
  %v221 = vadd.f32 %v113, %v220
  %v222 = vpop.f32.mrb[0].mxu0
  %v223 = vpop.f32.mrb[0].mxu0
  %v224 = vadd.f32 %v113, %v223
  %v225 = vpop.f32.mrb[0].mxu0
  %226 = vmatprep.mubr.bf16.mxu0 0
  %227 = vmatmul.mubr.bf16.gmra.mrb[0].mxu0 %v141
  %v228 = vpop.f32.mrb[0].mxu0
  %v229 = vadd.f32 %v113, %v228
  %v230 = vpop.f32.mrb[0].mxu0
  %v231 = vpop.f32.mrb[0].mxu0
  %v232 = vadd.f32 %v113, %v231
  %v233 = vpop.f32.mrb[0].mxu0
  %234 = vmatprep.mubr.bf16.mxu0 0
  %235 = vmatmul.mubr.bf16.gmra.mrb[0].mxu0 %v144
  %v236 = vpop.f32.mrb[0].mxu0
  %v237 = vadd.f32 %v113, %v236
  %v238 = vpop.f32.mrb[0].mxu0
  %v239 = vpop.f32.mrb[0].mxu0
  %v240 = vadd.f32 %v113, %v239
  %v241 = vpop.f32.mrb[0].mxu0
  %242 = vdwg.mxu0
  %v243 = vmax.f32 %v181, 0.0
  %v244 = vmax.f32 %v184, 0.0
  %v245 = vmax.f32 %v189, 0.0
  %v246 = vmax.f32 %v192, 0.0
  %v247 = vmax.f32 %v197, 0.0
  %v248 = vmax.f32 %v200, 0.0
  %v249 = vmax.f32 %v205, 0.0
  %v250 = vmax.f32 %v208, 0.0
  %v251 = vmax.f32 %v213, 0.0
  %v252 = vmax.f32 %v216, 0.0
  %v253 = vmax.f32 %v221, 0.0
  %v254 = vmax.f32 %v224, 0.0
  %v255 = vmax.f32 %v229, 0.0
  %v256 = vmax.f32 %v232, 0.0
  %v257 = vmax.f32 %v237, 0.0
  %v258 = vmax.f32 %v240, 0.0
  %v259 = vpack.c.bf16 %v244, %v243
  %v260 = vpack.c.bf16 %v246, %v245
  %v261 = vpack.c.bf16 %v248, %v247
  %v262 = vpack.c.bf16 %v250, %v249
  %v263 = vpack.c.bf16 %v252, %v251
  %v264 = vpack.c.bf16 %v254, %v253
  %v265 = vpack.c.bf16 %v256, %v255
  %v266 = vpack.c.bf16 %v258, %v257
  %v275 = vunpack.c.l.b16 %v259
  %v276 = vunpack.c.h.b16 %v259
  %v277 = vunpack.c.l.b16 %v260
  %v278 = vunpack.c.h.b16 %v260
  %v279 = vunpack.c.l.b16 %v261
  %v280 = vunpack.c.h.b16 %v261
  %v281 = vunpack.c.l.b16 %v262
  %v282 = vunpack.c.h.b16 %v262
  %v283 = vunpack.c.l.b16 %v263
  %v284 = vunpack.c.h.b16 %v263
  %v285 = vunpack.c.l.b16 %v264
  %v286 = vunpack.c.h.b16 %v264
  %v287 = vunpack.c.l.b16 %v265
  %v288 = vunpack.c.h.b16 %v265
  %v289 = vunpack.c.l.b16 %v266
  %v290 = vunpack.c.h.b16 %v266
  %v291 = vpack.c.b16 %v275, %v275
  %v292 = vpack.c.b16 %v276, %v276
  %v293 = vpack.c.b16 %v277, %v277
  %v294 = vpack.c.b16 %v278, %v278
  %v295 = vpack.c.b16 %v279, %v279
  %v296 = vpack.c.b16 %v280, %v280
  %v297 = vpack.c.b16 %v281, %v281
  %v298 = vpack.c.b16 %v282, %v282
  %v299 = vpack.c.b16 %v283, %v283
  %v300 = vpack.c.b16 %v284, %v284
  %v301 = vpack.c.b16 %v285, %v285
  %v302 = vpack.c.b16 %v286, %v286
  %v303 = vpack.c.b16 %v287, %v287
  %v304 = vpack.c.b16 %v288, %v288
  %v305 = vpack.c.b16 %v289, %v289
  %v306 = vpack.c.b16 %v290, %v290
  %vm323 = vcmask 60416
  %324 = vst.msk [vmem:[%s4] sm:$0xf] %vm323, %v291
  %325 = vst.msk [vmem:[%s4 + $0x4] sm:$0xf] %vm323, %v292
  %326 = vst.msk [vmem:[%s4 + $0x8] sm:$0xf] %vm323, %v293
  %327 = vst.msk [vmem:[%s4 + $0xc] sm:$0xf] %vm323, %v294
  %328 = vst.msk [vmem:[%s4 + $0x10] sm:$0xf] %vm323, %v295
  %329 = vst.msk [vmem:[%s4 + $0x14] sm:$0xf] %vm323, %v296
  %330 = vst.msk [vmem:[%s4 + $0x18] sm:$0xf] %vm323, %v297
  %331 = vst.msk [vmem:[%s4 + $0x1c] sm:$0xf] %vm323, %v298
  %332 = vst.msk [vmem:[%s4 + $0x20] sm:$0xf] %vm323, %v299
  %333 = vst.msk [vmem:[%s4 + $0x24] sm:$0xf] %vm323, %v300
  %334 = vst.msk [vmem:[%s4 + $0x28] sm:$0xf] %vm323, %v301
  %335 = vst.msk [vmem:[%s4 + $0x2c] sm:$0xf] %vm323, %v302
  %336 = vst.msk [vmem:[%s4 + $0x30] sm:$0xf] %vm323, %v303
  %337 = vst.msk [vmem:[%s4 + $0x34] sm:$0xf] %vm323, %v304
  %338 = vst.msk [vmem:[%s4 + $0x38] sm:$0xf] %vm323, %v305
  %339 = vst.msk [vmem:[%s4 + $0x3c] sm:$0xf] %vm323, %v306
  // Predicated region
  $region18: #{unet_forward.21} parent=0 // pred_check
    _
  $region19: #{unet_forward.21} parent=0 // pred_check_branch
    %341 = sbr.rel (0) target = $region21
  $region20: #{unet_forward.21} parent=0 // pred_region
    _
  $region21: #{unet_forward.21} parent=0 // pred_fallthru
    _
  // Predicated region
  $region22: #{unet_forward.21} parent=0 // pred_check
    _
  $region23: #{unet_forward.21} parent=0 // pred_check_branch
    %343 = sbr.rel (0) target = $region25
  $region24: #{unet_forward.21} parent=0 // pred_region
    _
  $region25: #{unet_forward.21} parent=0 // pred_fallthru
    _

// kernel: unet_forward.16
$region0: #{unet_forward.16}
  #allocation0 [shape = 'u32[]', space=smem, size = 0x4, offset = 0x4, fixed_abs, tag = 'smem constant byte address 0x4 - core index']
  #allocation1 [shape = 'u32[144,128]{1,0:T(1,128)}', space=vmem, size = 0x12000, scoped, tag = 'internal scratch']
  %s0 = inlined_call_operand.vmem [shape: bf16[4,512], index: 0, kind: input, shape index: {}]
  %s1 = inlined_call_operand.vmem [shape: bf16[512,512], index: 1, kind: input, shape index: {}]
  %s2 = inlined_call_operand.hbm [shape: f32[1,512], index: 2, kind: input, shape index: {}]
  %s3 = inlined_call_operand.hbm [shape: bf16[512,512], index: 3, kind: input, shape index: {}]
  %s4 = inlined_call_operand.hbm [shape: f32[1,512], index: 4, kind: input, shape index: {}]
  %s5 = inlined_call_operand.hbm [shape: bf16[512,512], index: 5, kind: input, shape index: {}]
  %s6 = inlined_call_operand.hbm [shape: f32[1,512], index: 6, kind: input, shape index: {}]
  %s7 = inlined_call_operand.vmem [shape: bf16[4,512], index: 7, kind: output, shape index: {}]
  %s8 = sld [smem:[#allocation0]]
  $region58: #{unet_forward.16} parent=0
    _
  %s10 = ssub.s32 1, %s8
  %s11 = scalar_select 0, %s10, %s8
  $region1: #{unet_forward.16} parent=0
    #allocation2 [shape = 'u8[2048]{0}', space=vmem, size = 0x800, scoped, tag = 'input window, operand 2, single buffered']
    #allocation3 [shape = 's32[1]{0}', space=sflag, size = 0x4, scoped, tag = 'scoped memory for unet_forward.16']
    #allocation4 [shape = 'u8[524288]{0}', space=vmem, size = 0x80000, scoped, tag = 'input window, operand 3, single buffered']
    #allocation5 [shape = 's32[1]{0}', space=sflag, size = 0x4, scoped, tag = 'scoped memory for unet_forward.16']
    #allocation6 [shape = 'u8[2048]{0}', space=vmem, size = 0x800, scoped, tag = 'input window, operand 4, single buffered']
    #allocation7 [shape = 'u8[524288]{0}', space=vmem, size = 0x80000, scoped, tag = 'input window, operand 5, single buffered']
    #allocation8 [shape = 's32[1]{0}', space=sflag, size = 0x4, scoped, tag = 'scoped memory for unet_forward.16']
    #allocation9 [shape = 'u8[2048]{0}', space=vmem, size = 0x800, scoped, tag = 'input window, operand 6, single buffered']
    %12 = vsyncpa [#allocation3], 0
    %13 = vsyncpa [#allocation5], 0
    %14 = vsyncpa [#allocation8], 0
    // Predicated region
    $region2: #{unet_forward.16} parent=1 // pred_check
      _
    $region3: #{unet_forward.16} parent=1 // pred_check_branch
      %16 = sbr.rel (0) target = $region5
    $region4: #{unet_forward.16} parent=1 // pred_region
      _
    $region5: #{unet_forward.16} parent=1 // pred_fallthru
      _
    // Predicated region
    $region6: #{unet_forward.16} parent=1 // pred_check
      _
    $region7: #{unet_forward.16} parent=1 // pred_check_branch
      %18 = sbr.rel (0) target = $region9
    $region8: #{unet_forward.16} parent=1 // pred_region
      _
    $region9: #{unet_forward.16} parent=1 // pred_fallthru
      _
    // Predicated region
    $region10: #{unet_forward.16} parent=1 // pred_check
      _
    $region11: #{unet_forward.16} parent=1 // pred_check_branch
      %20 = sbr.rel (0) target = $region13
    $region12: #{unet_forward.16} parent=1 // pred_region
      %s22 = ssub.s32 64, 64
      %23 = vsyncadd [#allocation3], %s22
      %s25 = sshll.u32 [#allocation2], 4
      %s26 = int_to_ptr.vmem [resolvable:$true] %s25
      %28 = dma.hbm_to_vmem [thread:$0]  %s2, 64, %s26, [#allocation3]
    $region13: #{unet_forward.16} parent=1 // pred_fallthru
      _
    // Predicated region
    $region14: #{unet_forward.16} parent=1 // pred_check
      _
    $region15: #{unet_forward.16} parent=1 // pred_check_branch
      %30 = sbr.rel (0) target = $region17
    $region16: #{unet_forward.16} parent=1 // pred_region
      %s32 = ssub.s32 16384, 16384
      %33 = vsyncadd [#allocation5], %s32
      %s34 = sshll.u32 [#allocation4], 4
      %s35 = int_to_ptr.vmem [resolvable:$true] %s34
      %40 = dma.hbm_to_vmem [thread:$0]  %s3, 16384, %s35, [#allocation5], 256, 256, 16
    $region17: #{unet_forward.16} parent=1 // pred_fallthru
      _
    // Predicated region
    $region18: #{unet_forward.16} parent=1 // pred_check
      _
    $region19: #{unet_forward.16} parent=1 // pred_check_branch
      %42 = sbr.rel (0) target = $region21
    $region20: #{unet_forward.16} parent=1 // pred_region
      %s44 = ssub.s32 64, 64
      %45 = vsyncadd [#allocation5], %s44
      %s47 = sshll.u32 [#allocation6], 4
      %s48 = int_to_ptr.vmem [resolvable:$true] %s47
      %50 = dma.hbm_to_vmem [thread:$0]  %s4, 64, %s48, [#allocation5]
    $region21: #{unet_forward.16} parent=1 // pred_fallthru
      _
    // Predicated region
    $region22: #{unet_forward.16} parent=1 // pred_check
      _
    $region23: #{unet_forward.16} parent=1 // pred_check_branch
      %52 = sbr.rel (0) target = $region25
    $region24: #{unet_forward.16} parent=1 // pred_region
      %s54 = ssub.s32 16384, 16384
      %55 = vsyncadd [#allocation8], %s54
      %s56 = sshll.u32 [#allocation7], 4
      %s57 = int_to_ptr.vmem [resolvable:$true] %s56
      %62 = dma.hbm_to_vmem [thread:$0]  %s5, 16384, %s57, [#allocation8], 256, 256, 16
    $region25: #{unet_forward.16} parent=1 // pred_fallthru
      _
    // Predicated region
    $region26: #{unet_forward.16} parent=1 // pred_check
      _
    $region27: #{unet_forward.16} parent=1 // pred_check_branch
      %64 = sbr.rel (0) target = $region29
    $region28: #{unet_forward.16} parent=1 // pred_region
      %s66 = ssub.s32 64, 64
      %67 = vsyncadd [#allocation8], %s66
      %s69 = sshll.u32 [#allocation9], 4
      %s70 = int_to_ptr.vmem [resolvable:$true] %s69
      %72 = dma.hbm_to_vmem [thread:$0]  %s6, 64, %s70, [#allocation8]
    $region29: #{unet_forward.16} parent=1 // pred_fallthru
      _
    // Predicated region
    $region30: #{unet_forward.16} parent=1 // pred_check
      _
    $region31: #{unet_forward.16} parent=1 // pred_check_branch
      %74 = sbr.rel (0) target = $region33
    $region32: #{unet_forward.16} parent=1 // pred_region
      %75 = dma.done [#allocation3], 64
    $region33: #{unet_forward.16} parent=1 // pred_fallthru
      _
    // Predicated region
    $region34: #{unet_forward.16} parent=1 // pred_check
      _
    $region35: #{unet_forward.16} parent=1 // pred_check_branch
      %77 = sbr.rel (0) target = $region37
    $region36: #{unet_forward.16} parent=1 // pred_region
      %78 = dma.done [#allocation5], 16384
    $region37: #{unet_forward.16} parent=1 // pred_fallthru
      _
    // Predicated region
    $region38: #{unet_forward.16} parent=1 // pred_check
      _
    $region39: #{unet_forward.16} parent=1 // pred_check_branch
      %80 = sbr.rel (0) target = $region41
    $region40: #{unet_forward.16} parent=1 // pred_region
      %81 = dma.done [#allocation5], 64
    $region41: #{unet_forward.16} parent=1 // pred_fallthru
      _
    // Predicated region
    $region42: #{unet_forward.16} parent=1 // pred_check
      _
    $region43: #{unet_forward.16} parent=1 // pred_check_branch
      %83 = sbr.rel (0) target = $region45
    $region44: #{unet_forward.16} parent=1 // pred_region
      %84 = dma.done [#allocation8], 16384
    $region45: #{unet_forward.16} parent=1 // pred_fallthru
      _
    // Predicated region
    $region46: #{unet_forward.16} parent=1 // pred_check
      _
    $region47: #{unet_forward.16} parent=1 // pred_check_branch
      %86 = sbr.rel (0) target = $region49
    $region48: #{unet_forward.16} parent=1 // pred_region
      %87 = dma.done [#allocation8], 64
    $region49: #{unet_forward.16} parent=1 // pred_fallthru
      _
    %v88 = vld [vmem:[%s0] sm:$0xff]
    %v89 = vld [vmem:[%s1] sm:$0xff]
    %v90 = vld [vmem:[%s1 + $0x8] sm:$0xff]
    %v91 = vld [vmem:[%s1 + $0x10] sm:$0xff]
    %v92 = vld [vmem:[%s1 + $0x18] sm:$0xff]
    %v93 = vld [vmem:[%s1 + $0x20] sm:$0xff]
    %v94 = vld [vmem:[%s1 + $0x28] sm:$0xff]
    %v95 = vld [vmem:[%s1 + $0x30] sm:$0xff]
    %v96 = vld [vmem:[%s1 + $0x38] sm:$0xff]
    %v97 = vld [vmem:[%s1 + $0x40] sm:$0xff]
    %v98 = vld [vmem:[%s1 + $0x48] sm:$0xff]
    %v99 = vld [vmem:[%s1 + $0x50] sm:$0xff]
    %v100 = vld [vmem:[%s1 + $0x58] sm:$0xff]
    %v101 = vld [vmem:[%s1 + $0x60] sm:$0xff]
    %v102 = vld [vmem:[%s1 + $0x68] sm:$0xff]
    %v103 = vld [vmem:[%s1 + $0x70] sm:$0xff]
    %v104 = vld [vmem:[%s1 + $0x78] sm:$0xff]
    %v105 = vld [vmem:[%s1 + $0x80] sm:$0xff]
    %v106 = vld [vmem:[%s1 + $0x88] sm:$0xff]
    %v107 = vld [vmem:[%s1 + $0x90] sm:$0xff]
    %v108 = vld [vmem:[%s1 + $0x98] sm:$0xff]
    %v109 = vld [vmem:[%s1 + $0xa0] sm:$0xff]
    %v110 = vld [vmem:[%s1 + $0xa8] sm:$0xff]
    %v111 = vld [vmem:[%s1 + $0xb0] sm:$0xff]
    %v112 = vld [vmem:[%s1 + $0xb8] sm:$0xff]
    %v113 = vld [vmem:[%s1 + $0xc0] sm:$0xff]
    %v114 = vld [vmem:[%s1 + $0xc8] sm:$0xff]
    %v115 = vld [vmem:[%s1 + $0xd0] sm:$0xff]
    %v116 = vld [vmem:[%s1 + $0xd8] sm:$0xff]
    %v117 = vld [vmem:[%s1 + $0xe0] sm:$0xff]
    %v118 = vld [vmem:[%s1 + $0xe8] sm:$0xff]
    %v119 = vld [vmem:[%s1 + $0xf0] sm:$0xff]
    %v120 = vld [vmem:[%s1 + $0xf8] sm:$0xff]
    %v121 = vld [vmem:[%s1 + $0x100] sm:$0xff]
    %v122 = vld [vmem:[%s1 + $0x108] sm:$0xff]
    %v123 = vld [vmem:[%s1 + $0x110] sm:$0xff]
    %v124 = vld [vmem:[%s1 + $0x118] sm:$0xff]
    %v125 = vld [vmem:[%s1 + $0x120] sm:$0xff]
    %v126 = vld [vmem:[%s1 + $0x128] sm:$0xff]
    %v127 = vld [vmem:[%s1 + $0x130] sm:$0xff]
    %v128 = vld [vmem:[%s1 + $0x138] sm:$0xff]
    %v129 = vld [vmem:[%s1 + $0x140] sm:$0xff]
    %v130 = vld [vmem:[%s1 + $0x148] sm:$0xff]
    %v131 = vld [vmem:[%s1 + $0x150] sm:$0xff]
    %v132 = vld [vmem:[%s1 + $0x158] sm:$0xff]
    %v133 = vld [vmem:[%s1 + $0x160] sm:$0xff]
    %v134 = vld [vmem:[%s1 + $0x168] sm:$0xff]
    %v135 = vld [vmem:[%s1 + $0x170] sm:$0xff]
    %v136 = vld [vmem:[%s1 + $0x178] sm:$0xff]
    %v137 = vld [vmem:[%s1 + $0x180] sm:$0xff]
    %v138 = vld [vmem:[%s1 + $0x188] sm:$0xff]
    %v139 = vld [vmem:[%s1 + $0x190] sm:$0xff]
    %v140 = vld [vmem:[%s1 + $0x198] sm:$0xff]
    %v141 = vld [vmem:[%s1 + $0x1a0] sm:$0xff]
    %v142 = vld [vmem:[%s1 + $0x1a8] sm:$0xff]
    %v143 = vld [vmem:[%s1 + $0x1b0] sm:$0xff]
    %v144 = vld [vmem:[%s1 + $0x1b8] sm:$0xff]
    %v145 = vld [vmem:[%s1 + $0x1c0] sm:$0xff]
    %v146 = vld [vmem:[%s1 + $0x1c8] sm:$0xff]
    %v147 = vld [vmem:[%s1 + $0x1d0] sm:$0xff]
    %v148 = vld [vmem:[%s1 + $0x1d8] sm:$0xff]
    %v149 = vld [vmem:[%s1 + $0x1e0] sm:$0xff]
    %v150 = vld [vmem:[%s1 + $0x1e8] sm:$0xff]
    %v151 = vld [vmem:[%s1 + $0x1f0] sm:$0xff]
    %v152 = vld [vmem:[%s1 + $0x1f8] sm:$0xff]
    %v153 = vld [vmem:[%s1 + $0x200] sm:$0xff]
    %v154 = vld [vmem:[%s1 + $0x208] sm:$0xff]
    %v155 = vld [vmem:[%s1 + $0x210] sm:$0xff]
    %v156 = vld [vmem:[%s1 + $0x218] sm:$0xff]
    %v157 = vld [vmem:[%s1 + $0x220] sm:$0xff]
    %v158 = vld [vmem:[%s1 + $0x228] sm:$0xff]
    %v159 = vld [vmem:[%s1 + $0x230] sm:$0xff]
    %v160 = vld [vmem:[%s1 + $0x238] sm:$0xff]
    %v161 = vld [vmem:[%s1 + $0x240] sm:$0xff]
    %v162 = vld [vmem:[%s1 + $0x248] sm:$0xff]
    %v163 = vld [vmem:[%s1 + $0x250] sm:$0xff]
    %v164 = vld [vmem:[%s1 + $0x258] sm:$0xff]
    %v165 = vld [vmem:[%s1 + $0x260] sm:$0xff]
    %v166 = vld [vmem:[%s1 + $0x268] sm:$0xff]
    %v167 = vld [vmem:[%s1 + $0x270] sm:$0xff]
    %v168 = vld [vmem:[%s1 + $0x278] sm:$0xff]
    %v169 = vld [vmem:[%s1 + $0x280] sm:$0xff]
    %v170 = vld [vmem:[%s1 + $0x288] sm:$0xff]
    %v171 = vld [vmem:[%s1 + $0x290] sm:$0xff]
    %v172 = vld [vmem:[%s1 + $0x298] sm:$0xff]
    %v173 = vld [vmem:[%s1 + $0x2a0] sm:$0xff]
    %v174 = vld [vmem:[%s1 + $0x2a8] sm:$0xff]
    %v175 = vld [vmem:[%s1 + $0x2b0] sm:$0xff]
    %v176 = vld [vmem:[%s1 + $0x2b8] sm:$0xff]
    %v177 = vld [vmem:[%s1 + $0x2c0] sm:$0xff]
    %v178 = vld [vmem:[%s1 + $0x2c8] sm:$0xff]
    %v179 = vld [vmem:[%s1 + $0x2d0] sm:$0xff]
    %v180 = vld [vmem:[%s1 + $0x2d8] sm:$0xff]
    %v181 = vld [vmem:[%s1 + $0x2e0] sm:$0xff]
    %v182 = vld [vmem:[%s1 + $0x2e8] sm:$0xff]
    %v183 = vld [vmem:[%s1 + $0x2f0] sm:$0xff]
    %v184 = vld [vmem:[%s1 + $0x2f8] sm:$0xff]
    %v185 = vld [vmem:[%s1 + $0x300] sm:$0xff]
    %v186 = vld [vmem:[%s1 + $0x308] sm:$0xff]
    %v187 = vld [vmem:[%s1 + $0x310] sm:$0xff]
    %v188 = vld [vmem:[%s1 + $0x318] sm:$0xff]
    %v189 = vld [vmem:[%s1 + $0x320] sm:$0xff]
    %v190 = vld [vmem:[%s1 + $0x328] sm:$0xff]
    %v191 = vld [vmem:[%s1 + $0x330] sm:$0xff]
    %v192 = vld [vmem:[%s1 + $0x338] sm:$0xff]
    %v193 = vld [vmem:[%s1 + $0x340] sm:$0xff]
    %v194 = vld [vmem:[%s1 + $0x348] sm:$0xff]
    %v195 = vld [vmem:[%s1 + $0x350] sm:$0xff]
    %v196 = vld [vmem:[%s1 + $0x358] sm:$0xff]
    %v197 = vld [vmem:[%s1 + $0x360] sm:$0xff]
    %v198 = vld [vmem:[%s1 + $0x368] sm:$0xff]
    %v199 = vld [vmem:[%s1 + $0x370] sm:$0xff]
    %v200 = vld [vmem:[%s1 + $0x378] sm:$0xff]
    %v201 = vld [vmem:[%s1 + $0x380] sm:$0xff]
    %v202 = vld [vmem:[%s1 + $0x388] sm:$0xff]
    %v203 = vld [vmem:[%s1 + $0x390] sm:$0xff]
    %v204 = vld [vmem:[%s1 + $0x398] sm:$0xff]
    %v205 = vld [vmem:[%s1 + $0x3a0] sm:$0xff]
    %v206 = vld [vmem:[%s1 + $0x3a8] sm:$0xff]
    %v207 = vld [vmem:[%s1 + $0x3b0] sm:$0xff]
    %v208 = vld [vmem:[%s1 + $0x3b8] sm:$0xff]
    %v209 = vld [vmem:[%s1 + $0x3c0] sm:$0xff]
    %v210 = vld [vmem:[%s1 + $0x3c8] sm:$0xff]
    %v211 = vld [vmem:[%s1 + $0x3d0] sm:$0xff]
    %v212 = vld [vmem:[%s1 + $0x3d8] sm:$0xff]
    %v213 = vld [vmem:[%s1 + $0x3e0] sm:$0xff]
    %v214 = vld [vmem:[%s1 + $0x3e8] sm:$0xff]
    %v215 = vld [vmem:[%s1 + $0x3f0] sm:$0xff]
    %v216 = vld [vmem:[%s1 + $0x3f8] sm:$0xff]
    %v217 = vld [vmem:[#allocation2] sm:$0xf]
    %v219 = vlaneseq
    %v220 = vshrl.u32 %v219, 7
    %v221 = vsub.s32 0, %v220
    %v222 = vrot.slane %v217, %v221
    %v223 = vlaneseq
    %v224 = vshrl.u32 %v223, 7
    %v225 = vsub.s32 1, %v224
    %v226 = vrot.slane %v217, %v225
    %v227 = vlaneseq
    %v228 = vshrl.u32 %v227, 7
    %v229 = vsub.s32 2, %v228
    %v230 = vrot.slane %v217, %v229
    %v231 = vlaneseq
    %v232 = vshrl.u32 %v231, 7
    %v233 = vsub.s32 3, %v232
    %v234 = vrot.slane %v217, %v233
    %v240 = vcombine.high %v88, %v88
    %v242 = vunpack.c.l.s4 1983009808
    %v243 = vunpack.c.0.s8 %v242
    %v244 = vlaneseq
    %v245 = vshrl.u32 %v244, 7
    %v246 = vsub.s32 %v243, %v245
    %v247 = vrot.slane %v88, %v246
    %v249 = vunpack.c.l.s4 1983009808
    %v250 = vunpack.c.0.s8 %v249
    %v251 = vlaneseq
    %v252 = vshrl.u32 %v251, 7
    %v253 = vsub.s32 %v250, %v252
    %v254 = vrot.slane %v240, %v253
    %v255 = vcombine.high %v247, %v247
    %v256 = vcombine.high %v254, %v254
    %v389 = vunpack.c.l.b16 %v89
    %v390 = vunpack.c.h.b16 %v89
    %v391 = vunpack.c.l.b16 %v90
    %v392 = vunpack.c.h.b16 %v90
    %v393 = vunpack.c.l.b16 %v91
    %v394 = vunpack.c.h.b16 %v91
    %v395 = vunpack.c.l.b16 %v92
    %v396 = vunpack.c.h.b16 %v92
    %v397 = vunpack.c.l.b16 %v93
    %v398 = vunpack.c.h.b16 %v93
    %v399 = vunpack.c.l.b16 %v94
    %v400 = vunpack.c.h.b16 %v94
    %v401 = vunpack.c.l.b16 %v95
    %v402 = vunpack.c.h.b16 %v95
    %v403 = vunpack.c.l.b16 %v96
    %v404 = vunpack.c.h.b16 %v96
    %v405 = vunpack.c.l.b16 %v97
    %v406 = vunpack.c.h.b16 %v97
    %v407 = vunpack.c.l.b16 %v98
    %v408 = vunpack.c.h.b16 %v98
    %v409 = vunpack.c.l.b16 %v99
    %v410 = vunpack.c.h.b16 %v99
    %v411 = vunpack.c.l.b16 %v100
    %v412 = vunpack.c.h.b16 %v100
    %v413 = vunpack.c.l.b16 %v101
    %v414 = vunpack.c.h.b16 %v101
    %v415 = vunpack.c.l.b16 %v102
    %v416 = vunpack.c.h.b16 %v102
    %v417 = vunpack.c.l.b16 %v103
    %v418 = vunpack.c.h.b16 %v103
    %v419 = vunpack.c.l.b16 %v104
    %v420 = vunpack.c.h.b16 %v104
    %v421 = vunpack.c.l.b16 %v105
    %v422 = vunpack.c.h.b16 %v105
    %v423 = vunpack.c.l.b16 %v106
    %v424 = vunpack.c.h.b16 %v106
    %v425 = vunpack.c.l.b16 %v107
    %v426 = vunpack.c.h.b16 %v107
    %v427 = vunpack.c.l.b16 %v108
    %v428 = vunpack.c.h.b16 %v108
    %v429 = vunpack.c.l.b16 %v109
    %v430 = vunpack.c.h.b16 %v109
    %v431 = vunpack.c.l.b16 %v110
    %v432 = vunpack.c.h.b16 %v110
    %v433 = vunpack.c.l.b16 %v111
    %v434 = vunpack.c.h.b16 %v111
    %v435 = vunpack.c.l.b16 %v112
    %v436 = vunpack.c.h.b16 %v112
    %v437 = vunpack.c.l.b16 %v113
    %v438 = vunpack.c.h.b16 %v113
    %v439 = vunpack.c.l.b16 %v114
    %v440 = vunpack.c.h.b16 %v114
    %v441 = vunpack.c.l.b16 %v115
    %v442 = vunpack.c.h.b16 %v115
    %v443 = vunpack.c.l.b16 %v116
    %v444 = vunpack.c.h.b16 %v116
    %v445 = vunpack.c.l.b16 %v117
    %v446 = vunpack.c.h.b16 %v117
    %v447 = vunpack.c.l.b16 %v118
    %v448 = vunpack.c.h.b16 %v118
    %v449 = vunpack.c.l.b16 %v119
    %v450 = vunpack.c.h.b16 %v119
    %v451 = vunpack.c.l.b16 %v120
    %v452 = vunpack.c.h.b16 %v120
    %v453 = vunpack.c.l.b16 %v121
    %v454 = vunpack.c.h.b16 %v121
    %v455 = vunpack.c.l.b16 %v122
    %v456 = vunpack.c.h.b16 %v122
    %v457 = vunpack.c.l.b16 %v123
    %v458 = vunpack.c.h.b16 %v123
    %v459 = vunpack.c.l.b16 %v124
    %v460 = vunpack.c.h.b16 %v124
    %v461 = vunpack.c.l.b16 %v125
    %v462 = vunpack.c.h.b16 %v125
    %v463 = vunpack.c.l.b16 %v126
    %v464 = vunpack.c.h.b16 %v126
    %v465 = vunpack.c.l.b16 %v127
    %v466 = vunpack.c.h.b16 %v127
    %v467 = vunpack.c.l.b16 %v128
    %v468 = vunpack.c.h.b16 %v128
    %v469 = vunpack.c.l.b16 %v129
    %v470 = vunpack.c.h.b16 %v129
    %v471 = vunpack.c.l.b16 %v130
    %v472 = vunpack.c.h.b16 %v130
    %v473 = vunpack.c.l.b16 %v131
    %v474 = vunpack.c.h.b16 %v131
    %v475 = vunpack.c.l.b16 %v132
    %v476 = vunpack.c.h.b16 %v132
    %v477 = vunpack.c.l.b16 %v133
    %v478 = vunpack.c.h.b16 %v133
    %v479 = vunpack.c.l.b16 %v134
    %v480 = vunpack.c.h.b16 %v134
    %v481 = vunpack.c.l.b16 %v135
    %v482 = vunpack.c.h.b16 %v135
    %v483 = vunpack.c.l.b16 %v136
    %v484 = vunpack.c.h.b16 %v136
    %v485 = vunpack.c.l.b16 %v137
    %v486 = vunpack.c.h.b16 %v137
    %v487 = vunpack.c.l.b16 %v138
    %v488 = vunpack.c.h.b16 %v138
    %v489 = vunpack.c.l.b16 %v139
    %v490 = vunpack.c.h.b16 %v139
    %v491 = vunpack.c.l.b16 %v140
    %v492 = vunpack.c.h.b16 %v140
    %v493 = vunpack.c.l.b16 %v141
    %v494 = vunpack.c.h.b16 %v141
    %v495 = vunpack.c.l.b16 %v142
    %v496 = vunpack.c.h.b16 %v142
    %v497 = vunpack.c.l.b16 %v143
    %v498 = vunpack.c.h.b16 %v143
    %v499 = vunpack.c.l.b16 %v144
    %v500 = vunpack.c.h.b16 %v144
    %v501 = vunpack.c.l.b16 %v145
    %v502 = vunpack.c.h.b16 %v145
    %v503 = vunpack.c.l.b16 %v146
    %v504 = vunpack.c.h.b16 %v146
    %v505 = vunpack.c.l.b16 %v147
    %v506 = vunpack.c.h.b16 %v147
    %v507 = vunpack.c.l.b16 %v148
    %v508 = vunpack.c.h.b16 %v148
    %v509 = vunpack.c.l.b16 %v149
    %v510 = vunpack.c.h.b16 %v149
    %v511 = vunpack.c.l.b16 %v150
    %v512 = vunpack.c.h.b16 %v150
    %v513 = vunpack.c.l.b16 %v151
    %v514 = vunpack.c.h.b16 %v151
    %v515 = vunpack.c.l.b16 %v152
    %v516 = vunpack.c.h.b16 %v152
    %v517 = vunpack.c.l.b16 %v153
    %v518 = vunpack.c.h.b16 %v153
    %v519 = vunpack.c.l.b16 %v154
    %v520 = vunpack.c.h.b16 %v154
    %v521 = vunpack.c.l.b16 %v155
    %v522 = vunpack.c.h.b16 %v155
    %v523 = vunpack.c.l.b16 %v156
    %v524 = vunpack.c.h.b16 %v156
    %v525 = vunpack.c.l.b16 %v157
    %v526 = vunpack.c.h.b16 %v157
    %v527 = vunpack.c.l.b16 %v158
    %v528 = vunpack.c.h.b16 %v158
    %v529 = vunpack.c.l.b16 %v159
    %v530 = vunpack.c.h.b16 %v159
    %v531 = vunpack.c.l.b16 %v160
    %v532 = vunpack.c.h.b16 %v160
    %v533 = vunpack.c.l.b16 %v161
    %v534 = vunpack.c.h.b16 %v161
    %v535 = vunpack.c.l.b16 %v162
    %v536 = vunpack.c.h.b16 %v162
    %v537 = vunpack.c.l.b16 %v163
    %v538 = vunpack.c.h.b16 %v163
    %v539 = vunpack.c.l.b16 %v164
    %v540 = vunpack.c.h.b16 %v164
    %v541 = vunpack.c.l.b16 %v165
    %v542 = vunpack.c.h.b16 %v165
    %v543 = vunpack.c.l.b16 %v166
    %v544 = vunpack.c.h.b16 %v166
    %v545 = vunpack.c.l.b16 %v167
    %v546 = vunpack.c.h.b16 %v167
    %v547 = vunpack.c.l.b16 %v168
    %v548 = vunpack.c.h.b16 %v168
    %v549 = vunpack.c.l.b16 %v169
    %v550 = vunpack.c.h.b16 %v169
    %v551 = vunpack.c.l.b16 %v170
    %v552 = vunpack.c.h.b16 %v170
    %v553 = vunpack.c.l.b16 %v171
    %v554 = vunpack.c.h.b16 %v171
    %v555 = vunpack.c.l.b16 %v172
    %v556 = vunpack.c.h.b16 %v172
    %v557 = vunpack.c.l.b16 %v173
    %v558 = vunpack.c.h.b16 %v173
    %v559 = vunpack.c.l.b16 %v174
    %v560 = vunpack.c.h.b16 %v174
    %v561 = vunpack.c.l.b16 %v175
    %v562 = vunpack.c.h.b16 %v175
    %v563 = vunpack.c.l.b16 %v176
    %v564 = vunpack.c.h.b16 %v176
    %v565 = vunpack.c.l.b16 %v177
    %v566 = vunpack.c.h.b16 %v177
    %v567 = vunpack.c.l.b16 %v178
    %v568 = vunpack.c.h.b16 %v178
    %v569 = vunpack.c.l.b16 %v179
    %v570 = vunpack.c.h.b16 %v179
    %v571 = vunpack.c.l.b16 %v180
    %v572 = vunpack.c.h.b16 %v180
    %v573 = vunpack.c.l.b16 %v181
    %v574 = vunpack.c.h.b16 %v181
    %v575 = vunpack.c.l.b16 %v182
    %v576 = vunpack.c.h.b16 %v182
    %v577 = vunpack.c.l.b16 %v183
    %v578 = vunpack.c.h.b16 %v183
    %v579 = vunpack.c.l.b16 %v184
    %v580 = vunpack.c.h.b16 %v184
    %v581 = vunpack.c.l.b16 %v185
    %v582 = vunpack.c.h.b16 %v185
    %v583 = vunpack.c.l.b16 %v186
    %v584 = vunpack.c.h.b16 %v186
    %v585 = vunpack.c.l.b16 %v187
    %v586 = vunpack.c.h.b16 %v187
    %v587 = vunpack.c.l.b16 %v188
    %v588 = vunpack.c.h.b16 %v188
    %v589 = vunpack.c.l.b16 %v189
    %v590 = vunpack.c.h.b16 %v189
    %v591 = vunpack.c.l.b16 %v190
    %v592 = vunpack.c.h.b16 %v190
    %v593 = vunpack.c.l.b16 %v191
    %v594 = vunpack.c.h.b16 %v191
    %v595 = vunpack.c.l.b16 %v192
    %v596 = vunpack.c.h.b16 %v192
    %v597 = vunpack.c.l.b16 %v193
    %v598 = vunpack.c.h.b16 %v193
    %v599 = vunpack.c.l.b16 %v194
    %v600 = vunpack.c.h.b16 %v194
    %v601 = vunpack.c.l.b16 %v195
    %v602 = vunpack.c.h.b16 %v195
    %v603 = vunpack.c.l.b16 %v196
    %v604 = vunpack.c.h.b16 %v196
    %v605 = vunpack.c.l.b16 %v197
    %v606 = vunpack.c.h.b16 %v197
    %v607 = vunpack.c.l.b16 %v198
    %v608 = vunpack.c.h.b16 %v198
    %v609 = vunpack.c.l.b16 %v199
    %v610 = vunpack.c.h.b16 %v199
    %v611 = vunpack.c.l.b16 %v200
    %v612 = vunpack.c.h.b16 %v200
    %v613 = vunpack.c.l.b16 %v201
    %v614 = vunpack.c.h.b16 %v201
    %v615 = vunpack.c.l.b16 %v202
    %v616 = vunpack.c.h.b16 %v202
    %v617 = vunpack.c.l.b16 %v203
    %v618 = vunpack.c.h.b16 %v203
    %v619 = vunpack.c.l.b16 %v204
    %v620 = vunpack.c.h.b16 %v204
    %v621 = vunpack.c.l.b16 %v205
    %v622 = vunpack.c.h.b16 %v205
    %v623 = vunpack.c.l.b16 %v206
    %v624 = vunpack.c.h.b16 %v206
    %v625 = vunpack.c.l.b16 %v207
    %v626 = vunpack.c.h.b16 %v207
    %v627 = vunpack.c.l.b16 %v208
    %v628 = vunpack.c.h.b16 %v208
    %v629 = vunpack.c.l.b16 %v209
    %v630 = vunpack.c.h.b16 %v209
    %v631 = vunpack.c.l.b16 %v210
    %v632 = vunpack.c.h.b16 %v210
    %v633 = vunpack.c.l.b16 %v211
    %v634 = vunpack.c.h.b16 %v211
    %v635 = vunpack.c.l.b16 %v212
    %v636 = vunpack.c.h.b16 %v212
    %v637 = vunpack.c.l.b16 %v213
    %v638 = vunpack.c.h.b16 %v213
    %v639 = vunpack.c.l.b16 %v214
    %v640 = vunpack.c.h.b16 %v214
    %v641 = vunpack.c.l.b16 %v215
    %v642 = vunpack.c.h.b16 %v215
    %v643 = vunpack.c.l.b16 %v216
    %v644 = vunpack.c.h.b16 %v216
    %v645 = vpack.c.b16 %v393, %v389
    %v646 = vpack.c.b16 %v394, %v390
    %v647 = vpack.c.b16 %v395, %v391
    %v648 = vpack.c.b16 %v396, %v392
    %v649 = vpack.c.b16 %v401, %v397
    %v650 = vpack.c.b16 %v402, %v398
    %v651 = vpack.c.b16 %v403, %v399
    %v652 = vpack.c.b16 %v404, %v400
    %v653 = vpack.c.b16 %v409, %v405
    %v654 = vpack.c.b16 %v410, %v406
    %v655 = vpack.c.b16 %v411, %v407
    %v656 = vpack.c.b16 %v412, %v408
    %v657 = vpack.c.b16 %v417, %v413
    %v658 = vpack.c.b16 %v418, %v414
    %v659 = vpack.c.b16 %v419, %v415
    %v660 = vpack.c.b16 %v420, %v416
    %v661 = vpack.c.b16 %v425, %v421
    %v662 = vpack.c.b16 %v426, %v422
    %v663 = vpack.c.b16 %v427, %v423
    %v664 = vpack.c.b16 %v428, %v424
    %v665 = vpack.c.b16 %v433, %v429
    %v666 = vpack.c.b16 %v434, %v430
    %v667 = vpack.c.b16 %v435, %v431
    %v668 = vpack.c.b16 %v436, %v432
    %v669 = vpack.c.b16 %v441, %v437
    %v670 = vpack.c.b16 %v442, %v438
    %v671 = vpack.c.b16 %v443, %v439
    %v672 = vpack.c.b16 %v444, %v440
    %v673 = vpack.c.b16 %v449, %v445
    %v674 = vpack.c.b16 %v450, %v446
    %v675 = vpack.c.b16 %v451, %v447
    %v676 = vpack.c.b16 %v452, %v448
    %v677 = vpack.c.b16 %v457, %v453
    %v678 = vpack.c.b16 %v458, %v454
    %v679 = vpack.c.b16 %v459, %v455
    %v680 = vpack.c.b16 %v460, %v456
    %v681 = vpack.c.b16 %v465, %v461
    %v682 = vpack.c.b16 %v466, %v462
    %v683 = vpack.c.b16 %v467, %v463
    %v684 = vpack.c.b16 %v468, %v464
    %v685 = vpack.c.b16 %v473, %v469
    %v686 = vpack.c.b16 %v474, %v470
    %v687 = vpack.c.b16 %v475, %v471
    %v688 = vpack.c.b16 %v476, %v472
    %v689 = vpack.c.b16 %v481, %v477
    %v690 = vpack.c.b16 %v482, %v478
    %v691 = vpack.c.b16 %v483, %v479
    %v692 = vpack.c.b16 %v484, %v480
    %v693 = vpack.c.b16 %v489, %v485
    %v694 = vpack.c.b16 %v490, %v486
    %v695 = vpack.c.b16 %v491, %v487
    %v696 = vpack.c.b16 %v492, %v488
    %v697 = vpack.c.b16 %v497, %v493
    %v698 = vpack.c.b16 %v498, %v494
    %v699 = vpack.c.b16 %v499, %v495
    %v700 = vpack.c.b16 %v500, %v496
    %v701 = vpack.c.b16 %v505, %v501
    %v702 = vpack.c.b16 %v506, %v502
    %v703 = vpack.c.b16 %v507, %v503
    %v704 = vpack.c.b16 %v508, %v504
    %v705 = vpack.c.b16 %v513, %v509
    %v706 = vpack.c.b16 %v514, %v510
    %v707 = vpack.c.b16 %v515, %v511
    %v708 = vpack.c.b16 %v516, %v512
    %v709 = vpack.c.b16 %v521, %v517
    %v710 = vpack.c.b16 %v522, %v518
    %v711 = vpack.c.b16 %v523, %v519
    %v712 = vpack.c.b16 %v524, %v520
    %v713 = vpack.c.b16 %v529, %v525
    %v714 = vpack.c.b16 %v530, %v526
    %v715 = vpack.c.b16 %v531, %v527
    %v716 = vpack.c.b16 %v532, %v528
    %v717 = vpack.c.b16 %v537, %v533
    %v718 = vpack.c.b16 %v538, %v534
    %v719 = vpack.c.b16 %v539, %v535
    %v720 = vpack.c.b16 %v540, %v536
    %v721 = vpack.c.b16 %v545, %v541
    %v722 = vpack.c.b16 %v546, %v542
    %v723 = vpack.c.b16 %v547, %v543
    %v724 = vpack.c.b16 %v548, %v544
    %v725 = vpack.c.b16 %v553, %v549
    %v726 = vpack.c.b16 %v554, %v550
    %v727 = vpack.c.b16 %v555, %v551
    %v728 = vpack.c.b16 %v556, %v552
    %v729 = vpack.c.b16 %v561, %v557
    %v730 = vpack.c.b16 %v562, %v558
    %v731 = vpack.c.b16 %v563, %v559
    %v732 = vpack.c.b16 %v564, %v560
    %v733 = vpack.c.b16 %v569, %v565
    %v734 = vpack.c.b16 %v570, %v566
    %v735 = vpack.c.b16 %v571, %v567
    %v736 = vpack.c.b16 %v572, %v568
    %v737 = vpack.c.b16 %v577, %v573
    %v738 = vpack.c.b16 %v578, %v574
    %v739 = vpack.c.b16 %v579, %v575
    %v740 = vpack.c.b16 %v580, %v576
    %v741 = vpack.c.b16 %v585, %v581
    %v742 = vpack.c.b16 %v586, %v582
    %v743 = vpack.c.b16 %v587, %v583
    %v744 = vpack.c.b16 %v588, %v584
    %v745 = vpack.c.b16 %v593, %v589
    %v746 = vpack.c.b16 %v594, %v590
    %v747 = vpack.c.b16 %v595, %v591
    %v748 = vpack.c.b16 %v596, %v592
    %v749 = vpack.c.b16 %v601, %v597
    %v750 = vpack.c.b16 %v602, %v598
    %v751 = vpack.c.b16 %v603, %v599
    %v752 = vpack.c.b16 %v604, %v600
    %v753 = vpack.c.b16 %v609, %v605
    %v754 = vpack.c.b16 %v610, %v606
    %v755 = vpack.c.b16 %v611, %v607
    %v756 = vpack.c.b16 %v612, %v608
    %v757 = vpack.c.b16 %v617, %v613
    %v758 = vpack.c.b16 %v618, %v614
    %v759 = vpack.c.b16 %v619, %v615
    %v760 = vpack.c.b16 %v620, %v616
    %v761 = vpack.c.b16 %v625, %v621
    %v762 = vpack.c.b16 %v626, %v622
    %v763 = vpack.c.b16 %v627, %v623
    %v764 = vpack.c.b16 %v628, %v624
    %v765 = vpack.c.b16 %v633, %v629
    %v766 = vpack.c.b16 %v634, %v630
    %v767 = vpack.c.b16 %v635, %v631
    %v768 = vpack.c.b16 %v636, %v632
    %v769 = vpack.c.b16 %v641, %v637
    %v770 = vpack.c.b16 %v642, %v638
    %v771 = vpack.c.b16 %v643, %v639
    %v772 = vpack.c.b16 %v644, %v640
    %901 = vmatprep.subr.bf16.mxu0 %v646
    %902 = vmatpush1.bf16.msra.mxu0 %v645
    %903 = vmatprep.subr.bf16.mxu0 %v650
    %904 = vmatpush1.bf16.msra.mxu0 %v649
    %905 = vmatprep.subr.bf16.mxu0 %v654
    %906 = vmatpush1.bf16.msra.mxu0 %v653
    %907 = vmatprep.subr.bf16.mxu0 %v658
    %908 = vmatpush1.bf16.msra.mxu0 %v657
    %909 = vmatprep.subr.bf16.mxu0 %v662
    %910 = vmatpush1.bf16.msra.mxu0 %v661
    %911 = vmatprep.subr.bf16.mxu0 %v666
    %912 = vmatpush1.bf16.msra.mxu0 %v665
    %913 = vmatprep.subr.bf16.mxu0 %v670
    %914 = vmatpush1.bf16.msra.mxu0 %v669
    %915 = vmatprep.subr.bf16.mxu0 %v674
    %916 = vmatpush1.bf16.msra.mxu0 %v673
    %917 = vmatprep.subr.bf16.mxu0 %v678
    %918 = vmatpush1.bf16.msra.mxu0 %v677
    %919 = vmatprep.subr.bf16.mxu0 %v682
    %920 = vmatpush1.bf16.msra.mxu0 %v681
    %921 = vmatprep.subr.bf16.mxu0 %v686
    %922 = vmatpush1.bf16.msra.mxu0 %v685
    %923 = vmatprep.subr.bf16.mxu0 %v690
    %924 = vmatpush1.bf16.msra.mxu0 %v689
    %925 = vmatprep.subr.bf16.mxu0 %v694
    %926 = vmatpush1.bf16.msra.mxu0 %v693
    %927 = vmatprep.subr.bf16.mxu0 %v698
    %928 = vmatpush1.bf16.msra.mxu0 %v697
    %929 = vmatprep.subr.bf16.mxu0 %v702
    %930 = vmatpush1.bf16.msra.mxu0 %v701
    %931 = vmatprep.subr.bf16.mxu0 %v706
    %932 = vmatpush1.bf16.msra.mxu0 %v705
    %933 = vmatprep.mubr.bf16.mxu0 %v255
    %934 = vmatmul.mubr.bf16.gmra.mrb[0].mxu0 %v247
    %v935 = vpop.f32.mrb[0].mxu0
    %v936 = vadd.f32 %v222, %v935
    %v937 = vpop.f32.mrb[0].mxu0
    %v938 = vadd.f32 %v226, %v937
    %v939 = vpop.f32.mrb[0].mxu0
    %v940 = vpop.f32.mrb[0].mxu0
    %941 = vdwg.mxu0
    %942 = vmatprep.subr.bf16.mxu0 %v710
    %943 = vmatpush1.bf16.msra.mxu0 %v709
    %944 = vmatprep.subr.bf16.mxu0 %v714
    %945 = vmatpush1.bf16.msra.mxu0 %v713
    %946 = vmatprep.subr.bf16.mxu0 %v718
    %947 = vmatpush1.bf16.msra.mxu0 %v717
    %948 = vmatprep.subr.bf16.mxu0 %v722
    %949 = vmatpush1.bf16.msra.mxu0 %v721
    %950 = vmatprep.subr.bf16.mxu0 %v726
    %951 = vmatpush1.bf16.msra.mxu0 %v725
    %952 = vmatprep.subr.bf16.mxu0 %v730
    %953 = vmatpush1.bf16.msra.mxu0 %v729
    %954 = vmatprep.subr.bf16.mxu0 %v734
    %955 = vmatpush1.bf16.msra.mxu0 %v733
    %956 = vmatprep.subr.bf16.mxu0 %v738
    %957 = vmatpush1.bf16.msra.mxu0 %v737
    %958 = vmatprep.subr.bf16.mxu0 %v742
    %959 = vmatpush1.bf16.msra.mxu0 %v741
    %960 = vmatprep.subr.bf16.mxu0 %v746
    %961 = vmatpush1.bf16.msra.mxu0 %v745
    %962 = vmatprep.subr.bf16.mxu0 %v750
    %963 = vmatpush1.bf16.msra.mxu0 %v749
    %964 = vmatprep.subr.bf16.mxu0 %v754
    %965 = vmatpush1.bf16.msra.mxu0 %v753
    %966 = vmatprep.subr.bf16.mxu0 %v758
    %967 = vmatpush1.bf16.msra.mxu0 %v757
    %968 = vmatprep.subr.bf16.mxu0 %v762
    %969 = vmatpush1.bf16.msra.mxu0 %v761
    %970 = vmatprep.subr.bf16.mxu0 %v766
    %971 = vmatpush1.bf16.msra.mxu0 %v765
    %972 = vmatprep.subr.bf16.mxu0 %v770
    %973 = vmatpush1.bf16.msra.mxu0 %v769
    %974 = vmatprep.mubr.bf16.mxu0 %v256
    %975 = vmatmul.mubr.bf16.gmra.mrb[0].mxu0 %v254
    %v976 = vpop.f32.mrb[0].mxu0
    %v977 = vadd.f32 %v936, %v976
    %v978 = vpop.f32.mrb[0].mxu0
    %v979 = vadd.f32 %v938, %v978
    %v980 = vpop.f32.mrb[0].mxu0
    %v981 = vpop.f32.mrb[0].mxu0
    %982 = vdwg.mxu0
    %983 = vmatprep.subr.bf16.mxu0 %v648
    %984 = vmatpush1.bf16.msra.mxu0 %v647
    %985 = vmatprep.subr.bf16.mxu0 %v652
    %986 = vmatpush1.bf16.msra.mxu0 %v651
    %987 = vmatprep.subr.bf16.mxu0 %v656
    %988 = vmatpush1.bf16.msra.mxu0 %v655
    %989 = vmatprep.subr.bf16.mxu0 %v660
    %990 = vmatpush1.bf16.msra.mxu0 %v659
    %991 = vmatprep.subr.bf16.mxu0 %v664
    %992 = vmatpush1.bf16.msra.mxu0 %v663
    %993 = vmatprep.subr.bf16.mxu0 %v668
    %994 = vmatpush1.bf16.msra.mxu0 %v667
    %995 = vmatprep.subr.bf16.mxu0 %v672
    %996 = vmatpush1.bf16.msra.mxu0 %v671
    %997 = vmatprep.subr.bf16.mxu0 %v676
    %998 = vmatpush1.bf16.msra.mxu0 %v675
    %999 = vmatprep.subr.bf16.mxu0 %v680
    %1000 = vmatpush1.bf16.msra.mxu0 %v679
    %1001 = vmatprep.subr.bf16.mxu0 %v684
    %1002 = vmatpush1.bf16.msra.mxu0 %v683
    %1003 = vmatprep.subr.bf16.mxu0 %v688
    %1004 = vmatpush1.bf16.msra.mxu0 %v687
    %1005 = vmatprep.subr.bf16.mxu0 %v692
    %1006 = vmatpush1.bf16.msra.mxu0 %v691
    %1007 = vmatprep.subr.bf16.mxu0 %v696
    %1008 = vmatpush1.bf16.msra.mxu0 %v695
    %1009 = vmatprep.subr.bf16.mxu0 %v700
    %1010 = vmatpush1.bf16.msra.mxu0 %v699
    %1011 = vmatprep.subr.bf16.mxu0 %v704
    %1012 = vmatpush1.bf16.msra.mxu0 %v703
    %1013 = vmatprep.subr.bf16.mxu0 %v708
    %1014 = vmatpush1.bf16.msra.mxu0 %v707
    %1015 = vmatprep.mubr.bf16.mxu0 %v255
    %1016 = vmatmul.mubr.bf16.gmra.mrb[0].mxu0 %v247
    %v1017 = vpop.f32.mrb[0].mxu0
    %v1018 = vadd.f32 %v230, %v1017
    %v1019 = vpop.f32.mrb[0].mxu0
    %v1020 = vadd.f32 %v234, %v1019
    %v1021 = vpop.f32.mrb[0].mxu0
    %v1022 = vpop.f32.mrb[0].mxu0
    %1023 = vdwg.mxu0
    %1024 = vmatprep.subr.bf16.mxu0 %v712
    %1025 = vmatpush1.bf16.msra.mxu0 %v711
    %1026 = vmatprep.subr.bf16.mxu0 %v716
    %1027 = vmatpush1.bf16.msra.mxu0 %v715
    %1028 = vmatprep.subr.bf16.mxu0 %v720
    %1029 = vmatpush1.bf16.msra.mxu0 %v719
    %1030 = vmatprep.subr.bf16.mxu0 %v724
    %1031 = vmatpush1.bf16.msra.mxu0 %v723
    %1032 = vmatprep.subr.bf16.mxu0 %v728
    %1033 = vmatpush1.bf16.msra.mxu0 %v727
    %1034 = vmatprep.subr.bf16.mxu0 %v732
    %1035 = vmatpush1.bf16.msra.mxu0 %v731
    %1036 = vmatprep.subr.bf16.mxu0 %v736
    %1037 = vmatpush1.bf16.msra.mxu0 %v735
    %1038 = vmatprep.subr.bf16.mxu0 %v740
    %1039 = vmatpush1.bf16.msra.mxu0 %v739
    %1040 = vmatprep.subr.bf16.mxu0 %v744
    %1041 = vmatpush1.bf16.msra.mxu0 %v743
    %1042 = vmatprep.subr.bf16.mxu0 %v748
    %1043 = vmatpush1.bf16.msra.mxu0 %v747
    %1044 = vmatprep.subr.bf16.mxu0 %v752
    %1045 = vmatpush1.bf16.msra.mxu0 %v751
    %1046 = vmatprep.subr.bf16.mxu0 %v756
    %1047 = vmatpush1.bf16.msra.mxu0 %v755
    %1048 = vmatprep.subr.bf16.mxu0 %v760
    %1049 = vmatpush1.bf16.msra.mxu0 %v759
    %1050 = vmatprep.subr.bf16.mxu0 %v764
    %1051 = vmatpush1.bf16.msra.mxu0 %v763
    %1052 = vmatprep.subr.bf16.mxu0 %v768
    %1053 = vmatpush1.bf16.msra.mxu0 %v767
    %1054 = vmatprep.subr.bf16.mxu0 %v772
    %1055 = vmatpush1.bf16.msra.mxu0 %v771
    %1056 = vmatprep.mubr.bf16.mxu0 %v256
    %1057 = vmatmul.mubr.bf16.gmra.mrb[0].mxu0 %v254
    %v1058 = vpop.f32.mrb[0].mxu0
    %v1059 = vadd.f32 %v1018, %v1058
    %v1060 = vpop.f32.mrb[0].mxu0
    %v1061 = vadd.f32 %v1020, %v1060
    %v1062 = vpop.f32.mrb[0].mxu0
    %v1063 = vpop.f32.mrb[0].mxu0
    %1064 = vdwg.mxu0
    %v1065 = vpack.c.bf16 %v977, %v977
    %v1066 = vpack.c.bf16 %v979, %v979
    %v1067 = vpack.c.bf16 %v1059, %v1059
    %v1068 = vpack.c.bf16 %v1061, %v1061
    %v1069 = vld [vmem:[#allocation4] sm:$0xff]
    %v1070 = vld [vmem:[#allocation4 + $0x8] sm:$0xff]
    %v1071 = vld [vmem:[#allocation4 + $0x10] sm:$0xff]
    %v1072 = vld [vmem:[#allocation4 + $0x18] sm:$0xff]
    %v1073 = vld [vmem:[#allocation4 + $0x20] sm:$0xff]
    %v1074 = vld [vmem:[#allocation4 + $0x28] sm:$0xff]
    %v1075 = vld [vmem:[#allocation4 + $0x30] sm:$0xff]
    %v1076 = vld [vmem:[#allocation4 + $0x38] sm:$0xff]
    %v1077 = vld [vmem:[#allocation4 + $0x40] sm:$0xff]
    %v1078 = vld [vmem:[#allocation4 + $0x48] sm:$0xff]
    %v1079 = vld [vmem:[#allocation4 + $0x50] sm:$0xff]
    %v1080 = vld [vmem:[#allocation4 + $0x58] sm:$0xff]
    %v1081 = vld [vmem:[#allocation4 + $0x60] sm:$0xff]
    %v1082 = vld [vmem:[#allocation4 + $0x68] sm:$0xff]
    %v1083 = vld [vmem:[#allocation4 + $0x70] sm:$0xff]
    %v1084 = vld [vmem:[#allocation4 + $0x78] sm:$0xff]
    %v1085 = vld [vmem:[#allocation4 + $0x80] sm:$0xff]
    %v1086 = vld [vmem:[#allocation4 + $0x88] sm:$0xff]
    %v1087 = vld [vmem:[#allocation4 + $0x90] sm:$0xff]
    %v1088 = vld [vmem:[#allocation4 + $0x98] sm:$0xff]
    %v1089 = vld [vmem:[#allocation4 + $0xa0] sm:$0xff]
    %v1090 = vld [vmem:[#allocation4 + $0xa8] sm:$0xff]
    %v1091 = vld [vmem:[#allocation4 + $0xb0] sm:$0xff]
    %v1092 = vld [vmem:[#allocation4 + $0xb8] sm:$0xff]
    %v1093 = vld [vmem:[#allocation4 + $0xc0] sm:$0xff]
    %v1094 = vld [vmem:[#allocation4 + $0xc8] sm:$0xff]
    %v1095 = vld [vmem:[#allocation4 + $0xd0] sm:$0xff]
    %v1096 = vld [vmem:[#allocation4 + $0xd8] sm:$0xff]
    %v1097 = vld [vmem:[#allocation4 + $0xe0] sm:$0xff]
    %v1098 = vld [vmem:[#allocation4 + $0xe8] sm:$0xff]
    %v1099 = vld [vmem:[#allocation4 + $0xf0] sm:$0xff]
    %v1100 = vld [vmem:[#allocation4 + $0xf8] sm:$0xff]
    %v1101 = vld [vmem:[#allocation4 + $0x100] sm:$0xff]
    %v1102 = vld [vmem:[#allocation4 + $0x108] sm:$0xff]
    %v1103 = vld [vmem:[#allocation4 + $0x110] sm:$0xff]
    %v1104 = vld [vmem:[#allocation4 + $0x118] sm:$0xff]
    %v1105 = vld [vmem:[#allocation4 + $0x120] sm:$0xff]
    %v1106 = vld [vmem:[#allocation4 + $0x128] sm:$0xff]
    %v1107 = vld [vmem:[#allocation4 + $0x130] sm:$0xff]
    %v1108 = vld [vmem:[#allocation4 + $0x138] sm:$0xff]
    %v1109 = vld [vmem:[#allocation4 + $0x140] sm:$0xff]
    %v1110 = vld [vmem:[#allocation4 + $0x148] sm:$0xff]
    %v1111 = vld [vmem:[#allocation4 + $0x150] sm:$0xff]
    %v1112 = vld [vmem:[#allocation4 + $0x158] sm:$0xff]
    %v1113 = vld [vmem:[#allocation4 + $0x160] sm:$0xff]
    %v1114 = vld [vmem:[#allocation4 + $0x168] sm:$0xff]
    %v1115 = vld [vmem:[#allocation4 + $0x170] sm:$0xff]
    %v1116 = vld [vmem:[#allocation4 + $0x178] sm:$0xff]
    %v1117 = vld [vmem:[#allocation4 + $0x180] sm:$0xff]
    %v1118 = vld [vmem:[#allocation4 + $0x188] sm:$0xff]
    %v1119 = vld [vmem:[#allocation4 + $0x190] sm:$0xff]
    %v1120 = vld [vmem:[#allocation4 + $0x198] sm:$0xff]
    %v1121 = vld [vmem:[#allocation4 + $0x1a0] sm:$0xff]
    %v1122 = vld [vmem:[#allocation4 + $0x1a8] sm:$0xff]
    %v1123 = vld [vmem:[#allocation4 + $0x1b0] sm:$0xff]
    %v1124 = vld [vmem:[#allocation4 + $0x1b8] sm:$0xff]
    %v1125 = vld [vmem:[#allocation4 + $0x1c0] sm:$0xff]
    %v1126 = vld [vmem:[#allocation4 + $0x1c8] sm:$0xff]
    %v1127 = vld [vmem:[#allocation4 + $0x1d0] sm:$0xff]
    %v1128 = vld [vmem:[#allocation4 + $0x1d8] sm:$0xff]
    %v1129 = vld [vmem:[#allocation4 + $0x1e0] sm:$0xff]
    %v1130 = vld [vmem:[#allocation4 + $0x1e8] sm:$0xff]
    %v1131 = vld [vmem:[#allocation4 + $0x1f0] sm:$0xff]
    %v1132 = vld [vmem:[#allocation4 + $0x1f8] sm:$0xff]
    %v1133 = vld [vmem:[#allocation4 + $0x200] sm:$0xff]
    %v1134 = vld [vmem:[#allocation4 + $0x208] sm:$0xff]
    %v1135 = vld [vmem:[#allocation4 + $0x210] sm:$0xff]
    %v1136 = vld [vmem:[#allocation4 + $0x218] sm:$0xff]
    %v1137 = vld [vmem:[#allocation4 + $0x220] sm:$0xff]
    %v1138 = vld [vmem:[#allocation4 + $0x228] sm:$0xff]
    %v1139 = vld [vmem:[#allocation4 + $0x230] sm:$0xff]
    %v1140 = vld [vmem:[#allocation4 + $0x238] sm:$0xff]
    %v1141 = vld [vmem:[#allocation4 + $0x240] sm:$0xff]
    %v1142 = vld [vmem:[#allocation4 + $0x248] sm:$0xff]
    %v1143 = vld [vmem:[#allocation4 + $0x250] sm:$0xff]
    %v1144 = vld [vmem:[#allocation4 + $0x258] sm:$0xff]
    %v1145 = vld [vmem:[#allocation4 + $0x260] sm:$0xff]
    %v1146 = vld [vmem:[#allocation4 + $0x268] sm:$0xff]
    %v1147 = vld [vmem:[#allocation4 + $0x270] sm:$0xff]
    %v1148 = vld [vmem:[#allocation4 + $0x278] sm:$0xff]
    %v1149 = vld [vmem:[#allocation4 + $0x280] sm:$0xff]
    %v1150 = vld [vmem:[#allocation4 + $0x288] sm:$0xff]
    %v1151 = vld [vmem:[#allocation4 + $0x290] sm:$0xff]
    %v1152 = vld [vmem:[#allocation4 + $0x298] sm:$0xff]
    %v1153 = vld [vmem:[#allocation4 + $0x2a0] sm:$0xff]
    %v1154 = vld [vmem:[#allocation4 + $0x2a8] sm:$0xff]
    %v1155 = vld [vmem:[#allocation4 + $0x2b0] sm:$0xff]
    %v1156 = vld [vmem:[#allocation4 + $0x2b8] sm:$0xff]
    %v1157 = vld [vmem:[#allocation4 + $0x2c0] sm:$0xff]
    %v1158 = vld [vmem:[#allocation4 + $0x2c8] sm:$0xff]
    %v1159 = vld [vmem:[#allocation4 + $0x2d0] sm:$0xff]
    %v1160 = vld [vmem:[#allocation4 + $0x2d8] sm:$0xff]
    %v1161 = vld [vmem:[#allocation4 + $0x2e0] sm:$0xff]
    %v1162 = vld [vmem:[#allocation4 + $0x2e8] sm:$0xff]
    %v1163 = vld [vmem:[#allocation4 + $0x2f0] sm:$0xff]
    %v1164 = vld [vmem:[#allocation4 + $0x2f8] sm:$0xff]
    %v1165 = vld [vmem:[#allocation4 + $0x300] sm:$0xff]
    %v1166 = vld [vmem:[#allocation4 + $0x308] sm:$0xff]
    %v1167 = vld [vmem:[#allocation4 + $0x310] sm:$0xff]
    %v1168 = vld [vmem:[#allocation4 + $0x318] sm:$0xff]
    %v1169 = vld [vmem:[#allocation4 + $0x320] sm:$0xff]
    %v1170 = vld [vmem:[#allocation4 + $0x328] sm:$0xff]
    %v1171 = vld [vmem:[#allocation4 + $0x330] sm:$0xff]
    %v1172 = vld [vmem:[#allocation4 + $0x338] sm:$0xff]
    %v1173 = vld [vmem:[#allocation4 + $0x340] sm:$0xff]
    %v1174 = vld [vmem:[#allocation4 + $0x348] sm:$0xff]
    %v1175 = vld [vmem:[#allocation4 + $0x350] sm:$0xff]
    %v1176 = vld [vmem:[#allocation4 + $0x358] sm:$0xff]
    %v1177 = vld [vmem:[#allocation4 + $0x360] sm:$0xff]
    %v1178 = vld [vmem:[#allocation4 + $0x368] sm:$0xff]
    %v1179 = vld [vmem:[#allocation4 + $0x370] sm:$0xff]
    %v1180 = vld [vmem:[#allocation4 + $0x378] sm:$0xff]
    %v1181 = vld [vmem:[#allocation4 + $0x380] sm:$0xff]
    %v1182 = vld [vmem:[#allocation4 + $0x388] sm:$0xff]
    %v1183 = vld [vmem:[#allocation4 + $0x390] sm:$0xff]
    %v1184 = vld [vmem:[#allocation4 + $0x398] sm:$0xff]
    %v1185 = vld [vmem:[#allocation4 + $0x3a0] sm:$0xff]
    %v1186 = vld [vmem:[#allocation4 + $0x3a8] sm:$0xff]
    %v1187 = vld [vmem:[#allocation4 + $0x3b0] sm:$0xff]
    %v1188 = vld [vmem:[#allocation4 + $0x3b8] sm:$0xff]
    %v1189 = vld [vmem:[#allocation4 + $0x3c0] sm:$0xff]
    %v1190 = vld [vmem:[#allocation4 + $0x3c8] sm:$0xff]
    %v1191 = vld [vmem:[#allocation4 + $0x3d0] sm:$0xff]
    %v1192 = vld [vmem:[#allocation4 + $0x3d8] sm:$0xff]
    %v1193 = vld [vmem:[#allocation4 + $0x3e0] sm:$0xff]
    %v1194 = vld [vmem:[#allocation4 + $0x3e8] sm:$0xff]
    %v1195 = vld [vmem:[#allocation4 + $0x3f0] sm:$0xff]
    %v1196 = vld [vmem:[#allocation4 + $0x3f8] sm:$0xff]
    %v1197 = vld [vmem:[#allocation6] sm:$0xf]
    %v1199 = vlaneseq
    %v1200 = vshrl.u32 %v1199, 7
    %v1201 = vsub.s32 0, %v1200
    %v1202 = vrot.slane %v1197, %v1201
    %v1203 = vlaneseq
    %v1204 = vshrl.u32 %v1203, 7
    %v1205 = vsub.s32 1, %v1204
    %v1206 = vrot.slane %v1197, %v1205
    %v1207 = vlaneseq
    %v1208 = vshrl.u32 %v1207, 7
    %v1209 = vsub.s32 2, %v1208
    %v1210 = vrot.slane %v1197, %v1209
    %v1211 = vlaneseq
    %v1212 = vshrl.u32 %v1211, 7
    %v1213 = vsub.s32 3, %v1212
    %v1214 = vrot.slane %v1197, %v1213
    %v1347 = vunpack.c.l.b16 %v1069
    %v1348 = vunpack.c.h.b16 %v1069
    %v1349 = vunpack.c.l.b16 %v1070
    %v1350 = vunpack.c.h.b16 %v1070
    %v1351 = vunpack.c.l.b16 %v1071
    %v1352 = vunpack.c.h.b16 %v1071
    %v1353 = vunpack.c.l.b16 %v1072
    %v1354 = vunpack.c.h.b16 %v1072
    %v1355 = vunpack.c.l.b16 %v1073
    %v1356 = vunpack.c.h.b16 %v1073
    %v1357 = vunpack.c.l.b16 %v1074
    %v1358 = vunpack.c.h.b16 %v1074
    %v1359 = vunpack.c.l.b16 %v1075
    %v1360 = vunpack.c.h.b16 %v1075
    %v1361 = vunpack.c.l.b16 %v1076
    %v1362 = vunpack.c.h.b16 %v1076
    %v1363 = vunpack.c.l.b16 %v1077
    %v1364 = vunpack.c.h.b16 %v1077
    %v1365 = vunpack.c.l.b16 %v1078
    %v1366 = vunpack.c.h.b16 %v1078
    %v1367 = vunpack.c.l.b16 %v1079
    %v1368 = vunpack.c.h.b16 %v1079
    %v1369 = vunpack.c.l.b16 %v1080
    %v1370 = vunpack.c.h.b16 %v1080
    %v1371 = vunpack.c.l.b16 %v1081
    %v1372 = vunpack.c.h.b16 %v1081
    %v1373 = vunpack.c.l.b16 %v1082
    %v1374 = vunpack.c.h.b16 %v1082
    %v1375 = vunpack.c.l.b16 %v1083
    %v1376 = vunpack.c.h.b16 %v1083
    %v1377 = vunpack.c.l.b16 %v1084
    %v1378 = vunpack.c.h.b16 %v1084
    %v1379 = vunpack.c.l.b16 %v1085
    %v1380 = vunpack.c.h.b16 %v1085
    %v1381 = vunpack.c.l.b16 %v1086
    %v1382 = vunpack.c.h.b16 %v1086
    %v1383 = vunpack.c.l.b16 %v1087
    %v1384 = vunpack.c.h.b16 %v1087
    %v1385 = vunpack.c.l.b16 %v1088
    %v1386 = vunpack.c.h.b16 %v1088
    %v1387 = vunpack.c.l.b16 %v1089
    %v1388 = vunpack.c.h.b16 %v1089
    %v1389 = vunpack.c.l.b16 %v1090
    %v1390 = vunpack.c.h.b16 %v1090
    %v1391 = vunpack.c.l.b16 %v1091
    %v1392 = vunpack.c.h.b16 %v1091
    %v1393 = vunpack.c.l.b16 %v1092
    %v1394 = vunpack.c.h.b16 %v1092
    %v1395 = vunpack.c.l.b16 %v1093
    %v1396 = vunpack.c.h.b16 %v1093
    %v1397 = vunpack.c.l.b16 %v1094
    %v1398 = vunpack.c.h.b16 %v1094
    %v1399 = vunpack.c.l.b16 %v1095
    %v1400 = vunpack.c.h.b16 %v1095
    %v1401 = vunpack.c.l.b16 %v1096
    %v1402 = vunpack.c.h.b16 %v1096
    %v1403 = vunpack.c.l.b16 %v1097
    %v1404 = vunpack.c.h.b16 %v1097
    %v1405 = vunpack.c.l.b16 %v1098
    %v1406 = vunpack.c.h.b16 %v1098
    %v1407 = vunpack.c.l.b16 %v1099
    %v1408 = vunpack.c.h.b16 %v1099
    %v1409 = vunpack.c.l.b16 %v1100
    %v1410 = vunpack.c.h.b16 %v1100
    %v1411 = vunpack.c.l.b16 %v1101
    %v1412 = vunpack.c.h.b16 %v1101
    %v1413 = vunpack.c.l.b16 %v1102
    %v1414 = vunpack.c.h.b16 %v1102
    %v1415 = vunpack.c.l.b16 %v1103
    %v1416 = vunpack.c.h.b16 %v1103
    %v1417 = vunpack.c.l.b16 %v1104
    %v1418 = vunpack.c.h.b16 %v1104
    %v1419 = vunpack.c.l.b16 %v1105
    %v1420 = vunpack.c.h.b16 %v1105
    %v1421 = vunpack.c.l.b16 %v1106
    %v1422 = vunpack.c.h.b16 %v1106
    %v1423 = vunpack.c.l.b16 %v1107
    %v1424 = vunpack.c.h.b16 %v1107
    %v1425 = vunpack.c.l.b16 %v1108
    %v1426 = vunpack.c.h.b16 %v1108
    %v1427 = vunpack.c.l.b16 %v1109
    %v1428 = vunpack.c.h.b16 %v1109
    %v1429 = vunpack.c.l.b16 %v1110
    %v1430 = vunpack.c.h.b16 %v1110
    %v1431 = vunpack.c.l.b16 %v1111
    %v1432 = vunpack.c.h.b16 %v1111
    %v1433 = vunpack.c.l.b16 %v1112
    %v1434 = vunpack.c.h.b16 %v1112
    %v1435 = vunpack.c.l.b16 %v1113
    %v1436 = vunpack.c.h.b16 %v1113
    %v1437 = vunpack.c.l.b16 %v1114
    %v1438 = vunpack.c.h.b16 %v1114
    %v1439 = vunpack.c.l.b16 %v1115
    %v1440 = vunpack.c.h.b16 %v1115
    %v1441 = vunpack.c.l.b16 %v1116
    %v1442 = vunpack.c.h.b16 %v1116
    %v1443 = vunpack.c.l.b16 %v1117
    %v1444 = vunpack.c.h.b16 %v1117
    %v1445 = vunpack.c.l.b16 %v1118
    %v1446 = vunpack.c.h.b16 %v1118
    %v1447 = vunpack.c.l.b16 %v1119
    %v1448 = vunpack.c.h.b16 %v1119
    %v1449 = vunpack.c.l.b16 %v1120
    %v1450 = vunpack.c.h.b16 %v1120
    %v1451 = vunpack.c.l.b16 %v1121
    %v1452 = vunpack.c.h.b16 %v1121
    %v1453 = vunpack.c.l.b16 %v1122
    %v1454 = vunpack.c.h.b16 %v1122
    %v1455 = vunpack.c.l.b16 %v1123
    %v1456 = vunpack.c.h.b16 %v1123
    %v1457 = vunpack.c.l.b16 %v1124
    %v1458 = vunpack.c.h.b16 %v1124
    %v1459 = vunpack.c.l.b16 %v1125
    %v1460 = vunpack.c.h.b16 %v1125
    %v1461 = vunpack.c.l.b16 %v1126
    %v1462 = vunpack.c.h.b16 %v1126
    %v1463 = vunpack.c.l.b16 %v1127
    %v1464 = vunpack.c.h.b16 %v1127
    %v1465 = vunpack.c.l.b16 %v1128
    %v1466 = vunpack.c.h.b16 %v1128
    %v1467 = vunpack.c.l.b16 %v1129
    %v1468 = vunpack.c.h.b16 %v1129
    %v1469 = vunpack.c.l.b16 %v1130
    %v1470 = vunpack.c.h.b16 %v1130
    %v1471 = vunpack.c.l.b16 %v1131
    %v1472 = vunpack.c.h.b16 %v1131
    %v1473 = vunpack.c.l.b16 %v1132
    %v1474 = vunpack.c.h.b16 %v1132
    %v1475 = vunpack.c.l.b16 %v1133
    %v1476 = vunpack.c.h.b16 %v1133
    %v1477 = vunpack.c.l.b16 %v1134
    %v1478 = vunpack.c.h.b16 %v1134
    %v1479 = vunpack.c.l.b16 %v1135
    %v1480 = vunpack.c.h.b16 %v1135
    %v1481 = vunpack.c.l.b16 %v1136
    %v1482 = vunpack.c.h.b16 %v1136
    %v1483 = vunpack.c.l.b16 %v1137
    %v1484 = vunpack.c.h.b16 %v1137
    %v1485 = vunpack.c.l.b16 %v1138
    %v1486 = vunpack.c.h.b16 %v1138
    %v1487 = vunpack.c.l.b16 %v1139
    %v1488 = vunpack.c.h.b16 %v1139
    %v1489 = vunpack.c.l.b16 %v1140
    %v1490 = vunpack.c.h.b16 %v1140
    %v1491 = vunpack.c.l.b16 %v1141
    %v1492 = vunpack.c.h.b16 %v1141
    %v1493 = vunpack.c.l.b16 %v1142
    %v1494 = vunpack.c.h.b16 %v1142
    %v1495 = vunpack.c.l.b16 %v1143
    %v1496 = vunpack.c.h.b16 %v1143
    %v1497 = vunpack.c.l.b16 %v1144
    %v1498 = vunpack.c.h.b16 %v1144
    %v1499 = vunpack.c.l.b16 %v1145
    %v1500 = vunpack.c.h.b16 %v1145
    %v1501 = vunpack.c.l.b16 %v1146
    %v1502 = vunpack.c.h.b16 %v1146
    %v1503 = vunpack.c.l.b16 %v1147
    %v1504 = vunpack.c.h.b16 %v1147
    %v1505 = vunpack.c.l.b16 %v1148
    %v1506 = vunpack.c.h.b16 %v1148
    %v1507 = vunpack.c.l.b16 %v1149
    %v1508 = vunpack.c.h.b16 %v1149
    %v1509 = vunpack.c.l.b16 %v1150
    %v1510 = vunpack.c.h.b16 %v1150
    %v1511 = vunpack.c.l.b16 %v1151
    %v1512 = vunpack.c.h.b16 %v1151
    %v1513 = vunpack.c.l.b16 %v1152
    %v1514 = vunpack.c.h.b16 %v1152
    %v1515 = vunpack.c.l.b16 %v1153
    %v1516 = vunpack.c.h.b16 %v1153
    %v1517 = vunpack.c.l.b16 %v1154
    %v1518 = vunpack.c.h.b16 %v1154
    %v1519 = vunpack.c.l.b16 %v1155
    %v1520 = vunpack.c.h.b16 %v1155
    %v1521 = vunpack.c.l.b16 %v1156
    %v1522 = vunpack.c.h.b16 %v1156
    %v1523 = vunpack.c.l.b16 %v1157
    %v1524 = vunpack.c.h.b16 %v1157
    %v1525 = vunpack.c.l.b16 %v1158
    %v1526 = vunpack.c.h.b16 %v1158
    %v1527 = vunpack.c.l.b16 %v1159
    %v1528 = vunpack.c.h.b16 %v1159
    %v1529 = vunpack.c.l.b16 %v1160
    %v1530 = vunpack.c.h.b16 %v1160
    %v1531 = vunpack.c.l.b16 %v1161
    %v1532 = vunpack.c.h.b16 %v1161
    %v1533 = vunpack.c.l.b16 %v1162
    %v1534 = vunpack.c.h.b16 %v1162
    %v1535 = vunpack.c.l.b16 %v1163
    %v1536 = vunpack.c.h.b16 %v1163
    %v1537 = vunpack.c.l.b16 %v1164
    %v1538 = vunpack.c.h.b16 %v1164
    %v1539 = vunpack.c.l.b16 %v1165
    %v1540 = vunpack.c.h.b16 %v1165
    %v1541 = vunpack.c.l.b16 %v1166
    %v1542 = vunpack.c.h.b16 %v1166
    %v1543 = vunpack.c.l.b16 %v1167
    %v1544 = vunpack.c.h.b16 %v1167
    %v1545 = vunpack.c.l.b16 %v1168
    %v1546 = vunpack.c.h.b16 %v1168
    %v1547 = vunpack.c.l.b16 %v1169
    %v1548 = vunpack.c.h.b16 %v1169
    %v1549 = vunpack.c.l.b16 %v1170
    %v1550 = vunpack.c.h.b16 %v1170
    %v1551 = vunpack.c.l.b16 %v1171
    %v1552 = vunpack.c.h.b16 %v1171
    %v1553 = vunpack.c.l.b16 %v1172
    %v1554 = vunpack.c.h.b16 %v1172
    %v1555 = vunpack.c.l.b16 %v1173
    %v1556 = vunpack.c.h.b16 %v1173
    %v1557 = vunpack.c.l.b16 %v1174
    %v1558 = vunpack.c.h.b16 %v1174
    %v1559 = vunpack.c.l.b16 %v1175
    %v1560 = vunpack.c.h.b16 %v1175
    %v1561 = vunpack.c.l.b16 %v1176
    %v1562 = vunpack.c.h.b16 %v1176
    %v1563 = vunpack.c.l.b16 %v1177
    %v1564 = vunpack.c.h.b16 %v1177
    %v1565 = vunpack.c.l.b16 %v1178
    %v1566 = vunpack.c.h.b16 %v1178
    %v1567 = vunpack.c.l.b16 %v1179
    %v1568 = vunpack.c.h.b16 %v1179
    %v1569 = vunpack.c.l.b16 %v1180
    %v1570 = vunpack.c.h.b16 %v1180
    %v1571 = vunpack.c.l.b16 %v1181
    %v1572 = vunpack.c.h.b16 %v1181
    %v1573 = vunpack.c.l.b16 %v1182
    %v1574 = vunpack.c.h.b16 %v1182
    %v1575 = vunpack.c.l.b16 %v1183
    %v1576 = vunpack.c.h.b16 %v1183
    %v1577 = vunpack.c.l.b16 %v1184
    %v1578 = vunpack.c.h.b16 %v1184
    %v1579 = vunpack.c.l.b16 %v1185
    %v1580 = vunpack.c.h.b16 %v1185
    %v1581 = vunpack.c.l.b16 %v1186
    %v1582 = vunpack.c.h.b16 %v1186
    %v1583 = vunpack.c.l.b16 %v1187
    %v1584 = vunpack.c.h.b16 %v1187
    %v1585 = vunpack.c.l.b16 %v1188
    %v1586 = vunpack.c.h.b16 %v1188
    %v1587 = vunpack.c.l.b16 %v1189
    %v1588 = vunpack.c.h.b16 %v1189
    %v1589 = vunpack.c.l.b16 %v1190
    %v1590 = vunpack.c.h.b16 %v1190
    %v1591 = vunpack.c.l.b16 %v1191
    %v1592 = vunpack.c.h.b16 %v1191
    %v1593 = vunpack.c.l.b16 %v1192
    %v1594 = vunpack.c.h.b16 %v1192
    %v1595 = vunpack.c.l.b16 %v1193
    %v1596 = vunpack.c.h.b16 %v1193
    %v1597 = vunpack.c.l.b16 %v1194
    %v1598 = vunpack.c.h.b16 %v1194
    %v1599 = vunpack.c.l.b16 %v1195
    %v1600 = vunpack.c.h.b16 %v1195
    %v1601 = vunpack.c.l.b16 %v1196
    %v1602 = vunpack.c.h.b16 %v1196
    %v1603 = vpack.c.b16 %v1351, %v1347
    %v1604 = vpack.c.b16 %v1352, %v1348
    %v1605 = vpack.c.b16 %v1353, %v1349
    %v1606 = vpack.c.b16 %v1354, %v1350
    %v1607 = vpack.c.b16 %v1359, %v1355
    %v1608 = vpack.c.b16 %v1360, %v1356
    %v1609 = vpack.c.b16 %v1361, %v1357
    %v1610 = vpack.c.b16 %v1362, %v1358
    %v1611 = vpack.c.b16 %v1367, %v1363
    %v1612 = vpack.c.b16 %v1368, %v1364
    %v1613 = vpack.c.b16 %v1369, %v1365
    %v1614 = vpack.c.b16 %v1370, %v1366
    %v1615 = vpack.c.b16 %v1375, %v1371
    %v1616 = vpack.c.b16 %v1376, %v1372
    %v1617 = vpack.c.b16 %v1377, %v1373
    %v1618 = vpack.c.b16 %v1378, %v1374
    %v1619 = vpack.c.b16 %v1383, %v1379
    %v1620 = vpack.c.b16 %v1384, %v1380
    %v1621 = vpack.c.b16 %v1385, %v1381
    %v1622 = vpack.c.b16 %v1386, %v1382
    %v1623 = vpack.c.b16 %v1391, %v1387
    %v1624 = vpack.c.b16 %v1392, %v1388
    %v1625 = vpack.c.b16 %v1393, %v1389
    %v1626 = vpack.c.b16 %v1394, %v1390
    %v1627 = vpack.c.b16 %v1399, %v1395
    %v1628 = vpack.c.b16 %v1400, %v1396
    %v1629 = vpack.c.b16 %v1401, %v1397
    %v1630 = vpack.c.b16 %v1402, %v1398
    %v1631 = vpack.c.b16 %v1407, %v1403
    %v1632 = vpack.c.b16 %v1408, %v1404
    %v1633 = vpack.c.b16 %v1409, %v1405
    %v1634 = vpack.c.b16 %v1410, %v1406
    %v1635 = vpack.c.b16 %v1415, %v1411
    %v1636 = vpack.c.b16 %v1416, %v1412
    %v1637 = vpack.c.b16 %v1417, %v1413
    %v1638 = vpack.c.b16 %v1418, %v1414
    %v1639 = vpack.c.b16 %v1423, %v1419
    %v1640 = vpack.c.b16 %v1424, %v1420
    %v1641 = vpack.c.b16 %v1425, %v1421
    %v1642 = vpack.c.b16 %v1426, %v1422
    %v1643 = vpack.c.b16 %v1431, %v1427
    %v1644 = vpack.c.b16 %v1432, %v1428
    %v1645 = vpack.c.b16 %v1433, %v1429
    %v1646 = vpack.c.b16 %v1434, %v1430
    %v1647 = vpack.c.b16 %v1439, %v1435
    %v1648 = vpack.c.b16 %v1440, %v1436
    %v1649 = vpack.c.b16 %v1441, %v1437
    %v1650 = vpack.c.b16 %v1442, %v1438
    %v1651 = vpack.c.b16 %v1447, %v1443
    %v1652 = vpack.c.b16 %v1448, %v1444
    %v1653 = vpack.c.b16 %v1449, %v1445
    %v1654 = vpack.c.b16 %v1450, %v1446
    %v1655 = vpack.c.b16 %v1455, %v1451
    %v1656 = vpack.c.b16 %v1456, %v1452
    %v1657 = vpack.c.b16 %v1457, %v1453
    %v1658 = vpack.c.b16 %v1458, %v1454
    %v1659 = vpack.c.b16 %v1463, %v1459
    %v1660 = vpack.c.b16 %v1464, %v1460
    %v1661 = vpack.c.b16 %v1465, %v1461
    %v1662 = vpack.c.b16 %v1466, %v1462
    %v1663 = vpack.c.b16 %v1471, %v1467
    %v1664 = vpack.c.b16 %v1472, %v1468
    %v1665 = vpack.c.b16 %v1473, %v1469
    %v1666 = vpack.c.b16 %v1474, %v1470
    %v1667 = vpack.c.b16 %v1479, %v1475
    %v1668 = vpack.c.b16 %v1480, %v1476
    %v1669 = vpack.c.b16 %v1481, %v1477
    %v1670 = vpack.c.b16 %v1482, %v1478
    %v1671 = vpack.c.b16 %v1487, %v1483
    %v1672 = vpack.c.b16 %v1488, %v1484
    %v1673 = vpack.c.b16 %v1489, %v1485
    %v1674 = vpack.c.b16 %v1490, %v1486
    %v1675 = vpack.c.b16 %v1495, %v1491
    %v1676 = vpack.c.b16 %v1496, %v1492
    %v1677 = vpack.c.b16 %v1497, %v1493
    %v1678 = vpack.c.b16 %v1498, %v1494
    %v1679 = vpack.c.b16 %v1503, %v1499
    %v1680 = vpack.c.b16 %v1504, %v1500
    %v1681 = vpack.c.b16 %v1505, %v1501
    %v1682 = vpack.c.b16 %v1506, %v1502
    %v1683 = vpack.c.b16 %v1511, %v1507
    %v1684 = vpack.c.b16 %v1512, %v1508
    %v1685 = vpack.c.b16 %v1513, %v1509
    %v1686 = vpack.c.b16 %v1514, %v1510
    %v1687 = vpack.c.b16 %v1519, %v1515
    %v1688 = vpack.c.b16 %v1520, %v1516
    %v1689 = vpack.c.b16 %v1521, %v1517
    %v1690 = vpack.c.b16 %v1522, %v1518
    %v1691 = vpack.c.b16 %v1527, %v1523
    %v1692 = vpack.c.b16 %v1528, %v1524
    %v1693 = vpack.c.b16 %v1529, %v1525
    %v1694 = vpack.c.b16 %v1530, %v1526
    %v1695 = vpack.c.b16 %v1535, %v1531
    %v1696 = vpack.c.b16 %v1536, %v1532
    %v1697 = vpack.c.b16 %v1537, %v1533
    %v1698 = vpack.c.b16 %v1538, %v1534
    %v1699 = vpack.c.b16 %v1543, %v1539
    %v1700 = vpack.c.b16 %v1544, %v1540
    %v1701 = vpack.c.b16 %v1545, %v1541
    %v1702 = vpack.c.b16 %v1546, %v1542
    %v1703 = vpack.c.b16 %v1551, %v1547
    %v1704 = vpack.c.b16 %v1552, %v1548
    %v1705 = vpack.c.b16 %v1553, %v1549
    %v1706 = vpack.c.b16 %v1554, %v1550
    %v1707 = vpack.c.b16 %v1559, %v1555
    %v1708 = vpack.c.b16 %v1560, %v1556
    %v1709 = vpack.c.b16 %v1561, %v1557
    %v1710 = vpack.c.b16 %v1562, %v1558
    %v1711 = vpack.c.b16 %v1567, %v1563
    %v1712 = vpack.c.b16 %v1568, %v1564
    %v1713 = vpack.c.b16 %v1569, %v1565
    %v1714 = vpack.c.b16 %v1570, %v1566
    %v1715 = vpack.c.b16 %v1575, %v1571
    %v1716 = vpack.c.b16 %v1576, %v1572
    %v1717 = vpack.c.b16 %v1577, %v1573
    %v1718 = vpack.c.b16 %v1578, %v1574
    %v1719 = vpack.c.b16 %v1583, %v1579
    %v1720 = vpack.c.b16 %v1584, %v1580
    %v1721 = vpack.c.b16 %v1585, %v1581
    %v1722 = vpack.c.b16 %v1586, %v1582
    %v1723 = vpack.c.b16 %v1591, %v1587
    %v1724 = vpack.c.b16 %v1592, %v1588
    %v1725 = vpack.c.b16 %v1593, %v1589
    %v1726 = vpack.c.b16 %v1594, %v1590
    %v1727 = vpack.c.b16 %v1599, %v1595
    %v1728 = vpack.c.b16 %v1600, %v1596
    %v1729 = vpack.c.b16 %v1601, %v1597
    %v1730 = vpack.c.b16 %v1602, %v1598
    %1859 = vmatprep.subr.bf16.mxu0 %v1604
    %1860 = vmatpush1.bf16.msra.mxu0 %v1603
    %1861 = vmatprep.subr.bf16.mxu0 %v1608
    %1862 = vmatpush1.bf16.msra.mxu0 %v1607
    %1863 = vmatprep.subr.bf16.mxu0 %v1612
    %1864 = vmatpush1.bf16.msra.mxu0 %v1611
    %1865 = vmatprep.subr.bf16.mxu0 %v1616
    %1866 = vmatpush1.bf16.msra.mxu0 %v1615
    %1867 = vmatprep.subr.bf16.mxu0 %v1620
    %1868 = vmatpush1.bf16.msra.mxu0 %v1619
    %1869 = vmatprep.subr.bf16.mxu0 %v1624
    %1870 = vmatpush1.bf16.msra.mxu0 %v1623
    %1871 = vmatprep.subr.bf16.mxu0 %v1628
    %1872 = vmatpush1.bf16.msra.mxu0 %v1627
    %1873 = vmatprep.subr.bf16.mxu0 %v1632
    %1874 = vmatpush1.bf16.msra.mxu0 %v1631
    %1875 = vmatprep.subr.bf16.mxu0 %v1636
    %1876 = vmatpush1.bf16.msra.mxu0 %v1635
    %1877 = vmatprep.subr.bf16.mxu0 %v1640
    %1878 = vmatpush1.bf16.msra.mxu0 %v1639
    %1879 = vmatprep.subr.bf16.mxu0 %v1644
    %1880 = vmatpush1.bf16.msra.mxu0 %v1643
    %1881 = vmatprep.subr.bf16.mxu0 %v1648
    %1882 = vmatpush1.bf16.msra.mxu0 %v1647
    %1883 = vmatprep.subr.bf16.mxu0 %v1652
    %1884 = vmatpush1.bf16.msra.mxu0 %v1651
    %1885 = vmatprep.subr.bf16.mxu0 %v1656
    %1886 = vmatpush1.bf16.msra.mxu0 %v1655
    %1887 = vmatprep.subr.bf16.mxu0 %v1660
    %1888 = vmatpush1.bf16.msra.mxu0 %v1659
    %1889 = vmatprep.subr.bf16.mxu0 %v1664
    %1890 = vmatpush1.bf16.msra.mxu0 %v1663
    %1891 = vmatprep.mubr.bf16.mxu0 %v1066
    %1892 = vmatmul.mubr.bf16.gmra.mrb[0].mxu0 %v1065
    %v1893 = vpop.f32.mrb[0].mxu0
    %v1894 = vadd.f32 %v1202, %v1893
    %v1895 = vpop.f32.mrb[0].mxu0
    %v1896 = vadd.f32 %v1206, %v1895
    %v1897 = vpop.f32.mrb[0].mxu0
    %v1898 = vpop.f32.mrb[0].mxu0
    %1899 = vdwg.mxu0
    %1900 = vmatprep.subr.bf16.mxu0 %v1668
    %1901 = vmatpush1.bf16.msra.mxu0 %v1667
    %1902 = vmatprep.subr.bf16.mxu0 %v1672
    %1903 = vmatpush1.bf16.msra.mxu0 %v1671
    %1904 = vmatprep.subr.bf16.mxu0 %v1676
    %1905 = vmatpush1.bf16.msra.mxu0 %v1675
    %1906 = vmatprep.subr.bf16.mxu0 %v1680
    %1907 = vmatpush1.bf16.msra.mxu0 %v1679
    %1908 = vmatprep.subr.bf16.mxu0 %v1684
    %1909 = vmatpush1.bf16.msra.mxu0 %v1683
    %1910 = vmatprep.subr.bf16.mxu0 %v1688
    %1911 = vmatpush1.bf16.msra.mxu0 %v1687
    %1912 = vmatprep.subr.bf16.mxu0 %v1692
    %1913 = vmatpush1.bf16.msra.mxu0 %v1691
    %1914 = vmatprep.subr.bf16.mxu0 %v1696
    %1915 = vmatpush1.bf16.msra.mxu0 %v1695
    %1916 = vmatprep.subr.bf16.mxu0 %v1700
    %1917 = vmatpush1.bf16.msra.mxu0 %v1699
    %1918 = vmatprep.subr.bf16.mxu0 %v1704
    %1919 = vmatpush1.bf16.msra.mxu0 %v1703
    %1920 = vmatprep.subr.bf16.mxu0 %v1708
    %1921 = vmatpush1.bf16.msra.mxu0 %v1707
    %1922 = vmatprep.subr.bf16.mxu0 %v1712
    %1923 = vmatpush1.bf16.msra.mxu0 %v1711
    %1924 = vmatprep.subr.bf16.mxu0 %v1716
    %1925 = vmatpush1.bf16.msra.mxu0 %v1715
    %1926 = vmatprep.subr.bf16.mxu0 %v1720
    %1927 = vmatpush1.bf16.msra.mxu0 %v1719
    %1928 = vmatprep.subr.bf16.mxu0 %v1724
    %1929 = vmatpush1.bf16.msra.mxu0 %v1723
    %1930 = vmatprep.subr.bf16.mxu0 %v1728
    %1931 = vmatpush1.bf16.msra.mxu0 %v1727
    %1932 = vmatprep.mubr.bf16.mxu0 %v1068
    %1933 = vmatmul.mubr.bf16.gmra.mrb[0].mxu0 %v1067
    %v1934 = vpop.f32.mrb[0].mxu0
    %v1935 = vadd.f32 %v1894, %v1934
    %v1936 = vpop.f32.mrb[0].mxu0
    %v1937 = vadd.f32 %v1896, %v1936
    %v1938 = vpop.f32.mrb[0].mxu0
    %v1939 = vpop.f32.mrb[0].mxu0
    %1940 = vdwg.mxu0
    %1941 = vmatprep.subr.bf16.mxu0 %v1606
    %1942 = vmatpush1.bf16.msra.mxu0 %v1605
    %1943 = vmatprep.subr.bf16.mxu0 %v1610
    %1944 = vmatpush1.bf16.msra.mxu0 %v1609
    %1945 = vmatprep.subr.bf16.mxu0 %v1614
    %1946 = vmatpush1.bf16.msra.mxu0 %v1613
    %1947 = vmatprep.subr.bf16.mxu0 %v1618
    %1948 = vmatpush1.bf16.msra.mxu0 %v1617
    %1949 = vmatprep.subr.bf16.mxu0 %v1622
    %1950 = vmatpush1.bf16.msra.mxu0 %v1621
    %1951 = vmatprep.subr.bf16.mxu0 %v1626
    %1952 = vmatpush1.bf16.msra.mxu0 %v1625
    %1953 = vmatprep.subr.bf16.mxu0 %v1630
    %1954 = vmatpush1.bf16.msra.mxu0 %v1629
    %1955 = vmatprep.subr.bf16.mxu0 %v1634
    %1956 = vmatpush1.bf16.msra.mxu0 %v1633
    %1957 = vmatprep.subr.bf16.mxu0 %v1638
    %1958 = vmatpush1.bf16.msra.mxu0 %v1637
    %1959 = vmatprep.subr.bf16.mxu0 %v1642
    %1960 = vmatpush1.bf16.msra.mxu0 %v1641
    %1961 = vmatprep.subr.bf16.mxu0 %v1646
    %1962 = vmatpush1.bf16.msra.mxu0 %v1645
    %1963 = vmatprep.subr.bf16.mxu0 %v1650
    %1964 = vmatpush1.bf16.msra.mxu0 %v1649
    %1965 = vmatprep.subr.bf16.mxu0 %v1654
    %1966 = vmatpush1.bf16.msra.mxu0 %v1653
    %1967 = vmatprep.subr.bf16.mxu0 %v1658
    %1968 = vmatpush1.bf16.msra.mxu0 %v1657
    %1969 = vmatprep.subr.bf16.mxu0 %v1662
    %1970 = vmatpush1.bf16.msra.mxu0 %v1661
    %1971 = vmatprep.subr.bf16.mxu0 %v1666
    %1972 = vmatpush1.bf16.msra.mxu0 %v1665
    %1973 = vmatprep.mubr.bf16.mxu0 %v1066
    %1974 = vmatmul.mubr.bf16.gmra.mrb[0].mxu0 %v1065
    %v1975 = vpop.f32.mrb[0].mxu0
    %v1976 = vadd.f32 %v1210, %v1975
    %v1977 = vpop.f32.mrb[0].mxu0
    %v1978 = vadd.f32 %v1214, %v1977
    %v1979 = vpop.f32.mrb[0].mxu0
    %v1980 = vpop.f32.mrb[0].mxu0
    %1981 = vdwg.mxu0
    %1982 = vmatprep.subr.bf16.mxu0 %v1670
    %1983 = vmatpush1.bf16.msra.mxu0 %v1669
    %1984 = vmatprep.subr.bf16.mxu0 %v1674
    %1985 = vmatpush1.bf16.msra.mxu0 %v1673
    %1986 = vmatprep.subr.bf16.mxu0 %v1678
    %1987 = vmatpush1.bf16.msra.mxu0 %v1677
    %1988 = vmatprep.subr.bf16.mxu0 %v1682
    %1989 = vmatpush1.bf16.msra.mxu0 %v1681
    %1990 = vmatprep.subr.bf16.mxu0 %v1686
    %1991 = vmatpush1.bf16.msra.mxu0 %v1685
    %1992 = vmatprep.subr.bf16.mxu0 %v1690
    %1993 = vmatpush1.bf16.msra.mxu0 %v1689
    %1994 = vmatprep.subr.bf16.mxu0 %v1694
    %1995 = vmatpush1.bf16.msra.mxu0 %v1693
    %1996 = vmatprep.subr.bf16.mxu0 %v1698
    %1997 = vmatpush1.bf16.msra.mxu0 %v1697
    %1998 = vmatprep.subr.bf16.mxu0 %v1702
    %1999 = vmatpush1.bf16.msra.mxu0 %v1701
    %2000 = vmatprep.subr.bf16.mxu0 %v1706
    %2001 = vmatpush1.bf16.msra.mxu0 %v1705
    %2002 = vmatprep.subr.bf16.mxu0 %v1710
    %2003 = vmatpush1.bf16.msra.mxu0 %v1709
    %2004 = vmatprep.subr.bf16.mxu0 %v1714
    %2005 = vmatpush1.bf16.msra.mxu0 %v1713
    %2006 = vmatprep.subr.bf16.mxu0 %v1718
    %2007 = vmatpush1.bf16.msra.mxu0 %v1717
    %2008 = vmatprep.subr.bf16.mxu0 %v1722
    %2009 = vmatpush1.bf16.msra.mxu0 %v1721
    %2010 = vmatprep.subr.bf16.mxu0 %v1726
    %2011 = vmatpush1.bf16.msra.mxu0 %v1725
    %2012 = vmatprep.subr.bf16.mxu0 %v1730
    %2013 = vmatpush1.bf16.msra.mxu0 %v1729
    %2014 = vmatprep.mubr.bf16.mxu0 %v1068
    %2015 = vmatmul.mubr.bf16.gmra.mrb[0].mxu0 %v1067
    %v2016 = vpop.f32.mrb[0].mxu0
    %v2017 = vadd.f32 %v1976, %v2016
    %v2018 = vpop.f32.mrb[0].mxu0
    %v2019 = vadd.f32 %v1978, %v2018
    %v2020 = vpop.f32.mrb[0].mxu0
    %v2021 = vpop.f32.mrb[0].mxu0
    %2022 = vdwg.mxu0
    %v2023 = vmax.f32 %v1935, 0.0
    %v2024 = vmax.f32 %v1937, 0.0
    %v2025 = vmax.f32 %v2017, 0.0
    %v2026 = vmax.f32 %v2019, 0.0
    %v2027 = vpack.c.bf16 %v2023, %v2023
    %v2028 = vpack.c.bf16 %v2024, %v2024
    %v2029 = vpack.c.bf16 %v2025, %v2025
    %v2030 = vpack.c.bf16 %v2026, %v2026
    %v2031 = vld [vmem:[#allocation7] sm:$0xff]
    %v2032 = vld [vmem:[#allocation7 + $0x8] sm:$0xff]
    %v2033 = vld [vmem:[#allocation7 + $0x10] sm:$0xff]
    %v2034 = vld [vmem:[#allocation7 + $0x18] sm:$0xff]
    %v2035 = vld [vmem:[#allocation7 + $0x20] sm:$0xff]
    %v2036 = vld [vmem:[#allocation7 + $0x28] sm:$0xff]
    %v2037 = vld [vmem:[#allocation7 + $0x30] sm:$0xff]
    %v2038 = vld [vmem:[#allocation7 + $0x38] sm:$0xff]
    %v2039 = vld [vmem:[#allocation7 + $0x40] sm:$0xff]
    %v2040 = vld [vmem:[#allocation7 + $0x48] sm:$0xff]
    %v2041 = vld [vmem:[#allocation7 + $0x50] sm:$0xff]
    %v2042 = vld [vmem:[#allocation7 + $0x58] sm:$0xff]
    %v2043 = vld [vmem:[#allocation7 + $0x60] sm:$0xff]
    %v2044 = vld [vmem:[#allocation7 + $0x68] sm:$0xff]
    %v2045 = vld [vmem:[#allocation7 + $0x70] sm:$0xff]
    %v2046 = vld [vmem:[#allocation7 + $0x78] sm:$0xff]
    %v2047 = vld [vmem:[#allocation7 + $0x80] sm:$0xff]
    %v2048 = vld [vmem:[#allocation7 + $0x88] sm:$0xff]
    %v2049 = vld [vmem:[#allocation7 + $0x90] sm:$0xff]
    %v2050 = vld [vmem:[#allocation7 + $0x98] sm:$0xff]
    %v2051 = vld [vmem:[#allocation7 + $0xa0] sm:$0xff]
    %v2052 = vld [vmem:[#allocation7 + $0xa8] sm:$0xff]
    %v2053 = vld [vmem:[#allocation7 + $0xb0] sm:$0xff]
    %v2054 = vld [vmem:[#allocation7 + $0xb8] sm:$0xff]
    %v2055 = vld [vmem:[#allocation7 + $0xc0] sm:$0xff]
    %v2056 = vld [vmem:[#allocation7 + $0xc8] sm:$0xff]
    %v2057 = vld [vmem:[#allocation7 + $0xd0] sm:$0xff]
    %v2058 = vld [vmem:[#allocation7 + $0xd8] sm:$0xff]
    %v2059 = vld [vmem:[#allocation7 + $0xe0] sm:$0xff]
    %v2060 = vld [vmem:[#allocation7 + $0xe8] sm:$0xff]
    %v2061 = vld [vmem:[#allocation7 + $0xf0] sm:$0xff]
    %v2062 = vld [vmem:[#allocation7 + $0xf8] sm:$0xff]
    %v2063 = vld [vmem:[#allocation7 + $0x100] sm:$0xff]
    %v2064 = vld [vmem:[#allocation7 + $0x108] sm:$0xff]
    %v2065 = vld [vmem:[#allocation7 + $0x110] sm:$0xff]
    %v2066 = vld [vmem:[#allocation7 + $0x118] sm:$0xff]
    %v2067 = vld [vmem:[#allocation7 + $0x120] sm:$0xff]
    %v2068 = vld [vmem:[#allocation7 + $0x128] sm:$0xff]
    %v2069 = vld [vmem:[#allocation7 + $0x130] sm:$0xff]
    %v2070 = vld [vmem:[#allocation7 + $0x138] sm:$0xff]
    %v2071 = vld [vmem:[#allocation7 + $0x140] sm:$0xff]
    %v2072 = vld [vmem:[#allocation7 + $0x148] sm:$0xff]
    %v2073 = vld [vmem:[#allocation7 + $0x150] sm:$0xff]
    %v2074 = vld [vmem:[#allocation7 + $0x158] sm:$0xff]
    %v2075 = vld [vmem:[#allocation7 + $0x160] sm:$0xff]
    %v2076 = vld [vmem:[#allocation7 + $0x168] sm:$0xff]
    %v2077 = vld [vmem:[#allocation7 + $0x170] sm:$0xff]
    %v2078 = vld [vmem:[#allocation7 + $0x178] sm:$0xff]
    %v2079 = vld [vmem:[#allocation7 + $0x180] sm:$0xff]
    %v2080 = vld [vmem:[#allocation7 + $0x188] sm:$0xff]
    %v2081 = vld [vmem:[#allocation7 + $0x190] sm:$0xff]
    %v2082 = vld [vmem:[#allocation7 + $0x198] sm:$0xff]
    %v2083 = vld [vmem:[#allocation7 + $0x1a0] sm:$0xff]
    %v2084 = vld [vmem:[#allocation7 + $0x1a8] sm:$0xff]
    %v2085 = vld [vmem:[#allocation7 + $0x1b0] sm:$0xff]
    %v2086 = vld [vmem:[#allocation7 + $0x1b8] sm:$0xff]
    %v2087 = vld [vmem:[#allocation7 + $0x1c0] sm:$0xff]
    %v2088 = vld [vmem:[#allocation7 + $0x1c8] sm:$0xff]
    %v2089 = vld [vmem:[#allocation7 + $0x1d0] sm:$0xff]
    %v2090 = vld [vmem:[#allocation7 + $0x1d8] sm:$0xff]
    %v2091 = vld [vmem:[#allocation7 + $0x1e0] sm:$0xff]
    %v2092 = vld [vmem:[#allocation7 + $0x1e8] sm:$0xff]
    %v2093 = vld [vmem:[#allocation7 + $0x1f0] sm:$0xff]
    %v2094 = vld [vmem:[#allocation7 + $0x1f8] sm:$0xff]
    %v2095 = vld [vmem:[#allocation7 + $0x200] sm:$0xff]
    %v2096 = vld [vmem:[#allocation7 + $0x208] sm:$0xff]
    %v2097 = vld [vmem:[#allocation7 + $0x210] sm:$0xff]
    %v2098 = vld [vmem:[#allocation7 + $0x218] sm:$0xff]
    %v2099 = vld [vmem:[#allocation7 + $0x220] sm:$0xff]
    %v2100 = vld [vmem:[#allocation7 + $0x228] sm:$0xff]
    %v2101 = vld [vmem:[#allocation7 + $0x230] sm:$0xff]
    %v2102 = vld [vmem:[#allocation7 + $0x238] sm:$0xff]
    %v2103 = vld [vmem:[#allocation7 + $0x240] sm:$0xff]
    %v2104 = vld [vmem:[#allocation7 + $0x248] sm:$0xff]
    %v2105 = vld [vmem:[#allocation7 + $0x250] sm:$0xff]
    %v2106 = vld [vmem:[#allocation7 + $0x258] sm:$0xff]
    %v2107 = vld [vmem:[#allocation7 + $0x260] sm:$0xff]
    %v2108 = vld [vmem:[#allocation7 + $0x268] sm:$0xff]
    %v2109 = vld [vmem:[#allocation7 + $0x270] sm:$0xff]
    %v2110 = vld [vmem:[#allocation7 + $0x278] sm:$0xff]
    %v2111 = vld [vmem:[#allocation7 + $0x280] sm:$0xff]
    %v2112 = vld [vmem:[#allocation7 + $0x288] sm:$0xff]
    %v2113 = vld [vmem:[#allocation7 + $0x290] sm:$0xff]
    %v2114 = vld [vmem:[#allocation7 + $0x298] sm:$0xff]
    %v2115 = vld [vmem:[#allocation7 + $0x2a0] sm:$0xff]
    %v2116 = vld [vmem:[#allocation7 + $0x2a8] sm:$0xff]
    %v2117 = vld [vmem:[#allocation7 + $0x2b0] sm:$0xff]
    %v2118 = vld [vmem:[#allocation7 + $0x2b8] sm:$0xff]
    %v2119 = vld [vmem:[#allocation7 + $0x2c0] sm:$0xff]
    %v2120 = vld [vmem:[#allocation7 + $0x2c8] sm:$0xff]
    %v2121 = vld [vmem:[#allocation7 + $0x2d0] sm:$0xff]
    %v2122 = vld [vmem:[#allocation7 + $0x2d8] sm:$0xff]
    %v2123 = vld [vmem:[#allocation7 + $0x2e0] sm:$0xff]
    %v2124 = vld [vmem:[#allocation7 + $0x2e8] sm:$0xff]
    %v2125 = vld [vmem:[#allocation7 + $0x2f0] sm:$0xff]
    %v2126 = vld [vmem:[#allocation7 + $0x2f8] sm:$0xff]
    %v2127 = vld [vmem:[#allocation7 + $0x300] sm:$0xff]
    %v2128 = vld [vmem:[#allocation7 + $0x308] sm:$0xff]
    %v2129 = vld [vmem:[#allocation7 + $0x310] sm:$0xff]
    %v2130 = vld [vmem:[#allocation7 + $0x318] sm:$0xff]
    %v2131 = vld [vmem:[#allocation7 + $0x320] sm:$0xff]
    %v2132 = vld [vmem:[#allocation7 + $0x328] sm:$0xff]
    %v2133 = vld [vmem:[#allocation7 + $0x330] sm:$0xff]
    %v2134 = vld [vmem:[#allocation7 + $0x338] sm:$0xff]
    %v2135 = vld [vmem:[#allocation7 + $0x340] sm:$0xff]
    %v2136 = vld [vmem:[#allocation7 + $0x348] sm:$0xff]
    %v2137 = vld [vmem:[#allocation7 + $0x350] sm:$0xff]
    %v2138 = vld [vmem:[#allocation7 + $0x358] sm:$0xff]
    %v2139 = vld [vmem:[#allocation7 + $0x360] sm:$0xff]
    %v2140 = vld [vmem:[#allocation7 + $0x368] sm:$0xff]
    %v2141 = vld [vmem:[#allocation7 + $0x370] sm:$0xff]
    %v2142 = vld [vmem:[#allocation7 + $0x378] sm:$0xff]
    %v2143 = vld [vmem:[#allocation7 + $0x380] sm:$0xff]
    %v2144 = vld [vmem:[#allocation7 + $0x388] sm:$0xff]
    %v2145 = vld [vmem:[#allocation7 + $0x390] sm:$0xff]
    %v2146 = vld [vmem:[#allocation7 + $0x398] sm:$0xff]
    %v2147 = vld [vmem:[#allocation7 + $0x3a0] sm:$0xff]
    %v2148 = vld [vmem:[#allocation7 + $0x3a8] sm:$0xff]
    %v2149 = vld [vmem:[#allocation7 + $0x3b0] sm:$0xff]
    %v2150 = vld [vmem:[#allocation7 + $0x3b8] sm:$0xff]
    %v2151 = vld [vmem:[#allocation7 + $0x3c0] sm:$0xff]
    %v2152 = vld [vmem:[#allocation7 + $0x3c8] sm:$0xff]
    %v2153 = vld [vmem:[#allocation7 + $0x3d0] sm:$0xff]
    %v2154 = vld [vmem:[#allocation7 + $0x3d8] sm:$0xff]
    %v2155 = vld [vmem:[#allocation7 + $0x3e0] sm:$0xff]
    %v2156 = vld [vmem:[#allocation7 + $0x3e8] sm:$0xff]
    %v2157 = vld [vmem:[#allocation7 + $0x3f0] sm:$0xff]
    %v2158 = vld [vmem:[#allocation7 + $0x3f8] sm:$0xff]
    %v2159 = vld [vmem:[#allocation9] sm:$0xf]
    %v2161 = vlaneseq
    %v2162 = vshrl.u32 %v2161, 7
    %v2163 = vsub.s32 0, %v2162
    %v2164 = vrot.slane %v2159, %v2163
    %v2165 = vlaneseq
    %v2166 = vshrl.u32 %v2165, 7
    %v2167 = vsub.s32 1, %v2166
    %v2168 = vrot.slane %v2159, %v2167
    %v2169 = vlaneseq
    %v2170 = vshrl.u32 %v2169, 7
    %v2171 = vsub.s32 2, %v2170
    %v2172 = vrot.slane %v2159, %v2171
    %v2173 = vlaneseq
    %v2174 = vshrl.u32 %v2173, 7
    %v2175 = vsub.s32 3, %v2174
    %v2176 = vrot.slane %v2159, %v2175
    %v2309 = vunpack.c.l.b16 %v2031
    %v2310 = vunpack.c.h.b16 %v2031
    %v2311 = vunpack.c.l.b16 %v2032
    %v2312 = vunpack.c.h.b16 %v2032
    %v2313 = vunpack.c.l.b16 %v2033
    %v2314 = vunpack.c.h.b16 %v2033
    %v2315 = vunpack.c.l.b16 %v2034
    %v2316 = vunpack.c.h.b16 %v2034
    %v2317 = vunpack.c.l.b16 %v2035
    %v2318 = vunpack.c.h.b16 %v2035
    %v2319 = vunpack.c.l.b16 %v2036
    %v2320 = vunpack.c.h.b16 %v2036
    %v2321 = vunpack.c.l.b16 %v2037
    %v2322 = vunpack.c.h.b16 %v2037
    %v2323 = vunpack.c.l.b16 %v2038
    %v2324 = vunpack.c.h.b16 %v2038
    %v2325 = vunpack.c.l.b16 %v2039
    %v2326 = vunpack.c.h.b16 %v2039
    %v2327 = vunpack.c.l.b16 %v2040
    %v2328 = vunpack.c.h.b16 %v2040
    %v2329 = vunpack.c.l.b16 %v2041
    %v2330 = vunpack.c.h.b16 %v2041
    %v2331 = vunpack.c.l.b16 %v2042
    %v2332 = vunpack.c.h.b16 %v2042
    %v2333 = vunpack.c.l.b16 %v2043
    %v2334 = vunpack.c.h.b16 %v2043
    %v2335 = vunpack.c.l.b16 %v2044
    %v2336 = vunpack.c.h.b16 %v2044
    %v2337 = vunpack.c.l.b16 %v2045
    %v2338 = vunpack.c.h.b16 %v2045
    %v2339 = vunpack.c.l.b16 %v2046
    %v2340 = vunpack.c.h.b16 %v2046
    %v2341 = vunpack.c.l.b16 %v2047
    %v2342 = vunpack.c.h.b16 %v2047
    %v2343 = vunpack.c.l.b16 %v2048
    %v2344 = vunpack.c.h.b16 %v2048
    %v2345 = vunpack.c.l.b16 %v2049
    %v2346 = vunpack.c.h.b16 %v2049
    %v2347 = vunpack.c.l.b16 %v2050
    %v2348 = vunpack.c.h.b16 %v2050
    %v2349 = vunpack.c.l.b16 %v2051
    %v2350 = vunpack.c.h.b16 %v2051
    %v2351 = vunpack.c.l.b16 %v2052
    %v2352 = vunpack.c.h.b16 %v2052
    %v2353 = vunpack.c.l.b16 %v2053
    %v2354 = vunpack.c.h.b16 %v2053
    %v2355 = vunpack.c.l.b16 %v2054
    %v2356 = vunpack.c.h.b16 %v2054
    %v2357 = vunpack.c.l.b16 %v2055
    %v2358 = vunpack.c.h.b16 %v2055
    %v2359 = vunpack.c.l.b16 %v2056
    %v2360 = vunpack.c.h.b16 %v2056
    %v2361 = vunpack.c.l.b16 %v2057
    %v2362 = vunpack.c.h.b16 %v2057
    %v2363 = vunpack.c.l.b16 %v2058
    %v2364 = vunpack.c.h.b16 %v2058
    %v2365 = vunpack.c.l.b16 %v2059
    %v2366 = vunpack.c.h.b16 %v2059
    %v2367 = vunpack.c.l.b16 %v2060
    %v2368 = vunpack.c.h.b16 %v2060
    %v2369 = vunpack.c.l.b16 %v2061
    %v2370 = vunpack.c.h.b16 %v2061
    %v2371 = vunpack.c.l.b16 %v2062
    %v2372 = vunpack.c.h.b16 %v2062
    %v2373 = vunpack.c.l.b16 %v2063
    %v2374 = vunpack.c.h.b16 %v2063
    %v2375 = vunpack.c.l.b16 %v2064
    %v2376 = vunpack.c.h.b16 %v2064
    %v2377 = vunpack.c.l.b16 %v2065
    %v2378 = vunpack.c.h.b16 %v2065
    %v2379 = vunpack.c.l.b16 %v2066
    %v2380 = vunpack.c.h.b16 %v2066
    %v2381 = vunpack.c.l.b16 %v2067
    %v2382 = vunpack.c.h.b16 %v2067
    %v2383 = vunpack.c.l.b16 %v2068
    %v2384 = vunpack.c.h.b16 %v2068
    %v2385 = vunpack.c.l.b16 %v2069
    %v2386 = vunpack.c.h.b16 %v2069
    %v2387 = vunpack.c.l.b16 %v2070
    %v2388 = vunpack.c.h.b16 %v2070
    %v2389 = vunpack.c.l.b16 %v2071
    %v2390 = vunpack.c.h.b16 %v2071
    %v2391 = vunpack.c.l.b16 %v2072
    %v2392 = vunpack.c.h.b16 %v2072
    %v2393 = vunpack.c.l.b16 %v2073
    %v2394 = vunpack.c.h.b16 %v2073
    %v2395 = vunpack.c.l.b16 %v2074
    %v2396 = vunpack.c.h.b16 %v2074
    %v2397 = vunpack.c.l.b16 %v2075
    %v2398 = vunpack.c.h.b16 %v2075
    %v2399 = vunpack.c.l.b16 %v2076
    %v2400 = vunpack.c.h.b16 %v2076
    %v2401 = vunpack.c.l.b16 %v2077
    %v2402 = vunpack.c.h.b16 %v2077
    %v2403 = vunpack.c.l.b16 %v2078
    %v2404 = vunpack.c.h.b16 %v2078
    %v2405 = vunpack.c.l.b16 %v2079
    %v2406 = vunpack.c.h.b16 %v2079
    %v2407 = vunpack.c.l.b16 %v2080
    %v2408 = vunpack.c.h.b16 %v2080
    %v2409 = vunpack.c.l.b16 %v2081
    %v2410 = vunpack.c.h.b16 %v2081
    %v2411 = vunpack.c.l.b16 %v2082
    %v2412 = vunpack.c.h.b16 %v2082
    %v2413 = vunpack.c.l.b16 %v2083
    %v2414 = vunpack.c.h.b16 %v2083
    %v2415 = vunpack.c.l.b16 %v2084
    %v2416 = vunpack.c.h.b16 %v2084
    %v2417 = vunpack.c.l.b16 %v2085
    %v2418 = vunpack.c.h.b16 %v2085
    %v2419 = vunpack.c.l.b16 %v2086
    %v2420 = vunpack.c.h.b16 %v2086
    %v2421 = vunpack.c.l.b16 %v2087
    %v2422 = vunpack.c.h.b16 %v2087
    %v2423 = vunpack.c.l.b16 %v2088
    %v2424 = vunpack.c.h.b16 %v2088
    %v2425 = vunpack.c.l.b16 %v2089
    %v2426 = vunpack.c.h.b16 %v2089
    %v2427 = vunpack.c.l.b16 %v2090
    %v2428 = vunpack.c.h.b16 %v2090
    %v2429 = vunpack.c.l.b16 %v2091
    %v2430 = vunpack.c.h.b16 %v2091
    %v2431 = vunpack.c.l.b16 %v2092
    %v2432 = vunpack.c.h.b16 %v2092
    %v2433 = vunpack.c.l.b16 %v2093
    %v2434 = vunpack.c.h.b16 %v2093
    %v2435 = vunpack.c.l.b16 %v2094
    %v2436 = vunpack.c.h.b16 %v2094
    %v2437 = vunpack.c.l.b16 %v2095
    %v2438 = vunpack.c.h.b16 %v2095
    %v2439 = vunpack.c.l.b16 %v2096
    %v2440 = vunpack.c.h.b16 %v2096
    %v2441 = vunpack.c.l.b16 %v2097
    %v2442 = vunpack.c.h.b16 %v2097
    %v2443 = vunpack.c.l.b16 %v2098
    %v2444 = vunpack.c.h.b16 %v2098
    %v2445 = vunpack.c.l.b16 %v2099
    %v2446 = vunpack.c.h.b16 %v2099
    %v2447 = vunpack.c.l.b16 %v2100
    %v2448 = vunpack.c.h.b16 %v2100
    %v2449 = vunpack.c.l.b16 %v2101
    %v2450 = vunpack.c.h.b16 %v2101
    %v2451 = vunpack.c.l.b16 %v2102
    %v2452 = vunpack.c.h.b16 %v2102
    %v2453 = vunpack.c.l.b16 %v2103
    %v2454 = vunpack.c.h.b16 %v2103
    %v2455 = vunpack.c.l.b16 %v2104
    %v2456 = vunpack.c.h.b16 %v2104
    %v2457 = vunpack.c.l.b16 %v2105
    %v2458 = vunpack.c.h.b16 %v2105
    %v2459 = vunpack.c.l.b16 %v2106
    %v2460 = vunpack.c.h.b16 %v2106
    %v2461 = vunpack.c.l.b16 %v2107
    %v2462 = vunpack.c.h.b16 %v2107
    %v2463 = vunpack.c.l.b16 %v2108
    %v2464 = vunpack.c.h.b16 %v2108
    %v2465 = vunpack.c.l.b16 %v2109
    %v2466 = vunpack.c.h.b16 %v2109
    %v2467 = vunpack.c.l.b16 %v2110
    %v2468 = vunpack.c.h.b16 %v2110
    %v2469 = vunpack.c.l.b16 %v2111
    %v2470 = vunpack.c.h.b16 %v2111
    %v2471 = vunpack.c.l.b16 %v2112
    %v2472 = vunpack.c.h.b16 %v2112
    %v2473 = vunpack.c.l.b16 %v2113
    %v2474 = vunpack.c.h.b16 %v2113
    %v2475 = vunpack.c.l.b16 %v2114
    %v2476 = vunpack.c.h.b16 %v2114
    %v2477 = vunpack.c.l.b16 %v2115
    %v2478 = vunpack.c.h.b16 %v2115
    %v2479 = vunpack.c.l.b16 %v2116
    %v2480 = vunpack.c.h.b16 %v2116
    %v2481 = vunpack.c.l.b16 %v2117
    %v2482 = vunpack.c.h.b16 %v2117
    %v2483 = vunpack.c.l.b16 %v2118
    %v2484 = vunpack.c.h.b16 %v2118
    %v2485 = vunpack.c.l.b16 %v2119
    %v2486 = vunpack.c.h.b16 %v2119
    %v2487 = vunpack.c.l.b16 %v2120
    %v2488 = vunpack.c.h.b16 %v2120
    %v2489 = vunpack.c.l.b16 %v2121
    %v2490 = vunpack.c.h.b16 %v2121
    %v2491 = vunpack.c.l.b16 %v2122
    %v2492 = vunpack.c.h.b16 %v2122
    %v2493 = vunpack.c.l.b16 %v2123
    %v2494 = vunpack.c.h.b16 %v2123
    %v2495 = vunpack.c.l.b16 %v2124
    %v2496 = vunpack.c.h.b16 %v2124
    %v2497 = vunpack.c.l.b16 %v2125
    %v2498 = vunpack.c.h.b16 %v2125
    %v2499 = vunpack.c.l.b16 %v2126
    %v2500 = vunpack.c.h.b16 %v2126
    %v2501 = vunpack.c.l.b16 %v2127
    %v2502 = vunpack.c.h.b16 %v2127
    %v2503 = vunpack.c.l.b16 %v2128
    %v2504 = vunpack.c.h.b16 %v2128
    %v2505 = vunpack.c.l.b16 %v2129
    %v2506 = vunpack.c.h.b16 %v2129
    %v2507 = vunpack.c.l.b16 %v2130
    %v2508 = vunpack.c.h.b16 %v2130
    %v2509 = vunpack.c.l.b16 %v2131
    %v2510 = vunpack.c.h.b16 %v2131
    %v2511 = vunpack.c.l.b16 %v2132
    %v2512 = vunpack.c.h.b16 %v2132
    %v2513 = vunpack.c.l.b16 %v2133
    %v2514 = vunpack.c.h.b16 %v2133
    %v2515 = vunpack.c.l.b16 %v2134
    %v2516 = vunpack.c.h.b16 %v2134
    %v2517 = vunpack.c.l.b16 %v2135
    %v2518 = vunpack.c.h.b16 %v2135
    %v2519 = vunpack.c.l.b16 %v2136
    %v2520 = vunpack.c.h.b16 %v2136
    %v2521 = vunpack.c.l.b16 %v2137
    %v2522 = vunpack.c.h.b16 %v2137
    %v2523 = vunpack.c.l.b16 %v2138
    %v2524 = vunpack.c.h.b16 %v2138
    %v2525 = vunpack.c.l.b16 %v2139
    %v2526 = vunpack.c.h.b16 %v2139
    %v2527 = vunpack.c.l.b16 %v2140
    %v2528 = vunpack.c.h.b16 %v2140
    %v2529 = vunpack.c.l.b16 %v2141
    %v2530 = vunpack.c.h.b16 %v2141
    %v2531 = vunpack.c.l.b16 %v2142
    %v2532 = vunpack.c.h.b16 %v2142
    %v2533 = vunpack.c.l.b16 %v2143
    %v2534 = vunpack.c.h.b16 %v2143
    %v2535 = vunpack.c.l.b16 %v2144
    %v2536 = vunpack.c.h.b16 %v2144
    %v2537 = vunpack.c.l.b16 %v2145
    %v2538 = vunpack.c.h.b16 %v2145
    %v2539 = vunpack.c.l.b16 %v2146
    %v2540 = vunpack.c.h.b16 %v2146
    %v2541 = vunpack.c.l.b16 %v2147
    %v2542 = vunpack.c.h.b16 %v2147
    %v2543 = vunpack.c.l.b16 %v2148
    %v2544 = vunpack.c.h.b16 %v2148
    %v2545 = vunpack.c.l.b16 %v2149
    %v2546 = vunpack.c.h.b16 %v2149
    %v2547 = vunpack.c.l.b16 %v2150
    %v2548 = vunpack.c.h.b16 %v2150
    %v2549 = vunpack.c.l.b16 %v2151
    %v2550 = vunpack.c.h.b16 %v2151
    %v2551 = vunpack.c.l.b16 %v2152
    %v2552 = vunpack.c.h.b16 %v2152
    %v2553 = vunpack.c.l.b16 %v2153
    %v2554 = vunpack.c.h.b16 %v2153
    %v2555 = vunpack.c.l.b16 %v2154
    %v2556 = vunpack.c.h.b16 %v2154
    %v2557 = vunpack.c.l.b16 %v2155
    %v2558 = vunpack.c.h.b16 %v2155
    %v2559 = vunpack.c.l.b16 %v2156
    %v2560 = vunpack.c.h.b16 %v2156
    %v2561 = vunpack.c.l.b16 %v2157
    %v2562 = vunpack.c.h.b16 %v2157
    %v2563 = vunpack.c.l.b16 %v2158
    %v2564 = vunpack.c.h.b16 %v2158
    %v2565 = vpack.c.b16 %v2313, %v2309
    %v2566 = vpack.c.b16 %v2314, %v2310
    %v2567 = vpack.c.b16 %v2315, %v2311
    %v2568 = vpack.c.b16 %v2316, %v2312
    %v2569 = vpack.c.b16 %v2321, %v2317
    %v2570 = vpack.c.b16 %v2322, %v2318
    %v2571 = vpack.c.b16 %v2323, %v2319
    %v2572 = vpack.c.b16 %v2324, %v2320
    %v2573 = vpack.c.b16 %v2329, %v2325
    %v2574 = vpack.c.b16 %v2330, %v2326
    %v2575 = vpack.c.b16 %v2331, %v2327
    %v2576 = vpack.c.b16 %v2332, %v2328
    %v2577 = vpack.c.b16 %v2337, %v2333
    %v2578 = vpack.c.b16 %v2338, %v2334
    %v2579 = vpack.c.b16 %v2339, %v2335
    %v2580 = vpack.c.b16 %v2340, %v2336
    %v2581 = vpack.c.b16 %v2345, %v2341
    %v2582 = vpack.c.b16 %v2346, %v2342
    %v2583 = vpack.c.b16 %v2347, %v2343
    %v2584 = vpack.c.b16 %v2348, %v2344
    %v2585 = vpack.c.b16 %v2353, %v2349
    %v2586 = vpack.c.b16 %v2354, %v2350
    %v2587 = vpack.c.b16 %v2355, %v2351
    %v2588 = vpack.c.b16 %v2356, %v2352
    %v2589 = vpack.c.b16 %v2361, %v2357
    %v2590 = vpack.c.b16 %v2362, %v2358
    %v2591 = vpack.c.b16 %v2363, %v2359
    %v2592 = vpack.c.b16 %v2364, %v2360
    %v2593 = vpack.c.b16 %v2369, %v2365
    %v2594 = vpack.c.b16 %v2370, %v2366
    %v2595 = vpack.c.b16 %v2371, %v2367
    %v2596 = vpack.c.b16 %v2372, %v2368
    %v2597 = vpack.c.b16 %v2377, %v2373
    %v2598 = vpack.c.b16 %v2378, %v2374
    %v2599 = vpack.c.b16 %v2379, %v2375
    %v2600 = vpack.c.b16 %v2380, %v2376
    %v2601 = vpack.c.b16 %v2385, %v2381
    %v2602 = vpack.c.b16 %v2386, %v2382
    %v2603 = vpack.c.b16 %v2387, %v2383
    %v2604 = vpack.c.b16 %v2388, %v2384
    %v2605 = vpack.c.b16 %v2393, %v2389
    %v2606 = vpack.c.b16 %v2394, %v2390
    %v2607 = vpack.c.b16 %v2395, %v2391
    %v2608 = vpack.c.b16 %v2396, %v2392
    %v2609 = vpack.c.b16 %v2401, %v2397
    %v2610 = vpack.c.b16 %v2402, %v2398
    %v2611 = vpack.c.b16 %v2403, %v2399
    %v2612 = vpack.c.b16 %v2404, %v2400
    %v2613 = vpack.c.b16 %v2409, %v2405
    %v2614 = vpack.c.b16 %v2410, %v2406
    %v2615 = vpack.c.b16 %v2411, %v2407
    %v2616 = vpack.c.b16 %v2412, %v2408
    %v2617 = vpack.c.b16 %v2417, %v2413
    %v2618 = vpack.c.b16 %v2418, %v2414
    %v2619 = vpack.c.b16 %v2419, %v2415
    %v2620 = vpack.c.b16 %v2420, %v2416
    %v2621 = vpack.c.b16 %v2425, %v2421
    %v2622 = vpack.c.b16 %v2426, %v2422
    %v2623 = vpack.c.b16 %v2427, %v2423
    %v2624 = vpack.c.b16 %v2428, %v2424
    %v2625 = vpack.c.b16 %v2433, %v2429
    %v2626 = vpack.c.b16 %v2434, %v2430
    %v2627 = vpack.c.b16 %v2435, %v2431
    %v2628 = vpack.c.b16 %v2436, %v2432
    %v2629 = vpack.c.b16 %v2441, %v2437
    %v2630 = vpack.c.b16 %v2442, %v2438
    %v2631 = vpack.c.b16 %v2443, %v2439
    %v2632 = vpack.c.b16 %v2444, %v2440
    %v2633 = vpack.c.b16 %v2449, %v2445
    %v2634 = vpack.c.b16 %v2450, %v2446
    %v2635 = vpack.c.b16 %v2451, %v2447
    %v2636 = vpack.c.b16 %v2452, %v2448
    %v2637 = vpack.c.b16 %v2457, %v2453
    %v2638 = vpack.c.b16 %v2458, %v2454
    %v2639 = vpack.c.b16 %v2459, %v2455
    %v2640 = vpack.c.b16 %v2460, %v2456
    %v2641 = vpack.c.b16 %v2465, %v2461
    %v2642 = vpack.c.b16 %v2466, %v2462
    %v2643 = vpack.c.b16 %v2467, %v2463
    %v2644 = vpack.c.b16 %v2468, %v2464
    %v2645 = vpack.c.b16 %v2473, %v2469
    %v2646 = vpack.c.b16 %v2474, %v2470
    %v2647 = vpack.c.b16 %v2475, %v2471
    %v2648 = vpack.c.b16 %v2476, %v2472
    %v2649 = vpack.c.b16 %v2481, %v2477
    %v2650 = vpack.c.b16 %v2482, %v2478
    %v2651 = vpack.c.b16 %v2483, %v2479
    %v2652 = vpack.c.b16 %v2484, %v2480
    %v2653 = vpack.c.b16 %v2489, %v2485
    %v2654 = vpack.c.b16 %v2490, %v2486
    %v2655 = vpack.c.b16 %v2491, %v2487
    %v2656 = vpack.c.b16 %v2492, %v2488
    %v2657 = vpack.c.b16 %v2497, %v2493
    %v2658 = vpack.c.b16 %v2498, %v2494
    %v2659 = vpack.c.b16 %v2499, %v2495
    %v2660 = vpack.c.b16 %v2500, %v2496
    %v2661 = vpack.c.b16 %v2505, %v2501
    %v2662 = vpack.c.b16 %v2506, %v2502
    %v2663 = vpack.c.b16 %v2507, %v2503
    %v2664 = vpack.c.b16 %v2508, %v2504
    %v2665 = vpack.c.b16 %v2513, %v2509
    %v2666 = vpack.c.b16 %v2514, %v2510
    %v2667 = vpack.c.b16 %v2515, %v2511
    %v2668 = vpack.c.b16 %v2516, %v2512
    %v2669 = vpack.c.b16 %v2521, %v2517
    %v2670 = vpack.c.b16 %v2522, %v2518
    %v2671 = vpack.c.b16 %v2523, %v2519
    %v2672 = vpack.c.b16 %v2524, %v2520
    %v2673 = vpack.c.b16 %v2529, %v2525
    %v2674 = vpack.c.b16 %v2530, %v2526
    %v2675 = vpack.c.b16 %v2531, %v2527
    %v2676 = vpack.c.b16 %v2532, %v2528
    %v2677 = vpack.c.b16 %v2537, %v2533
    %v2678 = vpack.c.b16 %v2538, %v2534
    %v2679 = vpack.c.b16 %v2539, %v2535
    %v2680 = vpack.c.b16 %v2540, %v2536
    %v2681 = vpack.c.b16 %v2545, %v2541
    %v2682 = vpack.c.b16 %v2546, %v2542
    %v2683 = vpack.c.b16 %v2547, %v2543
    %v2684 = vpack.c.b16 %v2548, %v2544
    %v2685 = vpack.c.b16 %v2553, %v2549
    %v2686 = vpack.c.b16 %v2554, %v2550
    %v2687 = vpack.c.b16 %v2555, %v2551
    %v2688 = vpack.c.b16 %v2556, %v2552
    %v2689 = vpack.c.b16 %v2561, %v2557
    %v2690 = vpack.c.b16 %v2562, %v2558
    %v2691 = vpack.c.b16 %v2563, %v2559
    %v2692 = vpack.c.b16 %v2564, %v2560
    %2821 = vmatprep.subr.bf16.mxu0 %v2566
    %2822 = vmatpush1.bf16.msra.mxu0 %v2565
    %2823 = vmatprep.subr.bf16.mxu0 %v2570
    %2824 = vmatpush1.bf16.msra.mxu0 %v2569
    %2825 = vmatprep.subr.bf16.mxu0 %v2574
    %2826 = vmatpush1.bf16.msra.mxu0 %v2573
    %2827 = vmatprep.subr.bf16.mxu0 %v2578
    %2828 = vmatpush1.bf16.msra.mxu0 %v2577
    %2829 = vmatprep.subr.bf16.mxu0 %v2582
    %2830 = vmatpush1.bf16.msra.mxu0 %v2581
    %2831 = vmatprep.subr.bf16.mxu0 %v2586
    %2832 = vmatpush1.bf16.msra.mxu0 %v2585
    %2833 = vmatprep.subr.bf16.mxu0 %v2590
    %2834 = vmatpush1.bf16.msra.mxu0 %v2589
    %2835 = vmatprep.subr.bf16.mxu0 %v2594
    %2836 = vmatpush1.bf16.msra.mxu0 %v2593
    %2837 = vmatprep.subr.bf16.mxu0 %v2598
    %2838 = vmatpush1.bf16.msra.mxu0 %v2597
    %2839 = vmatprep.subr.bf16.mxu0 %v2602
    %2840 = vmatpush1.bf16.msra.mxu0 %v2601
    %2841 = vmatprep.subr.bf16.mxu0 %v2606
    %2842 = vmatpush1.bf16.msra.mxu0 %v2605
    %2843 = vmatprep.subr.bf16.mxu0 %v2610
    %2844 = vmatpush1.bf16.msra.mxu0 %v2609
    %2845 = vmatprep.subr.bf16.mxu0 %v2614
    %2846 = vmatpush1.bf16.msra.mxu0 %v2613
    %2847 = vmatprep.subr.bf16.mxu0 %v2618
    %2848 = vmatpush1.bf16.msra.mxu0 %v2617
    %2849 = vmatprep.subr.bf16.mxu0 %v2622
    %2850 = vmatpush1.bf16.msra.mxu0 %v2621
    %2851 = vmatprep.subr.bf16.mxu0 %v2626
    %2852 = vmatpush1.bf16.msra.mxu0 %v2625
    %2853 = vmatprep.mubr.bf16.mxu0 %v2028
    %2854 = vmatmul.mubr.bf16.gmra.mrb[0].mxu0 %v2027
    %v2855 = vpop.f32.mrb[0].mxu0
    %v2856 = vadd.f32 %v2164, %v2855
    %v2857 = vpop.f32.mrb[0].mxu0
    %v2858 = vadd.f32 %v2168, %v2857
    %v2859 = vpop.f32.mrb[0].mxu0
    %v2860 = vpop.f32.mrb[0].mxu0
    %2861 = vdwg.mxu0
    %2862 = vmatprep.subr.bf16.mxu0 %v2630
    %2863 = vmatpush1.bf16.msra.mxu0 %v2629
    %2864 = vmatprep.subr.bf16.mxu0 %v2634
    %2865 = vmatpush1.bf16.msra.mxu0 %v2633
    %2866 = vmatprep.subr.bf16.mxu0 %v2638
    %2867 = vmatpush1.bf16.msra.mxu0 %v2637
    %2868 = vmatprep.subr.bf16.mxu0 %v2642
    %2869 = vmatpush1.bf16.msra.mxu0 %v2641
    %2870 = vmatprep.subr.bf16.mxu0 %v2646
    %2871 = vmatpush1.bf16.msra.mxu0 %v2645
    %2872 = vmatprep.subr.bf16.mxu0 %v2650
    %2873 = vmatpush1.bf16.msra.mxu0 %v2649
    %2874 = vmatprep.subr.bf16.mxu0 %v2654
    %2875 = vmatpush1.bf16.msra.mxu0 %v2653
    %2876 = vmatprep.subr.bf16.mxu0 %v2658
    %2877 = vmatpush1.bf16.msra.mxu0 %v2657
    %2878 = vmatprep.subr.bf16.mxu0 %v2662
    %2879 = vmatpush1.bf16.msra.mxu0 %v2661
    %2880 = vmatprep.subr.bf16.mxu0 %v2666
    %2881 = vmatpush1.bf16.msra.mxu0 %v2665
    %2882 = vmatprep.subr.bf16.mxu0 %v2670
    %2883 = vmatpush1.bf16.msra.mxu0 %v2669
    %2884 = vmatprep.subr.bf16.mxu0 %v2674
    %2885 = vmatpush1.bf16.msra.mxu0 %v2673
    %2886 = vmatprep.subr.bf16.mxu0 %v2678
    %2887 = vmatpush1.bf16.msra.mxu0 %v2677
    %2888 = vmatprep.subr.bf16.mxu0 %v2682
    %2889 = vmatpush1.bf16.msra.mxu0 %v2681
    %2890 = vmatprep.subr.bf16.mxu0 %v2686
    %2891 = vmatpush1.bf16.msra.mxu0 %v2685
    %2892 = vmatprep.subr.bf16.mxu0 %v2690
    %2893 = vmatpush1.bf16.msra.mxu0 %v2689
    %2894 = vmatprep.mubr.bf16.mxu0 %v2030
    %2895 = vmatmul.mubr.bf16.gmra.mrb[0].mxu0 %v2029
    %v2896 = vpop.f32.mrb[0].mxu0
    %v2897 = vadd.f32 %v2856, %v2896
    %v2898 = vpop.f32.mrb[0].mxu0
    %v2899 = vadd.f32 %v2858, %v2898
    %v2900 = vpop.f32.mrb[0].mxu0
    %v2901 = vpop.f32.mrb[0].mxu0
    %2902 = vdwg.mxu0
    %2903 = vmatprep.subr.bf16.mxu0 %v2568
    %2904 = vmatpush1.bf16.msra.mxu0 %v2567
    %2905 = vmatprep.subr.bf16.mxu0 %v2572
    %2906 = vmatpush1.bf16.msra.mxu0 %v2571
    %2907 = vmatprep.subr.bf16.mxu0 %v2576
    %2908 = vmatpush1.bf16.msra.mxu0 %v2575
    %2909 = vmatprep.subr.bf16.mxu0 %v2580
    %2910 = vmatpush1.bf16.msra.mxu0 %v2579
    %2911 = vmatprep.subr.bf16.mxu0 %v2584
    %2912 = vmatpush1.bf16.msra.mxu0 %v2583
    %2913 = vmatprep.subr.bf16.mxu0 %v2588
    %2914 = vmatpush1.bf16.msra.mxu0 %v2587
    %2915 = vmatprep.subr.bf16.mxu0 %v2592
    %2916 = vmatpush1.bf16.msra.mxu0 %v2591
    %2917 = vmatprep.subr.bf16.mxu0 %v2596
    %2918 = vmatpush1.bf16.msra.mxu0 %v2595
    %2919 = vmatprep.subr.bf16.mxu0 %v2600
    %2920 = vmatpush1.bf16.msra.mxu0 %v2599
    %2921 = vmatprep.subr.bf16.mxu0 %v2604
    %2922 = vmatpush1.bf16.msra.mxu0 %v2603
    %2923 = vmatprep.subr.bf16.mxu0 %v2608
    %2924 = vmatpush1.bf16.msra.mxu0 %v2607
    %2925 = vmatprep.subr.bf16.mxu0 %v2612
    %2926 = vmatpush1.bf16.msra.mxu0 %v2611
    %2927 = vmatprep.subr.bf16.mxu0 %v2616
    %2928 = vmatpush1.bf16.msra.mxu0 %v2615
    %2929 = vmatprep.subr.bf16.mxu0 %v2620
    %2930 = vmatpush1.bf16.msra.mxu0 %v2619
    %2931 = vmatprep.subr.bf16.mxu0 %v2624
    %2932 = vmatpush1.bf16.msra.mxu0 %v2623
    %2933 = vmatprep.subr.bf16.mxu0 %v2628
    %2934 = vmatpush1.bf16.msra.mxu0 %v2627
    %2935 = vmatprep.mubr.bf16.mxu0 %v2028
    %2936 = vmatmul.mubr.bf16.gmra.mrb[0].mxu0 %v2027
    %v2937 = vpop.f32.mrb[0].mxu0
    %v2938 = vadd.f32 %v2172, %v2937
    %v2939 = vpop.f32.mrb[0].mxu0
    %v2940 = vadd.f32 %v2176, %v2939
    %v2941 = vpop.f32.mrb[0].mxu0
    %v2942 = vpop.f32.mrb[0].mxu0
    %2943 = vdwg.mxu0
    %2944 = vmatprep.subr.bf16.mxu0 %v2632
    %2945 = vmatpush1.bf16.msra.mxu0 %v2631
    %2946 = vmatprep.subr.bf16.mxu0 %v2636
    %2947 = vmatpush1.bf16.msra.mxu0 %v2635
    %2948 = vmatprep.subr.bf16.mxu0 %v2640
    %2949 = vmatpush1.bf16.msra.mxu0 %v2639
    %2950 = vmatprep.subr.bf16.mxu0 %v2644
    %2951 = vmatpush1.bf16.msra.mxu0 %v2643
    %2952 = vmatprep.subr.bf16.mxu0 %v2648
    %2953 = vmatpush1.bf16.msra.mxu0 %v2647
    %2954 = vmatprep.subr.bf16.mxu0 %v2652
    %2955 = vmatpush1.bf16.msra.mxu0 %v2651
    %2956 = vmatprep.subr.bf16.mxu0 %v2656
    %2957 = vmatpush1.bf16.msra.mxu0 %v2655
    %2958 = vmatprep.subr.bf16.mxu0 %v2660
    %2959 = vmatpush1.bf16.msra.mxu0 %v2659
    %2960 = vmatprep.subr.bf16.mxu0 %v2664
    %2961 = vmatpush1.bf16.msra.mxu0 %v2663
    %2962 = vmatprep.subr.bf16.mxu0 %v2668
    %2963 = vmatpush1.bf16.msra.mxu0 %v2667
    %2964 = vmatprep.subr.bf16.mxu0 %v2672
    %2965 = vmatpush1.bf16.msra.mxu0 %v2671
    %2966 = vmatprep.subr.bf16.mxu0 %v2676
    %2967 = vmatpush1.bf16.msra.mxu0 %v2675
    %2968 = vmatprep.subr.bf16.mxu0 %v2680
    %2969 = vmatpush1.bf16.msra.mxu0 %v2679
    %2970 = vmatprep.subr.bf16.mxu0 %v2684
    %2971 = vmatpush1.bf16.msra.mxu0 %v2683
    %2972 = vmatprep.subr.bf16.mxu0 %v2688
    %2973 = vmatpush1.bf16.msra.mxu0 %v2687
    %2974 = vmatprep.subr.bf16.mxu0 %v2692
    %2975 = vmatpush1.bf16.msra.mxu0 %v2691
    %2976 = vmatprep.mubr.bf16.mxu0 %v2030
    %2977 = vmatmul.mubr.bf16.gmra.mrb[0].mxu0 %v2029
    %v2978 = vpop.f32.mrb[0].mxu0
    %v2979 = vadd.f32 %v2938, %v2978
    %v2980 = vpop.f32.mrb[0].mxu0
    %v2981 = vadd.f32 %v2940, %v2980
    %v2982 = vpop.f32.mrb[0].mxu0
    %v2983 = vpop.f32.mrb[0].mxu0
    %2984 = vdwg.mxu0
    %v2985 = vpack.c.bf16 %v2897, %v2897
    %v2986 = vpack.c.bf16 %v2899, %v2899
    %v2987 = vpack.c.bf16 %v2979, %v2979
    %v2988 = vpack.c.bf16 %v2981, %v2981
    %v2993 = vcombine.low %v2985, %v2986
    %v2994 = vcombine.low %v2987, %v2988
    %v2996 = vunpack.c.l.s4 1983009808
    %v2997 = vunpack.c.0.s8 %v2996
    %v2998 = vlaneseq
    %v2999 = vshrl.u32 %v2998, 7
    %v3000 = vsub.s32 %v2997, %v2999
    %v3001 = vrot.slane %v2993, %v3000
    %v3003 = vunpack.c.l.s4 1983009808
    %v3004 = vunpack.c.0.s8 %v3003
    %v3005 = vlaneseq
    %v3006 = vshrl.u32 %v3005, 7
    %v3007 = vsub.s32 %v3004, %v3006
    %v3008 = vrot.slane %v2994, %v3007
    %v3009 = vcombine.low %v3001, %v3008
    %3011 = vst [vmem:[%s7] sm:$0xff] %v3009
    // Predicated region
    $region50: #{unet_forward.16} parent=1 // pred_check
      _
    $region51: #{unet_forward.16} parent=1 // pred_check_branch
      %3013 = sbr.rel (0) target = $region53
    $region52: #{unet_forward.16} parent=1 // pred_region
      _
    $region53: #{unet_forward.16} parent=1 // pred_fallthru
      _
    // Predicated region
    $region54: #{unet_forward.16} parent=1 // pred_check
      _
    $region55: #{unet_forward.16} parent=1 // pred_check_branch
      %3015 = sbr.rel (0) target = $region57
    $region56: #{unet_forward.16} parent=1 // pred_region
      _
    $region57: #{unet_forward.16} parent=1 // pred_fallthru
      _
    %3016 = vsyncpa [#allocation3], 1
    %3017 = vsyncpa [#allocation5], 1
    %3018 = vsyncpa [#allocation8], 1

</llo_original>
